<compile_context>
chip_gen: v6e
topology: v6e:2x2x1
jax: 0.10.0
libtpu: 0.0.40
codegen_flags: <defaults>
</compile_context>

<pallas_src>
import functools

import jax
import jax.numpy as jnp
from jax.experimental import pallas as pl
from jax.experimental.pallas import tpu as pltpu


_VMEM_LIMIT = 32 * 1024 * 1024  # safe on v5e/v6e (128 MiB) and v7x (64 MiB)


# ----------------------------------------------------------------------------
# Pallas kernels
# ----------------------------------------------------------------------------
def _conv_pool_kernel(cols_ref, w_ref, b_ref, o_ref, *, n_win):
    # cols: (n_win, TM, K) bf16  w: (K, N) bf16  b: (1, N) f32  ->  o: (TM, N)
    # out[m, n] = max over pool-window slots of relu(cols[slot] @ W + b)
    w = w_ref[...]
    b = b_ref[...]
    acc = None
    for win in range(n_win):  # static unrolled loop over pool-window slots
        y = jnp.dot(cols_ref[win], w, preferred_element_type=jnp.float32) + b
        y = jnp.maximum(y, 0.0)
        acc = y if acc is None else jnp.maximum(acc, y)
    o_ref[...] = acc.astype(o_ref.dtype)


def _conv3_conv4_kernel(cols_ref, w3_ref, b3_ref, w4_ref, b4_ref, o_ref):
    # conv3 (3x3, via im2col) + ReLU, then conv4 (1x1) + ReLU, fused.
    h = jnp.dot(cols_ref[...], w3_ref[...], preferred_element_type=jnp.float32)
    h = jnp.maximum(h + b3_ref[...], 0.0).astype(jnp.bfloat16)
    y = jnp.dot(h, w4_ref[...], preferred_element_type=jnp.float32)
    o_ref[...] = jnp.maximum(y + b4_ref[...], 0.0).astype(o_ref.dtype)


def _fc_head_kernel(x_ref, w1_ref, b1_ref, w2_ref, b2_ref, w3_ref, b3_ref, o_ref):
    # fc1+ReLU, fc2+ReLU, fc3, softmax(dim=-1) -- all in one kernel.
    h = jnp.dot(x_ref[...], w1_ref[...], preferred_element_type=jnp.float32)
    h = jnp.maximum(h + b1_ref[...], 0.0).astype(jnp.bfloat16)
    h = jnp.dot(h, w2_ref[...], preferred_element_type=jnp.float32)
    h = jnp.maximum(h + b2_ref[...], 0.0).astype(jnp.bfloat16)
    logits = jnp.dot(h, w3_ref[...], preferred_element_type=jnp.float32) + b3_ref[...]
    m = jnp.max(logits, axis=-1, keepdims=True)
    e = jnp.exp(logits - m)
    o_ref[...] = (e / jnp.sum(e, axis=-1, keepdims=True)).astype(o_ref.dtype)


# ----------------------------------------------------------------------------
# pallas_call wrappers (M-tiled, pipelined, "parallel" grid axis)
# ----------------------------------------------------------------------------
def _round_up(x, m):
    return ((x + m - 1) // m) * m


def _tile_rows(m, pref):
    """Pick row-tile size (multiple of 16 for bf16 when tiling) and padded M."""
    if m <= pref:
        return m, m            # single full-extent block
    return pref, _round_up(m, pref)


def conv_relu_pool(cols, w, b, *, tm=128):
    n_win, M, K = cols.shape
    N = w.shape[1]
    TM, Mp = _tile_rows(M, tm)
    if Mp != M:
        cols = jnp.pad(cols, ((0, 0), (0, Mp - M), (0, 0)))
    kernel = functools.partial(_conv_pool_kernel, n_win=n_win)
    out = pl.pallas_call(
        kernel,
        grid=(Mp // TM,),
        in_specs=[
            pl.BlockSpec((n_win, TM, K), lambda i: (0, i, 0)),
            pl.BlockSpec((K, N), lambda i: (0, 0)),
            pl.BlockSpec((1, N), lambda i: (0, 0)),
        ],
        out_specs=pl.BlockSpec((TM, N), lambda i: (i, 0)),
        out_shape=jax.ShapeDtypeStruct((Mp, N), jnp.bfloat16),
        compiler_params=pltpu.CompilerParams(
            dimension_semantics=("parallel",),
            vmem_limit_bytes=_VMEM_LIMIT,
        ),
    )(cols, w, b.reshape(1, N))
    return out[:M] if Mp != M else out


def conv3_conv4_relu(cols, w3, b3, w4, b4, *, tm=256):
    M, K = cols.shape
    N3, N4 = w3.shape[1], w4.shape[1]
    TM, Mp = _tile_rows(M, tm)
    if Mp != M:
        cols = jnp.pad(cols, ((0, Mp - M), (0, 0)))
    out = pl.pallas_call(
        _conv3_conv4_kernel,
        grid=(Mp // TM,),
        in_specs=[
            pl.BlockSpec((TM, K), lambda i: (i, 0)),
            pl.BlockSpec((K, N3), lambda i: (0, 0)),
            pl.BlockSpec((1, N3), lambda i: (0, 0)),
            pl.BlockSpec((N3, N4), lambda i: (0, 0)),
            pl.BlockSpec((1, N4), lambda i: (0, 0)),
        ],
        out_specs=pl.BlockSpec((TM, N4), lambda i: (i, 0)),
        out_shape=jax.ShapeDtypeStruct((Mp, N4), jnp.bfloat16),
        compiler_params=pltpu.CompilerParams(
            dimension_semantics=("parallel",),
            vmem_limit_bytes=_VMEM_LIMIT,
        ),
    )(cols, w3, b3.reshape(1, N3), w4, b4.reshape(1, N4))
    return out[:M] if Mp != M else out


def fc_head(x, w1, b1, w2, b2, w3, b3, *, tb=128):
    B, K = x.shape
    N1, N2, N3 = w1.shape[1], w2.shape[1], w3.shape[1]
    TB, Bp = _tile_rows(B, tb)
    if Bp != B:
        x = jnp.pad(x, ((0, Bp - B), (0, 0)))
    out = pl.pallas_call(
        _fc_head_kernel,
        grid=(Bp // TB,),
        in_specs=[
            pl.BlockSpec((TB, K), lambda i: (i, 0)),
            pl.BlockSpec((K, N1), lambda i: (0, 0)),
            pl.BlockSpec((1, N1), lambda i: (0, 0)),
            pl.BlockSpec((N1, N2), lambda i: (0, 0)),
            pl.BlockSpec((1, N2), lambda i: (0, 0)),
            pl.BlockSpec((N2, N3), lambda i: (0, 0)),
            pl.BlockSpec((1, N3), lambda i: (0, 0)),
        ],
        out_specs=pl.BlockSpec((TB, N3), lambda i: (i, 0)),
        out_shape=jax.ShapeDtypeStruct((Bp, N3), jnp.float32),
        compiler_params=pltpu.CompilerParams(
            dimension_semantics=("parallel",),
            vmem_limit_bytes=_VMEM_LIMIT,
        ),
    )(x, w1, b1.reshape(1, N1), w2, b2.reshape(1, N2), w3, b3.reshape(1, N3))
    return out[:B] if Bp != B else out


# ----------------------------------------------------------------------------
# JAX glue: patch extraction (per pool-window slot), parameter conversion
# ----------------------------------------------------------------------------
def im2col(x, k):
    """Valid conv, stride 1. Returns ([B*Ho*Wo, k*k*C], (B, Ho, Wo))."""
    B, H, W, C = x.shape
    Ho, Wo = H - k + 1, W - k + 1
    patches = [x[:, di:di + Ho, dj:dj + Wo, :]
               for di in range(k) for dj in range(k)]
    p = jnp.stack(patches, axis=3)                       # (B, Ho, Wo, k*k, C)
    return p.reshape(B * Ho * Wo, k * k * C), (B, Ho, Wo)


def im2col_pooled(x, k, pk, ps):
    """For conv(k,k,valid,stride1) followed by MaxPool(pk, ps): build one
    im2col slab per pool-window slot (rows = pooled output positions).
    Returns ((pk*pk, B*Ph*Pw, k*k*C), (B, Ph, Pw))."""
    B, H, W, C = x.shape
    Ho, Wo = H - k + 1, W - k + 1
    Ph = (Ho - pk) // ps + 1      # PyTorch floor mode
    Pw = (Wo - pk) // ps + 1
    slabs = []
    for di in range(pk):
        for dj in range(pk):
            patches = []
            for ki in range(k):
                for kj in range(k):
                    r0, c0 = di + ki, dj + kj
                    v = x[:, r0:r0 + ps * (Ph - 1) + 1:ps,
                             c0:c0 + ps * (Pw - 1) + 1:ps, :]   # (B, Ph, Pw, C)
                    patches.append(v)
            slab = jnp.stack(patches, axis=3)                   # (B, Ph, Pw, k*k, C)
            slabs.append(slab.reshape(B * Ph * Pw, k * k * C))
    return jnp.stack(slabs, axis=0), (B, Ph, Pw)


def conv_weight_to_matmul(w):
    """[Cout, Cin, kh, kw] -> [kh*kw*Cin, Cout], matching im2col patch order."""
    cout, cin, kh, kw = w.shape
    return jnp.transpose(w, (2, 3, 1, 0)).reshape(kh * kw * cin, cout)


def fc1_weight_to_nhwc(w_in_out, c=64, h=4, w=4):
    """Permute fc1 weight rows so the NHWC flatten of conv4's output can feed
    fc1 directly (PyTorch flattens NCHW); the transpose is folded into init."""
    idx = jnp.arange(c * h * w)
    hw = idx // c
    ch = idx % c
    perm = ch * (h * w) + hw          # NHWC flat index -> NCHW flat index
    return w_in_out[perm, :]


def init_params(key):
    """Deterministic synthetic parameters (same shapes as the PyTorch module),
    converted to the layouts the kernels consume (bf16 matmul operands)."""
    ks = jax.random.split(key, 7)

    def w(k, shape, scale=0.05):
        return (scale * jax.random.normal(k, shape)).astype(jnp.float32)

    # PyTorch-layout weights
    conv1 = w(ks[0], (64, 3, 3, 3))
    conv2 = w(ks[1], (128, 64, 3, 3))
    conv3 = w(ks[2], (256, 128, 3, 3))
    conv4 = w(ks[3], (64, 256, 1, 1))
    fc1 = w(ks[4], (384, 1024))
    fc2 = w(ks[5], (192, 384))
    fc3 = w(ks[6], (10, 192))

    bf = jnp.bfloat16
    return {
        "conv1_w": conv_weight_to_matmul(conv1).astype(bf),
        "conv1_b": jnp.zeros((64,), jnp.float32),
        "conv2_w": conv_weight_to_matmul(conv2).astype(bf),
        "conv2_b": jnp.zeros((128,), jnp.float32),
        "conv3_w": conv_weight_to_matmul(conv3).astype(bf),
        "conv3_b": jnp.zeros((256,), jnp.float32),
        "conv4_w": conv_weight_to_matmul(conv4).astype(bf),
        "conv4_b": jnp.zeros((64,), jnp.float32),
        # fc weights stored [in, out]; fc1 rows permuted to NHWC flatten order
        "fc1_w": fc1_weight_to_nhwc(fc1.T).astype(bf),
        "fc1_b": jnp.zeros((384,), jnp.float32),
        "fc2_w": fc2.T.astype(bf),
        "fc2_b": jnp.zeros((192,), jnp.float32),
        "fc3_w": fc3.T.astype(bf),
        "fc3_b": jnp.zeros((10,), jnp.float32),
    }


# ----------------------------------------------------------------------------
# Forward pass (matches MyModel.forward)
# ----------------------------------------------------------------------------
def forward(params, x_nchw):
    # One-time NCHW -> NHWC so channels sit on the lane dim; bf16 activations.
    x = jnp.transpose(x_nchw, (0, 2, 3, 1)).astype(jnp.bfloat16)

    # conv1 (3->64, k=3) + ReLU + MaxPool(2,2)  -- fused Pallas kernel
    cols, (B, Ph, Pw) = im2col_pooled(x, 3, 2, 2)
    y = conv_relu_pool(cols, params["conv1_w"], params["conv1_b"])
    y = y.reshape(B, Ph, Pw, 64)                       # (B, 15, 15, 64)

    # conv2 (64->128, k=3) + ReLU + MaxPool(3,2) -- fused (overlapping pool
    # windows are recomputed per slot: exact result, no HBM blowup)
    cols, (B, Ph, Pw) = im2col_pooled(y, 3, 3, 2)
    y = conv_relu_pool(cols, params["conv2_w"], params["conv2_b"])
    y = y.reshape(B, Ph, Pw, 128)                      # (B, 6, 6, 128)

    # conv3 (128->256, k=3) + ReLU  fused with  conv4 (256->64, 1x1) + ReLU
    cols, (B, Ho, Wo) = im2col(y, 3)
    y = conv3_conv4_relu(cols, params["conv3_w"], params["conv3_b"],
                         params["conv4_w"], params["conv4_b"])   # (B*16, 64)

    # NHWC flatten; PyTorch's NCHW .view order is folded into fc1_w at init.
    y = y.reshape(B, Ho * Wo * 64)                     # (B, 1024)

    # fc1+ReLU, fc2+ReLU, fc3+softmax -- single fused Pallas kernel
    return fc_head(y, params["fc1_w"], params["fc1_b"],
                   params["fc2_w"], params["fc2_b"],
                   params["fc3_w"], params["fc3_b"])


# ----------------------------------------------------------------------------
if __name__ == "__main__":
    key = jax.random.PRNGKey(0)
    k_param, k_x = jax.random.split(key)

    params = init_params(k_param)
    # fc1 expects 1024 = 64*4*4 features, which pins the input to 32x32 (CIFAR-10)
    x = jax.random.normal(k_x, (2, 3, 32, 32), dtype=jnp.float32)

    fwd = jax.jit(forward)
    out = jax.block_until_ready(fwd(params, x))

    assert out.shape == (2, 10)
    assert jnp.allclose(jnp.sum(out, axis=-1), 1.0, atol=1e-5)
    print("KERNEL_OK")
</pallas_src>

<mosaic_0001>
module attributes {stable_mosaic.version = 11 : i64} {
  func.func @_conv_pool_kernel(%arg0: i32, %arg1: memref<4x128x27xbf16, #tpu.memory_space<vmem>>, %arg2: memref<27x64xbf16, #tpu.memory_space<vmem>>, %arg3: memref<1x64xf32, #tpu.memory_space<vmem>>, %arg4: memref<128x64xbf16, #tpu.memory_space<vmem>>) attributes {dimension_semantics = [#tpu.dimension_semantics<parallel>], iteration_bounds = array<i64: 4>, scalar_prefetch = 0 : i64, scratch_operands = 0 : i64, tpu.core_type = #tpu.core_type<tc>, window_params = [{transform_indices = @transform_0, window_bounds = array<i64: 4, 128, 27>}, {pipeline_mode = #tpu.pipeline_mode<synchronous>, transform_indices = @transform_1, window_bounds = array<i64: 27, 64>}, {pipeline_mode = #tpu.pipeline_mode<synchronous>, transform_indices = @transform_2, window_bounds = array<i64: 1, 64>}, {transform_indices = @transform_3, window_bounds = array<i64: 128, 64>}]} {
    %c0 = arith.constant 0 : index
    %c0_0 = arith.constant 0 : index
    %0 = vector.load %arg2[%c0, %c0_0] : memref<27x64xbf16, #tpu.memory_space<vmem>>, vector<27x64xbf16>
    %c0_1 = arith.constant 0 : index
    %c0_2 = arith.constant 0 : index
    %1 = vector.load %arg3[%c0_1, %c0_2] : memref<1x64xf32, #tpu.memory_space<vmem>>, vector<1x64xf32>
    %c0_3 = arith.constant 0 : index
    %c0_4 = arith.constant 0 : index
    %c0_5 = arith.constant 0 : index
    %2 = vector.load %arg1[%c0_3, %c0_4, %c0_5] : memref<4x128x27xbf16, #tpu.memory_space<vmem>>, vector<1x128x27xbf16>
    %3 = vector.shape_cast %2 : vector<1x128x27xbf16> to vector<128x27xbf16>
    %cst = arith.constant dense<0.000000e+00> : vector<128x64xf32>
    %4 = tpu.matmul %3, %0, %cst {dimension_numbers = #tpu.dot_dimension_numbers<[1], [0], [0], [1], [0, 0, 1, 1], [], []>} : vector<128x27xbf16>, vector<27x64xbf16>, vector<128x64xf32> -> vector<128x64xf32>
    %5 = vector.broadcast %1 : vector<1x64xf32> to vector<128x64xf32>
    %6 = arith.addf %4, %5 : vector<128x64xf32>
    %cst_6 = arith.constant 0.000000e+00 : f32
    %7 = vector.broadcast %cst_6 : f32 to vector<128x64xf32>
    %8 = arith.maximumf %6, %7 : vector<128x64xf32>
    %c1 = arith.constant 1 : index
    %c0_7 = arith.constant 0 : index
    %c0_8 = arith.constant 0 : index
    %9 = vector.load %arg1[%c1, %c0_7, %c0_8] : memref<4x128x27xbf16, #tpu.memory_space<vmem>>, vector<1x128x27xbf16>
    %10 = vector.shape_cast %9 : vector<1x128x27xbf16> to vector<128x27xbf16>
    %cst_9 = arith.constant dense<0.000000e+00> : vector<128x64xf32>
    %11 = tpu.matmul %10, %0, %cst_9 {dimension_numbers = #tpu.dot_dimension_numbers<[1], [0], [0], [1], [0, 0, 1, 1], [], []>} : vector<128x27xbf16>, vector<27x64xbf16>, vector<128x64xf32> -> vector<128x64xf32>
    %12 = vector.broadcast %1 : vector<1x64xf32> to vector<128x64xf32>
    %13 = arith.addf %11, %12 : vector<128x64xf32>
    %cst_10 = arith.constant 0.000000e+00 : f32
    %14 = vector.broadcast %cst_10 : f32 to vector<128x64xf32>
    %15 = arith.maximumf %13, %14 : vector<128x64xf32>
    %16 = arith.maximumf %8, %15 : vector<128x64xf32>
    %c2 = arith.constant 2 : index
    %c0_11 = arith.constant 0 : index
    %c0_12 = arith.constant 0 : index
    %17 = vector.load %arg1[%c2, %c0_11, %c0_12] : memref<4x128x27xbf16, #tpu.memory_space<vmem>>, vector<1x128x27xbf16>
    %18 = vector.shape_cast %17 : vector<1x128x27xbf16> to vector<128x27xbf16>
    %cst_13 = arith.constant dense<0.000000e+00> : vector<128x64xf32>
    %19 = tpu.matmul %18, %0, %cst_13 {dimension_numbers = #tpu.dot_dimension_numbers<[1], [0], [0], [1], [0, 0, 1, 1], [], []>} : vector<128x27xbf16>, vector<27x64xbf16>, vector<128x64xf32> -> vector<128x64xf32>
    %20 = vector.broadcast %1 : vector<1x64xf32> to vector<128x64xf32>
    %21 = arith.addf %19, %20 : vector<128x64xf32>
    %cst_14 = arith.constant 0.000000e+00 : f32
    %22 = vector.broadcast %cst_14 : f32 to vector<128x64xf32>
    %23 = arith.maximumf %21, %22 : vector<128x64xf32>
    %24 = arith.maximumf %16, %23 : vector<128x64xf32>
    %c3 = arith.constant 3 : index
    %c0_15 = arith.constant 0 : index
    %c0_16 = arith.constant 0 : index
    %25 = vector.load %arg1[%c3, %c0_15, %c0_16] : memref<4x128x27xbf16, #tpu.memory_space<vmem>>, vector<1x128x27xbf16>
    %26 = vector.shape_cast %25 : vector<1x128x27xbf16> to vector<128x27xbf16>
    %cst_17 = arith.constant dense<0.000000e+00> : vector<128x64xf32>
    %27 = tpu.matmul %26, %0, %cst_17 {dimension_numbers = #tpu.dot_dimension_numbers<[1], [0], [0], [1], [0, 0, 1, 1], [], []>} : vector<128x27xbf16>, vector<27x64xbf16>, vector<128x64xf32> -> vector<128x64xf32>
    %28 = vector.broadcast %1 : vector<1x64xf32> to vector<128x64xf32>
    %29 = arith.addf %27, %28 : vector<128x64xf32>
    %cst_18 = arith.constant 0.000000e+00 : f32
    %30 = vector.broadcast %cst_18 : f32 to vector<128x64xf32>
    %31 = arith.maximumf %29, %30 : vector<128x64xf32>
    %32 = arith.maximumf %24, %31 : vector<128x64xf32>
    %33 = arith.truncf %32 : vector<128x64xf32> to vector<128x64xbf16>
    %c0_19 = arith.constant 0 : index
    %c0_20 = arith.constant 0 : index
    %34 = vector.load %arg4[%c0_19, %c0_20] : memref<128x64xbf16, #tpu.memory_space<vmem>>, vector<128x64xbf16>
    tpu.vector_store %arg4[%c0_19, %c0_20], %33 {strides = array<i32>} : memref<128x64xbf16, #tpu.memory_space<vmem>>, vector<128x64xbf16>,
    return
  }
  func.func @transform_0(%arg0: i32) -> (i32, i32, i32) {
    %c0_i32 = arith.constant 0 : i32
    %c0_i32_0 = arith.constant 0 : i32
    %c0_i32_1 = arith.constant 0 : i32
    return %c0_i32, %arg0, %c0_i32_0 : i32, i32, i32
  }
  func.func @transform_1(%arg0: i32) -> (i32, i32) {
    %c0_i32 = arith.constant 0 : i32
    %c0_i32_0 = arith.constant 0 : i32
    %c0_i32_1 = arith.constant 0 : i32
    return %c0_i32, %c0_i32_0 : i32, i32
  }
  func.func @transform_2(%arg0: i32) -> (i32, i32) {
    %c0_i32 = arith.constant 0 : i32
    %c0_i32_0 = arith.constant 0 : i32
    %c0_i32_1 = arith.constant 0 : i32
    return %c0_i32, %c0_i32_0 : i32, i32
  }
  func.func @transform_3(%arg0: i32) -> (i32, i32) {
    %c0_i32 = arith.constant 0 : i32
    %c0_i32_0 = arith.constant 0 : i32
    return %arg0, %c0_i32 : i32, i32
  }
}

module attributes {stable_mosaic.version = 11 : i64} {
  func.func @_conv_pool_kernel(%arg0: i32, %arg1: memref<9x72x576xbf16, #tpu.memory_space<vmem>>, %arg2: memref<576x128xbf16, #tpu.memory_space<vmem>>, %arg3: memref<1x128xf32, #tpu.memory_space<vmem>>, %arg4: memref<72x128xbf16, #tpu.memory_space<vmem>>) attributes {dimension_semantics = [#tpu.dimension_semantics<parallel>], iteration_bounds = array<i64: 1>, scalar_prefetch = 0 : i64, scratch_operands = 0 : i64, tpu.core_type = #tpu.core_type<tc>, window_params = [{transform_indices = @transform_0, window_bounds = array<i64: 9, 72, 576>}, {pipeline_mode = #tpu.pipeline_mode<synchronous>, transform_indices = @transform_1, window_bounds = array<i64: 576, 128>}, {pipeline_mode = #tpu.pipeline_mode<synchronous>, transform_indices = @transform_2, window_bounds = array<i64: 1, 128>}, {transform_indices = @transform_3, window_bounds = array<i64: 72, 128>}]} {
    %c0 = arith.constant 0 : index
    %c0_0 = arith.constant 0 : index
    %0 = vector.load %arg2[%c0, %c0_0] : memref<576x128xbf16, #tpu.memory_space<vmem>>, vector<576x128xbf16>
    %c0_1 = arith.constant 0 : index
    %c0_2 = arith.constant 0 : index
    %1 = vector.load %arg3[%c0_1, %c0_2] : memref<1x128xf32, #tpu.memory_space<vmem>>, vector<1x128xf32>
    %c0_3 = arith.constant 0 : index
    %c0_4 = arith.constant 0 : index
    %c0_5 = arith.constant 0 : index
    %2 = vector.load %arg1[%c0_3, %c0_4, %c0_5] : memref<9x72x576xbf16, #tpu.memory_space<vmem>>, vector<1x72x576xbf16>
    %3 = vector.shape_cast %2 : vector<1x72x576xbf16> to vector<72x576xbf16>
    %cst = arith.constant dense<0.000000e+00> : vector<72x128xf32>
    %4 = tpu.matmul %3, %0, %cst {dimension_numbers = #tpu.dot_dimension_numbers<[1], [0], [0], [1], [0, 0, 1, 1], [], []>} : vector<72x576xbf16>, vector<576x128xbf16>, vector<72x128xf32> -> vector<72x128xf32>
    %5 = vector.broadcast %1 : vector<1x128xf32> to vector<72x128xf32>
    %6 = arith.addf %4, %5 : vector<72x128xf32>
    %cst_6 = arith.constant 0.000000e+00 : f32
    %7 = vector.broadcast %cst_6 : f32 to vector<72x128xf32>
    %8 = arith.maximumf %6, %7 : vector<72x128xf32>
    %c1 = arith.constant 1 : index
    %c0_7 = arith.constant 0 : index
    %c0_8 = arith.constant 0 : index
    %9 = vector.load %arg1[%c1, %c0_7, %c0_8] : memref<9x72x576xbf16, #tpu.memory_space<vmem>>, vector<1x72x576xbf16>
    %10 = vector.shape_cast %9 : vector<1x72x576xbf16> to vector<72x576xbf16>
    %cst_9 = arith.constant dense<0.000000e+00> : vector<72x128xf32>
    %11 = tpu.matmul %10, %0, %cst_9 {dimension_numbers = #tpu.dot_dimension_numbers<[1], [0], [0], [1], [0, 0, 1, 1], [], []>} : vector<72x576xbf16>, vector<576x128xbf16>, vector<72x128xf32> -> vector<72x128xf32>
    %12 = vector.broadcast %1 : vector<1x128xf32> to vector<72x128xf32>
    %13 = arith.addf %11, %12 : vector<72x128xf32>
    %cst_10 = arith.constant 0.000000e+00 : f32
    %14 = vector.broadcast %cst_10 : f32 to vector<72x128xf32>
    %15 = arith.maximumf %13, %14 : vector<72x128xf32>
    %16 = arith.maximumf %8, %15 : vector<72x128xf32>
    %c2 = arith.constant 2 : index
    %c0_11 = arith.constant 0 : index
    %c0_12 = arith.constant 0 : index
    %17 = vector.load %arg1[%c2, %c0_11, %c0_12] : memref<9x72x576xbf16, #tpu.memory_space<vmem>>, vector<1x72x576xbf16>
    %18 = vector.shape_cast %17 : vector<1x72x576xbf16> to vector<72x576xbf16>
    %cst_13 = arith.constant dense<0.000000e+00> : vector<72x128xf32>
    %19 = tpu.matmul %18, %0, %cst_13 {dimension_numbers = #tpu.dot_dimension_numbers<[1], [0], [0], [1], [0, 0, 1, 1], [], []>} : vector<72x576xbf16>, vector<576x128xbf16>, vector<72x128xf32> -> vector<72x128xf32>
    %20 = vector.broadcast %1 : vector<1x128xf32> to vector<72x128xf32>
    %21 = arith.addf %19, %20 : vector<72x128xf32>
    %cst_14 = arith.constant 0.000000e+00 : f32
    %22 = vector.broadcast %cst_14 : f32 to vector<72x128xf32>
    %23 = arith.maximumf %21, %22 : vector<72x128xf32>
    %24 = arith.maximumf %16, %23 : vector<72x128xf32>
    %c3 = arith.constant 3 : index
    %c0_15 = arith.constant 0 : index
    %c0_16 = arith.constant 0 : index
    %25 = vector.load %arg1[%c3, %c0_15, %c0_16] : memref<9x72x576xbf16, #tpu.memory_space<vmem>>, vector<1x72x576xbf16>
    %26 = vector.shape_cast %25 : vector<1x72x576xbf16> to vector<72x576xbf16>
    %cst_17 = arith.constant dense<0.000000e+00> : vector<72x128xf32>
    %27 = tpu.matmul %26, %0, %cst_17 {dimension_numbers = #tpu.dot_dimension_numbers<[1], [0], [0], [1], [0, 0, 1, 1], [], []>} : vector<72x576xbf16>, vector<576x128xbf16>, vector<72x128xf32> -> vector<72x128xf32>
    %28 = vector.broadcast %1 : vector<1x128xf32> to vector<72x128xf32>
    %29 = arith.addf %27, %28 : vector<72x128xf32>
    %cst_18 = arith.constant 0.000000e+00 : f32
    %30 = vector.broadcast %cst_18 : f32 to vector<72x128xf32>
    %31 = arith.maximumf %29, %30 : vector<72x128xf32>
    %32 = arith.maximumf %24, %31 : vector<72x128xf32>
    %c4 = arith.constant 4 : index
    %c0_19 = arith.constant 0 : index
    %c0_20 = arith.constant 0 : index
    %33 = vector.load %arg1[%c4, %c0_19, %c0_20] : memref<9x72x576xbf16, #tpu.memory_space<vmem>>, vector<1x72x576xbf16>
    %34 = vector.shape_cast %33 : vector<1x72x576xbf16> to vector<72x576xbf16>
    %cst_21 = arith.constant dense<0.000000e+00> : vector<72x128xf32>
    %35 = tpu.matmul %34, %0, %cst_21 {dimension_numbers = #tpu.dot_dimension_numbers<[1], [0], [0], [1], [0, 0, 1, 1], [], []>} : vector<72x576xbf16>, vector<576x128xbf16>, vector<72x128xf32> -> vector<72x128xf32>
    %36 = vector.broadcast %1 : vector<1x128xf32> to vector<72x128xf32>
    %37 = arith.addf %35, %36 : vector<72x128xf32>
    %cst_22 = arith.constant 0.000000e+00 : f32
    %38 = vector.broadcast %cst_22 : f32 to vector<72x128xf32>
    %39 = arith.maximumf %37, %38 : vector<72x128xf32>
    %40 = arith.maximumf %32, %39 : vector<72x128xf32>
    %c5 = arith.constant 5 : index
    %c0_23 = arith.constant 0 : index
    %c0_24 = arith.constant 0 : index
    %41 = vector.load %arg1[%c5, %c0_23, %c0_24] : memref<9x72x576xbf16, #tpu.memory_space<vmem>>, vector<1x72x576xbf16>
    %42 = vector.shape_cast %41 : vector<1x72x576xbf16> to vector<72x576xbf16>
    %cst_25 = arith.constant dense<0.000000e+00> : vector<72x128xf32>
    %43 = tpu.matmul %42, %0, %cst_25 {dimension_numbers = #tpu.dot_dimension_numbers<[1], [0], [0], [1], [0, 0, 1, 1], [], []>} : vector<72x576xbf16>, vector<576x128xbf16>, vector<72x128xf32> -> vector<72x128xf32>
    %44 = vector.broadcast %1 : vector<1x128xf32> to vector<72x128xf32>
    %45 = arith.addf %43, %44 : vector<72x128xf32>
    %cst_26 = arith.constant 0.000000e+00 : f32
    %46 = vector.broadcast %cst_26 : f32 to vector<72x128xf32>
    %47 = arith.maximumf %45, %46 : vector<72x128xf32>
    %48 = arith.maximumf %40, %47 : vector<72x128xf32>
    %c6 = arith.constant 6 : index
    %c0_27 = arith.constant 0 : index
    %c0_28 = arith.constant 0 : index
    %49 = vector.load %arg1[%c6, %c0_27, %c0_28] : memref<9x72x576xbf16, #tpu.memory_space<vmem>>, vector<1x72x576xbf16>
    %50 = vector.shape_cast %49 : vector<1x72x576xbf16> to vector<72x576xbf16>
    %cst_29 = arith.constant dense<0.000000e+00> : vector<72x128xf32>
    %51 = tpu.matmul %50, %0, %cst_29 {dimension_numbers = #tpu.dot_dimension_numbers<[1], [0], [0], [1], [0, 0, 1, 1], [], []>} : vector<72x576xbf16>, vector<576x128xbf16>, vector<72x128xf32> -> vector<72x128xf32>
    %52 = vector.broadcast %1 : vector<1x128xf32> to vector<72x128xf32>
    %53 = arith.addf %51, %52 : vector<72x128xf32>
    %cst_30 = arith.constant 0.000000e+00 : f32
    %54 = vector.broadcast %cst_30 : f32 to vector<72x128xf32>
    %55 = arith.maximumf %53, %54 : vector<72x128xf32>
    %56 = arith.maximumf %48, %55 : vector<72x128xf32>
    %c7 = arith.constant 7 : index
    %c0_31 = arith.constant 0 : index
    %c0_32 = arith.constant 0 : index
    %57 = vector.load %arg1[%c7, %c0_31, %c0_32] : memref<9x72x576xbf16, #tpu.memory_space<vmem>>, vector<1x72x576xbf16>
    %58 = vector.shape_cast %57 : vector<1x72x576xbf16> to vector<72x576xbf16>
    %cst_33 = arith.constant dense<0.000000e+00> : vector<72x128xf32>
    %59 = tpu.matmul %58, %0, %cst_33 {dimension_numbers = #tpu.dot_dimension_numbers<[1], [0], [0], [1], [0, 0, 1, 1], [], []>} : vector<72x576xbf16>, vector<576x128xbf16>, vector<72x128xf32> -> vector<72x128xf32>
    %60 = vector.broadcast %1 : vector<1x128xf32> to vector<72x128xf32>
    %61 = arith.addf %59, %60 : vector<72x128xf32>
    %cst_34 = arith.constant 0.000000e+00 : f32
    %62 = vector.broadcast %cst_34 : f32 to vector<72x128xf32>
    %63 = arith.maximumf %61, %62 : vector<72x128xf32>
    %64 = arith.maximumf %56, %63 : vector<72x128xf32>
    %c8 = arith.constant 8 : index
    %c0_35 = arith.constant 0 : index
    %c0_36 = arith.constant 0 : index
    %65 = vector.load %arg1[%c8, %c0_35, %c0_36] : memref<9x72x576xbf16, #tpu.memory_space<vmem>>, vector<1x72x576xbf16>
    %66 = vector.shape_cast %65 : vector<1x72x576xbf16> to vector<72x576xbf16>
    %cst_37 = arith.constant dense<0.000000e+00> : vector<72x128xf32>
    %67 = tpu.matmul %66, %0, %cst_37 {dimension_numbers = #tpu.dot_dimension_numbers<[1], [0], [0], [1], [0, 0, 1, 1], [], []>} : vector<72x576xbf16>, vector<576x128xbf16>, vector<72x128xf32> -> vector<72x128xf32>
    %68 = vector.broadcast %1 : vector<1x128xf32> to vector<72x128xf32>
    %69 = arith.addf %67, %68 : vector<72x128xf32>
    %cst_38 = arith.constant 0.000000e+00 : f32
    %70 = vector.broadcast %cst_38 : f32 to vector<72x128xf32>
    %71 = arith.maximumf %69, %70 : vector<72x128xf32>
    %72 = arith.maximumf %64, %71 : vector<72x128xf32>
    %73 = arith.truncf %72 : vector<72x128xf32> to vector<72x128xbf16>
    %c0_39 = arith.constant 0 : index
    %c0_40 = arith.constant 0 : index
    %74 = vector.load %arg4[%c0_39, %c0_40] : memref<72x128xbf16, #tpu.memory_space<vmem>>, vector<72x128xbf16>
    tpu.vector_store %arg4[%c0_39, %c0_40], %73 {strides = array<i32>} : memref<72x128xbf16, #tpu.memory_space<vmem>>, vector<72x128xbf16>,
    return
  }
  func.func @transform_0(%arg0: i32) -> (i32, i32, i32) {
    %c0_i32 = arith.constant 0 : i32
    %c0_i32_0 = arith.constant 0 : i32
    %c0_i32_1 = arith.constant 0 : i32
    return %c0_i32, %arg0, %c0_i32_0 : i32, i32, i32
  }
  func.func @transform_1(%arg0: i32) -> (i32, i32) {
    %c0_i32 = arith.constant 0 : i32
    %c0_i32_0 = arith.constant 0 : i32
    %c0_i32_1 = arith.constant 0 : i32
    return %c0_i32, %c0_i32_0 : i32, i32
  }
  func.func @transform_2(%arg0: i32) -> (i32, i32) {
    %c0_i32 = arith.constant 0 : i32
    %c0_i32_0 = arith.constant 0 : i32
    %c0_i32_1 = arith.constant 0 : i32
    return %c0_i32, %c0_i32_0 : i32, i32
  }
  func.func @transform_3(%arg0: i32) -> (i32, i32) {
    %c0_i32 = arith.constant 0 : i32
    %c0_i32_0 = arith.constant 0 : i32
    return %arg0, %c0_i32 : i32, i32
  }
}

module attributes {stable_mosaic.version = 11 : i64} {
  func.func @_conv3_conv4_kernel(%arg0: i32, %arg1: memref<32x1152xbf16, #tpu.memory_space<vmem>>, %arg2: memref<1152x256xbf16, #tpu.memory_space<vmem>>, %arg3: memref<1x256xf32, #tpu.memory_space<vmem>>, %arg4: memref<256x64xbf16, #tpu.memory_space<vmem>>, %arg5: memref<1x64xf32, #tpu.memory_space<vmem>>, %arg6: memref<32x64xbf16, #tpu.memory_space<vmem>>) attributes {dimension_semantics = [#tpu.dimension_semantics<parallel>], iteration_bounds = array<i64: 1>, scalar_prefetch = 0 : i64, scratch_operands = 0 : i64, tpu.core_type = #tpu.core_type<tc>, window_params = [{transform_indices = @transform_0, window_bounds = array<i64: 32, 1152>}, {pipeline_mode = #tpu.pipeline_mode<synchronous>, transform_indices = @transform_1, window_bounds = array<i64: 1152, 256>}, {pipeline_mode = #tpu.pipeline_mode<synchronous>, transform_indices = @transform_2, window_bounds = array<i64: 1, 256>}, {pipeline_mode = #tpu.pipeline_mode<synchronous>, transform_indices = @transform_3, window_bounds = array<i64: 256, 64>}, {pipeline_mode = #tpu.pipeline_mode<synchronous>, transform_indices = @transform_4, window_bounds = array<i64: 1, 64>}, {transform_indices = @transform_5, window_bounds = array<i64: 32, 64>}]} {
    %c0 = arith.constant 0 : index
    %c0_0 = arith.constant 0 : index
    %0 = vector.load %arg1[%c0, %c0_0] : memref<32x1152xbf16, #tpu.memory_space<vmem>>, vector<32x1152xbf16>
    %c0_1 = arith.constant 0 : index
    %c0_2 = arith.constant 0 : index
    %1 = vector.load %arg2[%c0_1, %c0_2] : memref<1152x256xbf16, #tpu.memory_space<vmem>>, vector<1152x256xbf16>
    %cst = arith.constant dense<0.000000e+00> : vector<32x256xf32>
    %2 = tpu.matmul %0, %1, %cst {dimension_numbers = #tpu.dot_dimension_numbers<[1], [0], [0], [1], [0, 0, 1, 1], [], []>} : vector<32x1152xbf16>, vector<1152x256xbf16>, vector<32x256xf32> -> vector<32x256xf32>
    %c0_3 = arith.constant 0 : index
    %c0_4 = arith.constant 0 : index
    %3 = vector.load %arg3[%c0_3, %c0_4] : memref<1x256xf32, #tpu.memory_space<vmem>>, vector<1x256xf32>
    %4 = vector.broadcast %3 : vector<1x256xf32> to vector<32x256xf32>
    %5 = arith.addf %2, %4 : vector<32x256xf32>
    %cst_5 = arith.constant 0.000000e+00 : f32
    %6 = vector.broadcast %cst_5 : f32 to vector<32x256xf32>
    %7 = arith.maximumf %5, %6 : vector<32x256xf32>
    %8 = arith.truncf %7 : vector<32x256xf32> to vector<32x256xbf16>
    %c0_6 = arith.constant 0 : index
    %c0_7 = arith.constant 0 : index
    %9 = vector.load %arg4[%c0_6, %c0_7] : memref<256x64xbf16, #tpu.memory_space<vmem>>, vector<256x64xbf16>
    %cst_8 = arith.constant dense<0.000000e+00> : vector<32x64xf32>
    %10 = tpu.matmul %8, %9, %cst_8 {dimension_numbers = #tpu.dot_dimension_numbers<[1], [0], [0], [1], [0, 0, 1, 1], [], []>} : vector<32x256xbf16>, vector<256x64xbf16>, vector<32x64xf32> -> vector<32x64xf32>
    %c0_9 = arith.constant 0 : index
    %c0_10 = arith.constant 0 : index
    %11 = vector.load %arg5[%c0_9, %c0_10] : memref<1x64xf32, #tpu.memory_space<vmem>>, vector<1x64xf32>
    %12 = vector.broadcast %11 : vector<1x64xf32> to vector<32x64xf32>
    %13 = arith.addf %10, %12 : vector<32x64xf32>
    %cst_11 = arith.constant 0.000000e+00 : f32
    %14 = vector.broadcast %cst_11 : f32 to vector<32x64xf32>
    %15 = arith.maximumf %13, %14 : vector<32x64xf32>
    %16 = arith.truncf %15 : vector<32x64xf32> to vector<32x64xbf16>
    %c0_12 = arith.constant 0 : index
    %c0_13 = arith.constant 0 : index
    %17 = vector.load %arg6[%c0_12, %c0_13] : memref<32x64xbf16, #tpu.memory_space<vmem>>, vector<32x64xbf16>
    tpu.vector_store %arg6[%c0_12, %c0_13], %16 {strides = array<i32>} : memref<32x64xbf16, #tpu.memory_space<vmem>>, vector<32x64xbf16>,
    return
  }
  func.func @transform_0(%arg0: i32) -> (i32, i32) {
    %c0_i32 = arith.constant 0 : i32
    %c0_i32_0 = arith.constant 0 : i32
    return %arg0, %c0_i32 : i32, i32
  }
  func.func @transform_1(%arg0: i32) -> (i32, i32) {
    %c0_i32 = arith.constant 0 : i32
    %c0_i32_0 = arith.constant 0 : i32
    %c0_i32_1 = arith.constant 0 : i32
    return %c0_i32, %c0_i32_0 : i32, i32
  }
  func.func @transform_2(%arg0: i32) -> (i32, i32) {
    %c0_i32 = arith.constant 0 : i32
    %c0_i32_0 = arith.constant 0 : i32
    %c0_i32_1 = arith.constant 0 : i32
    return %c0_i32, %c0_i32_0 : i32, i32
  }
  func.func @transform_3(%arg0: i32) -> (i32, i32) {
    %c0_i32 = arith.constant 0 : i32
    %c0_i32_0 = arith.constant 0 : i32
    %c0_i32_1 = arith.constant 0 : i32
    return %c0_i32, %c0_i32_0 : i32, i32
  }
  func.func @transform_4(%arg0: i32) -> (i32, i32) {
    %c0_i32 = arith.constant 0 : i32
    %c0_i32_0 = arith.constant 0 : i32
    %c0_i32_1 = arith.constant 0 : i32
    return %c0_i32, %c0_i32_0 : i32, i32
  }
  func.func @transform_5(%arg0: i32) -> (i32, i32) {
    %c0_i32 = arith.constant 0 : i32
    %c0_i32_0 = arith.constant 0 : i32
    return %arg0, %c0_i32 : i32, i32
  }
}

module attributes {stable_mosaic.version = 11 : i64} {
  func.func @_fc_head_kernel(%arg0: i32, %arg1: memref<2x1024xbf16, #tpu.memory_space<vmem>>, %arg2: memref<1024x384xbf16, #tpu.memory_space<vmem>>, %arg3: memref<1x384xf32, #tpu.memory_space<vmem>>, %arg4: memref<384x192xbf16, #tpu.memory_space<vmem>>, %arg5: memref<1x192xf32, #tpu.memory_space<vmem>>, %arg6: memref<192x10xbf16, #tpu.memory_space<vmem>>, %arg7: memref<1x10xf32, #tpu.memory_space<vmem>>, %arg8: memref<2x10xf32, #tpu.memory_space<vmem>>) attributes {dimension_semantics = [#tpu.dimension_semantics<parallel>], iteration_bounds = array<i64: 1>, scalar_prefetch = 0 : i64, scratch_operands = 0 : i64, tpu.core_type = #tpu.core_type<tc>, window_params = [{transform_indices = @transform_0, window_bounds = array<i64: 2, 1024>}, {pipeline_mode = #tpu.pipeline_mode<synchronous>, transform_indices = @transform_1, window_bounds = array<i64: 1024, 384>}, {pipeline_mode = #tpu.pipeline_mode<synchronous>, transform_indices = @transform_2, window_bounds = array<i64: 1, 384>}, {pipeline_mode = #tpu.pipeline_mode<synchronous>, transform_indices = @transform_3, window_bounds = array<i64: 384, 192>}, {pipeline_mode = #tpu.pipeline_mode<synchronous>, transform_indices = @transform_4, window_bounds = array<i64: 1, 192>}, {pipeline_mode = #tpu.pipeline_mode<synchronous>, transform_indices = @transform_5, window_bounds = array<i64: 192, 10>}, {pipeline_mode = #tpu.pipeline_mode<synchronous>, transform_indices = @transform_6, window_bounds = array<i64: 1, 10>}, {transform_indices = @transform_7, window_bounds = array<i64: 2, 10>}]} {
    %c0 = arith.constant 0 : index
    %c0_0 = arith.constant 0 : index
    %0 = vector.load %arg1[%c0, %c0_0] : memref<2x1024xbf16, #tpu.memory_space<vmem>>, vector<2x1024xbf16>
    %c0_1 = arith.constant 0 : index
    %c0_2 = arith.constant 0 : index
    %1 = vector.load %arg2[%c0_1, %c0_2] : memref<1024x384xbf16, #tpu.memory_space<vmem>>, vector<1024x384xbf16>
    %cst = arith.constant dense<0.000000e+00> : vector<2x384xf32>
    %2 = tpu.matmul %0, %1, %cst {dimension_numbers = #tpu.dot_dimension_numbers<[1], [0], [0], [1], [0, 0, 1, 1], [], []>} : vector<2x1024xbf16>, vector<1024x384xbf16>, vector<2x384xf32> -> vector<2x384xf32>
    %c0_3 = arith.constant 0 : index
    %c0_4 = arith.constant 0 : index
    %3 = vector.load %arg3[%c0_3, %c0_4] : memref<1x384xf32, #tpu.memory_space<vmem>>, vector<1x384xf32>
    %4 = vector.broadcast %3 : vector<1x384xf32> to vector<2x384xf32>
    %5 = arith.addf %2, %4 : vector<2x384xf32>
    %cst_5 = arith.constant 0.000000e+00 : f32
    %6 = vector.broadcast %cst_5 : f32 to vector<2x384xf32>
    %7 = arith.maximumf %5, %6 : vector<2x384xf32>
    %8 = arith.truncf %7 : vector<2x384xf32> to vector<2x384xbf16>
    %c0_6 = arith.constant 0 : index
    %c0_7 = arith.constant 0 : index
    %9 = vector.load %arg4[%c0_6, %c0_7] : memref<384x192xbf16, #tpu.memory_space<vmem>>, vector<384x192xbf16>
    %cst_8 = arith.constant dense<0.000000e+00> : vector<2x192xf32>
    %10 = tpu.matmul %8, %9, %cst_8 {dimension_numbers = #tpu.dot_dimension_numbers<[1], [0], [0], [1], [0, 0, 1, 1], [], []>} : vector<2x384xbf16>, vector<384x192xbf16>, vector<2x192xf32> -> vector<2x192xf32>
    %c0_9 = arith.constant 0 : index
    %c0_10 = arith.constant 0 : index
    %11 = vector.load %arg5[%c0_9, %c0_10] : memref<1x192xf32, #tpu.memory_space<vmem>>, vector<1x192xf32>
    %12 = vector.broadcast %11 : vector<1x192xf32> to vector<2x192xf32>
    %13 = arith.addf %10, %12 : vector<2x192xf32>
    %cst_11 = arith.constant 0.000000e+00 : f32
    %14 = vector.broadcast %cst_11 : f32 to vector<2x192xf32>
    %15 = arith.maximumf %13, %14 : vector<2x192xf32>
    %16 = arith.truncf %15 : vector<2x192xf32> to vector<2x192xbf16>
    %c0_12 = arith.constant 0 : index
    %c0_13 = arith.constant 0 : index
    %17 = vector.load %arg6[%c0_12, %c0_13] : memref<192x10xbf16, #tpu.memory_space<vmem>>, vector<192x10xbf16>
    %cst_14 = arith.constant dense<0.000000e+00> : vector<2x10xf32>
    %18 = tpu.matmul %16, %17, %cst_14 {dimension_numbers = #tpu.dot_dimension_numbers<[1], [0], [0], [1], [0, 0, 1, 1], [], []>} : vector<2x192xbf16>, vector<192x10xbf16>, vector<2x10xf32> -> vector<2x10xf32>
    %c0_15 = arith.constant 0 : index
    %c0_16 = arith.constant 0 : index
    %19 = vector.load %arg7[%c0_15, %c0_16] : memref<1x10xf32, #tpu.memory_space<vmem>>, vector<1x10xf32>
    %20 = vector.broadcast %19 : vector<1x10xf32> to vector<2x10xf32>
    %21 = arith.addf %18, %20 : vector<2x10xf32>
    %cst_17 = arith.constant dense<0xFF800000> : vector<2xf32>
    %22 = vector.multi_reduction <maximumf>, %21, %cst_17 [1] : vector<2x10xf32> to vector<2xf32>
    %23 = vector.shape_cast %22 : vector<2xf32> to vector<2x1xf32>
    %24 = vector.broadcast %23 : vector<2x1xf32> to vector<2x10xf32>
    %25 = arith.subf %21, %24 : vector<2x10xf32>
    %26 = math.exp %25 : vector<2x10xf32>
    %cst_18 = arith.constant dense<0.000000e+00> : vector<2xf32>
    %27 = vector.multi_reduction <add>, %26, %cst_18 [1] : vector<2x10xf32> to vector<2xf32>
    %28 = vector.shape_cast %27 : vector<2xf32> to vector<2x1xf32>
    %29 = vector.broadcast %28 : vector<2x1xf32> to vector<2x10xf32>
    %30 = arith.divf %26, %29 : vector<2x10xf32>
    %c0_19 = arith.constant 0 : index
    %c0_20 = arith.constant 0 : index
    %31 = vector.load %arg8[%c0_19, %c0_20] : memref<2x10xf32, #tpu.memory_space<vmem>>, vector<2x10xf32>
    tpu.vector_store %arg8[%c0_19, %c0_20], %30 {strides = array<i32>} : memref<2x10xf32, #tpu.memory_space<vmem>>, vector<2x10xf32>,
    return
  }
  func.func @transform_0(%arg0: i32) -> (i32, i32) {
    %c0_i32 = arith.constant 0 : i32
    %c0_i32_0 = arith.constant 0 : i32
    return %arg0, %c0_i32 : i32, i32
  }
  func.func @transform_1(%arg0: i32) -> (i32, i32) {
    %c0_i32 = arith.constant 0 : i32
    %c0_i32_0 = arith.constant 0 : i32
    %c0_i32_1 = arith.constant 0 : i32
    return %c0_i32, %c0_i32_0 : i32, i32
  }
  func.func @transform_2(%arg0: i32) -> (i32, i32) {
    %c0_i32 = arith.constant 0 : i32
    %c0_i32_0 = arith.constant 0 : i32
    %c0_i32_1 = arith.constant 0 : i32
    return %c0_i32, %c0_i32_0 : i32, i32
  }
  func.func @transform_3(%arg0: i32) -> (i32, i32) {
    %c0_i32 = arith.constant 0 : i32
    %c0_i32_0 = arith.constant 0 : i32
    %c0_i32_1 = arith.constant 0 : i32
    return %c0_i32, %c0_i32_0 : i32, i32
  }
  func.func @transform_4(%arg0: i32) -> (i32, i32) {
    %c0_i32 = arith.constant 0 : i32
    %c0_i32_0 = arith.constant 0 : i32
    %c0_i32_1 = arith.constant 0 : i32
    return %c0_i32, %c0_i32_0 : i32, i32
  }
  func.func @transform_5(%arg0: i32) -> (i32, i32) {
    %c0_i32 = arith.constant 0 : i32
    %c0_i32_0 = arith.constant 0 : i32
    %c0_i32_1 = arith.constant 0 : i32
    return %c0_i32, %c0_i32_0 : i32, i32
  }
  func.func @transform_6(%arg0: i32) -> (i32, i32) {
    %c0_i32 = arith.constant 0 : i32
    %c0_i32_0 = arith.constant 0 : i32
    %c0_i32_1 = arith.constant 0 : i32
    return %c0_i32, %c0_i32_0 : i32, i32
  }
  func.func @transform_7(%arg0: i32) -> (i32, i32) {
    %c0_i32 = arith.constant 0 : i32
    %c0_i32_0 = arith.constant 0 : i32
    return %arg0, %c0_i32 : i32, i32
  }
}

</mosaic_0001>

<llo_original>
// kernel: forward.4
$region0: #{forward.4}
  #allocation0 [shape = 'u32[]', space=smem, size = 0x4, offset = 0x4, fixed_abs, tag = 'smem constant byte address 0x4 - core index']
  #allocation1 [shape = 'u32[144,128]{1,0:T(1,128)}', space=vmem, size = 0x12000, scoped, tag = 'internal scratch']
  %s0 = inlined_call_operand.vmem [shape: bf16[4,512,27], index: 0, kind: input, shape index: {}]
  %s1 = inlined_call_operand.vmem [shape: bf16[27,64], index: 1, kind: input, shape index: {}]
  %s2 = inlined_call_operand.vmem [shape: f32[1,64], index: 2, kind: input, shape index: {}]
  %s3 = inlined_call_operand.vmem [shape: bf16[512,64], index: 3, kind: output, shape index: {}]
  %s4 = sld [smem:[#allocation0]]
  $region86: #{forward.4} parent=0
    _
  %s6 = ssub.s32 1, %s4
  %s7 = scalar_select 0, %s6, %s4
  $region1: #{forward.4} parent=0
    #allocation2 [shape = 'u8[262144]{0}', space=vmem, size = 0x40000, scoped, tag = 'input window, operand 0']
    loop: start=0, step=1, limit=6
    $region2: #{forward.4} parent=1 // loop_pre_header
      _
    $region3: #{forward.4} parent=1 // loop_header
      %s9 = sphi 0, %s13
      %p10 = scmp.ge.s32.totalorder %s9, 6
      %s19 = sphi 0, %s21
      %s22 = sphi 0, %s19
      %s23 = sphi 0, %s22
      %s39 = sphi 0, %s23
      %s43 = sphi 0, %s43
      %s45 = sphi 0, %s43
      %s46 = sphi 0, %s45
      %s60 = sphi 0, %s46
      %s64 = sphi 0, %s64
      %s66 = sphi 0, %s64
      %s67 = sphi 0, %s66
      %s81 = sphi 0, %s67
      %s87 = sphi 0, %s89
      %s90 = sphi 0, %s87
      %s91 = sphi 0, %s90
      %s107 = sphi 0, %s91
    $region4: #{forward.4} parent=1 // loop_header_branch
      %12 = sbr.rel (%p10) target = $region8
    $region5: #{forward.4} parent=1 // loop_body
      %s14 = ssub.s32 %s9, 1
      %s15 = ssub.s32 %s9, 2
      %s16 = sadd.s32 %s9, 1
      %s17 = ssub.s32 %s9, %s16
      %p18 = scmp.eq.s32.totalorder %s17, 0
      %s20 = sadd.s32 %s19, 1
      %s21 = scalar_select %p18, %s19, %s20
      %p24 = pneg %p18
      %p25 = scmp.eq.s32.totalorder %s9, 3
      %p26 = por %p24, %p25
      %p27 = scmp.ne.s32.totalorder %s19, %s22
      %p28 = scmp.eq.s32.totalorder %s9, 0
      %p29 = por %p27, %p28
      %p30 = scmp.ne.s32.totalorder %s19, %s22
      %p31 = scmp.eq.s32.totalorder %s14, 3
      %p32 = por %p30, %p31
      %p33 = scmp.ne.s32.totalorder %s22, %s23
      %p34 = scmp.eq.s32.totalorder %s14, 0
      %p35 = por %p33, %p34
      %p36 = scmp.ne.s32.totalorder %s22, %s23
      %p37 = scmp.eq.s32.totalorder %s15, 3
      %p38 = por %p36, %p37
      %p40 = scmp.ne.s32.totalorder %s23, %s39
      %p41 = scmp.eq.s32.totalorder %s15, 0
      %p42 = por %p40, %p41
      %s44 = sadd.s32 %s43, 1
      %p47 = scmp.eq.s32.totalorder %s9, 3
      %p48 = scmp.ne.s32.totalorder %s43, %s45
      %p49 = scmp.eq.s32.totalorder %s9, 0
      %p50 = por %p48, %p49
      %p51 = scmp.ne.s32.totalorder %s43, %s45
      %p52 = scmp.eq.s32.totalorder %s14, 3
      %p53 = por %p51, %p52
      %p54 = scmp.ne.s32.totalorder %s45, %s46
      %p55 = scmp.eq.s32.totalorder %s14, 0
      %p56 = por %p54, %p55
      %p57 = scmp.ne.s32.totalorder %s45, %s46
      %p58 = scmp.eq.s32.totalorder %s15, 3
      %p59 = por %p57, %p58
      %p61 = scmp.ne.s32.totalorder %s46, %s60
      %p62 = scmp.eq.s32.totalorder %s15, 0
      %p63 = por %p61, %p62
      %s65 = sadd.s32 %s64, 1
      %p68 = scmp.eq.s32.totalorder %s9, 3
      %p69 = scmp.ne.s32.totalorder %s64, %s66
      %p70 = scmp.eq.s32.totalorder %s9, 0
      %p71 = por %p69, %p70
      %p72 = scmp.ne.s32.totalorder %s64, %s66
      %p73 = scmp.eq.s32.totalorder %s14, 3
      %p74 = por %p72, %p73
      %p75 = scmp.ne.s32.totalorder %s66, %s67
      %p76 = scmp.eq.s32.totalorder %s14, 0
      %p77 = por %p75, %p76
      %p78 = scmp.ne.s32.totalorder %s66, %s67
      %p79 = scmp.eq.s32.totalorder %s15, 3
      %p80 = por %p78, %p79
      %p82 = scmp.ne.s32.totalorder %s67, %s81
      %p83 = scmp.eq.s32.totalorder %s15, 0
      %p84 = por %p82, %p83
      %s85 = ssub.s32 %s9, %s16
      %p86 = scmp.eq.s32.totalorder %s85, 0
      %s88 = sadd.s32 %s87, 1
      %s89 = scalar_select %p86, %s87, %s88
      %p92 = pneg %p86
      %p93 = scmp.eq.s32.totalorder %s9, 3
      %p94 = por %p92, %p93
      %p95 = scmp.ne.s32.totalorder %s87, %s90
      %p96 = scmp.eq.s32.totalorder %s9, 0
      %p97 = por %p95, %p96
      %p98 = scmp.ne.s32.totalorder %s87, %s90
      %p99 = scmp.eq.s32.totalorder %s14, 3
      %p100 = por %p98, %p99
      %p101 = scmp.ne.s32.totalorder %s90, %s91
      %p102 = scmp.eq.s32.totalorder %s14, 0
      %p103 = por %p101, %p102
      %p104 = scmp.ne.s32.totalorder %s90, %s91
      %p105 = scmp.eq.s32.totalorder %s15, 3
      %p106 = por %p104, %p105
      %p108 = scmp.ne.s32.totalorder %s91, %s107
      %p109 = scmp.eq.s32.totalorder %s15, 0
      %p110 = por %p108, %p109
      %p111 = scmp.le.s32.totalorder 1, %s9
      %p112 = scmp.lt.s32.totalorder %s9, 5
      %p113 = pnand %p111, %p112
      %p114 = pneg %p113
      // Predicated region
      $region9: #{forward.4} parent=5 // pred_check
        _
      $region10: #{forward.4} parent=5 // pred_check_branch
        %116 = sbr.rel (%p113) target = $region12
      $region11: #{forward.4} parent=5 // pred_region
        %s117 = ssub.s32 %s9, 1
        // Predicated region
        $region13: #{forward.4} parent=11 // pred_check
          %p118 = pneg %p56
        $region14: #{forward.4} parent=11 // pred_check_branch
          %120 = sbr.rel (%p118) target = $region16
        $region15: #{forward.4} parent=11 // pred_region
          _
        $region16: #{forward.4} parent=11 // pred_fallthru
          _
        // Predicated region
        $region17: #{forward.4} parent=11 // pred_check
          %p121 = pneg %p77
        $region18: #{forward.4} parent=11 // pred_check_branch
          %123 = sbr.rel (%p121) target = $region20
        $region19: #{forward.4} parent=11 // pred_region
          _
        $region20: #{forward.4} parent=11 // pred_fallthru
          _
      $region12: #{forward.4} parent=5 // pred_fallthru
        _
      %p124 = scmp.lt.s32.totalorder %s9, 4
      // Predicated region
      $region21: #{forward.4} parent=5 // pred_check
        %p125 = pneg %p124
      $region22: #{forward.4} parent=5 // pred_check_branch
        %127 = sbr.rel (%p125) target = $region24
      $region23: #{forward.4} parent=5 // pred_region
        // Predicated region
        $region25: #{forward.4} parent=23 // pred_check
          %p128 = pneg %p29
        $region26: #{forward.4} parent=23 // pred_check_branch
          %130 = sbr.rel (%p128) target = $region28
        $region27: #{forward.4} parent=23 // pred_region
          %s131 = sand.u32 %s19, 1
          %s132 = sand.u32 %s19, 1
          %s133 = smul.addr %s132, 256
          %s134 = scalar_lea.vmem [#allocation2], %s133
          %s135 = smul.u32 16, %s9
          %s136 = smul.addr %s135, 4
          %s137 = scalar_lea.vmem %s0, %s136
          // Predicated region
          $region29: #{forward.4} parent=27 // pred_check
            _
          $region30: #{forward.4} parent=27 // pred_check_branch
            %139 = sbr.rel (0) target = $region32
          $region31: #{forward.4} parent=27 // pred_region
            // Predicated region
            $region33: #{forward.4} parent=31 // pred_check
              _
            $region34: #{forward.4} parent=31 // pred_check_branch
              %141 = sbr.rel target = $region36
            $region35: #{forward.4} parent=31 // pred_region
              // Predicated region
              $region48: #{forward.4} parent=35 // pred_check
                _
              $region49: #{forward.4} parent=35 // pred_check_branch
                %283 = sbr.rel (0) target = $region51
              $region50: #{forward.4} parent=35 // pred_region
                loop: start=0, step=1, limit=1
                $region52: #{forward.4} parent=50 // loop_pre_header
                  _
                $region53: #{forward.4} parent=50 // loop_header
                  %s285 = sphi 0, %s289
                  %p286 = scmp.ge.s32.totalorder %s285, 1
                  %s290 = sphi %s137, %s137
                  %s291 = sphi %s134, %s134
                $region54: #{forward.4} parent=50 // loop_header_branch
                  %288 = sbr.rel (%p286) target = $region58
                $region55: #{forward.4} parent=50 // loop_body
                  _
                $region56: #{forward.4} parent=50 // loop_footer
                  %s289 = sadd.s32 1, %s285
                $region57: #{forward.4} parent=50 // loop_footer_branch
                  %284 = sbr.rel target = $region53
                $region58: #{forward.4} parent=50 // loop_exit
                  _
                %s293 = ssub.s32 16, 1
                loop: start=0, step=1, limit=1
                $region59: #{forward.4} parent=50 // loop_pre_header
                  _
                $region60: #{forward.4} parent=50 // loop_header
                  %s295 = sphi 0, %s299
                  %p296 = scmp.ge.s32.totalorder %s295, 1
                  %s300 = sphi %s137, %s137
                  %s301 = sphi %s134, %s134
                $region61: #{forward.4} parent=50 // loop_header_branch
                  %298 = sbr.rel (%p296) target = $region65
                $region62: #{forward.4} parent=50 // loop_body
                  %v302 = vld [vmem:[%s300] sm:%s293]
                  %303 = vst [vmem:[%s301] sm:%s293] %v302
                  %v304 = vld [vmem:[%s300 + $0x4] sm:%s293]
                  %305 = vst [vmem:[%s301 + $0x4] sm:%s293] %v304
                  %v306 = vld [vmem:[%s300 + $0x8] sm:%s293]
                  %307 = vst [vmem:[%s301 + $0x8] sm:%s293] %v306
                  %v308 = vld [vmem:[%s300 + $0xc] sm:%s293]
                  %309 = vst [vmem:[%s301 + $0xc] sm:%s293] %v308
                  %v310 = vld [vmem:[%s300 + $0x10] sm:%s293]
                  %311 = vst [vmem:[%s301 + $0x10] sm:%s293] %v310
                  %v312 = vld [vmem:[%s300 + $0x14] sm:%s293]
                  %313 = vst [vmem:[%s301 + $0x14] sm:%s293] %v312
                  %v314 = vld [vmem:[%s300 + $0x18] sm:%s293]
                  %315 = vst [vmem:[%s301 + $0x18] sm:%s293] %v314
                  %v316 = vld [vmem:[%s300 + $0x1c] sm:%s293]
                  %317 = vst [vmem:[%s301 + $0x1c] sm:%s293] %v316
                  %v318 = vld [vmem:[%s300 + $0x20] sm:%s293]
                  %319 = vst [vmem:[%s301 + $0x20] sm:%s293] %v318
                  %v320 = vld [vmem:[%s300 + $0x24] sm:%s293]
                  %321 = vst [vmem:[%s301 + $0x24] sm:%s293] %v320
                  %v322 = vld [vmem:[%s300 + $0x28] sm:%s293]
                  %323 = vst [vmem:[%s301 + $0x28] sm:%s293] %v322
                  %v324 = vld [vmem:[%s300 + $0x2c] sm:%s293]
                  %325 = vst [vmem:[%s301 + $0x2c] sm:%s293] %v324
                  %v326 = vld [vmem:[%s300 + $0x30] sm:%s293]
                  %327 = vst [vmem:[%s301 + $0x30] sm:%s293] %v326
                  %v328 = vld [vmem:[%s300 + $0x34] sm:%s293]
                  %329 = vst [vmem:[%s301 + $0x34] sm:%s293] %v328
                  %v330 = vld [vmem:[%s300 + $0x38] sm:%s293]
                  %331 = vst [vmem:[%s301 + $0x38] sm:%s293] %v330
                  %v332 = vld [vmem:[%s300 + $0x3c] sm:%s293]
                  %333 = vst [vmem:[%s301 + $0x3c] sm:%s293] %v332
                  %v334 = vld [vmem:[%s300 + $0x100] sm:%s293]
                  %335 = vst [vmem:[%s301 + $0x40] sm:%s293] %v334
                  %v336 = vld [vmem:[%s300 + $0x104] sm:%s293]
                  %337 = vst [vmem:[%s301 + $0x44] sm:%s293] %v336
                  %v338 = vld [vmem:[%s300 + $0x108] sm:%s293]
                  %339 = vst [vmem:[%s301 + $0x48] sm:%s293] %v338
                  %v340 = vld [vmem:[%s300 + $0x10c] sm:%s293]
                  %341 = vst [vmem:[%s301 + $0x4c] sm:%s293] %v340
                  %v342 = vld [vmem:[%s300 + $0x110] sm:%s293]
                  %343 = vst [vmem:[%s301 + $0x50] sm:%s293] %v342
                  %v344 = vld [vmem:[%s300 + $0x114] sm:%s293]
                  %345 = vst [vmem:[%s301 + $0x54] sm:%s293] %v344
                  %v346 = vld [vmem:[%s300 + $0x118] sm:%s293]
                  %347 = vst [vmem:[%s301 + $0x58] sm:%s293] %v346
                  %v348 = vld [vmem:[%s300 + $0x11c] sm:%s293]
                  %349 = vst [vmem:[%s301 + $0x5c] sm:%s293] %v348
                  %v350 = vld [vmem:[%s300 + $0x120] sm:%s293]
                  %351 = vst [vmem:[%s301 + $0x60] sm:%s293] %v350
                  %v352 = vld [vmem:[%s300 + $0x124] sm:%s293]
                  %353 = vst [vmem:[%s301 + $0x64] sm:%s293] %v352
                  %v354 = vld [vmem:[%s300 + $0x128] sm:%s293]
                  %355 = vst [vmem:[%s301 + $0x68] sm:%s293] %v354
                  %v356 = vld [vmem:[%s300 + $0x12c] sm:%s293]
                  %357 = vst [vmem:[%s301 + $0x6c] sm:%s293] %v356
                  %v358 = vld [vmem:[%s300 + $0x130] sm:%s293]
                  %359 = vst [vmem:[%s301 + $0x70] sm:%s293] %v358
                  %v360 = vld [vmem:[%s300 + $0x134] sm:%s293]
                  %361 = vst [vmem:[%s301 + $0x74] sm:%s293] %v360
                  %v362 = vld [vmem:[%s300 + $0x138] sm:%s293]
                  %363 = vst [vmem:[%s301 + $0x78] sm:%s293] %v362
                  %v364 = vld [vmem:[%s300 + $0x13c] sm:%s293]
                  %365 = vst [vmem:[%s301 + $0x7c] sm:%s293] %v364
                  %v366 = vld [vmem:[%s300 + $0x200] sm:%s293]
                  %367 = vst [vmem:[%s301 + $0x80] sm:%s293] %v366
                  %v368 = vld [vmem:[%s300 + $0x204] sm:%s293]
                  %369 = vst [vmem:[%s301 + $0x84] sm:%s293] %v368
                  %v370 = vld [vmem:[%s300 + $0x208] sm:%s293]
                  %371 = vst [vmem:[%s301 + $0x88] sm:%s293] %v370
                  %v372 = vld [vmem:[%s300 + $0x20c] sm:%s293]
                  %373 = vst [vmem:[%s301 + $0x8c] sm:%s293] %v372
                  %v374 = vld [vmem:[%s300 + $0x210] sm:%s293]
                  %375 = vst [vmem:[%s301 + $0x90] sm:%s293] %v374
                  %v376 = vld [vmem:[%s300 + $0x214] sm:%s293]
                  %377 = vst [vmem:[%s301 + $0x94] sm:%s293] %v376
                  %v378 = vld [vmem:[%s300 + $0x218] sm:%s293]
                  %379 = vst [vmem:[%s301 + $0x98] sm:%s293] %v378
                  %v380 = vld [vmem:[%s300 + $0x21c] sm:%s293]
                  %381 = vst [vmem:[%s301 + $0x9c] sm:%s293] %v380
                  %v382 = vld [vmem:[%s300 + $0x220] sm:%s293]
                  %383 = vst [vmem:[%s301 + $0xa0] sm:%s293] %v382
                  %v384 = vld [vmem:[%s300 + $0x224] sm:%s293]
                  %385 = vst [vmem:[%s301 + $0xa4] sm:%s293] %v384
                  %v386 = vld [vmem:[%s300 + $0x228] sm:%s293]
                  %387 = vst [vmem:[%s301 + $0xa8] sm:%s293] %v386
                  %v388 = vld [vmem:[%s300 + $0x22c] sm:%s293]
                  %389 = vst [vmem:[%s301 + $0xac] sm:%s293] %v388
                  %v390 = vld [vmem:[%s300 + $0x230] sm:%s293]
                  %391 = vst [vmem:[%s301 + $0xb0] sm:%s293] %v390
                  %v392 = vld [vmem:[%s300 + $0x234] sm:%s293]
                  %393 = vst [vmem:[%s301 + $0xb4] sm:%s293] %v392
                  %v394 = vld [vmem:[%s300 + $0x238] sm:%s293]
                  %395 = vst [vmem:[%s301 + $0xb8] sm:%s293] %v394
                  %v396 = vld [vmem:[%s300 + $0x23c] sm:%s293]
                  %397 = vst [vmem:[%s301 + $0xbc] sm:%s293] %v396
                  %v398 = vld [vmem:[%s300 + $0x300] sm:%s293]
                  %399 = vst [vmem:[%s301 + $0xc0] sm:%s293] %v398
                  %v400 = vld [vmem:[%s300 + $0x304] sm:%s293]
                  %401 = vst [vmem:[%s301 + $0xc4] sm:%s293] %v400
                  %v402 = vld [vmem:[%s300 + $0x308] sm:%s293]
                  %403 = vst [vmem:[%s301 + $0xc8] sm:%s293] %v402
                  %v404 = vld [vmem:[%s300 + $0x30c] sm:%s293]
                  %405 = vst [vmem:[%s301 + $0xcc] sm:%s293] %v404
                  %v406 = vld [vmem:[%s300 + $0x310] sm:%s293]
                  %407 = vst [vmem:[%s301 + $0xd0] sm:%s293] %v406
                  %v408 = vld [vmem:[%s300 + $0x314] sm:%s293]
                  %409 = vst [vmem:[%s301 + $0xd4] sm:%s293] %v408
                  %v410 = vld [vmem:[%s300 + $0x318] sm:%s293]
                  %411 = vst [vmem:[%s301 + $0xd8] sm:%s293] %v410
                  %v412 = vld [vmem:[%s300 + $0x31c] sm:%s293]
                  %413 = vst [vmem:[%s301 + $0xdc] sm:%s293] %v412
                  %v414 = vld [vmem:[%s300 + $0x320] sm:%s293]
                  %415 = vst [vmem:[%s301 + $0xe0] sm:%s293] %v414
                  %v416 = vld [vmem:[%s300 + $0x324] sm:%s293]
                  %417 = vst [vmem:[%s301 + $0xe4] sm:%s293] %v416
                  %v418 = vld [vmem:[%s300 + $0x328] sm:%s293]
                  %419 = vst [vmem:[%s301 + $0xe8] sm:%s293] %v418
                  %v420 = vld [vmem:[%s300 + $0x32c] sm:%s293]
                  %421 = vst [vmem:[%s301 + $0xec] sm:%s293] %v420
                  %v422 = vld [vmem:[%s300 + $0x330] sm:%s293]
                  %423 = vst [vmem:[%s301 + $0xf0] sm:%s293] %v422
                  %v424 = vld [vmem:[%s300 + $0x334] sm:%s293]
                  %425 = vst [vmem:[%s301 + $0xf4] sm:%s293] %v424
                  %v426 = vld [vmem:[%s300 + $0x338] sm:%s293]
                  %427 = vst [vmem:[%s301 + $0xf8] sm:%s293] %v426
                  %v428 = vld [vmem:[%s300 + $0x33c] sm:%s293]
                  %429 = vst [vmem:[%s301 + $0xfc] sm:%s293] %v428
                $region63: #{forward.4} parent=50 // loop_footer
                  %s299 = sadd.s32 1, %s295
                $region64: #{forward.4} parent=50 // loop_footer_branch
                  %294 = sbr.rel target = $region60
                $region65: #{forward.4} parent=50 // loop_exit
                  _
              $region51: #{forward.4} parent=35 // pred_fallthru
                _
            $region36: #{forward.4} parent=31 // pred_fallthru
              _
            // Predicated region
            $region37: #{forward.4} parent=31 // pred_check
              _
            $region38: #{forward.4} parent=31 // pred_check_branch
              %143 = sbr.rel (0) target = $region40
            $region39: #{forward.4} parent=31 // pred_region
              %s145 = ssub.s32 16, 1
              loop: start=0, step=1, limit=1
              $region41: #{forward.4} parent=39 // loop_pre_header
                _
              $region42: #{forward.4} parent=39 // loop_header
                %s147 = sphi 0, %s151
                %p148 = scmp.ge.s32.totalorder %s147, 1
                %s152 = sphi %s137, %s137
                %s153 = sphi %s134, %s134
              $region43: #{forward.4} parent=39 // loop_header_branch
                %150 = sbr.rel (%p148) target = $region47
              $region44: #{forward.4} parent=39 // loop_body
                %v154 = vld [vmem:[%s152] sm:%s145]
                %155 = vst [vmem:[%s153] sm:%s145] %v154
                %v156 = vld [vmem:[%s152 + $0x4] sm:%s145]
                %157 = vst [vmem:[%s153 + $0x4] sm:%s145] %v156
                %v158 = vld [vmem:[%s152 + $0x8] sm:%s145]
                %159 = vst [vmem:[%s153 + $0x8] sm:%s145] %v158
                %v160 = vld [vmem:[%s152 + $0xc] sm:%s145]
                %161 = vst [vmem:[%s153 + $0xc] sm:%s145] %v160
                %v162 = vld [vmem:[%s152 + $0x10] sm:%s145]
                %163 = vst [vmem:[%s153 + $0x10] sm:%s145] %v162
                %v164 = vld [vmem:[%s152 + $0x14] sm:%s145]
                %165 = vst [vmem:[%s153 + $0x14] sm:%s145] %v164
                %v166 = vld [vmem:[%s152 + $0x18] sm:%s145]
                %167 = vst [vmem:[%s153 + $0x18] sm:%s145] %v166
                %v168 = vld [vmem:[%s152 + $0x1c] sm:%s145]
                %169 = vst [vmem:[%s153 + $0x1c] sm:%s145] %v168
                %v170 = vld [vmem:[%s152 + $0x20] sm:%s145]
                %171 = vst [vmem:[%s153 + $0x20] sm:%s145] %v170
                %v172 = vld [vmem:[%s152 + $0x24] sm:%s145]
                %173 = vst [vmem:[%s153 + $0x24] sm:%s145] %v172
                %v174 = vld [vmem:[%s152 + $0x28] sm:%s145]
                %175 = vst [vmem:[%s153 + $0x28] sm:%s145] %v174
                %v176 = vld [vmem:[%s152 + $0x2c] sm:%s145]
                %177 = vst [vmem:[%s153 + $0x2c] sm:%s145] %v176
                %v178 = vld [vmem:[%s152 + $0x30] sm:%s145]
                %179 = vst [vmem:[%s153 + $0x30] sm:%s145] %v178
                %v180 = vld [vmem:[%s152 + $0x34] sm:%s145]
                %181 = vst [vmem:[%s153 + $0x34] sm:%s145] %v180
                %v182 = vld [vmem:[%s152 + $0x38] sm:%s145]
                %183 = vst [vmem:[%s153 + $0x38] sm:%s145] %v182
                %v184 = vld [vmem:[%s152 + $0x3c] sm:%s145]
                %185 = vst [vmem:[%s153 + $0x3c] sm:%s145] %v184
                %v186 = vld [vmem:[%s152 + $0x100] sm:%s145]
                %187 = vst [vmem:[%s153 + $0x40] sm:%s145] %v186
                %v188 = vld [vmem:[%s152 + $0x104] sm:%s145]
                %189 = vst [vmem:[%s153 + $0x44] sm:%s145] %v188
                %v190 = vld [vmem:[%s152 + $0x108] sm:%s145]
                %191 = vst [vmem:[%s153 + $0x48] sm:%s145] %v190
                %v192 = vld [vmem:[%s152 + $0x10c] sm:%s145]
                %193 = vst [vmem:[%s153 + $0x4c] sm:%s145] %v192
                %v194 = vld [vmem:[%s152 + $0x110] sm:%s145]
                %195 = vst [vmem:[%s153 + $0x50] sm:%s145] %v194
                %v196 = vld [vmem:[%s152 + $0x114] sm:%s145]
                %197 = vst [vmem:[%s153 + $0x54] sm:%s145] %v196
                %v198 = vld [vmem:[%s152 + $0x118] sm:%s145]
                %199 = vst [vmem:[%s153 + $0x58] sm:%s145] %v198
                %v200 = vld [vmem:[%s152 + $0x11c] sm:%s145]
                %201 = vst [vmem:[%s153 + $0x5c] sm:%s145] %v200
                %v202 = vld [vmem:[%s152 + $0x120] sm:%s145]
                %203 = vst [vmem:[%s153 + $0x60] sm:%s145] %v202
                %v204 = vld [vmem:[%s152 + $0x124] sm:%s145]
                %205 = vst [vmem:[%s153 + $0x64] sm:%s145] %v204
                %v206 = vld [vmem:[%s152 + $0x128] sm:%s145]
                %207 = vst [vmem:[%s153 + $0x68] sm:%s145] %v206
                %v208 = vld [vmem:[%s152 + $0x12c] sm:%s145]
                %209 = vst [vmem:[%s153 + $0x6c] sm:%s145] %v208
                %v210 = vld [vmem:[%s152 + $0x130] sm:%s145]
                %211 = vst [vmem:[%s153 + $0x70] sm:%s145] %v210
                %v212 = vld [vmem:[%s152 + $0x134] sm:%s145]
                %213 = vst [vmem:[%s153 + $0x74] sm:%s145] %v212
                %v214 = vld [vmem:[%s152 + $0x138] sm:%s145]
                %215 = vst [vmem:[%s153 + $0x78] sm:%s145] %v214
                %v216 = vld [vmem:[%s152 + $0x13c] sm:%s145]
                %217 = vst [vmem:[%s153 + $0x7c] sm:%s145] %v216
                %v218 = vld [vmem:[%s152 + $0x200] sm:%s145]
                %219 = vst [vmem:[%s153 + $0x80] sm:%s145] %v218
                %v220 = vld [vmem:[%s152 + $0x204] sm:%s145]
                %221 = vst [vmem:[%s153 + $0x84] sm:%s145] %v220
                %v222 = vld [vmem:[%s152 + $0x208] sm:%s145]
                %223 = vst [vmem:[%s153 + $0x88] sm:%s145] %v222
                %v224 = vld [vmem:[%s152 + $0x20c] sm:%s145]
                %225 = vst [vmem:[%s153 + $0x8c] sm:%s145] %v224
                %v226 = vld [vmem:[%s152 + $0x210] sm:%s145]
                %227 = vst [vmem:[%s153 + $0x90] sm:%s145] %v226
                %v228 = vld [vmem:[%s152 + $0x214] sm:%s145]
                %229 = vst [vmem:[%s153 + $0x94] sm:%s145] %v228
                %v230 = vld [vmem:[%s152 + $0x218] sm:%s145]
                %231 = vst [vmem:[%s153 + $0x98] sm:%s145] %v230
                %v232 = vld [vmem:[%s152 + $0x21c] sm:%s145]
                %233 = vst [vmem:[%s153 + $0x9c] sm:%s145] %v232
                %v234 = vld [vmem:[%s152 + $0x220] sm:%s145]
                %235 = vst [vmem:[%s153 + $0xa0] sm:%s145] %v234
                %v236 = vld [vmem:[%s152 + $0x224] sm:%s145]
                %237 = vst [vmem:[%s153 + $0xa4] sm:%s145] %v236
                %v238 = vld [vmem:[%s152 + $0x228] sm:%s145]
                %239 = vst [vmem:[%s153 + $0xa8] sm:%s145] %v238
                %v240 = vld [vmem:[%s152 + $0x22c] sm:%s145]
                %241 = vst [vmem:[%s153 + $0xac] sm:%s145] %v240
                %v242 = vld [vmem:[%s152 + $0x230] sm:%s145]
                %243 = vst [vmem:[%s153 + $0xb0] sm:%s145] %v242
                %v244 = vld [vmem:[%s152 + $0x234] sm:%s145]
                %245 = vst [vmem:[%s153 + $0xb4] sm:%s145] %v244
                %v246 = vld [vmem:[%s152 + $0x238] sm:%s145]
                %247 = vst [vmem:[%s153 + $0xb8] sm:%s145] %v246
                %v248 = vld [vmem:[%s152 + $0x23c] sm:%s145]
                %249 = vst [vmem:[%s153 + $0xbc] sm:%s145] %v248
                %v250 = vld [vmem:[%s152 + $0x300] sm:%s145]
                %251 = vst [vmem:[%s153 + $0xc0] sm:%s145] %v250
                %v252 = vld [vmem:[%s152 + $0x304] sm:%s145]
                %253 = vst [vmem:[%s153 + $0xc4] sm:%s145] %v252
                %v254 = vld [vmem:[%s152 + $0x308] sm:%s145]
                %255 = vst [vmem:[%s153 + $0xc8] sm:%s145] %v254
                %v256 = vld [vmem:[%s152 + $0x30c] sm:%s145]
                %257 = vst [vmem:[%s153 + $0xcc] sm:%s145] %v256
                %v258 = vld [vmem:[%s152 + $0x310] sm:%s145]
                %259 = vst [vmem:[%s153 + $0xd0] sm:%s145] %v258
                %v260 = vld [vmem:[%s152 + $0x314] sm:%s145]
                %261 = vst [vmem:[%s153 + $0xd4] sm:%s145] %v260
                %v262 = vld [vmem:[%s152 + $0x318] sm:%s145]
                %263 = vst [vmem:[%s153 + $0xd8] sm:%s145] %v262
                %v264 = vld [vmem:[%s152 + $0x31c] sm:%s145]
                %265 = vst [vmem:[%s153 + $0xdc] sm:%s145] %v264
                %v266 = vld [vmem:[%s152 + $0x320] sm:%s145]
                %267 = vst [vmem:[%s153 + $0xe0] sm:%s145] %v266
                %v268 = vld [vmem:[%s152 + $0x324] sm:%s145]
                %269 = vst [vmem:[%s153 + $0xe4] sm:%s145] %v268
                %v270 = vld [vmem:[%s152 + $0x328] sm:%s145]
                %271 = vst [vmem:[%s153 + $0xe8] sm:%s145] %v270
                %v272 = vld [vmem:[%s152 + $0x32c] sm:%s145]
                %273 = vst [vmem:[%s153 + $0xec] sm:%s145] %v272
                %v274 = vld [vmem:[%s152 + $0x330] sm:%s145]
                %275 = vst [vmem:[%s153 + $0xf0] sm:%s145] %v274
                %v276 = vld [vmem:[%s152 + $0x334] sm:%s145]
                %277 = vst [vmem:[%s153 + $0xf4] sm:%s145] %v276
                %v278 = vld [vmem:[%s152 + $0x338] sm:%s145]
                %279 = vst [vmem:[%s153 + $0xf8] sm:%s145] %v278
                %v280 = vld [vmem:[%s152 + $0x33c] sm:%s145]
                %281 = vst [vmem:[%s153 + $0xfc] sm:%s145] %v280
              $region45: #{forward.4} parent=39 // loop_footer
                %s151 = sadd.s32 1, %s147
              $region46: #{forward.4} parent=39 // loop_footer_branch
                %146 = sbr.rel target = $region42
              $region47: #{forward.4} parent=39 // loop_exit
                _
            $region40: #{forward.4} parent=31 // pred_fallthru
              _
          $region32: #{forward.4} parent=27 // pred_fallthru
            _
          %430 = vnop
        $region28: #{forward.4} parent=23 // pred_fallthru
          _
      $region24: #{forward.4} parent=5 // pred_fallthru
        _
      %p431 = scmp.le.s32.totalorder 1, %s9
      %p432 = scmp.lt.s32.totalorder %s9, 5
      %p433 = pnand %p431, %p432
      %p434 = pneg %p433
      // Predicated region
      $region66: #{forward.4} parent=5 // pred_check
        _
      $region67: #{forward.4} parent=5 // pred_check_branch
        %436 = sbr.rel (%p433) target = $region69
      $region68: #{forward.4} parent=5 // pred_region
        %s437 = ssub.s32 %s9, 1
        %s438 = sand.u32 %s22, 1
        %s439 = sand.u32 %s22, 1
        %s440 = smul.addr %s439, 256
        %s441 = scalar_lea.vmem [#allocation2], %s440
        // Predicated region
        $region70: #{forward.4} parent=68 // pred_check
          %p442 = pneg %p35
        $region71: #{forward.4} parent=68 // pred_check_branch
          %444 = sbr.rel (%p442) target = $region73
        $region72: #{forward.4} parent=68 // pred_region
          _
        $region73: #{forward.4} parent=68 // pred_fallthru
          _
        %s445 = sand.u32 %s22, 1
        %s446 = sand.u32 %s22, 1
        %s447 = smul.addr %s446, 256
        %s448 = scalar_lea.vmem [#allocation2], %s447
        %p449 = pneg %p35
        %p450 = pneg %p32
        %p451 = pneg %p56
        %p452 = pneg %p53
        %p453 = pneg %p77
        %p454 = pneg %p74
        %p455 = pneg %p103
        %p456 = pneg %p100
        %s457 = smul.u32 16, %s14
        %p458 = scmp.lt.s32.totalorder %s457, 63
        %s459 = scalar_select %p458, %s457, 63
        %s460 = smul.addr %s459, 4
        %s461 = scalar_lea.vmem %s3, %s460
        %s462 = smul.u32 16, %s14
        %s463 = smul.u32 16, %s14
        %p464 = scmp.lt.s32.totalorder %s463, 63
        %s465 = scalar_select %p464, %s463, 63
        %s466 = smul.addr %s465, 4
        %s467 = scalar_lea.vmem %s3, %s466
        %s468 = smul.u32 16, %s14
        %v470 = vld [vmem:[%s1] sm:$0xf]
        %v471 = vld [vmem:[%s1 + $0x4] sm:$0xf]
        %v472 = vld [vmem:[%s1 + $0x8] sm:$0xf]
        %v473 = vld [vmem:[%s1 + $0xc] sm:$0x3]
        %v474 = vld [vmem:[%s2] sm:$0x1]
        %v475 = vld [vmem:[%s441] sm:$0xf]
        %v476 = vld [vmem:[%s441 + $0x4] sm:$0xf]
        %v477 = vld [vmem:[%s441 + $0x8] sm:$0xf]
        %v478 = vld [vmem:[%s441 + $0xc] sm:$0xf]
        %v479 = vld [vmem:[%s441 + $0x10] sm:$0xf]
        %v480 = vld [vmem:[%s441 + $0x14] sm:$0xf]
        %v481 = vld [vmem:[%s441 + $0x18] sm:$0xf]
        %v482 = vld [vmem:[%s441 + $0x1c] sm:$0xf]
        %v483 = vld [vmem:[%s441 + $0x20] sm:$0xf]
        %v484 = vld [vmem:[%s441 + $0x24] sm:$0xf]
        %v485 = vld [vmem:[%s441 + $0x28] sm:$0xf]
        %v486 = vld [vmem:[%s441 + $0x2c] sm:$0xf]
        %v487 = vld [vmem:[%s441 + $0x30] sm:$0xf]
        %v488 = vld [vmem:[%s441 + $0x34] sm:$0xf]
        %v489 = vld [vmem:[%s441 + $0x38] sm:$0xf]
        %v490 = vld [vmem:[%s441 + $0x3c] sm:$0xf]
        %v492 = vlaneseq
        %v493 = vshrl.u32 %v492, 7
        %v494 = vsub.s32 0, %v493
        %v495 = vrot.slane %v474, %v494
        %v513 = vunpack.c.l.b16 %v475
        %v514 = vunpack.c.l.b16 %v476
        %v515 = vunpack.c.l.b16 %v477
        %v516 = vunpack.c.l.b16 %v478
        %v517 = vunpack.c.l.b16 %v479
        %v518 = vunpack.c.l.b16 %v480
        %v519 = vunpack.c.l.b16 %v481
        %v520 = vunpack.c.l.b16 %v482
        %v521 = vunpack.c.l.b16 %v483
        %v522 = vunpack.c.l.b16 %v484
        %v523 = vunpack.c.l.b16 %v485
        %v524 = vunpack.c.l.b16 %v486
        %v525 = vunpack.c.l.b16 %v487
        %v526 = vunpack.c.l.b16 %v488
        %v527 = vunpack.c.l.b16 %v489
        %v528 = vunpack.c.l.b16 %v490
        %v529 = vpack.c.b16 %v514, %v513
        %v530 = vpack.c.b16 %v516, %v515
        %v531 = vpack.c.b16 %v518, %v517
        %v532 = vpack.c.b16 %v520, %v519
        %v533 = vpack.c.b16 %v522, %v521
        %v534 = vpack.c.b16 %v524, %v523
        %v535 = vpack.c.b16 %v526, %v525
        %v536 = vpack.c.b16 %v528, %v527
        %v541 = vunpack.c.l.b16 %v470
        %v542 = vunpack.c.l.b16 %v471
        %v543 = vunpack.c.l.b16 %v472
        %v544 = vunpack.c.l.b16 %v473
        %v545 = vpack.c.b16 %v542, %v541
        %v546 = vpack.c.b16 %v544, %v543
        %vm548 = vcmask 220160
        %v550 = vsel %vm548, %v529, 0
        %v553 = vsel %vm548, %v530, 0
        %v556 = vsel %vm548, %v531, 0
        %v559 = vsel %vm548, %v532, 0
        %v562 = vsel %vm548, %v533, 0
        %v565 = vsel %vm548, %v534, 0
        %v568 = vsel %vm548, %v535, 0
        %v571 = vsel %vm548, %v536, 0
        %vm573 = vcmask 1044480
        %vm574 = vcmask 1045504
        %v575 = vsel %vm573, 4294967295, 65535
        %v576 = vsel %vm574, %v575, 0
        %v578 = vand.u32 %v546, %v576
        %580 = vmatprep.subr.bf16.mxu0 0
        %581 = vmatpush1.bf16.msra.mxu0 0
        %582 = vmatprep.subr.bf16.mxu0 0
        %583 = vmatpush1.bf16.msra.mxu0 0
        %584 = vmatprep.subr.bf16.mxu0 0
        %585 = vmatpush1.bf16.msra.mxu0 0
        %586 = vmatprep.subr.bf16.mxu0 0
        %587 = vmatpush1.bf16.msra.mxu0 0
        %588 = vmatprep.subr.bf16.mxu0 0
        %589 = vmatpush1.bf16.msra.mxu0 0
        %590 = vmatprep.subr.bf16.mxu0 0
        %591 = vmatpush1.bf16.msra.mxu0 0
        %592 = vmatprep.subr.bf16.mxu0 0
        %593 = vmatpush1.bf16.msra.mxu0 %v578
        %594 = vmatprep.subr.bf16.mxu0 0
        %595 = vmatpush1.bf16.msra.mxu0 %v545
        %596 = vmatprep.subr.bf16.mxu0 0
        %597 = vmatpush2.bf16.msra.mxu0 0
        %598 = vmatprep.subr.bf16.mxu0 0
        %599 = vmatpush2.bf16.msra.mxu0 0
        %600 = vmatprep.subr.bf16.mxu0 0
        %601 = vmatpush2.bf16.msra.mxu0 0
        %602 = vmatprep.subr.bf16.mxu0 0
        %603 = vmatpush2.bf16.msra.mxu0 0
        %604 = vmatprep.subr.bf16.mxu0 0
        %605 = vmatpush2.bf16.msra.mxu0 0
        %606 = vmatprep.subr.bf16.mxu0 0
        %607 = vmatpush2.bf16.msra.mxu0 0
        %608 = vmatprep.subr.bf16.mxu0 0
        %609 = vmatpush2.bf16.msra.mxu0 0
        %610 = vmatprep.subr.bf16.mxu0 0
        %611 = vmatpush2.bf16.msra.mxu0 0
        %612 = vmatprep.mubr.bf16.mxu0 0
        %613 = vmatmul.mubr.bf16.gmra.mxu0 %v550
        %v614 = vpop.f32.mrf.mxu0
        %v615 = vadd.f32 %v495, %v614
        %v616 = vpop.f32.mrf.mxu0
        %v617 = vpop.f32.mrf.mxu0
        %v618 = vadd.f32 %v495, %v617
        %v619 = vpop.f32.mrf.mxu0
        %620 = vmatprep.mubr.bf16.mxu0 0
        %621 = vmatmul.mubr.bf16.gmra.mxu0 %v553
        %v622 = vpop.f32.mrf.mxu0
        %v623 = vadd.f32 %v495, %v622
        %v624 = vpop.f32.mrf.mxu0
        %v625 = vpop.f32.mrf.mxu0
        %v626 = vadd.f32 %v495, %v625
        %v627 = vpop.f32.mrf.mxu0
        %628 = vmatprep.mubr.bf16.mxu0 0
        %629 = vmatmul.mubr.bf16.gmra.mxu0 %v556
        %v630 = vpop.f32.mrf.mxu0
        %v631 = vadd.f32 %v495, %v630
        %v632 = vpop.f32.mrf.mxu0
        %v633 = vpop.f32.mrf.mxu0
        %v634 = vadd.f32 %v495, %v633
        %v635 = vpop.f32.mrf.mxu0
        %636 = vmatprep.mubr.bf16.mxu0 0
        %637 = vmatmul.mubr.bf16.gmra.mxu0 %v559
        %v638 = vpop.f32.mrf.mxu0
        %v639 = vadd.f32 %v495, %v638
        %v640 = vpop.f32.mrf.mxu0
        %v641 = vpop.f32.mrf.mxu0
        %v642 = vadd.f32 %v495, %v641
        %v643 = vpop.f32.mrf.mxu0
        %644 = vmatprep.mubr.bf16.mxu0 0
        %645 = vmatmul.mubr.bf16.gmra.mxu0 %v562
        %v646 = vpop.f32.mrf.mxu0
        %v647 = vadd.f32 %v495, %v646
        %v648 = vpop.f32.mrf.mxu0
        %v649 = vpop.f32.mrf.mxu0
        %v650 = vadd.f32 %v495, %v649
        %v651 = vpop.f32.mrf.mxu0
        %652 = vmatprep.mubr.bf16.mxu0 0
        %653 = vmatmul.mubr.bf16.gmra.mxu0 %v565
        %v654 = vpop.f32.mrf.mxu0
        %v655 = vadd.f32 %v495, %v654
        %v656 = vpop.f32.mrf.mxu0
        %v657 = vpop.f32.mrf.mxu0
        %v658 = vadd.f32 %v495, %v657
        %v659 = vpop.f32.mrf.mxu0
        %660 = vmatprep.mubr.bf16.mxu0 0
        %661 = vmatmul.mubr.bf16.gmra.mxu0 %v568
        %v662 = vpop.f32.mrf.mxu0
        %v663 = vadd.f32 %v495, %v662
        %v664 = vpop.f32.mrf.mxu0
        %v665 = vpop.f32.mrf.mxu0
        %v666 = vadd.f32 %v495, %v665
        %v667 = vpop.f32.mrf.mxu0
        %668 = vmatprep.mubr.bf16.mxu0 0
        %669 = vmatmul.mubr.bf16.gmra.mxu0 %v571
        %v670 = vpop.f32.mrf.mxu0
        %v671 = vadd.f32 %v495, %v670
        %v672 = vpop.f32.mrf.mxu0
        %v673 = vpop.f32.mrf.mxu0
        %v674 = vadd.f32 %v495, %v673
        %v675 = vpop.f32.mrf.mxu0
        %676 = vdwg.mxu0
        %v677 = vmax.f32 %v615, 0.0
        %v678 = vmax.f32 %v618, 0.0
        %v679 = vmax.f32 %v623, 0.0
        %v680 = vmax.f32 %v626, 0.0
        %v681 = vmax.f32 %v631, 0.0
        %v682 = vmax.f32 %v634, 0.0
        %v683 = vmax.f32 %v639, 0.0
        %v684 = vmax.f32 %v642, 0.0
        %v685 = vmax.f32 %v647, 0.0
        %v686 = vmax.f32 %v650, 0.0
        %v687 = vmax.f32 %v655, 0.0
        %v688 = vmax.f32 %v658, 0.0
        %v689 = vmax.f32 %v663, 0.0
        %v690 = vmax.f32 %v666, 0.0
        %v691 = vmax.f32 %v671, 0.0
        %v692 = vmax.f32 %v674, 0.0
        %s693 = scalar_lea.vmem %s441, 64 [#allocation2]
        %v694 = vld [vmem:[%s693] sm:$0xf]
        %v695 = vld [vmem:[%s693 + $0x4] sm:$0xf]
        %v696 = vld [vmem:[%s693 + $0x8] sm:$0xf]
        %v697 = vld [vmem:[%s693 + $0xc] sm:$0xf]
        %v698 = vld [vmem:[%s693 + $0x10] sm:$0xf]
        %v699 = vld [vmem:[%s693 + $0x14] sm:$0xf]
        %v700 = vld [vmem:[%s693 + $0x18] sm:$0xf]
        %v701 = vld [vmem:[%s693 + $0x1c] sm:$0xf]
        %v702 = vld [vmem:[%s693 + $0x20] sm:$0xf]
        %v703 = vld [vmem:[%s693 + $0x24] sm:$0xf]
        %v704 = vld [vmem:[%s693 + $0x28] sm:$0xf]
        %v705 = vld [vmem:[%s693 + $0x2c] sm:$0xf]
        %v706 = vld [vmem:[%s693 + $0x30] sm:$0xf]
        %v707 = vld [vmem:[%s693 + $0x34] sm:$0xf]
        %v708 = vld [vmem:[%s693 + $0x38] sm:$0xf]
        %v709 = vld [vmem:[%s693 + $0x3c] sm:$0xf]
        %v726 = vunpack.c.l.b16 %v694
        %v727 = vunpack.c.l.b16 %v695
        %v728 = vunpack.c.l.b16 %v696
        %v729 = vunpack.c.l.b16 %v697
        %v730 = vunpack.c.l.b16 %v698
        %v731 = vunpack.c.l.b16 %v699
        %v732 = vunpack.c.l.b16 %v700
        %v733 = vunpack.c.l.b16 %v701
        %v734 = vunpack.c.l.b16 %v702
        %v735 = vunpack.c.l.b16 %v703
        %v736 = vunpack.c.l.b16 %v704
        %v737 = vunpack.c.l.b16 %v705
        %v738 = vunpack.c.l.b16 %v706
        %v739 = vunpack.c.l.b16 %v707
        %v740 = vunpack.c.l.b16 %v708
        %v741 = vunpack.c.l.b16 %v709
        %v742 = vpack.c.b16 %v727, %v726
        %v743 = vpack.c.b16 %v729, %v728
        %v744 = vpack.c.b16 %v731, %v730
        %v745 = vpack.c.b16 %v733, %v732
        %v746 = vpack.c.b16 %v735, %v734
        %v747 = vpack.c.b16 %v737, %v736
        %v748 = vpack.c.b16 %v739, %v738
        %v749 = vpack.c.b16 %v741, %v740
        %v751 = vsel %vm548, %v742, 0
        %v754 = vsel %vm548, %v743, 0
        %v757 = vsel %vm548, %v744, 0
        %v760 = vsel %vm548, %v745, 0
        %v763 = vsel %vm548, %v746, 0
        %v766 = vsel %vm548, %v747, 0
        %v769 = vsel %vm548, %v748, 0
        %v772 = vsel %vm548, %v749, 0
        %774 = vmatprep.subr.bf16.mxu0 0
        %775 = vmatpush1.bf16.msra.mxu0 0
        %776 = vmatprep.subr.bf16.mxu0 0
        %777 = vmatpush1.bf16.msra.mxu0 0
        %778 = vmatprep.subr.bf16.mxu0 0
        %779 = vmatpush1.bf16.msra.mxu0 0
        %780 = vmatprep.subr.bf16.mxu0 0
        %781 = vmatpush1.bf16.msra.mxu0 0
        %782 = vmatprep.subr.bf16.mxu0 0
        %783 = vmatpush1.bf16.msra.mxu0 0
        %784 = vmatprep.subr.bf16.mxu0 0
        %785 = vmatpush1.bf16.msra.mxu0 0
        %786 = vmatprep.subr.bf16.mxu0 0
        %787 = vmatpush1.bf16.msra.mxu0 %v578
        %788 = vmatprep.subr.bf16.mxu0 0
        %789 = vmatpush1.bf16.msra.mxu0 %v545
        %790 = vmatprep.subr.bf16.mxu0 0
        %791 = vmatpush2.bf16.msra.mxu0 0
        %792 = vmatprep.subr.bf16.mxu0 0
        %793 = vmatpush2.bf16.msra.mxu0 0
        %794 = vmatprep.subr.bf16.mxu0 0
        %795 = vmatpush2.bf16.msra.mxu0 0
        %796 = vmatprep.subr.bf16.mxu0 0
        %797 = vmatpush2.bf16.msra.mxu0 0
        %798 = vmatprep.subr.bf16.mxu0 0
        %799 = vmatpush2.bf16.msra.mxu0 0
        %800 = vmatprep.subr.bf16.mxu0 0
        %801 = vmatpush2.bf16.msra.mxu0 0
        %802 = vmatprep.subr.bf16.mxu0 0
        %803 = vmatpush2.bf16.msra.mxu0 0
        %804 = vmatprep.subr.bf16.mxu0 0
        %805 = vmatpush2.bf16.msra.mxu0 0
        %806 = vmatprep.mubr.bf16.mxu0 0
        %807 = vmatmul.mubr.bf16.gmra.mxu0 %v751
        %v808 = vpop.f32.mrf.mxu0
        %v809 = vadd.f32 %v495, %v808
        %v810 = vpop.f32.mrf.mxu0
        %v811 = vpop.f32.mrf.mxu0
        %v812 = vadd.f32 %v495, %v811
        %v813 = vpop.f32.mrf.mxu0
        %814 = vmatprep.mubr.bf16.mxu0 0
        %815 = vmatmul.mubr.bf16.gmra.mxu0 %v754
        %v816 = vpop.f32.mrf.mxu0
        %v817 = vadd.f32 %v495, %v816
        %v818 = vpop.f32.mrf.mxu0
        %v819 = vpop.f32.mrf.mxu0
        %v820 = vadd.f32 %v495, %v819
        %v821 = vpop.f32.mrf.mxu0
        %822 = vmatprep.mubr.bf16.mxu0 0
        %823 = vmatmul.mubr.bf16.gmra.mxu0 %v757
        %v824 = vpop.f32.mrf.mxu0
        %v825 = vadd.f32 %v495, %v824
        %v826 = vpop.f32.mrf.mxu0
        %v827 = vpop.f32.mrf.mxu0
        %v828 = vadd.f32 %v495, %v827
        %v829 = vpop.f32.mrf.mxu0
        %830 = vmatprep.mubr.bf16.mxu0 0
        %831 = vmatmul.mubr.bf16.gmra.mxu0 %v760
        %v832 = vpop.f32.mrf.mxu0
        %v833 = vadd.f32 %v495, %v832
        %v834 = vpop.f32.mrf.mxu0
        %v835 = vpop.f32.mrf.mxu0
        %v836 = vadd.f32 %v495, %v835
        %v837 = vpop.f32.mrf.mxu0
        %838 = vmatprep.mubr.bf16.mxu0 0
        %839 = vmatmul.mubr.bf16.gmra.mxu0 %v763
        %v840 = vpop.f32.mrf.mxu0
        %v841 = vadd.f32 %v495, %v840
        %v842 = vpop.f32.mrf.mxu0
        %v843 = vpop.f32.mrf.mxu0
        %v844 = vadd.f32 %v495, %v843
        %v845 = vpop.f32.mrf.mxu0
        %846 = vmatprep.mubr.bf16.mxu0 0
        %847 = vmatmul.mubr.bf16.gmra.mxu0 %v766
        %v848 = vpop.f32.mrf.mxu0
        %v849 = vadd.f32 %v495, %v848
        %v850 = vpop.f32.mrf.mxu0
        %v851 = vpop.f32.mrf.mxu0
        %v852 = vadd.f32 %v495, %v851
        %v853 = vpop.f32.mrf.mxu0
        %854 = vmatprep.mubr.bf16.mxu0 0
        %855 = vmatmul.mubr.bf16.gmra.mxu0 %v769
        %v856 = vpop.f32.mrf.mxu0
        %v857 = vadd.f32 %v495, %v856
        %v858 = vpop.f32.mrf.mxu0
        %v859 = vpop.f32.mrf.mxu0
        %v860 = vadd.f32 %v495, %v859
        %v861 = vpop.f32.mrf.mxu0
        %862 = vmatprep.mubr.bf16.mxu0 0
        %863 = vmatmul.mubr.bf16.gmra.mxu0 %v772
        %v864 = vpop.f32.mrf.mxu0
        %v865 = vadd.f32 %v495, %v864
        %v866 = vpop.f32.mrf.mxu0
        %v867 = vpop.f32.mrf.mxu0
        %v868 = vadd.f32 %v495, %v867
        %v869 = vpop.f32.mrf.mxu0
        %870 = vdwg.mxu0
        %v871 = vmax.f32 %v809, 0.0
        %v872 = vmax.f32 %v812, 0.0
        %v873 = vmax.f32 %v817, 0.0
        %v874 = vmax.f32 %v820, 0.0
        %v875 = vmax.f32 %v825, 0.0
        %v876 = vmax.f32 %v828, 0.0
        %v877 = vmax.f32 %v833, 0.0
        %v878 = vmax.f32 %v836, 0.0
        %v879 = vmax.f32 %v841, 0.0
        %v880 = vmax.f32 %v844, 0.0
        %v881 = vmax.f32 %v849, 0.0
        %v882 = vmax.f32 %v852, 0.0
        %v883 = vmax.f32 %v857, 0.0
        %v884 = vmax.f32 %v860, 0.0
        %v885 = vmax.f32 %v865, 0.0
        %v886 = vmax.f32 %v868, 0.0
        %v887 = vmax.f32 %v677, %v871
        %v888 = vmax.f32 %v678, %v872
        %v889 = vmax.f32 %v679, %v873
        %v890 = vmax.f32 %v680, %v874
        %v891 = vmax.f32 %v681, %v875
        %v892 = vmax.f32 %v682, %v876
        %v893 = vmax.f32 %v683, %v877
        %v894 = vmax.f32 %v684, %v878
        %v895 = vmax.f32 %v685, %v879
        %v896 = vmax.f32 %v686, %v880
        %v897 = vmax.f32 %v687, %v881
        %v898 = vmax.f32 %v688, %v882
        %v899 = vmax.f32 %v689, %v883
        %v900 = vmax.f32 %v690, %v884
        %v901 = vmax.f32 %v691, %v885
        %v902 = vmax.f32 %v692, %v886
        %s903 = scalar_lea.vmem %s441, 128 [#allocation2]
        %v904 = vld [vmem:[%s903] sm:$0xf]
        %v905 = vld [vmem:[%s903 + $0x4] sm:$0xf]
        %v906 = vld [vmem:[%s903 + $0x8] sm:$0xf]
        %v907 = vld [vmem:[%s903 + $0xc] sm:$0xf]
        %v908 = vld [vmem:[%s903 + $0x10] sm:$0xf]
        %v909 = vld [vmem:[%s903 + $0x14] sm:$0xf]
        %v910 = vld [vmem:[%s903 + $0x18] sm:$0xf]
        %v911 = vld [vmem:[%s903 + $0x1c] sm:$0xf]
        %v912 = vld [vmem:[%s903 + $0x20] sm:$0xf]
        %v913 = vld [vmem:[%s903 + $0x24] sm:$0xf]
        %v914 = vld [vmem:[%s903 + $0x28] sm:$0xf]
        %v915 = vld [vmem:[%s903 + $0x2c] sm:$0xf]
        %v916 = vld [vmem:[%s903 + $0x30] sm:$0xf]
        %v917 = vld [vmem:[%s903 + $0x34] sm:$0xf]
        %v918 = vld [vmem:[%s903 + $0x38] sm:$0xf]
        %v919 = vld [vmem:[%s903 + $0x3c] sm:$0xf]
        %v936 = vunpack.c.l.b16 %v904
        %v937 = vunpack.c.l.b16 %v905
        %v938 = vunpack.c.l.b16 %v906
        %v939 = vunpack.c.l.b16 %v907
        %v940 = vunpack.c.l.b16 %v908
        %v941 = vunpack.c.l.b16 %v909
        %v942 = vunpack.c.l.b16 %v910
        %v943 = vunpack.c.l.b16 %v911
        %v944 = vunpack.c.l.b16 %v912
        %v945 = vunpack.c.l.b16 %v913
        %v946 = vunpack.c.l.b16 %v914
        %v947 = vunpack.c.l.b16 %v915
        %v948 = vunpack.c.l.b16 %v916
        %v949 = vunpack.c.l.b16 %v917
        %v950 = vunpack.c.l.b16 %v918
        %v951 = vunpack.c.l.b16 %v919
        %v952 = vpack.c.b16 %v937, %v936
        %v953 = vpack.c.b16 %v939, %v938
        %v954 = vpack.c.b16 %v941, %v940
        %v955 = vpack.c.b16 %v943, %v942
        %v956 = vpack.c.b16 %v945, %v944
        %v957 = vpack.c.b16 %v947, %v946
        %v958 = vpack.c.b16 %v949, %v948
        %v959 = vpack.c.b16 %v951, %v950
        %v961 = vsel %vm548, %v952, 0
        %v964 = vsel %vm548, %v953, 0
        %v967 = vsel %vm548, %v954, 0
        %v970 = vsel %vm548, %v955, 0
        %v973 = vsel %vm548, %v956, 0
        %v976 = vsel %vm548, %v957, 0
        %v979 = vsel %vm548, %v958, 0
        %v982 = vsel %vm548, %v959, 0
        %984 = vmatprep.subr.bf16.mxu0 0
        %985 = vmatpush1.bf16.msra.mxu0 0
        %986 = vmatprep.subr.bf16.mxu0 0
        %987 = vmatpush1.bf16.msra.mxu0 0
        %988 = vmatprep.subr.bf16.mxu0 0
        %989 = vmatpush1.bf16.msra.mxu0 0
        %990 = vmatprep.subr.bf16.mxu0 0
        %991 = vmatpush1.bf16.msra.mxu0 0
        %992 = vmatprep.subr.bf16.mxu0 0
        %993 = vmatpush1.bf16.msra.mxu0 0
        %994 = vmatprep.subr.bf16.mxu0 0
        %995 = vmatpush1.bf16.msra.mxu0 0
        %996 = vmatprep.subr.bf16.mxu0 0
        %997 = vmatpush1.bf16.msra.mxu0 %v578
        %998 = vmatprep.subr.bf16.mxu0 0
        %999 = vmatpush1.bf16.msra.mxu0 %v545
        %1000 = vmatprep.subr.bf16.mxu0 0
        %1001 = vmatpush2.bf16.msra.mxu0 0
        %1002 = vmatprep.subr.bf16.mxu0 0
        %1003 = vmatpush2.bf16.msra.mxu0 0
        %1004 = vmatprep.subr.bf16.mxu0 0
        %1005 = vmatpush2.bf16.msra.mxu0 0
        %1006 = vmatprep.subr.bf16.mxu0 0
        %1007 = vmatpush2.bf16.msra.mxu0 0
        %1008 = vmatprep.subr.bf16.mxu0 0
        %1009 = vmatpush2.bf16.msra.mxu0 0
        %1010 = vmatprep.subr.bf16.mxu0 0
        %1011 = vmatpush2.bf16.msra.mxu0 0
        %1012 = vmatprep.subr.bf16.mxu0 0
        %1013 = vmatpush2.bf16.msra.mxu0 0
        %1014 = vmatprep.subr.bf16.mxu0 0
        %1015 = vmatpush2.bf16.msra.mxu0 0
        %1016 = vmatprep.mubr.bf16.mxu0 0
        %1017 = vmatmul.mubr.bf16.gmra.mxu0 %v961
        %v1018 = vpop.f32.mrf.mxu0
        %v1019 = vadd.f32 %v495, %v1018
        %v1020 = vpop.f32.mrf.mxu0
        %v1021 = vpop.f32.mrf.mxu0
        %v1022 = vadd.f32 %v495, %v1021
        %v1023 = vpop.f32.mrf.mxu0
        %1024 = vmatprep.mubr.bf16.mxu0 0
        %1025 = vmatmul.mubr.bf16.gmra.mxu0 %v964
        %v1026 = vpop.f32.mrf.mxu0
        %v1027 = vadd.f32 %v495, %v1026
        %v1028 = vpop.f32.mrf.mxu0
        %v1029 = vpop.f32.mrf.mxu0
        %v1030 = vadd.f32 %v495, %v1029
        %v1031 = vpop.f32.mrf.mxu0
        %1032 = vmatprep.mubr.bf16.mxu0 0
        %1033 = vmatmul.mubr.bf16.gmra.mxu0 %v967
        %v1034 = vpop.f32.mrf.mxu0
        %v1035 = vadd.f32 %v495, %v1034
        %v1036 = vpop.f32.mrf.mxu0
        %v1037 = vpop.f32.mrf.mxu0
        %v1038 = vadd.f32 %v495, %v1037
        %v1039 = vpop.f32.mrf.mxu0
        %1040 = vmatprep.mubr.bf16.mxu0 0
        %1041 = vmatmul.mubr.bf16.gmra.mxu0 %v970
        %v1042 = vpop.f32.mrf.mxu0
        %v1043 = vadd.f32 %v495, %v1042
        %v1044 = vpop.f32.mrf.mxu0
        %v1045 = vpop.f32.mrf.mxu0
        %v1046 = vadd.f32 %v495, %v1045
        %v1047 = vpop.f32.mrf.mxu0
        %1048 = vmatprep.mubr.bf16.mxu0 0
        %1049 = vmatmul.mubr.bf16.gmra.mxu0 %v973
        %v1050 = vpop.f32.mrf.mxu0
        %v1051 = vadd.f32 %v495, %v1050
        %v1052 = vpop.f32.mrf.mxu0
        %v1053 = vpop.f32.mrf.mxu0
        %v1054 = vadd.f32 %v495, %v1053
        %v1055 = vpop.f32.mrf.mxu0
        %1056 = vmatprep.mubr.bf16.mxu0 0
        %1057 = vmatmul.mubr.bf16.gmra.mxu0 %v976
        %v1058 = vpop.f32.mrf.mxu0
        %v1059 = vadd.f32 %v495, %v1058
        %v1060 = vpop.f32.mrf.mxu0
        %v1061 = vpop.f32.mrf.mxu0
        %v1062 = vadd.f32 %v495, %v1061
        %v1063 = vpop.f32.mrf.mxu0
        %1064 = vmatprep.mubr.bf16.mxu0 0
        %1065 = vmatmul.mubr.bf16.gmra.mxu0 %v979
        %v1066 = vpop.f32.mrf.mxu0
        %v1067 = vadd.f32 %v495, %v1066
        %v1068 = vpop.f32.mrf.mxu0
        %v1069 = vpop.f32.mrf.mxu0
        %v1070 = vadd.f32 %v495, %v1069
        %v1071 = vpop.f32.mrf.mxu0
        %1072 = vmatprep.mubr.bf16.mxu0 0
        %1073 = vmatmul.mubr.bf16.gmra.mxu0 %v982
        %v1074 = vpop.f32.mrf.mxu0
        %v1075 = vadd.f32 %v495, %v1074
        %v1076 = vpop.f32.mrf.mxu0
        %v1077 = vpop.f32.mrf.mxu0
        %v1078 = vadd.f32 %v495, %v1077
        %v1079 = vpop.f32.mrf.mxu0
        %1080 = vdwg.mxu0
        %v1081 = vmax.f32 %v1019, 0.0
        %v1082 = vmax.f32 %v1022, 0.0
        %v1083 = vmax.f32 %v1027, 0.0
        %v1084 = vmax.f32 %v1030, 0.0
        %v1085 = vmax.f32 %v1035, 0.0
        %v1086 = vmax.f32 %v1038, 0.0
        %v1087 = vmax.f32 %v1043, 0.0
        %v1088 = vmax.f32 %v1046, 0.0
        %v1089 = vmax.f32 %v1051, 0.0
        %v1090 = vmax.f32 %v1054, 0.0
        %v1091 = vmax.f32 %v1059, 0.0
        %v1092 = vmax.f32 %v1062, 0.0
        %v1093 = vmax.f32 %v1067, 0.0
        %v1094 = vmax.f32 %v1070, 0.0
        %v1095 = vmax.f32 %v1075, 0.0
        %v1096 = vmax.f32 %v1078, 0.0
        %v1097 = vmax.f32 %v887, %v1081
        %v1098 = vmax.f32 %v888, %v1082
        %v1099 = vmax.f32 %v889, %v1083
        %v1100 = vmax.f32 %v890, %v1084
        %v1101 = vmax.f32 %v891, %v1085
        %v1102 = vmax.f32 %v892, %v1086
        %v1103 = vmax.f32 %v893, %v1087
        %v1104 = vmax.f32 %v894, %v1088
        %v1105 = vmax.f32 %v895, %v1089
        %v1106 = vmax.f32 %v896, %v1090
        %v1107 = vmax.f32 %v897, %v1091
        %v1108 = vmax.f32 %v898, %v1092
        %v1109 = vmax.f32 %v899, %v1093
        %v1110 = vmax.f32 %v900, %v1094
        %v1111 = vmax.f32 %v901, %v1095
        %v1112 = vmax.f32 %v902, %v1096
        %s1113 = scalar_lea.vmem %s441, 192 [#allocation2]
        %v1114 = vld [vmem:[%s1113] sm:$0xf]
        %v1115 = vld [vmem:[%s1113 + $0x4] sm:$0xf]
        %v1116 = vld [vmem:[%s1113 + $0x8] sm:$0xf]
        %v1117 = vld [vmem:[%s1113 + $0xc] sm:$0xf]
        %v1118 = vld [vmem:[%s1113 + $0x10] sm:$0xf]
        %v1119 = vld [vmem:[%s1113 + $0x14] sm:$0xf]
        %v1120 = vld [vmem:[%s1113 + $0x18] sm:$0xf]
        %v1121 = vld [vmem:[%s1113 + $0x1c] sm:$0xf]
        %v1122 = vld [vmem:[%s1113 + $0x20] sm:$0xf]
        %v1123 = vld [vmem:[%s1113 + $0x24] sm:$0xf]
        %v1124 = vld [vmem:[%s1113 + $0x28] sm:$0xf]
        %v1125 = vld [vmem:[%s1113 + $0x2c] sm:$0xf]
        %v1126 = vld [vmem:[%s1113 + $0x30] sm:$0xf]
        %v1127 = vld [vmem:[%s1113 + $0x34] sm:$0xf]
        %v1128 = vld [vmem:[%s1113 + $0x38] sm:$0xf]
        %v1129 = vld [vmem:[%s1113 + $0x3c] sm:$0xf]
        %v1146 = vunpack.c.l.b16 %v1114
        %v1147 = vunpack.c.l.b16 %v1115
        %v1148 = vunpack.c.l.b16 %v1116
        %v1149 = vunpack.c.l.b16 %v1117
        %v1150 = vunpack.c.l.b16 %v1118
        %v1151 = vunpack.c.l.b16 %v1119
        %v1152 = vunpack.c.l.b16 %v1120
        %v1153 = vunpack.c.l.b16 %v1121
        %v1154 = vunpack.c.l.b16 %v1122
        %v1155 = vunpack.c.l.b16 %v1123
        %v1156 = vunpack.c.l.b16 %v1124
        %v1157 = vunpack.c.l.b16 %v1125
        %v1158 = vunpack.c.l.b16 %v1126
        %v1159 = vunpack.c.l.b16 %v1127
        %v1160 = vunpack.c.l.b16 %v1128
        %v1161 = vunpack.c.l.b16 %v1129
        %v1162 = vpack.c.b16 %v1147, %v1146
        %v1163 = vpack.c.b16 %v1149, %v1148
        %v1164 = vpack.c.b16 %v1151, %v1150
        %v1165 = vpack.c.b16 %v1153, %v1152
        %v1166 = vpack.c.b16 %v1155, %v1154
        %v1167 = vpack.c.b16 %v1157, %v1156
        %v1168 = vpack.c.b16 %v1159, %v1158
        %v1169 = vpack.c.b16 %v1161, %v1160
        %v1171 = vsel %vm548, %v1162, 0
        %v1174 = vsel %vm548, %v1163, 0
        %v1177 = vsel %vm548, %v1164, 0
        %v1180 = vsel %vm548, %v1165, 0
        %v1183 = vsel %vm548, %v1166, 0
        %v1186 = vsel %vm548, %v1167, 0
        %v1189 = vsel %vm548, %v1168, 0
        %v1192 = vsel %vm548, %v1169, 0
        %1194 = vmatprep.subr.bf16.mxu0 0
        %1195 = vmatpush1.bf16.msra.mxu0 0
        %1196 = vmatprep.subr.bf16.mxu0 0
        %1197 = vmatpush1.bf16.msra.mxu0 0
        %1198 = vmatprep.subr.bf16.mxu0 0
        %1199 = vmatpush1.bf16.msra.mxu0 0
        %1200 = vmatprep.subr.bf16.mxu0 0
        %1201 = vmatpush1.bf16.msra.mxu0 0
        %1202 = vmatprep.subr.bf16.mxu0 0
        %1203 = vmatpush1.bf16.msra.mxu0 0
        %1204 = vmatprep.subr.bf16.mxu0 0
        %1205 = vmatpush1.bf16.msra.mxu0 0
        %1206 = vmatprep.subr.bf16.mxu0 0
        %1207 = vmatpush1.bf16.msra.mxu0 %v578
        %1208 = vmatprep.subr.bf16.mxu0 0
        %1209 = vmatpush1.bf16.msra.mxu0 %v545
        %1210 = vmatprep.subr.bf16.mxu0 0
        %1211 = vmatpush2.bf16.msra.mxu0 0
        %1212 = vmatprep.subr.bf16.mxu0 0
        %1213 = vmatpush2.bf16.msra.mxu0 0
        %1214 = vmatprep.subr.bf16.mxu0 0
        %1215 = vmatpush2.bf16.msra.mxu0 0
        %1216 = vmatprep.subr.bf16.mxu0 0
        %1217 = vmatpush2.bf16.msra.mxu0 0
        %1218 = vmatprep.subr.bf16.mxu0 0
        %1219 = vmatpush2.bf16.msra.mxu0 0
        %1220 = vmatprep.subr.bf16.mxu0 0
        %1221 = vmatpush2.bf16.msra.mxu0 0
        %1222 = vmatprep.subr.bf16.mxu0 0
        %1223 = vmatpush2.bf16.msra.mxu0 0
        %1224 = vmatprep.subr.bf16.mxu0 0
        %1225 = vmatpush2.bf16.msra.mxu0 0
        %1226 = vmatprep.mubr.bf16.mxu0 0
        %1227 = vmatmul.mubr.bf16.gmra.mxu0 %v1171
        %v1228 = vpop.f32.mrf.mxu0
        %v1229 = vadd.f32 %v495, %v1228
        %v1230 = vpop.f32.mrf.mxu0
        %v1231 = vpop.f32.mrf.mxu0
        %v1232 = vadd.f32 %v495, %v1231
        %v1233 = vpop.f32.mrf.mxu0
        %1234 = vmatprep.mubr.bf16.mxu0 0
        %1235 = vmatmul.mubr.bf16.gmra.mxu0 %v1174
        %v1236 = vpop.f32.mrf.mxu0
        %v1237 = vadd.f32 %v495, %v1236
        %v1238 = vpop.f32.mrf.mxu0
        %v1239 = vpop.f32.mrf.mxu0
        %v1240 = vadd.f32 %v495, %v1239
        %v1241 = vpop.f32.mrf.mxu0
        %1242 = vmatprep.mubr.bf16.mxu0 0
        %1243 = vmatmul.mubr.bf16.gmra.mxu0 %v1177
        %v1244 = vpop.f32.mrf.mxu0
        %v1245 = vadd.f32 %v495, %v1244
        %v1246 = vpop.f32.mrf.mxu0
        %v1247 = vpop.f32.mrf.mxu0
        %v1248 = vadd.f32 %v495, %v1247
        %v1249 = vpop.f32.mrf.mxu0
        %1250 = vmatprep.mubr.bf16.mxu0 0
        %1251 = vmatmul.mubr.bf16.gmra.mxu0 %v1180
        %v1252 = vpop.f32.mrf.mxu0
        %v1253 = vadd.f32 %v495, %v1252
        %v1254 = vpop.f32.mrf.mxu0
        %v1255 = vpop.f32.mrf.mxu0
        %v1256 = vadd.f32 %v495, %v1255
        %v1257 = vpop.f32.mrf.mxu0
        %1258 = vmatprep.mubr.bf16.mxu0 0
        %1259 = vmatmul.mubr.bf16.gmra.mxu0 %v1183
        %v1260 = vpop.f32.mrf.mxu0
        %v1261 = vadd.f32 %v495, %v1260
        %v1262 = vpop.f32.mrf.mxu0
        %v1263 = vpop.f32.mrf.mxu0
        %v1264 = vadd.f32 %v495, %v1263
        %v1265 = vpop.f32.mrf.mxu0
        %1266 = vmatprep.mubr.bf16.mxu0 0
        %1267 = vmatmul.mubr.bf16.gmra.mxu0 %v1186
        %v1268 = vpop.f32.mrf.mxu0
        %v1269 = vadd.f32 %v495, %v1268
        %v1270 = vpop.f32.mrf.mxu0
        %v1271 = vpop.f32.mrf.mxu0
        %v1272 = vadd.f32 %v495, %v1271
        %v1273 = vpop.f32.mrf.mxu0
        %1274 = vmatprep.mubr.bf16.mxu0 0
        %1275 = vmatmul.mubr.bf16.gmra.mxu0 %v1189
        %v1276 = vpop.f32.mrf.mxu0
        %v1277 = vadd.f32 %v495, %v1276
        %v1278 = vpop.f32.mrf.mxu0
        %v1279 = vpop.f32.mrf.mxu0
        %v1280 = vadd.f32 %v495, %v1279
        %v1281 = vpop.f32.mrf.mxu0
        %1282 = vmatprep.mubr.bf16.mxu0 0
        %1283 = vmatmul.mubr.bf16.gmra.mxu0 %v1192
        %v1284 = vpop.f32.mrf.mxu0
        %v1285 = vadd.f32 %v495, %v1284
        %v1286 = vpop.f32.mrf.mxu0
        %v1287 = vpop.f32.mrf.mxu0
        %v1288 = vadd.f32 %v495, %v1287
        %v1289 = vpop.f32.mrf.mxu0
        %1290 = vdwg.mxu0
        %v1291 = vmax.f32 %v1229, 0.0
        %v1292 = vmax.f32 %v1232, 0.0
        %v1293 = vmax.f32 %v1237, 0.0
        %v1294 = vmax.f32 %v1240, 0.0
        %v1295 = vmax.f32 %v1245, 0.0
        %v1296 = vmax.f32 %v1248, 0.0
        %v1297 = vmax.f32 %v1253, 0.0
        %v1298 = vmax.f32 %v1256, 0.0
        %v1299 = vmax.f32 %v1261, 0.0
        %v1300 = vmax.f32 %v1264, 0.0
        %v1301 = vmax.f32 %v1269, 0.0
        %v1302 = vmax.f32 %v1272, 0.0
        %v1303 = vmax.f32 %v1277, 0.0
        %v1304 = vmax.f32 %v1280, 0.0
        %v1305 = vmax.f32 %v1285, 0.0
        %v1306 = vmax.f32 %v1288, 0.0
        %v1307 = vmax.f32 %v1097, %v1291
        %v1308 = vmax.f32 %v1098, %v1292
        %v1309 = vmax.f32 %v1099, %v1293
        %v1310 = vmax.f32 %v1100, %v1294
        %v1311 = vmax.f32 %v1101, %v1295
        %v1312 = vmax.f32 %v1102, %v1296
        %v1313 = vmax.f32 %v1103, %v1297
        %v1314 = vmax.f32 %v1104, %v1298
        %v1315 = vmax.f32 %v1105, %v1299
        %v1316 = vmax.f32 %v1106, %v1300
        %v1317 = vmax.f32 %v1107, %v1301
        %v1318 = vmax.f32 %v1108, %v1302
        %v1319 = vmax.f32 %v1109, %v1303
        %v1320 = vmax.f32 %v1110, %v1304
        %v1321 = vmax.f32 %v1111, %v1305
        %v1322 = vmax.f32 %v1112, %v1306
        %v1323 = vpack.c.bf16 %v1308, %v1307
        %v1324 = vpack.c.bf16 %v1310, %v1309
        %v1325 = vpack.c.bf16 %v1312, %v1311
        %v1326 = vpack.c.bf16 %v1314, %v1313
        %v1327 = vpack.c.bf16 %v1316, %v1315
        %v1328 = vpack.c.bf16 %v1318, %v1317
        %v1329 = vpack.c.bf16 %v1320, %v1319
        %v1330 = vpack.c.bf16 %v1322, %v1321
        %v1339 = vunpack.c.l.b16 %v1323
        %v1340 = vunpack.c.h.b16 %v1323
        %v1341 = vunpack.c.l.b16 %v1324
        %v1342 = vunpack.c.h.b16 %v1324
        %v1343 = vunpack.c.l.b16 %v1325
        %v1344 = vunpack.c.h.b16 %v1325
        %v1345 = vunpack.c.l.b16 %v1326
        %v1346 = vunpack.c.h.b16 %v1326
        %v1347 = vunpack.c.l.b16 %v1327
        %v1348 = vunpack.c.h.b16 %v1327
        %v1349 = vunpack.c.l.b16 %v1328
        %v1350 = vunpack.c.h.b16 %v1328
        %v1351 = vunpack.c.l.b16 %v1329
        %v1352 = vunpack.c.h.b16 %v1329
        %v1353 = vunpack.c.l.b16 %v1330
        %v1354 = vunpack.c.h.b16 %v1330
        %v1355 = vpack.c.b16 %v1339, %v1339
        %v1356 = vpack.c.b16 %v1340, %v1340
        %v1357 = vpack.c.b16 %v1341, %v1341
        %v1358 = vpack.c.b16 %v1342, %v1342
        %v1359 = vpack.c.b16 %v1343, %v1343
        %v1360 = vpack.c.b16 %v1344, %v1344
        %v1361 = vpack.c.b16 %v1345, %v1345
        %v1362 = vpack.c.b16 %v1346, %v1346
        %v1363 = vpack.c.b16 %v1347, %v1347
        %v1364 = vpack.c.b16 %v1348, %v1348
        %v1365 = vpack.c.b16 %v1349, %v1349
        %v1366 = vpack.c.b16 %v1350, %v1350
        %v1367 = vpack.c.b16 %v1351, %v1351
        %v1368 = vpack.c.b16 %v1352, %v1352
        %v1369 = vpack.c.b16 %v1353, %v1353
        %v1370 = vpack.c.b16 %v1354, %v1354
        %vm1387 = vcmask 519168
        %1388 = vst.msk [vmem:[%s467] sm:$0xf] %vm1387, %v1355
        %1389 = vst.msk [vmem:[%s467 + $0x4] sm:$0xf] %vm1387, %v1356
        %1390 = vst.msk [vmem:[%s467 + $0x8] sm:$0xf] %vm1387, %v1357
        %1391 = vst.msk [vmem:[%s467 + $0xc] sm:$0xf] %vm1387, %v1358
        %1392 = vst.msk [vmem:[%s467 + $0x10] sm:$0xf] %vm1387, %v1359
        %1393 = vst.msk [vmem:[%s467 + $0x14] sm:$0xf] %vm1387, %v1360
        %1394 = vst.msk [vmem:[%s467 + $0x18] sm:$0xf] %vm1387, %v1361
        %1395 = vst.msk [vmem:[%s467 + $0x1c] sm:$0xf] %vm1387, %v1362
        %1396 = vst.msk [vmem:[%s467 + $0x20] sm:$0xf] %vm1387, %v1363
        %1397 = vst.msk [vmem:[%s467 + $0x24] sm:$0xf] %vm1387, %v1364
        %1398 = vst.msk [vmem:[%s467 + $0x28] sm:$0xf] %vm1387, %v1365
        %1399 = vst.msk [vmem:[%s467 + $0x2c] sm:$0xf] %vm1387, %v1366
        %1400 = vst.msk [vmem:[%s467 + $0x30] sm:$0xf] %vm1387, %v1367
        %1401 = vst.msk [vmem:[%s467 + $0x34] sm:$0xf] %vm1387, %v1368
        %1402 = vst.msk [vmem:[%s467 + $0x38] sm:$0xf] %vm1387, %v1369
        %1403 = vst.msk [vmem:[%s467 + $0x3c] sm:$0xf] %vm1387, %v1370
        %s1404 = smul.u32 16, %s14
        %p1405 = scmp.lt.s32.totalorder %s1404, 63
        %s1406 = scalar_select %p1405, %s1404, 63
        %s1407 = smul.addr %s1406, 4
        %s1408 = scalar_lea.vmem %s3, %s1407
        // Predicated region
        $region74: #{forward.4} parent=68 // pred_check
          %p1409 = pneg %p100
        $region75: #{forward.4} parent=68 // pred_check_branch
          %1411 = sbr.rel (%p1409) target = $region77
        $region76: #{forward.4} parent=68 // pred_region
          %s1412 = smul.u32 16, %s14
        $region77: #{forward.4} parent=68 // pred_fallthru
          _
      $region69: #{forward.4} parent=5 // pred_fallthru
        _
      %p1413 = scmp.le.s32.totalorder 2, %s9
      // Predicated region
      $region78: #{forward.4} parent=5 // pred_check
        %p1414 = pneg %p1413
      $region79: #{forward.4} parent=5 // pred_check_branch
        %1416 = sbr.rel (%p1414) target = $region81
      $region80: #{forward.4} parent=5 // pred_region
        %s1417 = ssub.s32 %s9, 2
        // Predicated region
        $region82: #{forward.4} parent=80 // pred_check
          %p1418 = pneg %p106
        $region83: #{forward.4} parent=80 // pred_check_branch
          %1420 = sbr.rel (%p1418) target = $region85
        $region84: #{forward.4} parent=80 // pred_region
          %s1421 = smul.u32 16, %s15
          %p1422 = scmp.lt.s32.totalorder %s1421, 63
          %s1423 = scalar_select %p1422, %s1421, 63
          %s1424 = smul.addr %s1423, 4
          %s1425 = scalar_lea.vmem %s3, %s1424
        $region85: #{forward.4} parent=80 // pred_fallthru
          _
      $region81: #{forward.4} parent=5 // pred_fallthru
        _
    $region6: #{forward.4} parent=1 // loop_footer
      %s13 = sadd.s32 1, %s9
    $region7: #{forward.4} parent=1 // loop_footer_branch
      %8 = sbr.rel target = $region3
    $region8: #{forward.4} parent=1 // loop_exit
      _

// kernel: forward.6
$region0: #{forward.6}
  #allocation0 [shape = 'u32[]', space=smem, size = 0x4, offset = 0x4, fixed_abs, tag = 'smem constant byte address 0x4 - core index']
  #allocation1 [shape = 'u32[144,128]{1,0:T(1,128)}', space=vmem, size = 0x12000, scoped, tag = 'internal scratch']
  %s0 = inlined_call_operand.vmem [shape: bf16[32,1152], index: 0, kind: input, shape index: {}]
  %s1 = inlined_call_operand.vmem [shape: bf16[1152,256], index: 1, kind: input, shape index: {}]
  %s2 = inlined_call_operand.vmem [shape: f32[1,256], index: 2, kind: input, shape index: {}]
  %s3 = inlined_call_operand.vmem [shape: bf16[256,64], index: 3, kind: input, shape index: {}]
  %s4 = inlined_call_operand.vmem [shape: f32[1,64], index: 4, kind: input, shape index: {}]
  %s5 = inlined_call_operand.vmem [shape: bf16[32,64], index: 5, kind: output, shape index: {}]
  %s6 = sld [smem:[#allocation0]]
  $region30: #{forward.6} parent=0
    _
  %s8 = ssub.s32 1, %s6
  %s9 = scalar_select 0, %s8, %s6
  // Predicated region
  $region2: #{forward.6} parent=0 // pred_check
    _
  $region3: #{forward.6} parent=0 // pred_check_branch
    %11 = sbr.rel (0) target = $region5
  $region4: #{forward.6} parent=0 // pred_region
    _
  $region5: #{forward.6} parent=0 // pred_fallthru
    _
  // Predicated region
  $region6: #{forward.6} parent=0 // pred_check
    _
  $region7: #{forward.6} parent=0 // pred_check_branch
    %13 = sbr.rel (0) target = $region9
  $region8: #{forward.6} parent=0 // pred_region
    _
  $region9: #{forward.6} parent=0 // pred_fallthru
    _
  // Predicated region
  $region10: #{forward.6} parent=0 // pred_check
    _
  $region11: #{forward.6} parent=0 // pred_check_branch
    %15 = sbr.rel (0) target = $region13
  $region12: #{forward.6} parent=0 // pred_region
    _
  $region13: #{forward.6} parent=0 // pred_fallthru
    _
  // Predicated region
  $region14: #{forward.6} parent=0 // pred_check
    _
  $region15: #{forward.6} parent=0 // pred_check_branch
    %17 = sbr.rel (0) target = $region17
  $region16: #{forward.6} parent=0 // pred_region
    _
  $region17: #{forward.6} parent=0 // pred_fallthru
    _
  // Predicated region
  $region18: #{forward.6} parent=0 // pred_check
    _
  $region19: #{forward.6} parent=0 // pred_check_branch
    %19 = sbr.rel (0) target = $region21
  $region20: #{forward.6} parent=0 // pred_region
    _
  $region21: #{forward.6} parent=0 // pred_fallthru
    _
  %v21 = vld [vmem:[%s0] sm:$0xff]
  %v22 = vld [vmem:[%s0 + $0x8] sm:$0xff]
  %v23 = vld [vmem:[%s0 + $0x10] sm:$0xff]
  %v24 = vld [vmem:[%s0 + $0x18] sm:$0xff]
  %v25 = vld [vmem:[%s0 + $0x20] sm:$0xf]
  %v26 = vld [vmem:[%s0 + $0x24] sm:$0xff]
  %v27 = vld [vmem:[%s0 + $0x2c] sm:$0xff]
  %v28 = vld [vmem:[%s0 + $0x34] sm:$0xff]
  %v29 = vld [vmem:[%s0 + $0x3c] sm:$0xff]
  %v30 = vld [vmem:[%s0 + $0x44] sm:$0xf]
  %v31 = vld [vmem:[%s0 + $0x48] sm:$0xff]
  %v32 = vld [vmem:[%s0 + $0x50] sm:$0xff]
  %v33 = vld [vmem:[%s0 + $0x58] sm:$0xff]
  %v34 = vld [vmem:[%s0 + $0x60] sm:$0xff]
  %v35 = vld [vmem:[%s0 + $0x68] sm:$0xf]
  %v36 = vld [vmem:[%s0 + $0x6c] sm:$0xff]
  %v37 = vld [vmem:[%s0 + $0x74] sm:$0xff]
  %v38 = vld [vmem:[%s0 + $0x7c] sm:$0xff]
  %v39 = vld [vmem:[%s0 + $0x84] sm:$0xff]
  %v40 = vld [vmem:[%s0 + $0x8c] sm:$0xf]
  %v41 = vld [vmem:[%s1] sm:$0xff]
  %v42 = vld [vmem:[%s1 + $0x8] sm:$0xff]
  %v43 = vld [vmem:[%s1 + $0x10] sm:$0xff]
  %v44 = vld [vmem:[%s1 + $0x18] sm:$0xff]
  %v45 = vld [vmem:[%s1 + $0x20] sm:$0xff]
  %v46 = vld [vmem:[%s1 + $0x28] sm:$0xff]
  %v47 = vld [vmem:[%s1 + $0x30] sm:$0xff]
  %v48 = vld [vmem:[%s1 + $0x38] sm:$0xff]
  %v49 = vld [vmem:[%s1 + $0x40] sm:$0xff]
  %v50 = vld [vmem:[%s1 + $0x48] sm:$0xff]
  %v51 = vld [vmem:[%s1 + $0x50] sm:$0xff]
  %v52 = vld [vmem:[%s1 + $0x58] sm:$0xff]
  %v53 = vld [vmem:[%s1 + $0x60] sm:$0xff]
  %v54 = vld [vmem:[%s1 + $0x68] sm:$0xff]
  %v55 = vld [vmem:[%s1 + $0x70] sm:$0xff]
  %v56 = vld [vmem:[%s1 + $0x78] sm:$0xff]
  %v57 = vld [vmem:[%s1 + $0x80] sm:$0xff]
  %v58 = vld [vmem:[%s1 + $0x88] sm:$0xff]
  %v59 = vld [vmem:[%s1 + $0x90] sm:$0xff]
  %v60 = vld [vmem:[%s1 + $0x98] sm:$0xff]
  %v61 = vld [vmem:[%s1 + $0xa0] sm:$0xff]
  %v62 = vld [vmem:[%s1 + $0xa8] sm:$0xff]
  %v63 = vld [vmem:[%s1 + $0xb0] sm:$0xff]
  %v64 = vld [vmem:[%s1 + $0xb8] sm:$0xff]
  %v65 = vld [vmem:[%s1 + $0xc0] sm:$0xff]
  %v66 = vld [vmem:[%s1 + $0xc8] sm:$0xff]
  %v67 = vld [vmem:[%s1 + $0xd0] sm:$0xff]
  %v68 = vld [vmem:[%s1 + $0xd8] sm:$0xff]
  %v69 = vld [vmem:[%s1 + $0xe0] sm:$0xff]
  %v70 = vld [vmem:[%s1 + $0xe8] sm:$0xff]
  %v71 = vld [vmem:[%s1 + $0xf0] sm:$0xff]
  %v72 = vld [vmem:[%s1 + $0xf8] sm:$0xff]
  %v73 = vld [vmem:[%s1 + $0x100] sm:$0xff]
  %v74 = vld [vmem:[%s1 + $0x108] sm:$0xff]
  %v75 = vld [vmem:[%s1 + $0x110] sm:$0xff]
  %v76 = vld [vmem:[%s1 + $0x118] sm:$0xff]
  %v77 = vld [vmem:[%s1 + $0x120] sm:$0xff]
  %v78 = vld [vmem:[%s1 + $0x128] sm:$0xff]
  %v79 = vld [vmem:[%s1 + $0x130] sm:$0xff]
  %v80 = vld [vmem:[%s1 + $0x138] sm:$0xff]
  %v81 = vld [vmem:[%s1 + $0x140] sm:$0xff]
  %v82 = vld [vmem:[%s1 + $0x148] sm:$0xff]
  %v83 = vld [vmem:[%s1 + $0x150] sm:$0xff]
  %v84 = vld [vmem:[%s1 + $0x158] sm:$0xff]
  %v85 = vld [vmem:[%s1 + $0x160] sm:$0xff]
  %v86 = vld [vmem:[%s1 + $0x168] sm:$0xff]
  %v87 = vld [vmem:[%s1 + $0x170] sm:$0xff]
  %v88 = vld [vmem:[%s1 + $0x178] sm:$0xff]
  %v89 = vld [vmem:[%s1 + $0x180] sm:$0xff]
  %v90 = vld [vmem:[%s1 + $0x188] sm:$0xff]
  %v91 = vld [vmem:[%s1 + $0x190] sm:$0xff]
  %v92 = vld [vmem:[%s1 + $0x198] sm:$0xff]
  %v93 = vld [vmem:[%s1 + $0x1a0] sm:$0xff]
  %v94 = vld [vmem:[%s1 + $0x1a8] sm:$0xff]
  %v95 = vld [vmem:[%s1 + $0x1b0] sm:$0xff]
  %v96 = vld [vmem:[%s1 + $0x1b8] sm:$0xff]
  %v97 = vld [vmem:[%s1 + $0x1c0] sm:$0xff]
  %v98 = vld [vmem:[%s1 + $0x1c8] sm:$0xff]
  %v99 = vld [vmem:[%s1 + $0x1d0] sm:$0xff]
  %v100 = vld [vmem:[%s1 + $0x1d8] sm:$0xff]
  %v101 = vld [vmem:[%s1 + $0x1e0] sm:$0xff]
  %v102 = vld [vmem:[%s1 + $0x1e8] sm:$0xff]
  %v103 = vld [vmem:[%s1 + $0x1f0] sm:$0xff]
  %v104 = vld [vmem:[%s1 + $0x1f8] sm:$0xff]
  %v105 = vld [vmem:[%s1 + $0x200] sm:$0xff]
  %v106 = vld [vmem:[%s1 + $0x208] sm:$0xff]
  %v107 = vld [vmem:[%s1 + $0x210] sm:$0xff]
  %v108 = vld [vmem:[%s1 + $0x218] sm:$0xff]
  %v109 = vld [vmem:[%s1 + $0x220] sm:$0xff]
  %v110 = vld [vmem:[%s1 + $0x228] sm:$0xff]
  %v111 = vld [vmem:[%s1 + $0x230] sm:$0xff]
  %v112 = vld [vmem:[%s1 + $0x238] sm:$0xff]
  %v113 = vld [vmem:[%s1 + $0x240] sm:$0xff]
  %v114 = vld [vmem:[%s1 + $0x248] sm:$0xff]
  %v115 = vld [vmem:[%s1 + $0x250] sm:$0xff]
  %v116 = vld [vmem:[%s1 + $0x258] sm:$0xff]
  %v117 = vld [vmem:[%s1 + $0x260] sm:$0xff]
  %v118 = vld [vmem:[%s1 + $0x268] sm:$0xff]
  %v119 = vld [vmem:[%s1 + $0x270] sm:$0xff]
  %v120 = vld [vmem:[%s1 + $0x278] sm:$0xff]
  %v121 = vld [vmem:[%s1 + $0x280] sm:$0xff]
  %v122 = vld [vmem:[%s1 + $0x288] sm:$0xff]
  %v123 = vld [vmem:[%s1 + $0x290] sm:$0xff]
  %v124 = vld [vmem:[%s1 + $0x298] sm:$0xff]
  %v125 = vld [vmem:[%s1 + $0x2a0] sm:$0xff]
  %v126 = vld [vmem:[%s1 + $0x2a8] sm:$0xff]
  %v127 = vld [vmem:[%s1 + $0x2b0] sm:$0xff]
  %v128 = vld [vmem:[%s1 + $0x2b8] sm:$0xff]
  %v129 = vld [vmem:[%s1 + $0x2c0] sm:$0xff]
  %v130 = vld [vmem:[%s1 + $0x2c8] sm:$0xff]
  %v131 = vld [vmem:[%s1 + $0x2d0] sm:$0xff]
  %v132 = vld [vmem:[%s1 + $0x2d8] sm:$0xff]
  %v133 = vld [vmem:[%s1 + $0x2e0] sm:$0xff]
  %v134 = vld [vmem:[%s1 + $0x2e8] sm:$0xff]
  %v135 = vld [vmem:[%s1 + $0x2f0] sm:$0xff]
  %v136 = vld [vmem:[%s1 + $0x2f8] sm:$0xff]
  %v137 = vld [vmem:[%s1 + $0x300] sm:$0xff]
  %v138 = vld [vmem:[%s1 + $0x308] sm:$0xff]
  %v139 = vld [vmem:[%s1 + $0x310] sm:$0xff]
  %v140 = vld [vmem:[%s1 + $0x318] sm:$0xff]
  %v141 = vld [vmem:[%s1 + $0x320] sm:$0xff]
  %v142 = vld [vmem:[%s1 + $0x328] sm:$0xff]
  %v143 = vld [vmem:[%s1 + $0x330] sm:$0xff]
  %v144 = vld [vmem:[%s1 + $0x338] sm:$0xff]
  %v145 = vld [vmem:[%s1 + $0x340] sm:$0xff]
  %v146 = vld [vmem:[%s1 + $0x348] sm:$0xff]
  %v147 = vld [vmem:[%s1 + $0x350] sm:$0xff]
  %v148 = vld [vmem:[%s1 + $0x358] sm:$0xff]
  %v149 = vld [vmem:[%s1 + $0x360] sm:$0xff]
  %v150 = vld [vmem:[%s1 + $0x368] sm:$0xff]
  %v151 = vld [vmem:[%s1 + $0x370] sm:$0xff]
  %v152 = vld [vmem:[%s1 + $0x378] sm:$0xff]
  %v153 = vld [vmem:[%s1 + $0x380] sm:$0xff]
  %v154 = vld [vmem:[%s1 + $0x388] sm:$0xff]
  %v155 = vld [vmem:[%s1 + $0x390] sm:$0xff]
  %v156 = vld [vmem:[%s1 + $0x398] sm:$0xff]
  %v157 = vld [vmem:[%s1 + $0x3a0] sm:$0xff]
  %v158 = vld [vmem:[%s1 + $0x3a8] sm:$0xff]
  %v159 = vld [vmem:[%s1 + $0x3b0] sm:$0xff]
  %v160 = vld [vmem:[%s1 + $0x3b8] sm:$0xff]
  %v161 = vld [vmem:[%s1 + $0x3c0] sm:$0xff]
  %v162 = vld [vmem:[%s1 + $0x3c8] sm:$0xff]
  %v163 = vld [vmem:[%s1 + $0x3d0] sm:$0xff]
  %v164 = vld [vmem:[%s1 + $0x3d8] sm:$0xff]
  %v165 = vld [vmem:[%s1 + $0x3e0] sm:$0xff]
  %v166 = vld [vmem:[%s1 + $0x3e8] sm:$0xff]
  %v167 = vld [vmem:[%s1 + $0x3f0] sm:$0xff]
  %v168 = vld [vmem:[%s1 + $0x3f8] sm:$0xff]
  %v169 = vld [vmem:[%s1 + $0x400] sm:$0xff]
  %v170 = vld [vmem:[%s1 + $0x408] sm:$0xff]
  %v171 = vld [vmem:[%s1 + $0x410] sm:$0xff]
  %v172 = vld [vmem:[%s1 + $0x418] sm:$0xff]
  %v173 = vld [vmem:[%s1 + $0x420] sm:$0xff]
  %v174 = vld [vmem:[%s1 + $0x428] sm:$0xff]
  %v175 = vld [vmem:[%s1 + $0x430] sm:$0xff]
  %v176 = vld [vmem:[%s1 + $0x438] sm:$0xff]
  %v177 = vld [vmem:[%s1 + $0x440] sm:$0xff]
  %v178 = vld [vmem:[%s1 + $0x448] sm:$0xff]
  %v179 = vld [vmem:[%s1 + $0x450] sm:$0xff]
  %v180 = vld [vmem:[%s1 + $0x458] sm:$0xff]
  %v181 = vld [vmem:[%s1 + $0x460] sm:$0xff]
  %v182 = vld [vmem:[%s1 + $0x468] sm:$0xff]
  %v183 = vld [vmem:[%s1 + $0x470] sm:$0xff]
  %v184 = vld [vmem:[%s1 + $0x478] sm:$0xff]
  %v185 = vld [vmem:[%s2] sm:$0x3]
  %v187 = vlaneseq
  %v188 = vshrl.u32 %v187, 7
  %v189 = vsub.s32 0, %v188
  %v190 = vrot.slane %v185, %v189
  %v191 = vlaneseq
  %v192 = vshrl.u32 %v191, 7
  %v193 = vsub.s32 1, %v192
  %v194 = vrot.slane %v185, %v193
  %v217 = vunpack.c.l.b16 %v21
  %v218 = vunpack.c.h.b16 %v21
  %v219 = vunpack.c.l.b16 %v22
  %v220 = vunpack.c.h.b16 %v22
  %v221 = vunpack.c.l.b16 %v23
  %v222 = vunpack.c.h.b16 %v23
  %v223 = vunpack.c.l.b16 %v24
  %v224 = vunpack.c.h.b16 %v24
  %v225 = vunpack.c.l.b16 %v25
  %v226 = vunpack.c.l.b16 %v26
  %v227 = vunpack.c.h.b16 %v26
  %v228 = vunpack.c.l.b16 %v27
  %v229 = vunpack.c.h.b16 %v27
  %v230 = vunpack.c.l.b16 %v28
  %v231 = vunpack.c.h.b16 %v28
  %v232 = vunpack.c.l.b16 %v29
  %v233 = vunpack.c.h.b16 %v29
  %v234 = vunpack.c.l.b16 %v30
  %v235 = vunpack.c.l.b16 %v31
  %v236 = vunpack.c.h.b16 %v31
  %v237 = vunpack.c.l.b16 %v32
  %v238 = vunpack.c.h.b16 %v32
  %v239 = vunpack.c.l.b16 %v33
  %v240 = vunpack.c.h.b16 %v33
  %v241 = vunpack.c.l.b16 %v34
  %v242 = vunpack.c.h.b16 %v34
  %v243 = vunpack.c.l.b16 %v35
  %v244 = vunpack.c.l.b16 %v36
  %v245 = vunpack.c.h.b16 %v36
  %v246 = vunpack.c.l.b16 %v37
  %v247 = vunpack.c.h.b16 %v37
  %v248 = vunpack.c.l.b16 %v38
  %v249 = vunpack.c.h.b16 %v38
  %v250 = vunpack.c.l.b16 %v39
  %v251 = vunpack.c.h.b16 %v39
  %v252 = vunpack.c.l.b16 %v40
  %v253 = vpack.c.b16 %v226, %v217
  %v254 = vpack.c.b16 %v227, %v218
  %v255 = vpack.c.b16 %v228, %v219
  %v256 = vpack.c.b16 %v229, %v220
  %v257 = vpack.c.b16 %v230, %v221
  %v258 = vpack.c.b16 %v231, %v222
  %v259 = vpack.c.b16 %v232, %v223
  %v260 = vpack.c.b16 %v233, %v224
  %v261 = vpack.c.b16 %v234, %v225
  %v262 = vpack.c.b16 %v244, %v235
  %v263 = vpack.c.b16 %v245, %v236
  %v264 = vpack.c.b16 %v246, %v237
  %v265 = vpack.c.b16 %v247, %v238
  %v266 = vpack.c.b16 %v248, %v239
  %v267 = vpack.c.b16 %v249, %v240
  %v268 = vpack.c.b16 %v250, %v241
  %v269 = vpack.c.b16 %v251, %v242
  %v270 = vpack.c.b16 %v252, %v243
  %v433 = vunpack.c.l.b16 %v41
  %v434 = vunpack.c.h.b16 %v41
  %v435 = vunpack.c.l.b16 %v42
  %v436 = vunpack.c.h.b16 %v42
  %v437 = vunpack.c.l.b16 %v43
  %v438 = vunpack.c.h.b16 %v43
  %v439 = vunpack.c.l.b16 %v44
  %v440 = vunpack.c.h.b16 %v44
  %v441 = vunpack.c.l.b16 %v45
  %v442 = vunpack.c.h.b16 %v45
  %v443 = vunpack.c.l.b16 %v46
  %v444 = vunpack.c.h.b16 %v46
  %v445 = vunpack.c.l.b16 %v47
  %v446 = vunpack.c.h.b16 %v47
  %v447 = vunpack.c.l.b16 %v48
  %v448 = vunpack.c.h.b16 %v48
  %v449 = vunpack.c.l.b16 %v49
  %v450 = vunpack.c.h.b16 %v49
  %v451 = vunpack.c.l.b16 %v50
  %v452 = vunpack.c.h.b16 %v50
  %v453 = vunpack.c.l.b16 %v51
  %v454 = vunpack.c.h.b16 %v51
  %v455 = vunpack.c.l.b16 %v52
  %v456 = vunpack.c.h.b16 %v52
  %v457 = vunpack.c.l.b16 %v53
  %v458 = vunpack.c.h.b16 %v53
  %v459 = vunpack.c.l.b16 %v54
  %v460 = vunpack.c.h.b16 %v54
  %v461 = vunpack.c.l.b16 %v55
  %v462 = vunpack.c.h.b16 %v55
  %v463 = vunpack.c.l.b16 %v56
  %v464 = vunpack.c.h.b16 %v56
  %v465 = vunpack.c.l.b16 %v57
  %v466 = vunpack.c.h.b16 %v57
  %v467 = vunpack.c.l.b16 %v58
  %v468 = vunpack.c.h.b16 %v58
  %v469 = vunpack.c.l.b16 %v59
  %v470 = vunpack.c.h.b16 %v59
  %v471 = vunpack.c.l.b16 %v60
  %v472 = vunpack.c.h.b16 %v60
  %v473 = vunpack.c.l.b16 %v61
  %v474 = vunpack.c.h.b16 %v61
  %v475 = vunpack.c.l.b16 %v62
  %v476 = vunpack.c.h.b16 %v62
  %v477 = vunpack.c.l.b16 %v63
  %v478 = vunpack.c.h.b16 %v63
  %v479 = vunpack.c.l.b16 %v64
  %v480 = vunpack.c.h.b16 %v64
  %v481 = vunpack.c.l.b16 %v65
  %v482 = vunpack.c.h.b16 %v65
  %v483 = vunpack.c.l.b16 %v66
  %v484 = vunpack.c.h.b16 %v66
  %v485 = vunpack.c.l.b16 %v67
  %v486 = vunpack.c.h.b16 %v67
  %v487 = vunpack.c.l.b16 %v68
  %v488 = vunpack.c.h.b16 %v68
  %v489 = vunpack.c.l.b16 %v69
  %v490 = vunpack.c.h.b16 %v69
  %v491 = vunpack.c.l.b16 %v70
  %v492 = vunpack.c.h.b16 %v70
  %v493 = vunpack.c.l.b16 %v71
  %v494 = vunpack.c.h.b16 %v71
  %v495 = vunpack.c.l.b16 %v72
  %v496 = vunpack.c.h.b16 %v72
  %v497 = vunpack.c.l.b16 %v73
  %v498 = vunpack.c.h.b16 %v73
  %v499 = vunpack.c.l.b16 %v74
  %v500 = vunpack.c.h.b16 %v74
  %v501 = vunpack.c.l.b16 %v75
  %v502 = vunpack.c.h.b16 %v75
  %v503 = vunpack.c.l.b16 %v76
  %v504 = vunpack.c.h.b16 %v76
  %v505 = vunpack.c.l.b16 %v77
  %v506 = vunpack.c.h.b16 %v77
  %v507 = vunpack.c.l.b16 %v78
  %v508 = vunpack.c.h.b16 %v78
  %v509 = vunpack.c.l.b16 %v79
  %v510 = vunpack.c.h.b16 %v79
  %v511 = vunpack.c.l.b16 %v80
  %v512 = vunpack.c.h.b16 %v80
  %v513 = vunpack.c.l.b16 %v81
  %v514 = vunpack.c.h.b16 %v81
  %v515 = vunpack.c.l.b16 %v82
  %v516 = vunpack.c.h.b16 %v82
  %v517 = vunpack.c.l.b16 %v83
  %v518 = vunpack.c.h.b16 %v83
  %v519 = vunpack.c.l.b16 %v84
  %v520 = vunpack.c.h.b16 %v84
  %v521 = vunpack.c.l.b16 %v85
  %v522 = vunpack.c.h.b16 %v85
  %v523 = vunpack.c.l.b16 %v86
  %v524 = vunpack.c.h.b16 %v86
  %v525 = vunpack.c.l.b16 %v87
  %v526 = vunpack.c.h.b16 %v87
  %v527 = vunpack.c.l.b16 %v88
  %v528 = vunpack.c.h.b16 %v88
  %v529 = vunpack.c.l.b16 %v89
  %v530 = vunpack.c.h.b16 %v89
  %v531 = vunpack.c.l.b16 %v90
  %v532 = vunpack.c.h.b16 %v90
  %v533 = vunpack.c.l.b16 %v91
  %v534 = vunpack.c.h.b16 %v91
  %v535 = vunpack.c.l.b16 %v92
  %v536 = vunpack.c.h.b16 %v92
  %v537 = vunpack.c.l.b16 %v93
  %v538 = vunpack.c.h.b16 %v93
  %v539 = vunpack.c.l.b16 %v94
  %v540 = vunpack.c.h.b16 %v94
  %v541 = vunpack.c.l.b16 %v95
  %v542 = vunpack.c.h.b16 %v95
  %v543 = vunpack.c.l.b16 %v96
  %v544 = vunpack.c.h.b16 %v96
  %v545 = vunpack.c.l.b16 %v97
  %v546 = vunpack.c.h.b16 %v97
  %v547 = vunpack.c.l.b16 %v98
  %v548 = vunpack.c.h.b16 %v98
  %v549 = vunpack.c.l.b16 %v99
  %v550 = vunpack.c.h.b16 %v99
  %v551 = vunpack.c.l.b16 %v100
  %v552 = vunpack.c.h.b16 %v100
  %v553 = vunpack.c.l.b16 %v101
  %v554 = vunpack.c.h.b16 %v101
  %v555 = vunpack.c.l.b16 %v102
  %v556 = vunpack.c.h.b16 %v102
  %v557 = vunpack.c.l.b16 %v103
  %v558 = vunpack.c.h.b16 %v103
  %v559 = vunpack.c.l.b16 %v104
  %v560 = vunpack.c.h.b16 %v104
  %v561 = vunpack.c.l.b16 %v105
  %v562 = vunpack.c.h.b16 %v105
  %v563 = vunpack.c.l.b16 %v106
  %v564 = vunpack.c.h.b16 %v106
  %v565 = vunpack.c.l.b16 %v107
  %v566 = vunpack.c.h.b16 %v107
  %v567 = vunpack.c.l.b16 %v108
  %v568 = vunpack.c.h.b16 %v108
  %v569 = vunpack.c.l.b16 %v109
  %v570 = vunpack.c.h.b16 %v109
  %v571 = vunpack.c.l.b16 %v110
  %v572 = vunpack.c.h.b16 %v110
  %v573 = vunpack.c.l.b16 %v111
  %v574 = vunpack.c.h.b16 %v111
  %v575 = vunpack.c.l.b16 %v112
  %v576 = vunpack.c.h.b16 %v112
  %v577 = vunpack.c.l.b16 %v113
  %v578 = vunpack.c.h.b16 %v113
  %v579 = vunpack.c.l.b16 %v114
  %v580 = vunpack.c.h.b16 %v114
  %v581 = vunpack.c.l.b16 %v115
  %v582 = vunpack.c.h.b16 %v115
  %v583 = vunpack.c.l.b16 %v116
  %v584 = vunpack.c.h.b16 %v116
  %v585 = vunpack.c.l.b16 %v117
  %v586 = vunpack.c.h.b16 %v117
  %v587 = vunpack.c.l.b16 %v118
  %v588 = vunpack.c.h.b16 %v118
  %v589 = vunpack.c.l.b16 %v119
  %v590 = vunpack.c.h.b16 %v119
  %v591 = vunpack.c.l.b16 %v120
  %v592 = vunpack.c.h.b16 %v120
  %v593 = vunpack.c.l.b16 %v121
  %v594 = vunpack.c.h.b16 %v121
  %v595 = vunpack.c.l.b16 %v122
  %v596 = vunpack.c.h.b16 %v122
  %v597 = vunpack.c.l.b16 %v123
  %v598 = vunpack.c.h.b16 %v123
  %v599 = vunpack.c.l.b16 %v124
  %v600 = vunpack.c.h.b16 %v124
  %v601 = vunpack.c.l.b16 %v125
  %v602 = vunpack.c.h.b16 %v125
  %v603 = vunpack.c.l.b16 %v126
  %v604 = vunpack.c.h.b16 %v126
  %v605 = vunpack.c.l.b16 %v127
  %v606 = vunpack.c.h.b16 %v127
  %v607 = vunpack.c.l.b16 %v128
  %v608 = vunpack.c.h.b16 %v128
  %v609 = vunpack.c.l.b16 %v129
  %v610 = vunpack.c.h.b16 %v129
  %v611 = vunpack.c.l.b16 %v130
  %v612 = vunpack.c.h.b16 %v130
  %v613 = vunpack.c.l.b16 %v131
  %v614 = vunpack.c.h.b16 %v131
  %v615 = vunpack.c.l.b16 %v132
  %v616 = vunpack.c.h.b16 %v132
  %v617 = vunpack.c.l.b16 %v133
  %v618 = vunpack.c.h.b16 %v133
  %v619 = vunpack.c.l.b16 %v134
  %v620 = vunpack.c.h.b16 %v134
  %v621 = vunpack.c.l.b16 %v135
  %v622 = vunpack.c.h.b16 %v135
  %v623 = vunpack.c.l.b16 %v136
  %v624 = vunpack.c.h.b16 %v136
  %v625 = vunpack.c.l.b16 %v137
  %v626 = vunpack.c.h.b16 %v137
  %v627 = vunpack.c.l.b16 %v138
  %v628 = vunpack.c.h.b16 %v138
  %v629 = vunpack.c.l.b16 %v139
  %v630 = vunpack.c.h.b16 %v139
  %v631 = vunpack.c.l.b16 %v140
  %v632 = vunpack.c.h.b16 %v140
  %v633 = vunpack.c.l.b16 %v141
  %v634 = vunpack.c.h.b16 %v141
  %v635 = vunpack.c.l.b16 %v142
  %v636 = vunpack.c.h.b16 %v142
  %v637 = vunpack.c.l.b16 %v143
  %v638 = vunpack.c.h.b16 %v143
  %v639 = vunpack.c.l.b16 %v144
  %v640 = vunpack.c.h.b16 %v144
  %v641 = vunpack.c.l.b16 %v145
  %v642 = vunpack.c.h.b16 %v145
  %v643 = vunpack.c.l.b16 %v146
  %v644 = vunpack.c.h.b16 %v146
  %v645 = vunpack.c.l.b16 %v147
  %v646 = vunpack.c.h.b16 %v147
  %v647 = vunpack.c.l.b16 %v148
  %v648 = vunpack.c.h.b16 %v148
  %v649 = vunpack.c.l.b16 %v149
  %v650 = vunpack.c.h.b16 %v149
  %v651 = vunpack.c.l.b16 %v150
  %v652 = vunpack.c.h.b16 %v150
  %v653 = vunpack.c.l.b16 %v151
  %v654 = vunpack.c.h.b16 %v151
  %v655 = vunpack.c.l.b16 %v152
  %v656 = vunpack.c.h.b16 %v152
  %v657 = vunpack.c.l.b16 %v153
  %v658 = vunpack.c.h.b16 %v153
  %v659 = vunpack.c.l.b16 %v154
  %v660 = vunpack.c.h.b16 %v154
  %v661 = vunpack.c.l.b16 %v155
  %v662 = vunpack.c.h.b16 %v155
  %v663 = vunpack.c.l.b16 %v156
  %v664 = vunpack.c.h.b16 %v156
  %v665 = vunpack.c.l.b16 %v157
  %v666 = vunpack.c.h.b16 %v157
  %v667 = vunpack.c.l.b16 %v158
  %v668 = vunpack.c.h.b16 %v158
  %v669 = vunpack.c.l.b16 %v159
  %v670 = vunpack.c.h.b16 %v159
  %v671 = vunpack.c.l.b16 %v160
  %v672 = vunpack.c.h.b16 %v160
  %v673 = vunpack.c.l.b16 %v161
  %v674 = vunpack.c.h.b16 %v161
  %v675 = vunpack.c.l.b16 %v162
  %v676 = vunpack.c.h.b16 %v162
  %v677 = vunpack.c.l.b16 %v163
  %v678 = vunpack.c.h.b16 %v163
  %v679 = vunpack.c.l.b16 %v164
  %v680 = vunpack.c.h.b16 %v164
  %v681 = vunpack.c.l.b16 %v165
  %v682 = vunpack.c.h.b16 %v165
  %v683 = vunpack.c.l.b16 %v166
  %v684 = vunpack.c.h.b16 %v166
  %v685 = vunpack.c.l.b16 %v167
  %v686 = vunpack.c.h.b16 %v167
  %v687 = vunpack.c.l.b16 %v168
  %v688 = vunpack.c.h.b16 %v168
  %v689 = vunpack.c.l.b16 %v169
  %v690 = vunpack.c.h.b16 %v169
  %v691 = vunpack.c.l.b16 %v170
  %v692 = vunpack.c.h.b16 %v170
  %v693 = vunpack.c.l.b16 %v171
  %v694 = vunpack.c.h.b16 %v171
  %v695 = vunpack.c.l.b16 %v172
  %v696 = vunpack.c.h.b16 %v172
  %v697 = vunpack.c.l.b16 %v173
  %v698 = vunpack.c.h.b16 %v173
  %v699 = vunpack.c.l.b16 %v174
  %v700 = vunpack.c.h.b16 %v174
  %v701 = vunpack.c.l.b16 %v175
  %v702 = vunpack.c.h.b16 %v175
  %v703 = vunpack.c.l.b16 %v176
  %v704 = vunpack.c.h.b16 %v176
  %v705 = vunpack.c.l.b16 %v177
  %v706 = vunpack.c.h.b16 %v177
  %v707 = vunpack.c.l.b16 %v178
  %v708 = vunpack.c.h.b16 %v178
  %v709 = vunpack.c.l.b16 %v179
  %v710 = vunpack.c.h.b16 %v179
  %v711 = vunpack.c.l.b16 %v180
  %v712 = vunpack.c.h.b16 %v180
  %v713 = vunpack.c.l.b16 %v181
  %v714 = vunpack.c.h.b16 %v181
  %v715 = vunpack.c.l.b16 %v182
  %v716 = vunpack.c.h.b16 %v182
  %v717 = vunpack.c.l.b16 %v183
  %v718 = vunpack.c.h.b16 %v183
  %v719 = vunpack.c.l.b16 %v184
  %v720 = vunpack.c.h.b16 %v184
  %v721 = vpack.c.b16 %v435, %v433
  %v722 = vpack.c.b16 %v436, %v434
  %v723 = vpack.c.b16 %v439, %v437
  %v724 = vpack.c.b16 %v440, %v438
  %v725 = vpack.c.b16 %v443, %v441
  %v726 = vpack.c.b16 %v444, %v442
  %v727 = vpack.c.b16 %v447, %v445
  %v728 = vpack.c.b16 %v448, %v446
  %v729 = vpack.c.b16 %v451, %v449
  %v730 = vpack.c.b16 %v452, %v450
  %v731 = vpack.c.b16 %v455, %v453
  %v732 = vpack.c.b16 %v456, %v454
  %v733 = vpack.c.b16 %v459, %v457
  %v734 = vpack.c.b16 %v460, %v458
  %v735 = vpack.c.b16 %v463, %v461
  %v736 = vpack.c.b16 %v464, %v462
  %v737 = vpack.c.b16 %v467, %v465
  %v738 = vpack.c.b16 %v468, %v466
  %v739 = vpack.c.b16 %v471, %v469
  %v740 = vpack.c.b16 %v472, %v470
  %v741 = vpack.c.b16 %v475, %v473
  %v742 = vpack.c.b16 %v476, %v474
  %v743 = vpack.c.b16 %v479, %v477
  %v744 = vpack.c.b16 %v480, %v478
  %v745 = vpack.c.b16 %v483, %v481
  %v746 = vpack.c.b16 %v484, %v482
  %v747 = vpack.c.b16 %v487, %v485
  %v748 = vpack.c.b16 %v488, %v486
  %v749 = vpack.c.b16 %v491, %v489
  %v750 = vpack.c.b16 %v492, %v490
  %v751 = vpack.c.b16 %v495, %v493
  %v752 = vpack.c.b16 %v496, %v494
  %v753 = vpack.c.b16 %v499, %v497
  %v754 = vpack.c.b16 %v500, %v498
  %v755 = vpack.c.b16 %v503, %v501
  %v756 = vpack.c.b16 %v504, %v502
  %v757 = vpack.c.b16 %v507, %v505
  %v758 = vpack.c.b16 %v508, %v506
  %v759 = vpack.c.b16 %v511, %v509
  %v760 = vpack.c.b16 %v512, %v510
  %v761 = vpack.c.b16 %v515, %v513
  %v762 = vpack.c.b16 %v516, %v514
  %v763 = vpack.c.b16 %v519, %v517
  %v764 = vpack.c.b16 %v520, %v518
  %v765 = vpack.c.b16 %v523, %v521
  %v766 = vpack.c.b16 %v524, %v522
  %v767 = vpack.c.b16 %v527, %v525
  %v768 = vpack.c.b16 %v528, %v526
  %v769 = vpack.c.b16 %v531, %v529
  %v770 = vpack.c.b16 %v532, %v530
  %v771 = vpack.c.b16 %v535, %v533
  %v772 = vpack.c.b16 %v536, %v534
  %v773 = vpack.c.b16 %v539, %v537
  %v774 = vpack.c.b16 %v540, %v538
  %v775 = vpack.c.b16 %v543, %v541
  %v776 = vpack.c.b16 %v544, %v542
  %v777 = vpack.c.b16 %v547, %v545
  %v778 = vpack.c.b16 %v548, %v546
  %v779 = vpack.c.b16 %v551, %v549
  %v780 = vpack.c.b16 %v552, %v550
  %v781 = vpack.c.b16 %v555, %v553
  %v782 = vpack.c.b16 %v556, %v554
  %v783 = vpack.c.b16 %v559, %v557
  %v784 = vpack.c.b16 %v560, %v558
  %v785 = vpack.c.b16 %v563, %v561
  %v786 = vpack.c.b16 %v564, %v562
  %v787 = vpack.c.b16 %v567, %v565
  %v788 = vpack.c.b16 %v568, %v566
  %v789 = vpack.c.b16 %v571, %v569
  %v790 = vpack.c.b16 %v572, %v570
  %v791 = vpack.c.b16 %v575, %v573
  %v792 = vpack.c.b16 %v576, %v574
  %v793 = vpack.c.b16 %v579, %v577
  %v794 = vpack.c.b16 %v580, %v578
  %v795 = vpack.c.b16 %v583, %v581
  %v796 = vpack.c.b16 %v584, %v582
  %v797 = vpack.c.b16 %v587, %v585
  %v798 = vpack.c.b16 %v588, %v586
  %v799 = vpack.c.b16 %v591, %v589
  %v800 = vpack.c.b16 %v592, %v590
  %v801 = vpack.c.b16 %v595, %v593
  %v802 = vpack.c.b16 %v596, %v594
  %v803 = vpack.c.b16 %v599, %v597
  %v804 = vpack.c.b16 %v600, %v598
  %v805 = vpack.c.b16 %v603, %v601
  %v806 = vpack.c.b16 %v604, %v602
  %v807 = vpack.c.b16 %v607, %v605
  %v808 = vpack.c.b16 %v608, %v606
  %v809 = vpack.c.b16 %v611, %v609
  %v810 = vpack.c.b16 %v612, %v610
  %v811 = vpack.c.b16 %v615, %v613
  %v812 = vpack.c.b16 %v616, %v614
  %v813 = vpack.c.b16 %v619, %v617
  %v814 = vpack.c.b16 %v620, %v618
  %v815 = vpack.c.b16 %v623, %v621
  %v816 = vpack.c.b16 %v624, %v622
  %v817 = vpack.c.b16 %v627, %v625
  %v818 = vpack.c.b16 %v628, %v626
  %v819 = vpack.c.b16 %v631, %v629
  %v820 = vpack.c.b16 %v632, %v630
  %v821 = vpack.c.b16 %v635, %v633
  %v822 = vpack.c.b16 %v636, %v634
  %v823 = vpack.c.b16 %v639, %v637
  %v824 = vpack.c.b16 %v640, %v638
  %v825 = vpack.c.b16 %v643, %v641
  %v826 = vpack.c.b16 %v644, %v642
  %v827 = vpack.c.b16 %v647, %v645
  %v828 = vpack.c.b16 %v648, %v646
  %v829 = vpack.c.b16 %v651, %v649
  %v830 = vpack.c.b16 %v652, %v650
  %v831 = vpack.c.b16 %v655, %v653
  %v832 = vpack.c.b16 %v656, %v654
  %v833 = vpack.c.b16 %v659, %v657
  %v834 = vpack.c.b16 %v660, %v658
  %v835 = vpack.c.b16 %v663, %v661
  %v836 = vpack.c.b16 %v664, %v662
  %v837 = vpack.c.b16 %v667, %v665
  %v838 = vpack.c.b16 %v668, %v666
  %v839 = vpack.c.b16 %v671, %v669
  %v840 = vpack.c.b16 %v672, %v670
  %v841 = vpack.c.b16 %v675, %v673
  %v842 = vpack.c.b16 %v676, %v674
  %v843 = vpack.c.b16 %v679, %v677
  %v844 = vpack.c.b16 %v680, %v678
  %v845 = vpack.c.b16 %v683, %v681
  %v846 = vpack.c.b16 %v684, %v682
  %v847 = vpack.c.b16 %v687, %v685
  %v848 = vpack.c.b16 %v688, %v686
  %v849 = vpack.c.b16 %v691, %v689
  %v850 = vpack.c.b16 %v692, %v690
  %v851 = vpack.c.b16 %v695, %v693
  %v852 = vpack.c.b16 %v696, %v694
  %v853 = vpack.c.b16 %v699, %v697
  %v854 = vpack.c.b16 %v700, %v698
  %v855 = vpack.c.b16 %v703, %v701
  %v856 = vpack.c.b16 %v704, %v702
  %v857 = vpack.c.b16 %v707, %v705
  %v858 = vpack.c.b16 %v708, %v706
  %v859 = vpack.c.b16 %v711, %v709
  %v860 = vpack.c.b16 %v712, %v710
  %v861 = vpack.c.b16 %v715, %v713
  %v862 = vpack.c.b16 %v716, %v714
  %v863 = vpack.c.b16 %v719, %v717
  %v864 = vpack.c.b16 %v720, %v718
  %1009 = vmatprep.subr.bf16.mxu0 %v736
  %1010 = vmatpush1.bf16.msra.mxu0 %v735
  %1011 = vmatprep.subr.bf16.mxu0 %v734
  %1012 = vmatpush1.bf16.msra.mxu0 %v733
  %1013 = vmatprep.subr.bf16.mxu0 %v732
  %1014 = vmatpush1.bf16.msra.mxu0 %v731
  %1015 = vmatprep.subr.bf16.mxu0 %v730
  %1016 = vmatpush1.bf16.msra.mxu0 %v729
  %1017 = vmatprep.subr.bf16.mxu0 %v728
  %1018 = vmatpush1.bf16.msra.mxu0 %v727
  %1019 = vmatprep.subr.bf16.mxu0 %v726
  %1020 = vmatpush1.bf16.msra.mxu0 %v725
  %1021 = vmatprep.subr.bf16.mxu0 %v724
  %1022 = vmatpush1.bf16.msra.mxu0 %v723
  %1023 = vmatprep.subr.bf16.mxu0 %v722
  %1024 = vmatpush1.bf16.msra.mxu0 %v721
  %1025 = vmatprep.subr.bf16.mxu0 %v752
  %1026 = vmatpush2.bf16.msra.mxu0 %v751
  %1027 = vmatprep.subr.bf16.mxu0 %v750
  %1028 = vmatpush2.bf16.msra.mxu0 %v749
  %1029 = vmatprep.subr.bf16.mxu0 %v748
  %1030 = vmatpush2.bf16.msra.mxu0 %v747
  %1031 = vmatprep.subr.bf16.mxu0 %v746
  %1032 = vmatpush2.bf16.msra.mxu0 %v745
  %1033 = vmatprep.subr.bf16.mxu0 %v744
  %1034 = vmatpush2.bf16.msra.mxu0 %v743
  %1035 = vmatprep.subr.bf16.mxu0 %v742
  %1036 = vmatpush2.bf16.msra.mxu0 %v741
  %1037 = vmatprep.subr.bf16.mxu0 %v740
  %1038 = vmatpush2.bf16.msra.mxu0 %v739
  %1039 = vmatprep.subr.bf16.mxu0 %v738
  %1040 = vmatpush2.bf16.msra.mxu0 %v737
  %1041 = vmatprep.mubr.bf16.mxu0 %v254
  %1042 = vmatmul.mubr.bf16.gmra.mxu0 %v253
  %v1043 = vpop.f32.mrf.mxu0
  %v1044 = vadd.f32 %v190, %v1043
  %v1045 = vpop.f32.mrf.mxu0
  %v1046 = vadd.f32 %v194, %v1045
  %v1047 = vpop.f32.mrf.mxu0
  %v1048 = vadd.f32 %v190, %v1047
  %v1049 = vpop.f32.mrf.mxu0
  %v1050 = vadd.f32 %v194, %v1049
  %1051 = vmatprep.mubr.bf16.mxu0 %v263
  %1052 = vmatmul.mubr.bf16.gmra.mxu0 %v262
  %v1053 = vpop.f32.mrf.mxu0
  %v1054 = vadd.f32 %v190, %v1053
  %v1055 = vpop.f32.mrf.mxu0
  %v1056 = vadd.f32 %v194, %v1055
  %v1057 = vpop.f32.mrf.mxu0
  %v1058 = vadd.f32 %v190, %v1057
  %v1059 = vpop.f32.mrf.mxu0
  %v1060 = vadd.f32 %v194, %v1059
  %1061 = vdwg.mxu0
  %1062 = vmatprep.subr.bf16.mxu0 %v768
  %1063 = vmatpush1.bf16.msra.mxu0 %v767
  %1064 = vmatprep.subr.bf16.mxu0 %v766
  %1065 = vmatpush1.bf16.msra.mxu0 %v765
  %1066 = vmatprep.subr.bf16.mxu0 %v764
  %1067 = vmatpush1.bf16.msra.mxu0 %v763
  %1068 = vmatprep.subr.bf16.mxu0 %v762
  %1069 = vmatpush1.bf16.msra.mxu0 %v761
  %1070 = vmatprep.subr.bf16.mxu0 %v760
  %1071 = vmatpush1.bf16.msra.mxu0 %v759
  %1072 = vmatprep.subr.bf16.mxu0 %v758
  %1073 = vmatpush1.bf16.msra.mxu0 %v757
  %1074 = vmatprep.subr.bf16.mxu0 %v756
  %1075 = vmatpush1.bf16.msra.mxu0 %v755
  %1076 = vmatprep.subr.bf16.mxu0 %v754
  %1077 = vmatpush1.bf16.msra.mxu0 %v753
  %1078 = vmatprep.subr.bf16.mxu0 %v784
  %1079 = vmatpush2.bf16.msra.mxu0 %v783
  %1080 = vmatprep.subr.bf16.mxu0 %v782
  %1081 = vmatpush2.bf16.msra.mxu0 %v781
  %1082 = vmatprep.subr.bf16.mxu0 %v780
  %1083 = vmatpush2.bf16.msra.mxu0 %v779
  %1084 = vmatprep.subr.bf16.mxu0 %v778
  %1085 = vmatpush2.bf16.msra.mxu0 %v777
  %1086 = vmatprep.subr.bf16.mxu0 %v776
  %1087 = vmatpush2.bf16.msra.mxu0 %v775
  %1088 = vmatprep.subr.bf16.mxu0 %v774
  %1089 = vmatpush2.bf16.msra.mxu0 %v773
  %1090 = vmatprep.subr.bf16.mxu0 %v772
  %1091 = vmatpush2.bf16.msra.mxu0 %v771
  %1092 = vmatprep.subr.bf16.mxu0 %v770
  %1093 = vmatpush2.bf16.msra.mxu0 %v769
  %1094 = vmatprep.mubr.bf16.mxu0 %v256
  %1095 = vmatmul.mubr.bf16.gmra.mxu0 %v255
  %v1096 = vpop.f32.mrf.mxu0
  %v1097 = vadd.f32 %v1044, %v1096
  %v1098 = vpop.f32.mrf.mxu0
  %v1099 = vadd.f32 %v1046, %v1098
  %v1100 = vpop.f32.mrf.mxu0
  %v1101 = vadd.f32 %v1048, %v1100
  %v1102 = vpop.f32.mrf.mxu0
  %v1103 = vadd.f32 %v1050, %v1102
  %1104 = vmatprep.mubr.bf16.mxu0 %v265
  %1105 = vmatmul.mubr.bf16.gmra.mxu0 %v264
  %v1106 = vpop.f32.mrf.mxu0
  %v1107 = vadd.f32 %v1054, %v1106
  %v1108 = vpop.f32.mrf.mxu0
  %v1109 = vadd.f32 %v1056, %v1108
  %v1110 = vpop.f32.mrf.mxu0
  %v1111 = vadd.f32 %v1058, %v1110
  %v1112 = vpop.f32.mrf.mxu0
  %v1113 = vadd.f32 %v1060, %v1112
  %1114 = vdwg.mxu0
  %1115 = vmatprep.subr.bf16.mxu0 %v800
  %1116 = vmatpush1.bf16.msra.mxu0 %v799
  %1117 = vmatprep.subr.bf16.mxu0 %v798
  %1118 = vmatpush1.bf16.msra.mxu0 %v797
  %1119 = vmatprep.subr.bf16.mxu0 %v796
  %1120 = vmatpush1.bf16.msra.mxu0 %v795
  %1121 = vmatprep.subr.bf16.mxu0 %v794
  %1122 = vmatpush1.bf16.msra.mxu0 %v793
  %1123 = vmatprep.subr.bf16.mxu0 %v792
  %1124 = vmatpush1.bf16.msra.mxu0 %v791
  %1125 = vmatprep.subr.bf16.mxu0 %v790
  %1126 = vmatpush1.bf16.msra.mxu0 %v789
  %1127 = vmatprep.subr.bf16.mxu0 %v788
  %1128 = vmatpush1.bf16.msra.mxu0 %v787
  %1129 = vmatprep.subr.bf16.mxu0 %v786
  %1130 = vmatpush1.bf16.msra.mxu0 %v785
  %1131 = vmatprep.subr.bf16.mxu0 %v816
  %1132 = vmatpush2.bf16.msra.mxu0 %v815
  %1133 = vmatprep.subr.bf16.mxu0 %v814
  %1134 = vmatpush2.bf16.msra.mxu0 %v813
  %1135 = vmatprep.subr.bf16.mxu0 %v812
  %1136 = vmatpush2.bf16.msra.mxu0 %v811
  %1137 = vmatprep.subr.bf16.mxu0 %v810
  %1138 = vmatpush2.bf16.msra.mxu0 %v809
  %1139 = vmatprep.subr.bf16.mxu0 %v808
  %1140 = vmatpush2.bf16.msra.mxu0 %v807
  %1141 = vmatprep.subr.bf16.mxu0 %v806
  %1142 = vmatpush2.bf16.msra.mxu0 %v805
  %1143 = vmatprep.subr.bf16.mxu0 %v804
  %1144 = vmatpush2.bf16.msra.mxu0 %v803
  %1145 = vmatprep.subr.bf16.mxu0 %v802
  %1146 = vmatpush2.bf16.msra.mxu0 %v801
  %1147 = vmatprep.mubr.bf16.mxu0 %v258
  %1148 = vmatmul.mubr.bf16.gmra.mxu0 %v257
  %v1149 = vpop.f32.mrf.mxu0
  %v1150 = vadd.f32 %v1097, %v1149
  %v1151 = vpop.f32.mrf.mxu0
  %v1152 = vadd.f32 %v1099, %v1151
  %v1153 = vpop.f32.mrf.mxu0
  %v1154 = vadd.f32 %v1101, %v1153
  %v1155 = vpop.f32.mrf.mxu0
  %v1156 = vadd.f32 %v1103, %v1155
  %1157 = vmatprep.mubr.bf16.mxu0 %v267
  %1158 = vmatmul.mubr.bf16.gmra.mxu0 %v266
  %v1159 = vpop.f32.mrf.mxu0
  %v1160 = vadd.f32 %v1107, %v1159
  %v1161 = vpop.f32.mrf.mxu0
  %v1162 = vadd.f32 %v1109, %v1161
  %v1163 = vpop.f32.mrf.mxu0
  %v1164 = vadd.f32 %v1111, %v1163
  %v1165 = vpop.f32.mrf.mxu0
  %v1166 = vadd.f32 %v1113, %v1165
  %1167 = vdwg.mxu0
  %1168 = vmatprep.subr.bf16.mxu0 %v832
  %1169 = vmatpush1.bf16.msra.mxu0 %v831
  %1170 = vmatprep.subr.bf16.mxu0 %v830
  %1171 = vmatpush1.bf16.msra.mxu0 %v829
  %1172 = vmatprep.subr.bf16.mxu0 %v828
  %1173 = vmatpush1.bf16.msra.mxu0 %v827
  %1174 = vmatprep.subr.bf16.mxu0 %v826
  %1175 = vmatpush1.bf16.msra.mxu0 %v825
  %1176 = vmatprep.subr.bf16.mxu0 %v824
  %1177 = vmatpush1.bf16.msra.mxu0 %v823
  %1178 = vmatprep.subr.bf16.mxu0 %v822
  %1179 = vmatpush1.bf16.msra.mxu0 %v821
  %1180 = vmatprep.subr.bf16.mxu0 %v820
  %1181 = vmatpush1.bf16.msra.mxu0 %v819
  %1182 = vmatprep.subr.bf16.mxu0 %v818
  %1183 = vmatpush1.bf16.msra.mxu0 %v817
  %1184 = vmatprep.subr.bf16.mxu0 %v848
  %1185 = vmatpush2.bf16.msra.mxu0 %v847
  %1186 = vmatprep.subr.bf16.mxu0 %v846
  %1187 = vmatpush2.bf16.msra.mxu0 %v845
  %1188 = vmatprep.subr.bf16.mxu0 %v844
  %1189 = vmatpush2.bf16.msra.mxu0 %v843
  %1190 = vmatprep.subr.bf16.mxu0 %v842
  %1191 = vmatpush2.bf16.msra.mxu0 %v841
  %1192 = vmatprep.subr.bf16.mxu0 %v840
  %1193 = vmatpush2.bf16.msra.mxu0 %v839
  %1194 = vmatprep.subr.bf16.mxu0 %v838
  %1195 = vmatpush2.bf16.msra.mxu0 %v837
  %1196 = vmatprep.subr.bf16.mxu0 %v836
  %1197 = vmatpush2.bf16.msra.mxu0 %v835
  %1198 = vmatprep.subr.bf16.mxu0 %v834
  %1199 = vmatpush2.bf16.msra.mxu0 %v833
  %1200 = vmatprep.mubr.bf16.mxu0 %v260
  %1201 = vmatmul.mubr.bf16.gmra.mxu0 %v259
  %v1202 = vpop.f32.mrf.mxu0
  %v1203 = vadd.f32 %v1150, %v1202
  %v1204 = vpop.f32.mrf.mxu0
  %v1205 = vadd.f32 %v1152, %v1204
  %v1206 = vpop.f32.mrf.mxu0
  %v1207 = vadd.f32 %v1154, %v1206
  %v1208 = vpop.f32.mrf.mxu0
  %v1209 = vadd.f32 %v1156, %v1208
  %1210 = vmatprep.mubr.bf16.mxu0 %v269
  %1211 = vmatmul.mubr.bf16.gmra.mxu0 %v268
  %v1212 = vpop.f32.mrf.mxu0
  %v1213 = vadd.f32 %v1160, %v1212
  %v1214 = vpop.f32.mrf.mxu0
  %v1215 = vadd.f32 %v1162, %v1214
  %v1216 = vpop.f32.mrf.mxu0
  %v1217 = vadd.f32 %v1164, %v1216
  %v1218 = vpop.f32.mrf.mxu0
  %v1219 = vadd.f32 %v1166, %v1218
  %1220 = vdwg.mxu0
  %1221 = vmatprep.subr.bf16.mxu0 %v864
  %1222 = vmatpush1.bf16.msra.mxu0 %v863
  %1223 = vmatprep.subr.bf16.mxu0 %v862
  %1224 = vmatpush1.bf16.msra.mxu0 %v861
  %1225 = vmatprep.subr.bf16.mxu0 %v860
  %1226 = vmatpush1.bf16.msra.mxu0 %v859
  %1227 = vmatprep.subr.bf16.mxu0 %v858
  %1228 = vmatpush1.bf16.msra.mxu0 %v857
  %1229 = vmatprep.subr.bf16.mxu0 %v856
  %1230 = vmatpush1.bf16.msra.mxu0 %v855
  %1231 = vmatprep.subr.bf16.mxu0 %v854
  %1232 = vmatpush1.bf16.msra.mxu0 %v853
  %1233 = vmatprep.subr.bf16.mxu0 %v852
  %1234 = vmatpush1.bf16.msra.mxu0 %v851
  %1235 = vmatprep.subr.bf16.mxu0 %v850
  %1236 = vmatpush1.bf16.msra.mxu0 %v849
  %1237 = vmatprep.subr.bf16.mxu0 0
  %1238 = vmatpush2.bf16.msra.mxu0 0
  %1239 = vmatprep.subr.bf16.mxu0 0
  %1240 = vmatpush2.bf16.msra.mxu0 0
  %1241 = vmatprep.subr.bf16.mxu0 0
  %1242 = vmatpush2.bf16.msra.mxu0 0
  %1243 = vmatprep.subr.bf16.mxu0 0
  %1244 = vmatpush2.bf16.msra.mxu0 0
  %1245 = vmatprep.subr.bf16.mxu0 0
  %1246 = vmatpush2.bf16.msra.mxu0 0
  %1247 = vmatprep.subr.bf16.mxu0 0
  %1248 = vmatpush2.bf16.msra.mxu0 0
  %1249 = vmatprep.subr.bf16.mxu0 0
  %1250 = vmatpush2.bf16.msra.mxu0 0
  %1251 = vmatprep.subr.bf16.mxu0 0
  %1252 = vmatpush2.bf16.msra.mxu0 0
  %1253 = vmatprep.mubr.bf16.mxu0 0
  %1254 = vmatmul.mubr.bf16.gmra.mxu0 %v261
  %v1255 = vpop.f32.mrf.mxu0
  %v1256 = vadd.f32 %v1203, %v1255
  %v1257 = vpop.f32.mrf.mxu0
  %v1258 = vadd.f32 %v1205, %v1257
  %v1259 = vpop.f32.mrf.mxu0
  %v1260 = vadd.f32 %v1207, %v1259
  %v1261 = vpop.f32.mrf.mxu0
  %v1262 = vadd.f32 %v1209, %v1261
  %1263 = vmatprep.mubr.bf16.mxu0 0
  %1264 = vmatmul.mubr.bf16.gmra.mxu0 %v270
  %v1265 = vpop.f32.mrf.mxu0
  %v1266 = vadd.f32 %v1213, %v1265
  %v1267 = vpop.f32.mrf.mxu0
  %v1268 = vadd.f32 %v1215, %v1267
  %v1269 = vpop.f32.mrf.mxu0
  %v1270 = vadd.f32 %v1217, %v1269
  %v1271 = vpop.f32.mrf.mxu0
  %v1272 = vadd.f32 %v1219, %v1271
  %1273 = vdwg.mxu0
  %v1274 = vmax.f32 %v1256, 0.0
  %v1275 = vmax.f32 %v1258, 0.0
  %v1276 = vmax.f32 %v1260, 0.0
  %v1277 = vmax.f32 %v1262, 0.0
  %v1278 = vmax.f32 %v1266, 0.0
  %v1279 = vmax.f32 %v1268, 0.0
  %v1280 = vmax.f32 %v1270, 0.0
  %v1281 = vmax.f32 %v1272, 0.0
  %v1282 = vpack.c.bf16 %v1276, %v1274
  %v1283 = vpack.c.bf16 %v1277, %v1275
  %v1284 = vpack.c.bf16 %v1280, %v1278
  %v1285 = vpack.c.bf16 %v1281, %v1279
  %v1286 = vld [vmem:[%s3] sm:$0xf]
  %v1287 = vld [vmem:[%s3 + $0x4] sm:$0xf]
  %v1288 = vld [vmem:[%s3 + $0x8] sm:$0xf]
  %v1289 = vld [vmem:[%s3 + $0xc] sm:$0xf]
  %v1290 = vld [vmem:[%s3 + $0x10] sm:$0xf]
  %v1291 = vld [vmem:[%s3 + $0x14] sm:$0xf]
  %v1292 = vld [vmem:[%s3 + $0x18] sm:$0xf]
  %v1293 = vld [vmem:[%s3 + $0x1c] sm:$0xf]
  %v1294 = vld [vmem:[%s3 + $0x20] sm:$0xf]
  %v1295 = vld [vmem:[%s3 + $0x24] sm:$0xf]
  %v1296 = vld [vmem:[%s3 + $0x28] sm:$0xf]
  %v1297 = vld [vmem:[%s3 + $0x2c] sm:$0xf]
  %v1298 = vld [vmem:[%s3 + $0x30] sm:$0xf]
  %v1299 = vld [vmem:[%s3 + $0x34] sm:$0xf]
  %v1300 = vld [vmem:[%s3 + $0x38] sm:$0xf]
  %v1301 = vld [vmem:[%s3 + $0x3c] sm:$0xf]
  %v1302 = vld [vmem:[%s3 + $0x40] sm:$0xf]
  %v1303 = vld [vmem:[%s3 + $0x44] sm:$0xf]
  %v1304 = vld [vmem:[%s3 + $0x48] sm:$0xf]
  %v1305 = vld [vmem:[%s3 + $0x4c] sm:$0xf]
  %v1306 = vld [vmem:[%s3 + $0x50] sm:$0xf]
  %v1307 = vld [vmem:[%s3 + $0x54] sm:$0xf]
  %v1308 = vld [vmem:[%s3 + $0x58] sm:$0xf]
  %v1309 = vld [vmem:[%s3 + $0x5c] sm:$0xf]
  %v1310 = vld [vmem:[%s3 + $0x60] sm:$0xf]
  %v1311 = vld [vmem:[%s3 + $0x64] sm:$0xf]
  %v1312 = vld [vmem:[%s3 + $0x68] sm:$0xf]
  %v1313 = vld [vmem:[%s3 + $0x6c] sm:$0xf]
  %v1314 = vld [vmem:[%s3 + $0x70] sm:$0xf]
  %v1315 = vld [vmem:[%s3 + $0x74] sm:$0xf]
  %v1316 = vld [vmem:[%s3 + $0x78] sm:$0xf]
  %v1317 = vld [vmem:[%s3 + $0x7c] sm:$0xf]
  %v1318 = vld [vmem:[%s4] sm:$0x1]
  %v1320 = vlaneseq
  %v1321 = vshrl.u32 %v1320, 7
  %v1322 = vsub.s32 0, %v1321
  %v1323 = vrot.slane %v1318, %v1322
  %v1357 = vunpack.c.l.b16 %v1286
  %v1358 = vunpack.c.l.b16 %v1287
  %v1359 = vunpack.c.l.b16 %v1288
  %v1360 = vunpack.c.l.b16 %v1289
  %v1361 = vunpack.c.l.b16 %v1290
  %v1362 = vunpack.c.l.b16 %v1291
  %v1363 = vunpack.c.l.b16 %v1292
  %v1364 = vunpack.c.l.b16 %v1293
  %v1365 = vunpack.c.l.b16 %v1294
  %v1366 = vunpack.c.l.b16 %v1295
  %v1367 = vunpack.c.l.b16 %v1296
  %v1368 = vunpack.c.l.b16 %v1297
  %v1369 = vunpack.c.l.b16 %v1298
  %v1370 = vunpack.c.l.b16 %v1299
  %v1371 = vunpack.c.l.b16 %v1300
  %v1372 = vunpack.c.l.b16 %v1301
  %v1373 = vunpack.c.l.b16 %v1302
  %v1374 = vunpack.c.l.b16 %v1303
  %v1375 = vunpack.c.l.b16 %v1304
  %v1376 = vunpack.c.l.b16 %v1305
  %v1377 = vunpack.c.l.b16 %v1306
  %v1378 = vunpack.c.l.b16 %v1307
  %v1379 = vunpack.c.l.b16 %v1308
  %v1380 = vunpack.c.l.b16 %v1309
  %v1381 = vunpack.c.l.b16 %v1310
  %v1382 = vunpack.c.l.b16 %v1311
  %v1383 = vunpack.c.l.b16 %v1312
  %v1384 = vunpack.c.l.b16 %v1313
  %v1385 = vunpack.c.l.b16 %v1314
  %v1386 = vunpack.c.l.b16 %v1315
  %v1387 = vunpack.c.l.b16 %v1316
  %v1388 = vunpack.c.l.b16 %v1317
  %v1389 = vpack.c.b16 %v1358, %v1357
  %v1390 = vpack.c.b16 %v1360, %v1359
  %v1391 = vpack.c.b16 %v1362, %v1361
  %v1392 = vpack.c.b16 %v1364, %v1363
  %v1393 = vpack.c.b16 %v1366, %v1365
  %v1394 = vpack.c.b16 %v1368, %v1367
  %v1395 = vpack.c.b16 %v1370, %v1369
  %v1396 = vpack.c.b16 %v1372, %v1371
  %v1397 = vpack.c.b16 %v1374, %v1373
  %v1398 = vpack.c.b16 %v1376, %v1375
  %v1399 = vpack.c.b16 %v1378, %v1377
  %v1400 = vpack.c.b16 %v1380, %v1379
  %v1401 = vpack.c.b16 %v1382, %v1381
  %v1402 = vpack.c.b16 %v1384, %v1383
  %v1403 = vpack.c.b16 %v1386, %v1385
  %v1404 = vpack.c.b16 %v1388, %v1387
  %1421 = vmatprep.subr.bf16.mxu0 0
  %1422 = vmatpush1.bf16.msra.mxu0 %v1396
  %1423 = vmatprep.subr.bf16.mxu0 0
  %1424 = vmatpush1.bf16.msra.mxu0 %v1395
  %1425 = vmatprep.subr.bf16.mxu0 0
  %1426 = vmatpush1.bf16.msra.mxu0 %v1394
  %1427 = vmatprep.subr.bf16.mxu0 0
  %1428 = vmatpush1.bf16.msra.mxu0 %v1393
  %1429 = vmatprep.subr.bf16.mxu0 0
  %1430 = vmatpush1.bf16.msra.mxu0 %v1392
  %1431 = vmatprep.subr.bf16.mxu0 0
  %1432 = vmatpush1.bf16.msra.mxu0 %v1391
  %1433 = vmatprep.subr.bf16.mxu0 0
  %1434 = vmatpush1.bf16.msra.mxu0 %v1390
  %1435 = vmatprep.subr.bf16.mxu0 0
  %1436 = vmatpush1.bf16.msra.mxu0 %v1389
  %1437 = vmatprep.subr.bf16.mxu0 0
  %1438 = vmatpush2.bf16.msra.mxu0 %v1404
  %1439 = vmatprep.subr.bf16.mxu0 0
  %1440 = vmatpush2.bf16.msra.mxu0 %v1403
  %1441 = vmatprep.subr.bf16.mxu0 0
  %1442 = vmatpush2.bf16.msra.mxu0 %v1402
  %1443 = vmatprep.subr.bf16.mxu0 0
  %1444 = vmatpush2.bf16.msra.mxu0 %v1401
  %1445 = vmatprep.subr.bf16.mxu0 0
  %1446 = vmatpush2.bf16.msra.mxu0 %v1400
  %1447 = vmatprep.subr.bf16.mxu0 0
  %1448 = vmatpush2.bf16.msra.mxu0 %v1399
  %1449 = vmatprep.subr.bf16.mxu0 0
  %1450 = vmatpush2.bf16.msra.mxu0 %v1398
  %1451 = vmatprep.subr.bf16.mxu0 0
  %1452 = vmatpush2.bf16.msra.mxu0 %v1397
  %1453 = vmatprep.mubr.bf16.mxu0 %v1283
  %1454 = vmatmul.mubr.bf16.gmra.mxu0 %v1282
  %v1455 = vpop.f32.mrf.mxu0
  %v1456 = vadd.f32 %v1323, %v1455
  %v1457 = vpop.f32.mrf.mxu0
  %v1458 = vpop.f32.mrf.mxu0
  %v1459 = vadd.f32 %v1323, %v1458
  %v1460 = vpop.f32.mrf.mxu0
  %1461 = vmatprep.mubr.bf16.mxu0 %v1285
  %1462 = vmatmul.mubr.bf16.gmra.mxu0 %v1284
  %v1463 = vpop.f32.mrf.mxu0
  %v1464 = vadd.f32 %v1323, %v1463
  %v1465 = vpop.f32.mrf.mxu0
  %v1466 = vpop.f32.mrf.mxu0
  %v1467 = vadd.f32 %v1323, %v1466
  %v1468 = vpop.f32.mrf.mxu0
  %1469 = vdwg.mxu0
  %v1470 = vmax.f32 %v1456, 0.0
  %v1471 = vmax.f32 %v1459, 0.0
  %v1472 = vmax.f32 %v1464, 0.0
  %v1473 = vmax.f32 %v1467, 0.0
  %v1474 = vpack.c.bf16 %v1471, %v1470
  %v1475 = vpack.c.bf16 %v1473, %v1472
  %v1478 = vunpack.c.l.b16 %v1474
  %v1479 = vunpack.c.h.b16 %v1474
  %v1480 = vunpack.c.l.b16 %v1475
  %v1481 = vunpack.c.h.b16 %v1475
  %v1482 = vpack.c.b16 %v1478, %v1478
  %v1483 = vpack.c.b16 %v1479, %v1479
  %v1484 = vpack.c.b16 %v1480, %v1480
  %v1485 = vpack.c.b16 %v1481, %v1481
  %vm1490 = vcmask 519168
  %1491 = vst.msk [vmem:[%s5] sm:$0xf] %vm1490, %v1482
  %1492 = vst.msk [vmem:[%s5 + $0x4] sm:$0xf] %vm1490, %v1483
  %1493 = vst.msk [vmem:[%s5 + $0x8] sm:$0xf] %vm1490, %v1484
  %1494 = vst.msk [vmem:[%s5 + $0xc] sm:$0xf] %vm1490, %v1485
  // Predicated region
  $region22: #{forward.6} parent=0 // pred_check
    _
  $region23: #{forward.6} parent=0 // pred_check_branch
    %1496 = sbr.rel (0) target = $region25
  $region24: #{forward.6} parent=0 // pred_region
    _
  $region25: #{forward.6} parent=0 // pred_fallthru
    _
  // Predicated region
  $region26: #{forward.6} parent=0 // pred_check
    _
  $region27: #{forward.6} parent=0 // pred_check_branch
    %1498 = sbr.rel (0) target = $region29
  $region28: #{forward.6} parent=0 // pred_region
    _
  $region29: #{forward.6} parent=0 // pred_fallthru
    _

// kernel: forward.5
$region0: #{forward.5}
  #allocation0 [shape = 'u32[]', space=smem, size = 0x4, offset = 0x4, fixed_abs, tag = 'smem constant byte address 0x4 - core index']
  #allocation1 [shape = 'u32[144,128]{1,0:T(1,128)}', space=vmem, size = 0x12000, scoped, tag = 'internal scratch']
  %s0 = inlined_call_operand.vmem [shape: bf16[9,72,576], index: 0, kind: input, shape index: {}]
  %s1 = inlined_call_operand.vmem [shape: bf16[576,128], index: 1, kind: input, shape index: {}]
  %s2 = inlined_call_operand.vmem [shape: f32[1,128], index: 2, kind: input, shape index: {}]
  %s3 = inlined_call_operand.vmem [shape: bf16[72,128], index: 3, kind: output, shape index: {}]
  %s4 = sld [smem:[#allocation0]]
  $region22: #{forward.5} parent=0
    _
  %s6 = ssub.s32 1, %s4
  %s7 = scalar_select 0, %s6, %s4
  // Predicated region
  $region2: #{forward.5} parent=0 // pred_check
    _
  $region3: #{forward.5} parent=0 // pred_check_branch
    %9 = sbr.rel (0) target = $region5
  $region4: #{forward.5} parent=0 // pred_region
    _
  $region5: #{forward.5} parent=0 // pred_fallthru
    _
  // Predicated region
  $region6: #{forward.5} parent=0 // pred_check
    _
  $region7: #{forward.5} parent=0 // pred_check_branch
    %11 = sbr.rel (0) target = $region9
  $region8: #{forward.5} parent=0 // pred_region
    _
  $region9: #{forward.5} parent=0 // pred_fallthru
    _
  // Predicated region
  $region10: #{forward.5} parent=0 // pred_check
    _
  $region11: #{forward.5} parent=0 // pred_check_branch
    %13 = sbr.rel (0) target = $region13
  $region12: #{forward.5} parent=0 // pred_region
    _
  $region13: #{forward.5} parent=0 // pred_fallthru
    _
  %v15 = vld [vmem:[%s1] sm:$0xf]
  %v16 = vld [vmem:[%s1 + $0x4] sm:$0xf]
  %v17 = vld [vmem:[%s1 + $0x8] sm:$0xf]
  %v18 = vld [vmem:[%s1 + $0xc] sm:$0xf]
  %v19 = vld [vmem:[%s1 + $0x10] sm:$0xf]
  %v20 = vld [vmem:[%s1 + $0x14] sm:$0xf]
  %v21 = vld [vmem:[%s1 + $0x18] sm:$0xf]
  %v22 = vld [vmem:[%s1 + $0x1c] sm:$0xf]
  %v23 = vld [vmem:[%s1 + $0x20] sm:$0xf]
  %v24 = vld [vmem:[%s1 + $0x24] sm:$0xf]
  %v25 = vld [vmem:[%s1 + $0x28] sm:$0xf]
  %v26 = vld [vmem:[%s1 + $0x2c] sm:$0xf]
  %v27 = vld [vmem:[%s1 + $0x30] sm:$0xf]
  %v28 = vld [vmem:[%s1 + $0x34] sm:$0xf]
  %v29 = vld [vmem:[%s1 + $0x38] sm:$0xf]
  %v30 = vld [vmem:[%s1 + $0x3c] sm:$0xf]
  %v31 = vld [vmem:[%s1 + $0x40] sm:$0xf]
  %v32 = vld [vmem:[%s1 + $0x44] sm:$0xf]
  %v33 = vld [vmem:[%s1 + $0x48] sm:$0xf]
  %v34 = vld [vmem:[%s1 + $0x4c] sm:$0xf]
  %v35 = vld [vmem:[%s1 + $0x50] sm:$0xf]
  %v36 = vld [vmem:[%s1 + $0x54] sm:$0xf]
  %v37 = vld [vmem:[%s1 + $0x58] sm:$0xf]
  %v38 = vld [vmem:[%s1 + $0x5c] sm:$0xf]
  %v39 = vld [vmem:[%s1 + $0x60] sm:$0xf]
  %v40 = vld [vmem:[%s1 + $0x64] sm:$0xf]
  %v41 = vld [vmem:[%s1 + $0x68] sm:$0xf]
  %v42 = vld [vmem:[%s1 + $0x6c] sm:$0xf]
  %v43 = vld [vmem:[%s1 + $0x70] sm:$0xf]
  %v44 = vld [vmem:[%s1 + $0x74] sm:$0xf]
  %v45 = vld [vmem:[%s1 + $0x78] sm:$0xf]
  %v46 = vld [vmem:[%s1 + $0x7c] sm:$0xf]
  %v47 = vld [vmem:[%s1 + $0x80] sm:$0xf]
  %v48 = vld [vmem:[%s1 + $0x84] sm:$0xf]
  %v49 = vld [vmem:[%s1 + $0x88] sm:$0xf]
  %v50 = vld [vmem:[%s1 + $0x8c] sm:$0xf]
  %v51 = vld [vmem:[%s1 + $0x90] sm:$0xf]
  %v52 = vld [vmem:[%s1 + $0x94] sm:$0xf]
  %v53 = vld [vmem:[%s1 + $0x98] sm:$0xf]
  %v54 = vld [vmem:[%s1 + $0x9c] sm:$0xf]
  %v55 = vld [vmem:[%s1 + $0xa0] sm:$0xf]
  %v56 = vld [vmem:[%s1 + $0xa4] sm:$0xf]
  %v57 = vld [vmem:[%s1 + $0xa8] sm:$0xf]
  %v58 = vld [vmem:[%s1 + $0xac] sm:$0xf]
  %v59 = vld [vmem:[%s1 + $0xb0] sm:$0xf]
  %v60 = vld [vmem:[%s1 + $0xb4] sm:$0xf]
  %v61 = vld [vmem:[%s1 + $0xb8] sm:$0xf]
  %v62 = vld [vmem:[%s1 + $0xbc] sm:$0xf]
  %v63 = vld [vmem:[%s1 + $0xc0] sm:$0xf]
  %v64 = vld [vmem:[%s1 + $0xc4] sm:$0xf]
  %v65 = vld [vmem:[%s1 + $0xc8] sm:$0xf]
  %v66 = vld [vmem:[%s1 + $0xcc] sm:$0xf]
  %v67 = vld [vmem:[%s1 + $0xd0] sm:$0xf]
  %v68 = vld [vmem:[%s1 + $0xd4] sm:$0xf]
  %v69 = vld [vmem:[%s1 + $0xd8] sm:$0xf]
  %v70 = vld [vmem:[%s1 + $0xdc] sm:$0xf]
  %v71 = vld [vmem:[%s1 + $0xe0] sm:$0xf]
  %v72 = vld [vmem:[%s1 + $0xe4] sm:$0xf]
  %v73 = vld [vmem:[%s1 + $0xe8] sm:$0xf]
  %v74 = vld [vmem:[%s1 + $0xec] sm:$0xf]
  %v75 = vld [vmem:[%s1 + $0xf0] sm:$0xf]
  %v76 = vld [vmem:[%s1 + $0xf4] sm:$0xf]
  %v77 = vld [vmem:[%s1 + $0xf8] sm:$0xf]
  %v78 = vld [vmem:[%s1 + $0xfc] sm:$0xf]
  %v79 = vld [vmem:[%s1 + $0x100] sm:$0xf]
  %v80 = vld [vmem:[%s1 + $0x104] sm:$0xf]
  %v81 = vld [vmem:[%s1 + $0x108] sm:$0xf]
  %v82 = vld [vmem:[%s1 + $0x10c] sm:$0xf]
  %v83 = vld [vmem:[%s1 + $0x110] sm:$0xf]
  %v84 = vld [vmem:[%s1 + $0x114] sm:$0xf]
  %v85 = vld [vmem:[%s1 + $0x118] sm:$0xf]
  %v86 = vld [vmem:[%s1 + $0x11c] sm:$0xf]
  %v87 = vld [vmem:[%s2] sm:$0x1]
  %v88 = vld [vmem:[%s0] sm:$0xff]
  %v89 = vld [vmem:[%s0 + $0x8] sm:$0xff]
  %v90 = vld [vmem:[%s0 + $0x10] sm:$0xf]
  %v91 = vld [vmem:[%s0 + $0x14] sm:$0xff]
  %v92 = vld [vmem:[%s0 + $0x1c] sm:$0xff]
  %v93 = vld [vmem:[%s0 + $0x24] sm:$0xf]
  %v94 = vld [vmem:[%s0 + $0x28] sm:$0xff]
  %v95 = vld [vmem:[%s0 + $0x30] sm:$0xff]
  %v96 = vld [vmem:[%s0 + $0x38] sm:$0xf]
  %v97 = vld [vmem:[%s0 + $0x3c] sm:$0xff]
  %v98 = vld [vmem:[%s0 + $0x44] sm:$0xff]
  %v99 = vld [vmem:[%s0 + $0x4c] sm:$0xf]
  %v100 = vld [vmem:[%s0 + $0x50] sm:$0xff]
  %v101 = vld [vmem:[%s0 + $0x58] sm:$0xff]
  %v102 = vld [vmem:[%s0 + $0x60] sm:$0xf]
  %v103 = vld [vmem:[%s0 + $0x64] sm:$0xff]
  %v104 = vld [vmem:[%s0 + $0x6c] sm:$0xff]
  %v105 = vld [vmem:[%s0 + $0x74] sm:$0xf]
  %v106 = vld [vmem:[%s0 + $0x78] sm:$0xff]
  %v107 = vld [vmem:[%s0 + $0x80] sm:$0xff]
  %v108 = vld [vmem:[%s0 + $0x88] sm:$0xf]
  %v109 = vld [vmem:[%s0 + $0x8c] sm:$0xff]
  %v110 = vld [vmem:[%s0 + $0x94] sm:$0xff]
  %v111 = vld [vmem:[%s0 + $0x9c] sm:$0xf]
  %v112 = vld [vmem:[%s0 + $0xa0] sm:$0xff]
  %v113 = vld [vmem:[%s0 + $0xa8] sm:$0xff]
  %v114 = vld [vmem:[%s0 + $0xb0] sm:$0xf]
  %v116 = vlaneseq
  %v117 = vshrl.u32 %v116, 7
  %v118 = vsub.s32 0, %v117
  %v119 = vrot.slane %v87, %v118
  %v148 = vunpack.c.l.b16 %v88
  %v149 = vunpack.c.h.b16 %v88
  %v150 = vunpack.c.l.b16 %v89
  %v151 = vunpack.c.h.b16 %v89
  %v152 = vunpack.c.l.b16 %v90
  %v153 = vunpack.c.l.b16 %v91
  %v154 = vunpack.c.h.b16 %v91
  %v155 = vunpack.c.l.b16 %v92
  %v156 = vunpack.c.h.b16 %v92
  %v157 = vunpack.c.l.b16 %v93
  %v158 = vunpack.c.l.b16 %v94
  %v159 = vunpack.c.h.b16 %v94
  %v160 = vunpack.c.l.b16 %v95
  %v161 = vunpack.c.h.b16 %v95
  %v162 = vunpack.c.l.b16 %v96
  %v163 = vunpack.c.l.b16 %v97
  %v164 = vunpack.c.h.b16 %v97
  %v165 = vunpack.c.l.b16 %v98
  %v166 = vunpack.c.h.b16 %v98
  %v167 = vunpack.c.l.b16 %v99
  %v168 = vunpack.c.l.b16 %v100
  %v169 = vunpack.c.h.b16 %v100
  %v170 = vunpack.c.l.b16 %v101
  %v171 = vunpack.c.h.b16 %v101
  %v172 = vunpack.c.l.b16 %v102
  %v173 = vunpack.c.l.b16 %v103
  %v174 = vunpack.c.h.b16 %v103
  %v175 = vunpack.c.l.b16 %v104
  %v176 = vunpack.c.h.b16 %v104
  %v177 = vunpack.c.l.b16 %v105
  %v178 = vunpack.c.l.b16 %v106
  %v179 = vunpack.c.h.b16 %v106
  %v180 = vunpack.c.l.b16 %v107
  %v181 = vunpack.c.h.b16 %v107
  %v182 = vunpack.c.l.b16 %v108
  %v183 = vunpack.c.l.b16 %v109
  %v184 = vunpack.c.h.b16 %v109
  %v185 = vunpack.c.l.b16 %v110
  %v186 = vunpack.c.h.b16 %v110
  %v187 = vunpack.c.l.b16 %v111
  %v188 = vunpack.c.l.b16 %v112
  %v189 = vunpack.c.h.b16 %v112
  %v190 = vunpack.c.l.b16 %v113
  %v191 = vunpack.c.h.b16 %v113
  %v192 = vunpack.c.l.b16 %v114
  %v193 = vpack.c.b16 %v153, %v148
  %v194 = vpack.c.b16 %v154, %v149
  %v195 = vpack.c.b16 %v155, %v150
  %v196 = vpack.c.b16 %v156, %v151
  %v197 = vpack.c.b16 %v157, %v152
  %v198 = vpack.c.b16 %v163, %v158
  %v199 = vpack.c.b16 %v164, %v159
  %v200 = vpack.c.b16 %v165, %v160
  %v201 = vpack.c.b16 %v166, %v161
  %v202 = vpack.c.b16 %v167, %v162
  %v203 = vpack.c.b16 %v173, %v168
  %v204 = vpack.c.b16 %v174, %v169
  %v205 = vpack.c.b16 %v175, %v170
  %v206 = vpack.c.b16 %v176, %v171
  %v207 = vpack.c.b16 %v177, %v172
  %v208 = vpack.c.b16 %v183, %v178
  %v209 = vpack.c.b16 %v184, %v179
  %v210 = vpack.c.b16 %v185, %v180
  %v211 = vpack.c.b16 %v186, %v181
  %v212 = vpack.c.b16 %v187, %v182
  %v213 = vpack.c.b16 %v188, %v188
  %v214 = vpack.c.b16 %v189, %v189
  %v215 = vpack.c.b16 %v190, %v190
  %v216 = vpack.c.b16 %v191, %v191
  %v217 = vpack.c.b16 %v192, %v192
  %v310 = vunpack.c.l.b16 %v15
  %v311 = vunpack.c.l.b16 %v16
  %v312 = vunpack.c.l.b16 %v17
  %v313 = vunpack.c.l.b16 %v18
  %v314 = vunpack.c.l.b16 %v19
  %v315 = vunpack.c.l.b16 %v20
  %v316 = vunpack.c.l.b16 %v21
  %v317 = vunpack.c.l.b16 %v22
  %v318 = vunpack.c.l.b16 %v23
  %v319 = vunpack.c.l.b16 %v24
  %v320 = vunpack.c.l.b16 %v25
  %v321 = vunpack.c.l.b16 %v26
  %v322 = vunpack.c.l.b16 %v27
  %v323 = vunpack.c.l.b16 %v28
  %v324 = vunpack.c.l.b16 %v29
  %v325 = vunpack.c.l.b16 %v30
  %v326 = vunpack.c.l.b16 %v31
  %v327 = vunpack.c.l.b16 %v32
  %v328 = vunpack.c.l.b16 %v33
  %v329 = vunpack.c.l.b16 %v34
  %v330 = vunpack.c.l.b16 %v35
  %v331 = vunpack.c.l.b16 %v36
  %v332 = vunpack.c.l.b16 %v37
  %v333 = vunpack.c.l.b16 %v38
  %v334 = vunpack.c.l.b16 %v39
  %v335 = vunpack.c.l.b16 %v40
  %v336 = vunpack.c.l.b16 %v41
  %v337 = vunpack.c.l.b16 %v42
  %v338 = vunpack.c.l.b16 %v43
  %v339 = vunpack.c.l.b16 %v44
  %v340 = vunpack.c.l.b16 %v45
  %v341 = vunpack.c.l.b16 %v46
  %v342 = vunpack.c.l.b16 %v47
  %v343 = vunpack.c.l.b16 %v48
  %v344 = vunpack.c.l.b16 %v49
  %v345 = vunpack.c.l.b16 %v50
  %v346 = vunpack.c.l.b16 %v51
  %v347 = vunpack.c.l.b16 %v52
  %v348 = vunpack.c.l.b16 %v53
  %v349 = vunpack.c.l.b16 %v54
  %v350 = vunpack.c.l.b16 %v55
  %v351 = vunpack.c.l.b16 %v56
  %v352 = vunpack.c.l.b16 %v57
  %v353 = vunpack.c.l.b16 %v58
  %v354 = vunpack.c.l.b16 %v59
  %v355 = vunpack.c.l.b16 %v60
  %v356 = vunpack.c.l.b16 %v61
  %v357 = vunpack.c.l.b16 %v62
  %v358 = vunpack.c.l.b16 %v63
  %v359 = vunpack.c.l.b16 %v64
  %v360 = vunpack.c.l.b16 %v65
  %v361 = vunpack.c.l.b16 %v66
  %v362 = vunpack.c.l.b16 %v67
  %v363 = vunpack.c.l.b16 %v68
  %v364 = vunpack.c.l.b16 %v69
  %v365 = vunpack.c.l.b16 %v70
  %v366 = vunpack.c.l.b16 %v71
  %v367 = vunpack.c.l.b16 %v72
  %v368 = vunpack.c.l.b16 %v73
  %v369 = vunpack.c.l.b16 %v74
  %v370 = vunpack.c.l.b16 %v75
  %v371 = vunpack.c.l.b16 %v76
  %v372 = vunpack.c.l.b16 %v77
  %v373 = vunpack.c.l.b16 %v78
  %v374 = vunpack.c.l.b16 %v79
  %v375 = vunpack.c.l.b16 %v80
  %v376 = vunpack.c.l.b16 %v81
  %v377 = vunpack.c.l.b16 %v82
  %v378 = vunpack.c.l.b16 %v83
  %v379 = vunpack.c.l.b16 %v84
  %v380 = vunpack.c.l.b16 %v85
  %v381 = vunpack.c.l.b16 %v86
  %v382 = vpack.c.b16 %v311, %v310
  %v383 = vpack.c.b16 %v313, %v312
  %v384 = vpack.c.b16 %v315, %v314
  %v385 = vpack.c.b16 %v317, %v316
  %v386 = vpack.c.b16 %v319, %v318
  %v387 = vpack.c.b16 %v321, %v320
  %v388 = vpack.c.b16 %v323, %v322
  %v389 = vpack.c.b16 %v325, %v324
  %v390 = vpack.c.b16 %v327, %v326
  %v391 = vpack.c.b16 %v329, %v328
  %v392 = vpack.c.b16 %v331, %v330
  %v393 = vpack.c.b16 %v333, %v332
  %v394 = vpack.c.b16 %v335, %v334
  %v395 = vpack.c.b16 %v337, %v336
  %v396 = vpack.c.b16 %v339, %v338
  %v397 = vpack.c.b16 %v341, %v340
  %v398 = vpack.c.b16 %v343, %v342
  %v399 = vpack.c.b16 %v345, %v344
  %v400 = vpack.c.b16 %v347, %v346
  %v401 = vpack.c.b16 %v349, %v348
  %v402 = vpack.c.b16 %v351, %v350
  %v403 = vpack.c.b16 %v353, %v352
  %v404 = vpack.c.b16 %v355, %v354
  %v405 = vpack.c.b16 %v357, %v356
  %v406 = vpack.c.b16 %v359, %v358
  %v407 = vpack.c.b16 %v361, %v360
  %v408 = vpack.c.b16 %v363, %v362
  %v409 = vpack.c.b16 %v365, %v364
  %v410 = vpack.c.b16 %v367, %v366
  %v411 = vpack.c.b16 %v369, %v368
  %v412 = vpack.c.b16 %v371, %v370
  %v413 = vpack.c.b16 %v373, %v372
  %v414 = vpack.c.b16 %v375, %v374
  %v415 = vpack.c.b16 %v377, %v376
  %v416 = vpack.c.b16 %v379, %v378
  %v417 = vpack.c.b16 %v381, %v380
  %vm454 = vcmask 523264
  %v456 = vsel %vm454, %v197, 0
  %v459 = vsel %vm454, %v202, 0
  %v462 = vsel %vm454, %v207, 0
  %v465 = vsel %vm454, %v212, 0
  %v468 = vsel %vm454, %v217, 0
  %470 = vmatprep.subr.bf16.mxu0 0
  %471 = vmatpush1.bf16.msra.mxu0 %v389
  %472 = vmatprep.subr.bf16.mxu0 0
  %473 = vmatpush1.bf16.msra.mxu0 %v388
  %474 = vmatprep.subr.bf16.mxu0 0
  %475 = vmatpush1.bf16.msra.mxu0 %v387
  %476 = vmatprep.subr.bf16.mxu0 0
  %477 = vmatpush1.bf16.msra.mxu0 %v386
  %478 = vmatprep.subr.bf16.mxu0 0
  %479 = vmatpush1.bf16.msra.mxu0 %v385
  %480 = vmatprep.subr.bf16.mxu0 0
  %481 = vmatpush1.bf16.msra.mxu0 %v384
  %482 = vmatprep.subr.bf16.mxu0 0
  %483 = vmatpush1.bf16.msra.mxu0 %v383
  %484 = vmatprep.subr.bf16.mxu0 0
  %485 = vmatpush1.bf16.msra.mxu0 %v382
  %486 = vmatprep.subr.bf16.mxu0 0
  %487 = vmatpush2.bf16.msra.mxu0 %v397
  %488 = vmatprep.subr.bf16.mxu0 0
  %489 = vmatpush2.bf16.msra.mxu0 %v396
  %490 = vmatprep.subr.bf16.mxu0 0
  %491 = vmatpush2.bf16.msra.mxu0 %v395
  %492 = vmatprep.subr.bf16.mxu0 0
  %493 = vmatpush2.bf16.msra.mxu0 %v394
  %494 = vmatprep.subr.bf16.mxu0 0
  %495 = vmatpush2.bf16.msra.mxu0 %v393
  %496 = vmatprep.subr.bf16.mxu0 0
  %497 = vmatpush2.bf16.msra.mxu0 %v392
  %498 = vmatprep.subr.bf16.mxu0 0
  %499 = vmatpush2.bf16.msra.mxu0 %v391
  %500 = vmatprep.subr.bf16.mxu0 0
  %501 = vmatpush2.bf16.msra.mxu0 %v390
  %502 = vmatprep.mubr.bf16.mxu0 %v194
  %503 = vmatmul.mubr.bf16.gmra.mxu0 %v193
  %v504 = vpop.f32.mrf.mxu0
  %v505 = vadd.f32 %v119, %v504
  %v506 = vpop.f32.mrf.mxu0
  %v507 = vpop.f32.mrf.mxu0
  %v508 = vadd.f32 %v119, %v507
  %v509 = vpop.f32.mrf.mxu0
  %510 = vmatprep.mubr.bf16.mxu0 %v199
  %511 = vmatmul.mubr.bf16.gmra.mxu0 %v198
  %v512 = vpop.f32.mrf.mxu0
  %v513 = vadd.f32 %v119, %v512
  %v514 = vpop.f32.mrf.mxu0
  %v515 = vpop.f32.mrf.mxu0
  %v516 = vadd.f32 %v119, %v515
  %v517 = vpop.f32.mrf.mxu0
  %518 = vmatprep.mubr.bf16.mxu0 %v204
  %519 = vmatmul.mubr.bf16.gmra.mxu0 %v203
  %v520 = vpop.f32.mrf.mxu0
  %v521 = vadd.f32 %v119, %v520
  %v522 = vpop.f32.mrf.mxu0
  %v523 = vpop.f32.mrf.mxu0
  %v524 = vadd.f32 %v119, %v523
  %v525 = vpop.f32.mrf.mxu0
  %526 = vmatprep.mubr.bf16.mxu0 %v209
  %527 = vmatmul.mubr.bf16.gmra.mxu0 %v208
  %v528 = vpop.f32.mrf.mxu0
  %v529 = vadd.f32 %v119, %v528
  %v530 = vpop.f32.mrf.mxu0
  %v531 = vpop.f32.mrf.mxu0
  %v532 = vadd.f32 %v119, %v531
  %v533 = vpop.f32.mrf.mxu0
  %534 = vmatprep.mubr.bf16.mxu0 %v214
  %535 = vmatmul.mubr.bf16.gmra.mxu0 %v213
  %v536 = vpop.f32.mrf.mxu0
  %v537 = vadd.f32 %v119, %v536
  %v538 = vpop.f32.mrf.mxu0
  %v539 = vpop.f32.mrf.mxu0
  %v540 = vpop.f32.mrf.mxu0
  %541 = vdwg.mxu0
  %542 = vmatprep.subr.bf16.mxu0 0
  %543 = vmatpush1.bf16.msra.mxu0 %v405
  %544 = vmatprep.subr.bf16.mxu0 0
  %545 = vmatpush1.bf16.msra.mxu0 %v404
  %546 = vmatprep.subr.bf16.mxu0 0
  %547 = vmatpush1.bf16.msra.mxu0 %v403
  %548 = vmatprep.subr.bf16.mxu0 0
  %549 = vmatpush1.bf16.msra.mxu0 %v402
  %550 = vmatprep.subr.bf16.mxu0 0
  %551 = vmatpush1.bf16.msra.mxu0 %v401
  %552 = vmatprep.subr.bf16.mxu0 0
  %553 = vmatpush1.bf16.msra.mxu0 %v400
  %554 = vmatprep.subr.bf16.mxu0 0
  %555 = vmatpush1.bf16.msra.mxu0 %v399
  %556 = vmatprep.subr.bf16.mxu0 0
  %557 = vmatpush1.bf16.msra.mxu0 %v398
  %558 = vmatprep.subr.bf16.mxu0 0
  %559 = vmatpush2.bf16.msra.mxu0 %v413
  %560 = vmatprep.subr.bf16.mxu0 0
  %561 = vmatpush2.bf16.msra.mxu0 %v412
  %562 = vmatprep.subr.bf16.mxu0 0
  %563 = vmatpush2.bf16.msra.mxu0 %v411
  %564 = vmatprep.subr.bf16.mxu0 0
  %565 = vmatpush2.bf16.msra.mxu0 %v410
  %566 = vmatprep.subr.bf16.mxu0 0
  %567 = vmatpush2.bf16.msra.mxu0 %v409
  %568 = vmatprep.subr.bf16.mxu0 0
  %569 = vmatpush2.bf16.msra.mxu0 %v408
  %570 = vmatprep.subr.bf16.mxu0 0
  %571 = vmatpush2.bf16.msra.mxu0 %v407
  %572 = vmatprep.subr.bf16.mxu0 0
  %573 = vmatpush2.bf16.msra.mxu0 %v406
  %574 = vmatprep.mubr.bf16.mxu0 %v196
  %575 = vmatmul.mubr.bf16.gmra.mxu0 %v195
  %v576 = vpop.f32.mrf.mxu0
  %v577 = vadd.f32 %v505, %v576
  %v578 = vpop.f32.mrf.mxu0
  %v579 = vpop.f32.mrf.mxu0
  %v580 = vadd.f32 %v508, %v579
  %v581 = vpop.f32.mrf.mxu0
  %582 = vmatprep.mubr.bf16.mxu0 %v201
  %583 = vmatmul.mubr.bf16.gmra.mxu0 %v200
  %v584 = vpop.f32.mrf.mxu0
  %v585 = vadd.f32 %v513, %v584
  %v586 = vpop.f32.mrf.mxu0
  %v587 = vpop.f32.mrf.mxu0
  %v588 = vadd.f32 %v516, %v587
  %v589 = vpop.f32.mrf.mxu0
  %590 = vmatprep.mubr.bf16.mxu0 %v206
  %591 = vmatmul.mubr.bf16.gmra.mxu0 %v205
  %v592 = vpop.f32.mrf.mxu0
  %v593 = vadd.f32 %v521, %v592
  %v594 = vpop.f32.mrf.mxu0
  %v595 = vpop.f32.mrf.mxu0
  %v596 = vadd.f32 %v524, %v595
  %v597 = vpop.f32.mrf.mxu0
  %598 = vmatprep.mubr.bf16.mxu0 %v211
  %599 = vmatmul.mubr.bf16.gmra.mxu0 %v210
  %v600 = vpop.f32.mrf.mxu0
  %v601 = vadd.f32 %v529, %v600
  %v602 = vpop.f32.mrf.mxu0
  %v603 = vpop.f32.mrf.mxu0
  %v604 = vadd.f32 %v532, %v603
  %v605 = vpop.f32.mrf.mxu0
  %606 = vmatprep.mubr.bf16.mxu0 %v216
  %607 = vmatmul.mubr.bf16.gmra.mxu0 %v215
  %v608 = vpop.f32.mrf.mxu0
  %v609 = vadd.f32 %v537, %v608
  %v610 = vpop.f32.mrf.mxu0
  %v611 = vpop.f32.mrf.mxu0
  %v612 = vpop.f32.mrf.mxu0
  %613 = vdwg.mxu0
  %614 = vmatprep.subr.bf16.mxu0 0
  %615 = vmatpush1.bf16.msra.mxu0 0
  %616 = vmatprep.subr.bf16.mxu0 0
  %617 = vmatpush1.bf16.msra.mxu0 0
  %618 = vmatprep.subr.bf16.mxu0 0
  %619 = vmatpush1.bf16.msra.mxu0 0
  %620 = vmatprep.subr.bf16.mxu0 0
  %621 = vmatpush1.bf16.msra.mxu0 0
  %622 = vmatprep.subr.bf16.mxu0 0
  %623 = vmatpush1.bf16.msra.mxu0 %v417
  %624 = vmatprep.subr.bf16.mxu0 0
  %625 = vmatpush1.bf16.msra.mxu0 %v416
  %626 = vmatprep.subr.bf16.mxu0 0
  %627 = vmatpush1.bf16.msra.mxu0 %v415
  %628 = vmatprep.subr.bf16.mxu0 0
  %629 = vmatpush1.bf16.msra.mxu0 %v414
  %630 = vmatprep.subr.bf16.mxu0 0
  %631 = vmatpush2.bf16.msra.mxu0 0
  %632 = vmatprep.subr.bf16.mxu0 0
  %633 = vmatpush2.bf16.msra.mxu0 0
  %634 = vmatprep.subr.bf16.mxu0 0
  %635 = vmatpush2.bf16.msra.mxu0 0
  %636 = vmatprep.subr.bf16.mxu0 0
  %637 = vmatpush2.bf16.msra.mxu0 0
  %638 = vmatprep.subr.bf16.mxu0 0
  %639 = vmatpush2.bf16.msra.mxu0 0
  %640 = vmatprep.subr.bf16.mxu0 0
  %641 = vmatpush2.bf16.msra.mxu0 0
  %642 = vmatprep.subr.bf16.mxu0 0
  %643 = vmatpush2.bf16.msra.mxu0 0
  %644 = vmatprep.subr.bf16.mxu0 0
  %645 = vmatpush2.bf16.msra.mxu0 0
  %646 = vmatprep.mubr.bf16.mxu0 0
  %647 = vmatmul.mubr.bf16.gmra.mxu0 %v456
  %v648 = vpop.f32.mrf.mxu0
  %v649 = vadd.f32 %v577, %v648
  %v650 = vpop.f32.mrf.mxu0
  %v651 = vpop.f32.mrf.mxu0
  %v652 = vadd.f32 %v580, %v651
  %v653 = vpop.f32.mrf.mxu0
  %654 = vmatprep.mubr.bf16.mxu0 0
  %655 = vmatmul.mubr.bf16.gmra.mxu0 %v459
  %v656 = vpop.f32.mrf.mxu0
  %v657 = vadd.f32 %v585, %v656
  %v658 = vpop.f32.mrf.mxu0
  %v659 = vpop.f32.mrf.mxu0
  %v660 = vadd.f32 %v588, %v659
  %v661 = vpop.f32.mrf.mxu0
  %662 = vmatprep.mubr.bf16.mxu0 0
  %663 = vmatmul.mubr.bf16.gmra.mxu0 %v462
  %v664 = vpop.f32.mrf.mxu0
  %v665 = vadd.f32 %v593, %v664
  %v666 = vpop.f32.mrf.mxu0
  %v667 = vpop.f32.mrf.mxu0
  %v668 = vadd.f32 %v596, %v667
  %v669 = vpop.f32.mrf.mxu0
  %670 = vmatprep.mubr.bf16.mxu0 0
  %671 = vmatmul.mubr.bf16.gmra.mxu0 %v465
  %v672 = vpop.f32.mrf.mxu0
  %v673 = vadd.f32 %v601, %v672
  %v674 = vpop.f32.mrf.mxu0
  %v675 = vpop.f32.mrf.mxu0
  %v676 = vadd.f32 %v604, %v675
  %v677 = vpop.f32.mrf.mxu0
  %678 = vmatprep.mubr.bf16.mxu0 0
  %679 = vmatmul.mubr.bf16.gmra.mxu0 %v468
  %v680 = vpop.f32.mrf.mxu0
  %v681 = vadd.f32 %v609, %v680
  %v682 = vpop.f32.mrf.mxu0
  %v683 = vpop.f32.mrf.mxu0
  %v684 = vpop.f32.mrf.mxu0
  %685 = vdwg.mxu0
  %v686 = vmax.f32 %v649, 0.0
  %v687 = vmax.f32 %v652, 0.0
  %v688 = vmax.f32 %v657, 0.0
  %v689 = vmax.f32 %v660, 0.0
  %v690 = vmax.f32 %v665, 0.0
  %v691 = vmax.f32 %v668, 0.0
  %v692 = vmax.f32 %v673, 0.0
  %v693 = vmax.f32 %v676, 0.0
  %v694 = vmax.f32 %v681, 0.0
  %s695 = scalar_lea.vmem %s0, 180
  %v696 = vld [vmem:[%s695] sm:$0xff]
  %v697 = vld [vmem:[%s695 + $0x8] sm:$0xff]
  %v698 = vld [vmem:[%s695 + $0x10] sm:$0xf]
  %v699 = vld [vmem:[%s695 + $0x14] sm:$0xff]
  %v700 = vld [vmem:[%s695 + $0x1c] sm:$0xff]
  %v701 = vld [vmem:[%s695 + $0x24] sm:$0xf]
  %v702 = vld [vmem:[%s695 + $0x28] sm:$0xff]
  %v703 = vld [vmem:[%s695 + $0x30] sm:$0xff]
  %v704 = vld [vmem:[%s695 + $0x38] sm:$0xf]
  %v705 = vld [vmem:[%s695 + $0x3c] sm:$0xff]
  %v706 = vld [vmem:[%s695 + $0x44] sm:$0xff]
  %v707 = vld [vmem:[%s695 + $0x4c] sm:$0xf]
  %v708 = vld [vmem:[%s695 + $0x50] sm:$0xff]
  %v709 = vld [vmem:[%s695 + $0x58] sm:$0xff]
  %v710 = vld [vmem:[%s695 + $0x60] sm:$0xf]
  %v711 = vld [vmem:[%s695 + $0x64] sm:$0xff]
  %v712 = vld [vmem:[%s695 + $0x6c] sm:$0xff]
  %v713 = vld [vmem:[%s695 + $0x74] sm:$0xf]
  %v714 = vld [vmem:[%s695 + $0x78] sm:$0xff]
  %v715 = vld [vmem:[%s695 + $0x80] sm:$0xff]
  %v716 = vld [vmem:[%s695 + $0x88] sm:$0xf]
  %v717 = vld [vmem:[%s695 + $0x8c] sm:$0xff]
  %v718 = vld [vmem:[%s695 + $0x94] sm:$0xff]
  %v719 = vld [vmem:[%s695 + $0x9c] sm:$0xf]
  %v720 = vld [vmem:[%s695 + $0xa0] sm:$0xff]
  %v721 = vld [vmem:[%s695 + $0xa8] sm:$0xff]
  %v722 = vld [vmem:[%s695 + $0xb0] sm:$0xf]
  %v750 = vunpack.c.l.b16 %v696
  %v751 = vunpack.c.h.b16 %v696
  %v752 = vunpack.c.l.b16 %v697
  %v753 = vunpack.c.h.b16 %v697
  %v754 = vunpack.c.l.b16 %v698
  %v755 = vunpack.c.l.b16 %v699
  %v756 = vunpack.c.h.b16 %v699
  %v757 = vunpack.c.l.b16 %v700
  %v758 = vunpack.c.h.b16 %v700
  %v759 = vunpack.c.l.b16 %v701
  %v760 = vunpack.c.l.b16 %v702
  %v761 = vunpack.c.h.b16 %v702
  %v762 = vunpack.c.l.b16 %v703
  %v763 = vunpack.c.h.b16 %v703
  %v764 = vunpack.c.l.b16 %v704
  %v765 = vunpack.c.l.b16 %v705
  %v766 = vunpack.c.h.b16 %v705
  %v767 = vunpack.c.l.b16 %v706
  %v768 = vunpack.c.h.b16 %v706
  %v769 = vunpack.c.l.b16 %v707
  %v770 = vunpack.c.l.b16 %v708
  %v771 = vunpack.c.h.b16 %v708
  %v772 = vunpack.c.l.b16 %v709
  %v773 = vunpack.c.h.b16 %v709
  %v774 = vunpack.c.l.b16 %v710
  %v775 = vunpack.c.l.b16 %v711
  %v776 = vunpack.c.h.b16 %v711
  %v777 = vunpack.c.l.b16 %v712
  %v778 = vunpack.c.h.b16 %v712
  %v779 = vunpack.c.l.b16 %v713
  %v780 = vunpack.c.l.b16 %v714
  %v781 = vunpack.c.h.b16 %v714
  %v782 = vunpack.c.l.b16 %v715
  %v783 = vunpack.c.h.b16 %v715
  %v784 = vunpack.c.l.b16 %v716
  %v785 = vunpack.c.l.b16 %v717
  %v786 = vunpack.c.h.b16 %v717
  %v787 = vunpack.c.l.b16 %v718
  %v788 = vunpack.c.h.b16 %v718
  %v789 = vunpack.c.l.b16 %v719
  %v790 = vunpack.c.l.b16 %v720
  %v791 = vunpack.c.h.b16 %v720
  %v792 = vunpack.c.l.b16 %v721
  %v793 = vunpack.c.h.b16 %v721
  %v794 = vunpack.c.l.b16 %v722
  %v795 = vpack.c.b16 %v755, %v750
  %v796 = vpack.c.b16 %v756, %v751
  %v797 = vpack.c.b16 %v757, %v752
  %v798 = vpack.c.b16 %v758, %v753
  %v799 = vpack.c.b16 %v759, %v754
  %v800 = vpack.c.b16 %v765, %v760
  %v801 = vpack.c.b16 %v766, %v761
  %v802 = vpack.c.b16 %v767, %v762
  %v803 = vpack.c.b16 %v768, %v763
  %v804 = vpack.c.b16 %v769, %v764
  %v805 = vpack.c.b16 %v775, %v770
  %v806 = vpack.c.b16 %v776, %v771
  %v807 = vpack.c.b16 %v777, %v772
  %v808 = vpack.c.b16 %v778, %v773
  %v809 = vpack.c.b16 %v779, %v774
  %v810 = vpack.c.b16 %v785, %v780
  %v811 = vpack.c.b16 %v786, %v781
  %v812 = vpack.c.b16 %v787, %v782
  %v813 = vpack.c.b16 %v788, %v783
  %v814 = vpack.c.b16 %v789, %v784
  %v815 = vpack.c.b16 %v790, %v790
  %v816 = vpack.c.b16 %v791, %v791
  %v817 = vpack.c.b16 %v792, %v792
  %v818 = vpack.c.b16 %v793, %v793
  %v819 = vpack.c.b16 %v794, %v794
  %v841 = vsel %vm454, %v799, 0
  %v844 = vsel %vm454, %v804, 0
  %v847 = vsel %vm454, %v809, 0
  %v850 = vsel %vm454, %v814, 0
  %v853 = vsel %vm454, %v819, 0
  %855 = vmatprep.subr.bf16.mxu0 0
  %856 = vmatpush1.bf16.msra.mxu0 %v389
  %857 = vmatprep.subr.bf16.mxu0 0
  %858 = vmatpush1.bf16.msra.mxu0 %v388
  %859 = vmatprep.subr.bf16.mxu0 0
  %860 = vmatpush1.bf16.msra.mxu0 %v387
  %861 = vmatprep.subr.bf16.mxu0 0
  %862 = vmatpush1.bf16.msra.mxu0 %v386
  %863 = vmatprep.subr.bf16.mxu0 0
  %864 = vmatpush1.bf16.msra.mxu0 %v385
  %865 = vmatprep.subr.bf16.mxu0 0
  %866 = vmatpush1.bf16.msra.mxu0 %v384
  %867 = vmatprep.subr.bf16.mxu0 0
  %868 = vmatpush1.bf16.msra.mxu0 %v383
  %869 = vmatprep.subr.bf16.mxu0 0
  %870 = vmatpush1.bf16.msra.mxu0 %v382
  %871 = vmatprep.subr.bf16.mxu0 0
  %872 = vmatpush2.bf16.msra.mxu0 %v397
  %873 = vmatprep.subr.bf16.mxu0 0
  %874 = vmatpush2.bf16.msra.mxu0 %v396
  %875 = vmatprep.subr.bf16.mxu0 0
  %876 = vmatpush2.bf16.msra.mxu0 %v395
  %877 = vmatprep.subr.bf16.mxu0 0
  %878 = vmatpush2.bf16.msra.mxu0 %v394
  %879 = vmatprep.subr.bf16.mxu0 0
  %880 = vmatpush2.bf16.msra.mxu0 %v393
  %881 = vmatprep.subr.bf16.mxu0 0
  %882 = vmatpush2.bf16.msra.mxu0 %v392
  %883 = vmatprep.subr.bf16.mxu0 0
  %884 = vmatpush2.bf16.msra.mxu0 %v391
  %885 = vmatprep.subr.bf16.mxu0 0
  %886 = vmatpush2.bf16.msra.mxu0 %v390
  %887 = vmatprep.mubr.bf16.mxu0 %v796
  %888 = vmatmul.mubr.bf16.gmra.mxu0 %v795
  %v889 = vpop.f32.mrf.mxu0
  %v890 = vadd.f32 %v119, %v889
  %v891 = vpop.f32.mrf.mxu0
  %v892 = vpop.f32.mrf.mxu0
  %v893 = vadd.f32 %v119, %v892
  %v894 = vpop.f32.mrf.mxu0
  %895 = vmatprep.mubr.bf16.mxu0 %v801
  %896 = vmatmul.mubr.bf16.gmra.mxu0 %v800
  %v897 = vpop.f32.mrf.mxu0
  %v898 = vadd.f32 %v119, %v897
  %v899 = vpop.f32.mrf.mxu0
  %v900 = vpop.f32.mrf.mxu0
  %v901 = vadd.f32 %v119, %v900
  %v902 = vpop.f32.mrf.mxu0
  %903 = vmatprep.mubr.bf16.mxu0 %v806
  %904 = vmatmul.mubr.bf16.gmra.mxu0 %v805
  %v905 = vpop.f32.mrf.mxu0
  %v906 = vadd.f32 %v119, %v905
  %v907 = vpop.f32.mrf.mxu0
  %v908 = vpop.f32.mrf.mxu0
  %v909 = vadd.f32 %v119, %v908
  %v910 = vpop.f32.mrf.mxu0
  %911 = vmatprep.mubr.bf16.mxu0 %v811
  %912 = vmatmul.mubr.bf16.gmra.mxu0 %v810
  %v913 = vpop.f32.mrf.mxu0
  %v914 = vadd.f32 %v119, %v913
  %v915 = vpop.f32.mrf.mxu0
  %v916 = vpop.f32.mrf.mxu0
  %v917 = vadd.f32 %v119, %v916
  %v918 = vpop.f32.mrf.mxu0
  %919 = vmatprep.mubr.bf16.mxu0 %v816
  %920 = vmatmul.mubr.bf16.gmra.mxu0 %v815
  %v921 = vpop.f32.mrf.mxu0
  %v922 = vadd.f32 %v119, %v921
  %v923 = vpop.f32.mrf.mxu0
  %v924 = vpop.f32.mrf.mxu0
  %v925 = vpop.f32.mrf.mxu0
  %926 = vdwg.mxu0
  %927 = vmatprep.subr.bf16.mxu0 0
  %928 = vmatpush1.bf16.msra.mxu0 %v405
  %929 = vmatprep.subr.bf16.mxu0 0
  %930 = vmatpush1.bf16.msra.mxu0 %v404
  %931 = vmatprep.subr.bf16.mxu0 0
  %932 = vmatpush1.bf16.msra.mxu0 %v403
  %933 = vmatprep.subr.bf16.mxu0 0
  %934 = vmatpush1.bf16.msra.mxu0 %v402
  %935 = vmatprep.subr.bf16.mxu0 0
  %936 = vmatpush1.bf16.msra.mxu0 %v401
  %937 = vmatprep.subr.bf16.mxu0 0
  %938 = vmatpush1.bf16.msra.mxu0 %v400
  %939 = vmatprep.subr.bf16.mxu0 0
  %940 = vmatpush1.bf16.msra.mxu0 %v399
  %941 = vmatprep.subr.bf16.mxu0 0
  %942 = vmatpush1.bf16.msra.mxu0 %v398
  %943 = vmatprep.subr.bf16.mxu0 0
  %944 = vmatpush2.bf16.msra.mxu0 %v413
  %945 = vmatprep.subr.bf16.mxu0 0
  %946 = vmatpush2.bf16.msra.mxu0 %v412
  %947 = vmatprep.subr.bf16.mxu0 0
  %948 = vmatpush2.bf16.msra.mxu0 %v411
  %949 = vmatprep.subr.bf16.mxu0 0
  %950 = vmatpush2.bf16.msra.mxu0 %v410
  %951 = vmatprep.subr.bf16.mxu0 0
  %952 = vmatpush2.bf16.msra.mxu0 %v409
  %953 = vmatprep.subr.bf16.mxu0 0
  %954 = vmatpush2.bf16.msra.mxu0 %v408
  %955 = vmatprep.subr.bf16.mxu0 0
  %956 = vmatpush2.bf16.msra.mxu0 %v407
  %957 = vmatprep.subr.bf16.mxu0 0
  %958 = vmatpush2.bf16.msra.mxu0 %v406
  %959 = vmatprep.mubr.bf16.mxu0 %v798
  %960 = vmatmul.mubr.bf16.gmra.mxu0 %v797
  %v961 = vpop.f32.mrf.mxu0
  %v962 = vadd.f32 %v890, %v961
  %v963 = vpop.f32.mrf.mxu0
  %v964 = vpop.f32.mrf.mxu0
  %v965 = vadd.f32 %v893, %v964
  %v966 = vpop.f32.mrf.mxu0
  %967 = vmatprep.mubr.bf16.mxu0 %v803
  %968 = vmatmul.mubr.bf16.gmra.mxu0 %v802
  %v969 = vpop.f32.mrf.mxu0
  %v970 = vadd.f32 %v898, %v969
  %v971 = vpop.f32.mrf.mxu0
  %v972 = vpop.f32.mrf.mxu0
  %v973 = vadd.f32 %v901, %v972
  %v974 = vpop.f32.mrf.mxu0
  %975 = vmatprep.mubr.bf16.mxu0 %v808
  %976 = vmatmul.mubr.bf16.gmra.mxu0 %v807
  %v977 = vpop.f32.mrf.mxu0
  %v978 = vadd.f32 %v906, %v977
  %v979 = vpop.f32.mrf.mxu0
  %v980 = vpop.f32.mrf.mxu0
  %v981 = vadd.f32 %v909, %v980
  %v982 = vpop.f32.mrf.mxu0
  %983 = vmatprep.mubr.bf16.mxu0 %v813
  %984 = vmatmul.mubr.bf16.gmra.mxu0 %v812
  %v985 = vpop.f32.mrf.mxu0
  %v986 = vadd.f32 %v914, %v985
  %v987 = vpop.f32.mrf.mxu0
  %v988 = vpop.f32.mrf.mxu0
  %v989 = vadd.f32 %v917, %v988
  %v990 = vpop.f32.mrf.mxu0
  %991 = vmatprep.mubr.bf16.mxu0 %v818
  %992 = vmatmul.mubr.bf16.gmra.mxu0 %v817
  %v993 = vpop.f32.mrf.mxu0
  %v994 = vadd.f32 %v922, %v993
  %v995 = vpop.f32.mrf.mxu0
  %v996 = vpop.f32.mrf.mxu0
  %v997 = vpop.f32.mrf.mxu0
  %998 = vdwg.mxu0
  %999 = vmatprep.subr.bf16.mxu0 0
  %1000 = vmatpush1.bf16.msra.mxu0 0
  %1001 = vmatprep.subr.bf16.mxu0 0
  %1002 = vmatpush1.bf16.msra.mxu0 0
  %1003 = vmatprep.subr.bf16.mxu0 0
  %1004 = vmatpush1.bf16.msra.mxu0 0
  %1005 = vmatprep.subr.bf16.mxu0 0
  %1006 = vmatpush1.bf16.msra.mxu0 0
  %1007 = vmatprep.subr.bf16.mxu0 0
  %1008 = vmatpush1.bf16.msra.mxu0 %v417
  %1009 = vmatprep.subr.bf16.mxu0 0
  %1010 = vmatpush1.bf16.msra.mxu0 %v416
  %1011 = vmatprep.subr.bf16.mxu0 0
  %1012 = vmatpush1.bf16.msra.mxu0 %v415
  %1013 = vmatprep.subr.bf16.mxu0 0
  %1014 = vmatpush1.bf16.msra.mxu0 %v414
  %1015 = vmatprep.subr.bf16.mxu0 0
  %1016 = vmatpush2.bf16.msra.mxu0 0
  %1017 = vmatprep.subr.bf16.mxu0 0
  %1018 = vmatpush2.bf16.msra.mxu0 0
  %1019 = vmatprep.subr.bf16.mxu0 0
  %1020 = vmatpush2.bf16.msra.mxu0 0
  %1021 = vmatprep.subr.bf16.mxu0 0
  %1022 = vmatpush2.bf16.msra.mxu0 0
  %1023 = vmatprep.subr.bf16.mxu0 0
  %1024 = vmatpush2.bf16.msra.mxu0 0
  %1025 = vmatprep.subr.bf16.mxu0 0
  %1026 = vmatpush2.bf16.msra.mxu0 0
  %1027 = vmatprep.subr.bf16.mxu0 0
  %1028 = vmatpush2.bf16.msra.mxu0 0
  %1029 = vmatprep.subr.bf16.mxu0 0
  %1030 = vmatpush2.bf16.msra.mxu0 0
  %1031 = vmatprep.mubr.bf16.mxu0 0
  %1032 = vmatmul.mubr.bf16.gmra.mxu0 %v841
  %v1033 = vpop.f32.mrf.mxu0
  %v1034 = vadd.f32 %v962, %v1033
  %v1035 = vpop.f32.mrf.mxu0
  %v1036 = vpop.f32.mrf.mxu0
  %v1037 = vadd.f32 %v965, %v1036
  %v1038 = vpop.f32.mrf.mxu0
  %1039 = vmatprep.mubr.bf16.mxu0 0
  %1040 = vmatmul.mubr.bf16.gmra.mxu0 %v844
  %v1041 = vpop.f32.mrf.mxu0
  %v1042 = vadd.f32 %v970, %v1041
  %v1043 = vpop.f32.mrf.mxu0
  %v1044 = vpop.f32.mrf.mxu0
  %v1045 = vadd.f32 %v973, %v1044
  %v1046 = vpop.f32.mrf.mxu0
  %1047 = vmatprep.mubr.bf16.mxu0 0
  %1048 = vmatmul.mubr.bf16.gmra.mxu0 %v847
  %v1049 = vpop.f32.mrf.mxu0
  %v1050 = vadd.f32 %v978, %v1049
  %v1051 = vpop.f32.mrf.mxu0
  %v1052 = vpop.f32.mrf.mxu0
  %v1053 = vadd.f32 %v981, %v1052
  %v1054 = vpop.f32.mrf.mxu0
  %1055 = vmatprep.mubr.bf16.mxu0 0
  %1056 = vmatmul.mubr.bf16.gmra.mxu0 %v850
  %v1057 = vpop.f32.mrf.mxu0
  %v1058 = vadd.f32 %v986, %v1057
  %v1059 = vpop.f32.mrf.mxu0
  %v1060 = vpop.f32.mrf.mxu0
  %v1061 = vadd.f32 %v989, %v1060
  %v1062 = vpop.f32.mrf.mxu0
  %1063 = vmatprep.mubr.bf16.mxu0 0
  %1064 = vmatmul.mubr.bf16.gmra.mxu0 %v853
  %v1065 = vpop.f32.mrf.mxu0
  %v1066 = vadd.f32 %v994, %v1065
  %v1067 = vpop.f32.mrf.mxu0
  %v1068 = vpop.f32.mrf.mxu0
  %v1069 = vpop.f32.mrf.mxu0
  %1070 = vdwg.mxu0
  %v1071 = vmax.f32 %v1034, 0.0
  %v1072 = vmax.f32 %v1037, 0.0
  %v1073 = vmax.f32 %v1042, 0.0
  %v1074 = vmax.f32 %v1045, 0.0
  %v1075 = vmax.f32 %v1050, 0.0
  %v1076 = vmax.f32 %v1053, 0.0
  %v1077 = vmax.f32 %v1058, 0.0
  %v1078 = vmax.f32 %v1061, 0.0
  %v1079 = vmax.f32 %v1066, 0.0
  %v1080 = vmax.f32 %v686, %v1071
  %v1081 = vmax.f32 %v687, %v1072
  %v1082 = vmax.f32 %v688, %v1073
  %v1083 = vmax.f32 %v689, %v1074
  %v1084 = vmax.f32 %v690, %v1075
  %v1085 = vmax.f32 %v691, %v1076
  %v1086 = vmax.f32 %v692, %v1077
  %v1087 = vmax.f32 %v693, %v1078
  %v1088 = vmax.f32 %v694, %v1079
  %s1089 = scalar_lea.vmem %s0, 360
  %v1090 = vld [vmem:[%s1089] sm:$0xff]
  %v1091 = vld [vmem:[%s1089 + $0x8] sm:$0xff]
  %v1092 = vld [vmem:[%s1089 + $0x10] sm:$0xf]
  %v1093 = vld [vmem:[%s1089 + $0x14] sm:$0xff]
  %v1094 = vld [vmem:[%s1089 + $0x1c] sm:$0xff]
  %v1095 = vld [vmem:[%s1089 + $0x24] sm:$0xf]
  %v1096 = vld [vmem:[%s1089 + $0x28] sm:$0xff]
  %v1097 = vld [vmem:[%s1089 + $0x30] sm:$0xff]
  %v1098 = vld [vmem:[%s1089 + $0x38] sm:$0xf]
  %v1099 = vld [vmem:[%s1089 + $0x3c] sm:$0xff]
  %v1100 = vld [vmem:[%s1089 + $0x44] sm:$0xff]
  %v1101 = vld [vmem:[%s1089 + $0x4c] sm:$0xf]
  %v1102 = vld [vmem:[%s1089 + $0x50] sm:$0xff]
  %v1103 = vld [vmem:[%s1089 + $0x58] sm:$0xff]
  %v1104 = vld [vmem:[%s1089 + $0x60] sm:$0xf]
  %v1105 = vld [vmem:[%s1089 + $0x64] sm:$0xff]
  %v1106 = vld [vmem:[%s1089 + $0x6c] sm:$0xff]
  %v1107 = vld [vmem:[%s1089 + $0x74] sm:$0xf]
  %v1108 = vld [vmem:[%s1089 + $0x78] sm:$0xff]
  %v1109 = vld [vmem:[%s1089 + $0x80] sm:$0xff]
  %v1110 = vld [vmem:[%s1089 + $0x88] sm:$0xf]
  %v1111 = vld [vmem:[%s1089 + $0x8c] sm:$0xff]
  %v1112 = vld [vmem:[%s1089 + $0x94] sm:$0xff]
  %v1113 = vld [vmem:[%s1089 + $0x9c] sm:$0xf]
  %v1114 = vld [vmem:[%s1089 + $0xa0] sm:$0xff]
  %v1115 = vld [vmem:[%s1089 + $0xa8] sm:$0xff]
  %v1116 = vld [vmem:[%s1089 + $0xb0] sm:$0xf]
  %v1144 = vunpack.c.l.b16 %v1090
  %v1145 = vunpack.c.h.b16 %v1090
  %v1146 = vunpack.c.l.b16 %v1091
  %v1147 = vunpack.c.h.b16 %v1091
  %v1148 = vunpack.c.l.b16 %v1092
  %v1149 = vunpack.c.l.b16 %v1093
  %v1150 = vunpack.c.h.b16 %v1093
  %v1151 = vunpack.c.l.b16 %v1094
  %v1152 = vunpack.c.h.b16 %v1094
  %v1153 = vunpack.c.l.b16 %v1095
  %v1154 = vunpack.c.l.b16 %v1096
  %v1155 = vunpack.c.h.b16 %v1096
  %v1156 = vunpack.c.l.b16 %v1097
  %v1157 = vunpack.c.h.b16 %v1097
  %v1158 = vunpack.c.l.b16 %v1098
  %v1159 = vunpack.c.l.b16 %v1099
  %v1160 = vunpack.c.h.b16 %v1099
  %v1161 = vunpack.c.l.b16 %v1100
  %v1162 = vunpack.c.h.b16 %v1100
  %v1163 = vunpack.c.l.b16 %v1101
  %v1164 = vunpack.c.l.b16 %v1102
  %v1165 = vunpack.c.h.b16 %v1102
  %v1166 = vunpack.c.l.b16 %v1103
  %v1167 = vunpack.c.h.b16 %v1103
  %v1168 = vunpack.c.l.b16 %v1104
  %v1169 = vunpack.c.l.b16 %v1105
  %v1170 = vunpack.c.h.b16 %v1105
  %v1171 = vunpack.c.l.b16 %v1106
  %v1172 = vunpack.c.h.b16 %v1106
  %v1173 = vunpack.c.l.b16 %v1107
  %v1174 = vunpack.c.l.b16 %v1108
  %v1175 = vunpack.c.h.b16 %v1108
  %v1176 = vunpack.c.l.b16 %v1109
  %v1177 = vunpack.c.h.b16 %v1109
  %v1178 = vunpack.c.l.b16 %v1110
  %v1179 = vunpack.c.l.b16 %v1111
  %v1180 = vunpack.c.h.b16 %v1111
  %v1181 = vunpack.c.l.b16 %v1112
  %v1182 = vunpack.c.h.b16 %v1112
  %v1183 = vunpack.c.l.b16 %v1113
  %v1184 = vunpack.c.l.b16 %v1114
  %v1185 = vunpack.c.h.b16 %v1114
  %v1186 = vunpack.c.l.b16 %v1115
  %v1187 = vunpack.c.h.b16 %v1115
  %v1188 = vunpack.c.l.b16 %v1116
  %v1189 = vpack.c.b16 %v1149, %v1144
  %v1190 = vpack.c.b16 %v1150, %v1145
  %v1191 = vpack.c.b16 %v1151, %v1146
  %v1192 = vpack.c.b16 %v1152, %v1147
  %v1193 = vpack.c.b16 %v1153, %v1148
  %v1194 = vpack.c.b16 %v1159, %v1154
  %v1195 = vpack.c.b16 %v1160, %v1155
  %v1196 = vpack.c.b16 %v1161, %v1156
  %v1197 = vpack.c.b16 %v1162, %v1157
  %v1198 = vpack.c.b16 %v1163, %v1158
  %v1199 = vpack.c.b16 %v1169, %v1164
  %v1200 = vpack.c.b16 %v1170, %v1165
  %v1201 = vpack.c.b16 %v1171, %v1166
  %v1202 = vpack.c.b16 %v1172, %v1167
  %v1203 = vpack.c.b16 %v1173, %v1168
  %v1204 = vpack.c.b16 %v1179, %v1174
  %v1205 = vpack.c.b16 %v1180, %v1175
  %v1206 = vpack.c.b16 %v1181, %v1176
  %v1207 = vpack.c.b16 %v1182, %v1177
  %v1208 = vpack.c.b16 %v1183, %v1178
  %v1209 = vpack.c.b16 %v1184, %v1184
  %v1210 = vpack.c.b16 %v1185, %v1185
  %v1211 = vpack.c.b16 %v1186, %v1186
  %v1212 = vpack.c.b16 %v1187, %v1187
  %v1213 = vpack.c.b16 %v1188, %v1188
  %v1235 = vsel %vm454, %v1193, 0
  %v1238 = vsel %vm454, %v1198, 0
  %v1241 = vsel %vm454, %v1203, 0
  %v1244 = vsel %vm454, %v1208, 0
  %v1247 = vsel %vm454, %v1213, 0
  %1249 = vmatprep.subr.bf16.mxu0 0
  %1250 = vmatpush1.bf16.msra.mxu0 %v389
  %1251 = vmatprep.subr.bf16.mxu0 0
  %1252 = vmatpush1.bf16.msra.mxu0 %v388
  %1253 = vmatprep.subr.bf16.mxu0 0
  %1254 = vmatpush1.bf16.msra.mxu0 %v387
  %1255 = vmatprep.subr.bf16.mxu0 0
  %1256 = vmatpush1.bf16.msra.mxu0 %v386
  %1257 = vmatprep.subr.bf16.mxu0 0
  %1258 = vmatpush1.bf16.msra.mxu0 %v385
  %1259 = vmatprep.subr.bf16.mxu0 0
  %1260 = vmatpush1.bf16.msra.mxu0 %v384
  %1261 = vmatprep.subr.bf16.mxu0 0
  %1262 = vmatpush1.bf16.msra.mxu0 %v383
  %1263 = vmatprep.subr.bf16.mxu0 0
  %1264 = vmatpush1.bf16.msra.mxu0 %v382
  %1265 = vmatprep.subr.bf16.mxu0 0
  %1266 = vmatpush2.bf16.msra.mxu0 %v397
  %1267 = vmatprep.subr.bf16.mxu0 0
  %1268 = vmatpush2.bf16.msra.mxu0 %v396
  %1269 = vmatprep.subr.bf16.mxu0 0
  %1270 = vmatpush2.bf16.msra.mxu0 %v395
  %1271 = vmatprep.subr.bf16.mxu0 0
  %1272 = vmatpush2.bf16.msra.mxu0 %v394
  %1273 = vmatprep.subr.bf16.mxu0 0
  %1274 = vmatpush2.bf16.msra.mxu0 %v393
  %1275 = vmatprep.subr.bf16.mxu0 0
  %1276 = vmatpush2.bf16.msra.mxu0 %v392
  %1277 = vmatprep.subr.bf16.mxu0 0
  %1278 = vmatpush2.bf16.msra.mxu0 %v391
  %1279 = vmatprep.subr.bf16.mxu0 0
  %1280 = vmatpush2.bf16.msra.mxu0 %v390
  %1281 = vmatprep.mubr.bf16.mxu0 %v1190
  %1282 = vmatmul.mubr.bf16.gmra.mxu0 %v1189
  %v1283 = vpop.f32.mrf.mxu0
  %v1284 = vadd.f32 %v119, %v1283
  %v1285 = vpop.f32.mrf.mxu0
  %v1286 = vpop.f32.mrf.mxu0
  %v1287 = vadd.f32 %v119, %v1286
  %v1288 = vpop.f32.mrf.mxu0
  %1289 = vmatprep.mubr.bf16.mxu0 %v1195
  %1290 = vmatmul.mubr.bf16.gmra.mxu0 %v1194
  %v1291 = vpop.f32.mrf.mxu0
  %v1292 = vadd.f32 %v119, %v1291
  %v1293 = vpop.f32.mrf.mxu0
  %v1294 = vpop.f32.mrf.mxu0
  %v1295 = vadd.f32 %v119, %v1294
  %v1296 = vpop.f32.mrf.mxu0
  %1297 = vmatprep.mubr.bf16.mxu0 %v1200
  %1298 = vmatmul.mubr.bf16.gmra.mxu0 %v1199
  %v1299 = vpop.f32.mrf.mxu0
  %v1300 = vadd.f32 %v119, %v1299
  %v1301 = vpop.f32.mrf.mxu0
  %v1302 = vpop.f32.mrf.mxu0
  %v1303 = vadd.f32 %v119, %v1302
  %v1304 = vpop.f32.mrf.mxu0
  %1305 = vmatprep.mubr.bf16.mxu0 %v1205
  %1306 = vmatmul.mubr.bf16.gmra.mxu0 %v1204
  %v1307 = vpop.f32.mrf.mxu0
  %v1308 = vadd.f32 %v119, %v1307
  %v1309 = vpop.f32.mrf.mxu0
  %v1310 = vpop.f32.mrf.mxu0
  %v1311 = vadd.f32 %v119, %v1310
  %v1312 = vpop.f32.mrf.mxu0
  %1313 = vmatprep.mubr.bf16.mxu0 %v1210
  %1314 = vmatmul.mubr.bf16.gmra.mxu0 %v1209
  %v1315 = vpop.f32.mrf.mxu0
  %v1316 = vadd.f32 %v119, %v1315
  %v1317 = vpop.f32.mrf.mxu0
  %v1318 = vpop.f32.mrf.mxu0
  %v1319 = vpop.f32.mrf.mxu0
  %1320 = vdwg.mxu0
  %1321 = vmatprep.subr.bf16.mxu0 0
  %1322 = vmatpush1.bf16.msra.mxu0 %v405
  %1323 = vmatprep.subr.bf16.mxu0 0
  %1324 = vmatpush1.bf16.msra.mxu0 %v404
  %1325 = vmatprep.subr.bf16.mxu0 0
  %1326 = vmatpush1.bf16.msra.mxu0 %v403
  %1327 = vmatprep.subr.bf16.mxu0 0
  %1328 = vmatpush1.bf16.msra.mxu0 %v402
  %1329 = vmatprep.subr.bf16.mxu0 0
  %1330 = vmatpush1.bf16.msra.mxu0 %v401
  %1331 = vmatprep.subr.bf16.mxu0 0
  %1332 = vmatpush1.bf16.msra.mxu0 %v400
  %1333 = vmatprep.subr.bf16.mxu0 0
  %1334 = vmatpush1.bf16.msra.mxu0 %v399
  %1335 = vmatprep.subr.bf16.mxu0 0
  %1336 = vmatpush1.bf16.msra.mxu0 %v398
  %1337 = vmatprep.subr.bf16.mxu0 0
  %1338 = vmatpush2.bf16.msra.mxu0 %v413
  %1339 = vmatprep.subr.bf16.mxu0 0
  %1340 = vmatpush2.bf16.msra.mxu0 %v412
  %1341 = vmatprep.subr.bf16.mxu0 0
  %1342 = vmatpush2.bf16.msra.mxu0 %v411
  %1343 = vmatprep.subr.bf16.mxu0 0
  %1344 = vmatpush2.bf16.msra.mxu0 %v410
  %1345 = vmatprep.subr.bf16.mxu0 0
  %1346 = vmatpush2.bf16.msra.mxu0 %v409
  %1347 = vmatprep.subr.bf16.mxu0 0
  %1348 = vmatpush2.bf16.msra.mxu0 %v408
  %1349 = vmatprep.subr.bf16.mxu0 0
  %1350 = vmatpush2.bf16.msra.mxu0 %v407
  %1351 = vmatprep.subr.bf16.mxu0 0
  %1352 = vmatpush2.bf16.msra.mxu0 %v406
  %1353 = vmatprep.mubr.bf16.mxu0 %v1192
  %1354 = vmatmul.mubr.bf16.gmra.mxu0 %v1191
  %v1355 = vpop.f32.mrf.mxu0
  %v1356 = vadd.f32 %v1284, %v1355
  %v1357 = vpop.f32.mrf.mxu0
  %v1358 = vpop.f32.mrf.mxu0
  %v1359 = vadd.f32 %v1287, %v1358
  %v1360 = vpop.f32.mrf.mxu0
  %1361 = vmatprep.mubr.bf16.mxu0 %v1197
  %1362 = vmatmul.mubr.bf16.gmra.mxu0 %v1196
  %v1363 = vpop.f32.mrf.mxu0
  %v1364 = vadd.f32 %v1292, %v1363
  %v1365 = vpop.f32.mrf.mxu0
  %v1366 = vpop.f32.mrf.mxu0
  %v1367 = vadd.f32 %v1295, %v1366
  %v1368 = vpop.f32.mrf.mxu0
  %1369 = vmatprep.mubr.bf16.mxu0 %v1202
  %1370 = vmatmul.mubr.bf16.gmra.mxu0 %v1201
  %v1371 = vpop.f32.mrf.mxu0
  %v1372 = vadd.f32 %v1300, %v1371
  %v1373 = vpop.f32.mrf.mxu0
  %v1374 = vpop.f32.mrf.mxu0
  %v1375 = vadd.f32 %v1303, %v1374
  %v1376 = vpop.f32.mrf.mxu0
  %1377 = vmatprep.mubr.bf16.mxu0 %v1207
  %1378 = vmatmul.mubr.bf16.gmra.mxu0 %v1206
  %v1379 = vpop.f32.mrf.mxu0
  %v1380 = vadd.f32 %v1308, %v1379
  %v1381 = vpop.f32.mrf.mxu0
  %v1382 = vpop.f32.mrf.mxu0
  %v1383 = vadd.f32 %v1311, %v1382
  %v1384 = vpop.f32.mrf.mxu0
  %1385 = vmatprep.mubr.bf16.mxu0 %v1212
  %1386 = vmatmul.mubr.bf16.gmra.mxu0 %v1211
  %v1387 = vpop.f32.mrf.mxu0
  %v1388 = vadd.f32 %v1316, %v1387
  %v1389 = vpop.f32.mrf.mxu0
  %v1390 = vpop.f32.mrf.mxu0
  %v1391 = vpop.f32.mrf.mxu0
  %1392 = vdwg.mxu0
  %1393 = vmatprep.subr.bf16.mxu0 0
  %1394 = vmatpush1.bf16.msra.mxu0 0
  %1395 = vmatprep.subr.bf16.mxu0 0
  %1396 = vmatpush1.bf16.msra.mxu0 0
  %1397 = vmatprep.subr.bf16.mxu0 0
  %1398 = vmatpush1.bf16.msra.mxu0 0
  %1399 = vmatprep.subr.bf16.mxu0 0
  %1400 = vmatpush1.bf16.msra.mxu0 0
  %1401 = vmatprep.subr.bf16.mxu0 0
  %1402 = vmatpush1.bf16.msra.mxu0 %v417
  %1403 = vmatprep.subr.bf16.mxu0 0
  %1404 = vmatpush1.bf16.msra.mxu0 %v416
  %1405 = vmatprep.subr.bf16.mxu0 0
  %1406 = vmatpush1.bf16.msra.mxu0 %v415
  %1407 = vmatprep.subr.bf16.mxu0 0
  %1408 = vmatpush1.bf16.msra.mxu0 %v414
  %1409 = vmatprep.subr.bf16.mxu0 0
  %1410 = vmatpush2.bf16.msra.mxu0 0
  %1411 = vmatprep.subr.bf16.mxu0 0
  %1412 = vmatpush2.bf16.msra.mxu0 0
  %1413 = vmatprep.subr.bf16.mxu0 0
  %1414 = vmatpush2.bf16.msra.mxu0 0
  %1415 = vmatprep.subr.bf16.mxu0 0
  %1416 = vmatpush2.bf16.msra.mxu0 0
  %1417 = vmatprep.subr.bf16.mxu0 0
  %1418 = vmatpush2.bf16.msra.mxu0 0
  %1419 = vmatprep.subr.bf16.mxu0 0
  %1420 = vmatpush2.bf16.msra.mxu0 0
  %1421 = vmatprep.subr.bf16.mxu0 0
  %1422 = vmatpush2.bf16.msra.mxu0 0
  %1423 = vmatprep.subr.bf16.mxu0 0
  %1424 = vmatpush2.bf16.msra.mxu0 0
  %1425 = vmatprep.mubr.bf16.mxu0 0
  %1426 = vmatmul.mubr.bf16.gmra.mxu0 %v1235
  %v1427 = vpop.f32.mrf.mxu0
  %v1428 = vadd.f32 %v1356, %v1427
  %v1429 = vpop.f32.mrf.mxu0
  %v1430 = vpop.f32.mrf.mxu0
  %v1431 = vadd.f32 %v1359, %v1430
  %v1432 = vpop.f32.mrf.mxu0
  %1433 = vmatprep.mubr.bf16.mxu0 0
  %1434 = vmatmul.mubr.bf16.gmra.mxu0 %v1238
  %v1435 = vpop.f32.mrf.mxu0
  %v1436 = vadd.f32 %v1364, %v1435
  %v1437 = vpop.f32.mrf.mxu0
  %v1438 = vpop.f32.mrf.mxu0
  %v1439 = vadd.f32 %v1367, %v1438
  %v1440 = vpop.f32.mrf.mxu0
  %1441 = vmatprep.mubr.bf16.mxu0 0
  %1442 = vmatmul.mubr.bf16.gmra.mxu0 %v1241
  %v1443 = vpop.f32.mrf.mxu0
  %v1444 = vadd.f32 %v1372, %v1443
  %v1445 = vpop.f32.mrf.mxu0
  %v1446 = vpop.f32.mrf.mxu0
  %v1447 = vadd.f32 %v1375, %v1446
  %v1448 = vpop.f32.mrf.mxu0
  %1449 = vmatprep.mubr.bf16.mxu0 0
  %1450 = vmatmul.mubr.bf16.gmra.mxu0 %v1244
  %v1451 = vpop.f32.mrf.mxu0
  %v1452 = vadd.f32 %v1380, %v1451
  %v1453 = vpop.f32.mrf.mxu0
  %v1454 = vpop.f32.mrf.mxu0
  %v1455 = vadd.f32 %v1383, %v1454
  %v1456 = vpop.f32.mrf.mxu0
  %1457 = vmatprep.mubr.bf16.mxu0 0
  %1458 = vmatmul.mubr.bf16.gmra.mxu0 %v1247
  %v1459 = vpop.f32.mrf.mxu0
  %v1460 = vadd.f32 %v1388, %v1459
  %v1461 = vpop.f32.mrf.mxu0
  %v1462 = vpop.f32.mrf.mxu0
  %v1463 = vpop.f32.mrf.mxu0
  %1464 = vdwg.mxu0
  %v1465 = vmax.f32 %v1428, 0.0
  %v1466 = vmax.f32 %v1431, 0.0
  %v1467 = vmax.f32 %v1436, 0.0
  %v1468 = vmax.f32 %v1439, 0.0
  %v1469 = vmax.f32 %v1444, 0.0
  %v1470 = vmax.f32 %v1447, 0.0
  %v1471 = vmax.f32 %v1452, 0.0
  %v1472 = vmax.f32 %v1455, 0.0
  %v1473 = vmax.f32 %v1460, 0.0
  %v1474 = vmax.f32 %v1080, %v1465
  %v1475 = vmax.f32 %v1081, %v1466
  %v1476 = vmax.f32 %v1082, %v1467
  %v1477 = vmax.f32 %v1083, %v1468
  %v1478 = vmax.f32 %v1084, %v1469
  %v1479 = vmax.f32 %v1085, %v1470
  %v1480 = vmax.f32 %v1086, %v1471
  %v1481 = vmax.f32 %v1087, %v1472
  %v1482 = vmax.f32 %v1088, %v1473
  %s1483 = scalar_lea.vmem %s0, 540
  %v1484 = vld [vmem:[%s1483] sm:$0xff]
  %v1485 = vld [vmem:[%s1483 + $0x8] sm:$0xff]
  %v1486 = vld [vmem:[%s1483 + $0x10] sm:$0xf]
  %v1487 = vld [vmem:[%s1483 + $0x14] sm:$0xff]
  %v1488 = vld [vmem:[%s1483 + $0x1c] sm:$0xff]
  %v1489 = vld [vmem:[%s1483 + $0x24] sm:$0xf]
  %v1490 = vld [vmem:[%s1483 + $0x28] sm:$0xff]
  %v1491 = vld [vmem:[%s1483 + $0x30] sm:$0xff]
  %v1492 = vld [vmem:[%s1483 + $0x38] sm:$0xf]
  %v1493 = vld [vmem:[%s1483 + $0x3c] sm:$0xff]
  %v1494 = vld [vmem:[%s1483 + $0x44] sm:$0xff]
  %v1495 = vld [vmem:[%s1483 + $0x4c] sm:$0xf]
  %v1496 = vld [vmem:[%s1483 + $0x50] sm:$0xff]
  %v1497 = vld [vmem:[%s1483 + $0x58] sm:$0xff]
  %v1498 = vld [vmem:[%s1483 + $0x60] sm:$0xf]
  %v1499 = vld [vmem:[%s1483 + $0x64] sm:$0xff]
  %v1500 = vld [vmem:[%s1483 + $0x6c] sm:$0xff]
  %v1501 = vld [vmem:[%s1483 + $0x74] sm:$0xf]
  %v1502 = vld [vmem:[%s1483 + $0x78] sm:$0xff]
  %v1503 = vld [vmem:[%s1483 + $0x80] sm:$0xff]
  %v1504 = vld [vmem:[%s1483 + $0x88] sm:$0xf]
  %v1505 = vld [vmem:[%s1483 + $0x8c] sm:$0xff]
  %v1506 = vld [vmem:[%s1483 + $0x94] sm:$0xff]
  %v1507 = vld [vmem:[%s1483 + $0x9c] sm:$0xf]
  %v1508 = vld [vmem:[%s1483 + $0xa0] sm:$0xff]
  %v1509 = vld [vmem:[%s1483 + $0xa8] sm:$0xff]
  %v1510 = vld [vmem:[%s1483 + $0xb0] sm:$0xf]
  %v1538 = vunpack.c.l.b16 %v1484
  %v1539 = vunpack.c.h.b16 %v1484
  %v1540 = vunpack.c.l.b16 %v1485
  %v1541 = vunpack.c.h.b16 %v1485
  %v1542 = vunpack.c.l.b16 %v1486
  %v1543 = vunpack.c.l.b16 %v1487
  %v1544 = vunpack.c.h.b16 %v1487
  %v1545 = vunpack.c.l.b16 %v1488
  %v1546 = vunpack.c.h.b16 %v1488
  %v1547 = vunpack.c.l.b16 %v1489
  %v1548 = vunpack.c.l.b16 %v1490
  %v1549 = vunpack.c.h.b16 %v1490
  %v1550 = vunpack.c.l.b16 %v1491
  %v1551 = vunpack.c.h.b16 %v1491
  %v1552 = vunpack.c.l.b16 %v1492
  %v1553 = vunpack.c.l.b16 %v1493
  %v1554 = vunpack.c.h.b16 %v1493
  %v1555 = vunpack.c.l.b16 %v1494
  %v1556 = vunpack.c.h.b16 %v1494
  %v1557 = vunpack.c.l.b16 %v1495
  %v1558 = vunpack.c.l.b16 %v1496
  %v1559 = vunpack.c.h.b16 %v1496
  %v1560 = vunpack.c.l.b16 %v1497
  %v1561 = vunpack.c.h.b16 %v1497
  %v1562 = vunpack.c.l.b16 %v1498
  %v1563 = vunpack.c.l.b16 %v1499
  %v1564 = vunpack.c.h.b16 %v1499
  %v1565 = vunpack.c.l.b16 %v1500
  %v1566 = vunpack.c.h.b16 %v1500
  %v1567 = vunpack.c.l.b16 %v1501
  %v1568 = vunpack.c.l.b16 %v1502
  %v1569 = vunpack.c.h.b16 %v1502
  %v1570 = vunpack.c.l.b16 %v1503
  %v1571 = vunpack.c.h.b16 %v1503
  %v1572 = vunpack.c.l.b16 %v1504
  %v1573 = vunpack.c.l.b16 %v1505
  %v1574 = vunpack.c.h.b16 %v1505
  %v1575 = vunpack.c.l.b16 %v1506
  %v1576 = vunpack.c.h.b16 %v1506
  %v1577 = vunpack.c.l.b16 %v1507
  %v1578 = vunpack.c.l.b16 %v1508
  %v1579 = vunpack.c.h.b16 %v1508
  %v1580 = vunpack.c.l.b16 %v1509
  %v1581 = vunpack.c.h.b16 %v1509
  %v1582 = vunpack.c.l.b16 %v1510
  %v1583 = vpack.c.b16 %v1543, %v1538
  %v1584 = vpack.c.b16 %v1544, %v1539
  %v1585 = vpack.c.b16 %v1545, %v1540
  %v1586 = vpack.c.b16 %v1546, %v1541
  %v1587 = vpack.c.b16 %v1547, %v1542
  %v1588 = vpack.c.b16 %v1553, %v1548
  %v1589 = vpack.c.b16 %v1554, %v1549
  %v1590 = vpack.c.b16 %v1555, %v1550
  %v1591 = vpack.c.b16 %v1556, %v1551
  %v1592 = vpack.c.b16 %v1557, %v1552
  %v1593 = vpack.c.b16 %v1563, %v1558
  %v1594 = vpack.c.b16 %v1564, %v1559
  %v1595 = vpack.c.b16 %v1565, %v1560
  %v1596 = vpack.c.b16 %v1566, %v1561
  %v1597 = vpack.c.b16 %v1567, %v1562
  %v1598 = vpack.c.b16 %v1573, %v1568
  %v1599 = vpack.c.b16 %v1574, %v1569
  %v1600 = vpack.c.b16 %v1575, %v1570
  %v1601 = vpack.c.b16 %v1576, %v1571
  %v1602 = vpack.c.b16 %v1577, %v1572
  %v1603 = vpack.c.b16 %v1578, %v1578
  %v1604 = vpack.c.b16 %v1579, %v1579
  %v1605 = vpack.c.b16 %v1580, %v1580
  %v1606 = vpack.c.b16 %v1581, %v1581
  %v1607 = vpack.c.b16 %v1582, %v1582
  %v1629 = vsel %vm454, %v1587, 0
  %v1632 = vsel %vm454, %v1592, 0
  %v1635 = vsel %vm454, %v1597, 0
  %v1638 = vsel %vm454, %v1602, 0
  %v1641 = vsel %vm454, %v1607, 0
  %1643 = vmatprep.subr.bf16.mxu0 0
  %1644 = vmatpush1.bf16.msra.mxu0 %v389
  %1645 = vmatprep.subr.bf16.mxu0 0
  %1646 = vmatpush1.bf16.msra.mxu0 %v388
  %1647 = vmatprep.subr.bf16.mxu0 0
  %1648 = vmatpush1.bf16.msra.mxu0 %v387
  %1649 = vmatprep.subr.bf16.mxu0 0
  %1650 = vmatpush1.bf16.msra.mxu0 %v386
  %1651 = vmatprep.subr.bf16.mxu0 0
  %1652 = vmatpush1.bf16.msra.mxu0 %v385
  %1653 = vmatprep.subr.bf16.mxu0 0
  %1654 = vmatpush1.bf16.msra.mxu0 %v384
  %1655 = vmatprep.subr.bf16.mxu0 0
  %1656 = vmatpush1.bf16.msra.mxu0 %v383
  %1657 = vmatprep.subr.bf16.mxu0 0
  %1658 = vmatpush1.bf16.msra.mxu0 %v382
  %1659 = vmatprep.subr.bf16.mxu0 0
  %1660 = vmatpush2.bf16.msra.mxu0 %v397
  %1661 = vmatprep.subr.bf16.mxu0 0
  %1662 = vmatpush2.bf16.msra.mxu0 %v396
  %1663 = vmatprep.subr.bf16.mxu0 0
  %1664 = vmatpush2.bf16.msra.mxu0 %v395
  %1665 = vmatprep.subr.bf16.mxu0 0
  %1666 = vmatpush2.bf16.msra.mxu0 %v394
  %1667 = vmatprep.subr.bf16.mxu0 0
  %1668 = vmatpush2.bf16.msra.mxu0 %v393
  %1669 = vmatprep.subr.bf16.mxu0 0
  %1670 = vmatpush2.bf16.msra.mxu0 %v392
  %1671 = vmatprep.subr.bf16.mxu0 0
  %1672 = vmatpush2.bf16.msra.mxu0 %v391
  %1673 = vmatprep.subr.bf16.mxu0 0
  %1674 = vmatpush2.bf16.msra.mxu0 %v390
  %1675 = vmatprep.mubr.bf16.mxu0 %v1584
  %1676 = vmatmul.mubr.bf16.gmra.mxu0 %v1583
  %v1677 = vpop.f32.mrf.mxu0
  %v1678 = vadd.f32 %v119, %v1677
  %v1679 = vpop.f32.mrf.mxu0
  %v1680 = vpop.f32.mrf.mxu0
  %v1681 = vadd.f32 %v119, %v1680
  %v1682 = vpop.f32.mrf.mxu0
  %1683 = vmatprep.mubr.bf16.mxu0 %v1589
  %1684 = vmatmul.mubr.bf16.gmra.mxu0 %v1588
  %v1685 = vpop.f32.mrf.mxu0
  %v1686 = vadd.f32 %v119, %v1685
  %v1687 = vpop.f32.mrf.mxu0
  %v1688 = vpop.f32.mrf.mxu0
  %v1689 = vadd.f32 %v119, %v1688
  %v1690 = vpop.f32.mrf.mxu0
  %1691 = vmatprep.mubr.bf16.mxu0 %v1594
  %1692 = vmatmul.mubr.bf16.gmra.mxu0 %v1593
  %v1693 = vpop.f32.mrf.mxu0
  %v1694 = vadd.f32 %v119, %v1693
  %v1695 = vpop.f32.mrf.mxu0
  %v1696 = vpop.f32.mrf.mxu0
  %v1697 = vadd.f32 %v119, %v1696
  %v1698 = vpop.f32.mrf.mxu0
  %1699 = vmatprep.mubr.bf16.mxu0 %v1599
  %1700 = vmatmul.mubr.bf16.gmra.mxu0 %v1598
  %v1701 = vpop.f32.mrf.mxu0
  %v1702 = vadd.f32 %v119, %v1701
  %v1703 = vpop.f32.mrf.mxu0
  %v1704 = vpop.f32.mrf.mxu0
  %v1705 = vadd.f32 %v119, %v1704
  %v1706 = vpop.f32.mrf.mxu0
  %1707 = vmatprep.mubr.bf16.mxu0 %v1604
  %1708 = vmatmul.mubr.bf16.gmra.mxu0 %v1603
  %v1709 = vpop.f32.mrf.mxu0
  %v1710 = vadd.f32 %v119, %v1709
  %v1711 = vpop.f32.mrf.mxu0
  %v1712 = vpop.f32.mrf.mxu0
  %v1713 = vpop.f32.mrf.mxu0
  %1714 = vdwg.mxu0
  %1715 = vmatprep.subr.bf16.mxu0 0
  %1716 = vmatpush1.bf16.msra.mxu0 %v405
  %1717 = vmatprep.subr.bf16.mxu0 0
  %1718 = vmatpush1.bf16.msra.mxu0 %v404
  %1719 = vmatprep.subr.bf16.mxu0 0
  %1720 = vmatpush1.bf16.msra.mxu0 %v403
  %1721 = vmatprep.subr.bf16.mxu0 0
  %1722 = vmatpush1.bf16.msra.mxu0 %v402
  %1723 = vmatprep.subr.bf16.mxu0 0
  %1724 = vmatpush1.bf16.msra.mxu0 %v401
  %1725 = vmatprep.subr.bf16.mxu0 0
  %1726 = vmatpush1.bf16.msra.mxu0 %v400
  %1727 = vmatprep.subr.bf16.mxu0 0
  %1728 = vmatpush1.bf16.msra.mxu0 %v399
  %1729 = vmatprep.subr.bf16.mxu0 0
  %1730 = vmatpush1.bf16.msra.mxu0 %v398
  %1731 = vmatprep.subr.bf16.mxu0 0
  %1732 = vmatpush2.bf16.msra.mxu0 %v413
  %1733 = vmatprep.subr.bf16.mxu0 0
  %1734 = vmatpush2.bf16.msra.mxu0 %v412
  %1735 = vmatprep.subr.bf16.mxu0 0
  %1736 = vmatpush2.bf16.msra.mxu0 %v411
  %1737 = vmatprep.subr.bf16.mxu0 0
  %1738 = vmatpush2.bf16.msra.mxu0 %v410
  %1739 = vmatprep.subr.bf16.mxu0 0
  %1740 = vmatpush2.bf16.msra.mxu0 %v409
  %1741 = vmatprep.subr.bf16.mxu0 0
  %1742 = vmatpush2.bf16.msra.mxu0 %v408
  %1743 = vmatprep.subr.bf16.mxu0 0
  %1744 = vmatpush2.bf16.msra.mxu0 %v407
  %1745 = vmatprep.subr.bf16.mxu0 0
  %1746 = vmatpush2.bf16.msra.mxu0 %v406
  %1747 = vmatprep.mubr.bf16.mxu0 %v1586
  %1748 = vmatmul.mubr.bf16.gmra.mxu0 %v1585
  %v1749 = vpop.f32.mrf.mxu0
  %v1750 = vadd.f32 %v1678, %v1749
  %v1751 = vpop.f32.mrf.mxu0
  %v1752 = vpop.f32.mrf.mxu0
  %v1753 = vadd.f32 %v1681, %v1752
  %v1754 = vpop.f32.mrf.mxu0
  %1755 = vmatprep.mubr.bf16.mxu0 %v1591
  %1756 = vmatmul.mubr.bf16.gmra.mxu0 %v1590
  %v1757 = vpop.f32.mrf.mxu0
  %v1758 = vadd.f32 %v1686, %v1757
  %v1759 = vpop.f32.mrf.mxu0
  %v1760 = vpop.f32.mrf.mxu0
  %v1761 = vadd.f32 %v1689, %v1760
  %v1762 = vpop.f32.mrf.mxu0
  %1763 = vmatprep.mubr.bf16.mxu0 %v1596
  %1764 = vmatmul.mubr.bf16.gmra.mxu0 %v1595
  %v1765 = vpop.f32.mrf.mxu0
  %v1766 = vadd.f32 %v1694, %v1765
  %v1767 = vpop.f32.mrf.mxu0
  %v1768 = vpop.f32.mrf.mxu0
  %v1769 = vadd.f32 %v1697, %v1768
  %v1770 = vpop.f32.mrf.mxu0
  %1771 = vmatprep.mubr.bf16.mxu0 %v1601
  %1772 = vmatmul.mubr.bf16.gmra.mxu0 %v1600
  %v1773 = vpop.f32.mrf.mxu0
  %v1774 = vadd.f32 %v1702, %v1773
  %v1775 = vpop.f32.mrf.mxu0
  %v1776 = vpop.f32.mrf.mxu0
  %v1777 = vadd.f32 %v1705, %v1776
  %v1778 = vpop.f32.mrf.mxu0
  %1779 = vmatprep.mubr.bf16.mxu0 %v1606
  %1780 = vmatmul.mubr.bf16.gmra.mxu0 %v1605
  %v1781 = vpop.f32.mrf.mxu0
  %v1782 = vadd.f32 %v1710, %v1781
  %v1783 = vpop.f32.mrf.mxu0
  %v1784 = vpop.f32.mrf.mxu0
  %v1785 = vpop.f32.mrf.mxu0
  %1786 = vdwg.mxu0
  %1787 = vmatprep.subr.bf16.mxu0 0
  %1788 = vmatpush1.bf16.msra.mxu0 0
  %1789 = vmatprep.subr.bf16.mxu0 0
  %1790 = vmatpush1.bf16.msra.mxu0 0
  %1791 = vmatprep.subr.bf16.mxu0 0
  %1792 = vmatpush1.bf16.msra.mxu0 0
  %1793 = vmatprep.subr.bf16.mxu0 0
  %1794 = vmatpush1.bf16.msra.mxu0 0
  %1795 = vmatprep.subr.bf16.mxu0 0
  %1796 = vmatpush1.bf16.msra.mxu0 %v417
  %1797 = vmatprep.subr.bf16.mxu0 0
  %1798 = vmatpush1.bf16.msra.mxu0 %v416
  %1799 = vmatprep.subr.bf16.mxu0 0
  %1800 = vmatpush1.bf16.msra.mxu0 %v415
  %1801 = vmatprep.subr.bf16.mxu0 0
  %1802 = vmatpush1.bf16.msra.mxu0 %v414
  %1803 = vmatprep.subr.bf16.mxu0 0
  %1804 = vmatpush2.bf16.msra.mxu0 0
  %1805 = vmatprep.subr.bf16.mxu0 0
  %1806 = vmatpush2.bf16.msra.mxu0 0
  %1807 = vmatprep.subr.bf16.mxu0 0
  %1808 = vmatpush2.bf16.msra.mxu0 0
  %1809 = vmatprep.subr.bf16.mxu0 0
  %1810 = vmatpush2.bf16.msra.mxu0 0
  %1811 = vmatprep.subr.bf16.mxu0 0
  %1812 = vmatpush2.bf16.msra.mxu0 0
  %1813 = vmatprep.subr.bf16.mxu0 0
  %1814 = vmatpush2.bf16.msra.mxu0 0
  %1815 = vmatprep.subr.bf16.mxu0 0
  %1816 = vmatpush2.bf16.msra.mxu0 0
  %1817 = vmatprep.subr.bf16.mxu0 0
  %1818 = vmatpush2.bf16.msra.mxu0 0
  %1819 = vmatprep.mubr.bf16.mxu0 0
  %1820 = vmatmul.mubr.bf16.gmra.mxu0 %v1629
  %v1821 = vpop.f32.mrf.mxu0
  %v1822 = vadd.f32 %v1750, %v1821
  %v1823 = vpop.f32.mrf.mxu0
  %v1824 = vpop.f32.mrf.mxu0
  %v1825 = vadd.f32 %v1753, %v1824
  %v1826 = vpop.f32.mrf.mxu0
  %1827 = vmatprep.mubr.bf16.mxu0 0
  %1828 = vmatmul.mubr.bf16.gmra.mxu0 %v1632
  %v1829 = vpop.f32.mrf.mxu0
  %v1830 = vadd.f32 %v1758, %v1829
  %v1831 = vpop.f32.mrf.mxu0
  %v1832 = vpop.f32.mrf.mxu0
  %v1833 = vadd.f32 %v1761, %v1832
  %v1834 = vpop.f32.mrf.mxu0
  %1835 = vmatprep.mubr.bf16.mxu0 0
  %1836 = vmatmul.mubr.bf16.gmra.mxu0 %v1635
  %v1837 = vpop.f32.mrf.mxu0
  %v1838 = vadd.f32 %v1766, %v1837
  %v1839 = vpop.f32.mrf.mxu0
  %v1840 = vpop.f32.mrf.mxu0
  %v1841 = vadd.f32 %v1769, %v1840
  %v1842 = vpop.f32.mrf.mxu0
  %1843 = vmatprep.mubr.bf16.mxu0 0
  %1844 = vmatmul.mubr.bf16.gmra.mxu0 %v1638
  %v1845 = vpop.f32.mrf.mxu0
  %v1846 = vadd.f32 %v1774, %v1845
  %v1847 = vpop.f32.mrf.mxu0
  %v1848 = vpop.f32.mrf.mxu0
  %v1849 = vadd.f32 %v1777, %v1848
  %v1850 = vpop.f32.mrf.mxu0
  %1851 = vmatprep.mubr.bf16.mxu0 0
  %1852 = vmatmul.mubr.bf16.gmra.mxu0 %v1641
  %v1853 = vpop.f32.mrf.mxu0
  %v1854 = vadd.f32 %v1782, %v1853
  %v1855 = vpop.f32.mrf.mxu0
  %v1856 = vpop.f32.mrf.mxu0
  %v1857 = vpop.f32.mrf.mxu0
  %1858 = vdwg.mxu0
  %v1859 = vmax.f32 %v1822, 0.0
  %v1860 = vmax.f32 %v1825, 0.0
  %v1861 = vmax.f32 %v1830, 0.0
  %v1862 = vmax.f32 %v1833, 0.0
  %v1863 = vmax.f32 %v1838, 0.0
  %v1864 = vmax.f32 %v1841, 0.0
  %v1865 = vmax.f32 %v1846, 0.0
  %v1866 = vmax.f32 %v1849, 0.0
  %v1867 = vmax.f32 %v1854, 0.0
  %v1868 = vmax.f32 %v1474, %v1859
  %v1869 = vmax.f32 %v1475, %v1860
  %v1870 = vmax.f32 %v1476, %v1861
  %v1871 = vmax.f32 %v1477, %v1862
  %v1872 = vmax.f32 %v1478, %v1863
  %v1873 = vmax.f32 %v1479, %v1864
  %v1874 = vmax.f32 %v1480, %v1865
  %v1875 = vmax.f32 %v1481, %v1866
  %v1876 = vmax.f32 %v1482, %v1867
  %s1877 = scalar_lea.vmem %s0, 720
  %v1878 = vld [vmem:[%s1877] sm:$0xff]
  %v1879 = vld [vmem:[%s1877 + $0x8] sm:$0xff]
  %v1880 = vld [vmem:[%s1877 + $0x10] sm:$0xf]
  %v1881 = vld [vmem:[%s1877 + $0x14] sm:$0xff]
  %v1882 = vld [vmem:[%s1877 + $0x1c] sm:$0xff]
  %v1883 = vld [vmem:[%s1877 + $0x24] sm:$0xf]
  %v1884 = vld [vmem:[%s1877 + $0x28] sm:$0xff]
  %v1885 = vld [vmem:[%s1877 + $0x30] sm:$0xff]
  %v1886 = vld [vmem:[%s1877 + $0x38] sm:$0xf]
  %v1887 = vld [vmem:[%s1877 + $0x3c] sm:$0xff]
  %v1888 = vld [vmem:[%s1877 + $0x44] sm:$0xff]
  %v1889 = vld [vmem:[%s1877 + $0x4c] sm:$0xf]
  %v1890 = vld [vmem:[%s1877 + $0x50] sm:$0xff]
  %v1891 = vld [vmem:[%s1877 + $0x58] sm:$0xff]
  %v1892 = vld [vmem:[%s1877 + $0x60] sm:$0xf]
  %v1893 = vld [vmem:[%s1877 + $0x64] sm:$0xff]
  %v1894 = vld [vmem:[%s1877 + $0x6c] sm:$0xff]
  %v1895 = vld [vmem:[%s1877 + $0x74] sm:$0xf]
  %v1896 = vld [vmem:[%s1877 + $0x78] sm:$0xff]
  %v1897 = vld [vmem:[%s1877 + $0x80] sm:$0xff]
  %v1898 = vld [vmem:[%s1877 + $0x88] sm:$0xf]
  %v1899 = vld [vmem:[%s1877 + $0x8c] sm:$0xff]
  %v1900 = vld [vmem:[%s1877 + $0x94] sm:$0xff]
  %v1901 = vld [vmem:[%s1877 + $0x9c] sm:$0xf]
  %v1902 = vld [vmem:[%s1877 + $0xa0] sm:$0xff]
  %v1903 = vld [vmem:[%s1877 + $0xa8] sm:$0xff]
  %v1904 = vld [vmem:[%s1877 + $0xb0] sm:$0xf]
  %v1932 = vunpack.c.l.b16 %v1878
  %v1933 = vunpack.c.h.b16 %v1878
  %v1934 = vunpack.c.l.b16 %v1879
  %v1935 = vunpack.c.h.b16 %v1879
  %v1936 = vunpack.c.l.b16 %v1880
  %v1937 = vunpack.c.l.b16 %v1881
  %v1938 = vunpack.c.h.b16 %v1881
  %v1939 = vunpack.c.l.b16 %v1882
  %v1940 = vunpack.c.h.b16 %v1882
  %v1941 = vunpack.c.l.b16 %v1883
  %v1942 = vunpack.c.l.b16 %v1884
  %v1943 = vunpack.c.h.b16 %v1884
  %v1944 = vunpack.c.l.b16 %v1885
  %v1945 = vunpack.c.h.b16 %v1885
  %v1946 = vunpack.c.l.b16 %v1886
  %v1947 = vunpack.c.l.b16 %v1887
  %v1948 = vunpack.c.h.b16 %v1887
  %v1949 = vunpack.c.l.b16 %v1888
  %v1950 = vunpack.c.h.b16 %v1888
  %v1951 = vunpack.c.l.b16 %v1889
  %v1952 = vunpack.c.l.b16 %v1890
  %v1953 = vunpack.c.h.b16 %v1890
  %v1954 = vunpack.c.l.b16 %v1891
  %v1955 = vunpack.c.h.b16 %v1891
  %v1956 = vunpack.c.l.b16 %v1892
  %v1957 = vunpack.c.l.b16 %v1893
  %v1958 = vunpack.c.h.b16 %v1893
  %v1959 = vunpack.c.l.b16 %v1894
  %v1960 = vunpack.c.h.b16 %v1894
  %v1961 = vunpack.c.l.b16 %v1895
  %v1962 = vunpack.c.l.b16 %v1896
  %v1963 = vunpack.c.h.b16 %v1896
  %v1964 = vunpack.c.l.b16 %v1897
  %v1965 = vunpack.c.h.b16 %v1897
  %v1966 = vunpack.c.l.b16 %v1898
  %v1967 = vunpack.c.l.b16 %v1899
  %v1968 = vunpack.c.h.b16 %v1899
  %v1969 = vunpack.c.l.b16 %v1900
  %v1970 = vunpack.c.h.b16 %v1900
  %v1971 = vunpack.c.l.b16 %v1901
  %v1972 = vunpack.c.l.b16 %v1902
  %v1973 = vunpack.c.h.b16 %v1902
  %v1974 = vunpack.c.l.b16 %v1903
  %v1975 = vunpack.c.h.b16 %v1903
  %v1976 = vunpack.c.l.b16 %v1904
  %v1977 = vpack.c.b16 %v1937, %v1932
  %v1978 = vpack.c.b16 %v1938, %v1933
  %v1979 = vpack.c.b16 %v1939, %v1934
  %v1980 = vpack.c.b16 %v1940, %v1935
  %v1981 = vpack.c.b16 %v1941, %v1936
  %v1982 = vpack.c.b16 %v1947, %v1942
  %v1983 = vpack.c.b16 %v1948, %v1943
  %v1984 = vpack.c.b16 %v1949, %v1944
  %v1985 = vpack.c.b16 %v1950, %v1945
  %v1986 = vpack.c.b16 %v1951, %v1946
  %v1987 = vpack.c.b16 %v1957, %v1952
  %v1988 = vpack.c.b16 %v1958, %v1953
  %v1989 = vpack.c.b16 %v1959, %v1954
  %v1990 = vpack.c.b16 %v1960, %v1955
  %v1991 = vpack.c.b16 %v1961, %v1956
  %v1992 = vpack.c.b16 %v1967, %v1962
  %v1993 = vpack.c.b16 %v1968, %v1963
  %v1994 = vpack.c.b16 %v1969, %v1964
  %v1995 = vpack.c.b16 %v1970, %v1965
  %v1996 = vpack.c.b16 %v1971, %v1966
  %v1997 = vpack.c.b16 %v1972, %v1972
  %v1998 = vpack.c.b16 %v1973, %v1973
  %v1999 = vpack.c.b16 %v1974, %v1974
  %v2000 = vpack.c.b16 %v1975, %v1975
  %v2001 = vpack.c.b16 %v1976, %v1976
  %v2023 = vsel %vm454, %v1981, 0
  %v2026 = vsel %vm454, %v1986, 0
  %v2029 = vsel %vm454, %v1991, 0
  %v2032 = vsel %vm454, %v1996, 0
  %v2035 = vsel %vm454, %v2001, 0
  %2037 = vmatprep.subr.bf16.mxu0 0
  %2038 = vmatpush1.bf16.msra.mxu0 %v389
  %2039 = vmatprep.subr.bf16.mxu0 0
  %2040 = vmatpush1.bf16.msra.mxu0 %v388
  %2041 = vmatprep.subr.bf16.mxu0 0
  %2042 = vmatpush1.bf16.msra.mxu0 %v387
  %2043 = vmatprep.subr.bf16.mxu0 0
  %2044 = vmatpush1.bf16.msra.mxu0 %v386
  %2045 = vmatprep.subr.bf16.mxu0 0
  %2046 = vmatpush1.bf16.msra.mxu0 %v385
  %2047 = vmatprep.subr.bf16.mxu0 0
  %2048 = vmatpush1.bf16.msra.mxu0 %v384
  %2049 = vmatprep.subr.bf16.mxu0 0
  %2050 = vmatpush1.bf16.msra.mxu0 %v383
  %2051 = vmatprep.subr.bf16.mxu0 0
  %2052 = vmatpush1.bf16.msra.mxu0 %v382
  %2053 = vmatprep.subr.bf16.mxu0 0
  %2054 = vmatpush2.bf16.msra.mxu0 %v397
  %2055 = vmatprep.subr.bf16.mxu0 0
  %2056 = vmatpush2.bf16.msra.mxu0 %v396
  %2057 = vmatprep.subr.bf16.mxu0 0
  %2058 = vmatpush2.bf16.msra.mxu0 %v395
  %2059 = vmatprep.subr.bf16.mxu0 0
  %2060 = vmatpush2.bf16.msra.mxu0 %v394
  %2061 = vmatprep.subr.bf16.mxu0 0
  %2062 = vmatpush2.bf16.msra.mxu0 %v393
  %2063 = vmatprep.subr.bf16.mxu0 0
  %2064 = vmatpush2.bf16.msra.mxu0 %v392
  %2065 = vmatprep.subr.bf16.mxu0 0
  %2066 = vmatpush2.bf16.msra.mxu0 %v391
  %2067 = vmatprep.subr.bf16.mxu0 0
  %2068 = vmatpush2.bf16.msra.mxu0 %v390
  %2069 = vmatprep.mubr.bf16.mxu0 %v1978
  %2070 = vmatmul.mubr.bf16.gmra.mxu0 %v1977
  %v2071 = vpop.f32.mrf.mxu0
  %v2072 = vadd.f32 %v119, %v2071
  %v2073 = vpop.f32.mrf.mxu0
  %v2074 = vpop.f32.mrf.mxu0
  %v2075 = vadd.f32 %v119, %v2074
  %v2076 = vpop.f32.mrf.mxu0
  %2077 = vmatprep.mubr.bf16.mxu0 %v1983
  %2078 = vmatmul.mubr.bf16.gmra.mxu0 %v1982
  %v2079 = vpop.f32.mrf.mxu0
  %v2080 = vadd.f32 %v119, %v2079
  %v2081 = vpop.f32.mrf.mxu0
  %v2082 = vpop.f32.mrf.mxu0
  %v2083 = vadd.f32 %v119, %v2082
  %v2084 = vpop.f32.mrf.mxu0
  %2085 = vmatprep.mubr.bf16.mxu0 %v1988
  %2086 = vmatmul.mubr.bf16.gmra.mxu0 %v1987
  %v2087 = vpop.f32.mrf.mxu0
  %v2088 = vadd.f32 %v119, %v2087
  %v2089 = vpop.f32.mrf.mxu0
  %v2090 = vpop.f32.mrf.mxu0
  %v2091 = vadd.f32 %v119, %v2090
  %v2092 = vpop.f32.mrf.mxu0
  %2093 = vmatprep.mubr.bf16.mxu0 %v1993
  %2094 = vmatmul.mubr.bf16.gmra.mxu0 %v1992
  %v2095 = vpop.f32.mrf.mxu0
  %v2096 = vadd.f32 %v119, %v2095
  %v2097 = vpop.f32.mrf.mxu0
  %v2098 = vpop.f32.mrf.mxu0
  %v2099 = vadd.f32 %v119, %v2098
  %v2100 = vpop.f32.mrf.mxu0
  %2101 = vmatprep.mubr.bf16.mxu0 %v1998
  %2102 = vmatmul.mubr.bf16.gmra.mxu0 %v1997
  %v2103 = vpop.f32.mrf.mxu0
  %v2104 = vadd.f32 %v119, %v2103
  %v2105 = vpop.f32.mrf.mxu0
  %v2106 = vpop.f32.mrf.mxu0
  %v2107 = vpop.f32.mrf.mxu0
  %2108 = vdwg.mxu0
  %2109 = vmatprep.subr.bf16.mxu0 0
  %2110 = vmatpush1.bf16.msra.mxu0 %v405
  %2111 = vmatprep.subr.bf16.mxu0 0
  %2112 = vmatpush1.bf16.msra.mxu0 %v404
  %2113 = vmatprep.subr.bf16.mxu0 0
  %2114 = vmatpush1.bf16.msra.mxu0 %v403
  %2115 = vmatprep.subr.bf16.mxu0 0
  %2116 = vmatpush1.bf16.msra.mxu0 %v402
  %2117 = vmatprep.subr.bf16.mxu0 0
  %2118 = vmatpush1.bf16.msra.mxu0 %v401
  %2119 = vmatprep.subr.bf16.mxu0 0
  %2120 = vmatpush1.bf16.msra.mxu0 %v400
  %2121 = vmatprep.subr.bf16.mxu0 0
  %2122 = vmatpush1.bf16.msra.mxu0 %v399
  %2123 = vmatprep.subr.bf16.mxu0 0
  %2124 = vmatpush1.bf16.msra.mxu0 %v398
  %2125 = vmatprep.subr.bf16.mxu0 0
  %2126 = vmatpush2.bf16.msra.mxu0 %v413
  %2127 = vmatprep.subr.bf16.mxu0 0
  %2128 = vmatpush2.bf16.msra.mxu0 %v412
  %2129 = vmatprep.subr.bf16.mxu0 0
  %2130 = vmatpush2.bf16.msra.mxu0 %v411
  %2131 = vmatprep.subr.bf16.mxu0 0
  %2132 = vmatpush2.bf16.msra.mxu0 %v410
  %2133 = vmatprep.subr.bf16.mxu0 0
  %2134 = vmatpush2.bf16.msra.mxu0 %v409
  %2135 = vmatprep.subr.bf16.mxu0 0
  %2136 = vmatpush2.bf16.msra.mxu0 %v408
  %2137 = vmatprep.subr.bf16.mxu0 0
  %2138 = vmatpush2.bf16.msra.mxu0 %v407
  %2139 = vmatprep.subr.bf16.mxu0 0
  %2140 = vmatpush2.bf16.msra.mxu0 %v406
  %2141 = vmatprep.mubr.bf16.mxu0 %v1980
  %2142 = vmatmul.mubr.bf16.gmra.mxu0 %v1979
  %v2143 = vpop.f32.mrf.mxu0
  %v2144 = vadd.f32 %v2072, %v2143
  %v2145 = vpop.f32.mrf.mxu0
  %v2146 = vpop.f32.mrf.mxu0
  %v2147 = vadd.f32 %v2075, %v2146
  %v2148 = vpop.f32.mrf.mxu0
  %2149 = vmatprep.mubr.bf16.mxu0 %v1985
  %2150 = vmatmul.mubr.bf16.gmra.mxu0 %v1984
  %v2151 = vpop.f32.mrf.mxu0
  %v2152 = vadd.f32 %v2080, %v2151
  %v2153 = vpop.f32.mrf.mxu0
  %v2154 = vpop.f32.mrf.mxu0
  %v2155 = vadd.f32 %v2083, %v2154
  %v2156 = vpop.f32.mrf.mxu0
  %2157 = vmatprep.mubr.bf16.mxu0 %v1990
  %2158 = vmatmul.mubr.bf16.gmra.mxu0 %v1989
  %v2159 = vpop.f32.mrf.mxu0
  %v2160 = vadd.f32 %v2088, %v2159
  %v2161 = vpop.f32.mrf.mxu0
  %v2162 = vpop.f32.mrf.mxu0
  %v2163 = vadd.f32 %v2091, %v2162
  %v2164 = vpop.f32.mrf.mxu0
  %2165 = vmatprep.mubr.bf16.mxu0 %v1995
  %2166 = vmatmul.mubr.bf16.gmra.mxu0 %v1994
  %v2167 = vpop.f32.mrf.mxu0
  %v2168 = vadd.f32 %v2096, %v2167
  %v2169 = vpop.f32.mrf.mxu0
  %v2170 = vpop.f32.mrf.mxu0
  %v2171 = vadd.f32 %v2099, %v2170
  %v2172 = vpop.f32.mrf.mxu0
  %2173 = vmatprep.mubr.bf16.mxu0 %v2000
  %2174 = vmatmul.mubr.bf16.gmra.mxu0 %v1999
  %v2175 = vpop.f32.mrf.mxu0
  %v2176 = vadd.f32 %v2104, %v2175
  %v2177 = vpop.f32.mrf.mxu0
  %v2178 = vpop.f32.mrf.mxu0
  %v2179 = vpop.f32.mrf.mxu0
  %2180 = vdwg.mxu0
  %2181 = vmatprep.subr.bf16.mxu0 0
  %2182 = vmatpush1.bf16.msra.mxu0 0
  %2183 = vmatprep.subr.bf16.mxu0 0
  %2184 = vmatpush1.bf16.msra.mxu0 0
  %2185 = vmatprep.subr.bf16.mxu0 0
  %2186 = vmatpush1.bf16.msra.mxu0 0
  %2187 = vmatprep.subr.bf16.mxu0 0
  %2188 = vmatpush1.bf16.msra.mxu0 0
  %2189 = vmatprep.subr.bf16.mxu0 0
  %2190 = vmatpush1.bf16.msra.mxu0 %v417
  %2191 = vmatprep.subr.bf16.mxu0 0
  %2192 = vmatpush1.bf16.msra.mxu0 %v416
  %2193 = vmatprep.subr.bf16.mxu0 0
  %2194 = vmatpush1.bf16.msra.mxu0 %v415
  %2195 = vmatprep.subr.bf16.mxu0 0
  %2196 = vmatpush1.bf16.msra.mxu0 %v414
  %2197 = vmatprep.subr.bf16.mxu0 0
  %2198 = vmatpush2.bf16.msra.mxu0 0
  %2199 = vmatprep.subr.bf16.mxu0 0
  %2200 = vmatpush2.bf16.msra.mxu0 0
  %2201 = vmatprep.subr.bf16.mxu0 0
  %2202 = vmatpush2.bf16.msra.mxu0 0
  %2203 = vmatprep.subr.bf16.mxu0 0
  %2204 = vmatpush2.bf16.msra.mxu0 0
  %2205 = vmatprep.subr.bf16.mxu0 0
  %2206 = vmatpush2.bf16.msra.mxu0 0
  %2207 = vmatprep.subr.bf16.mxu0 0
  %2208 = vmatpush2.bf16.msra.mxu0 0
  %2209 = vmatprep.subr.bf16.mxu0 0
  %2210 = vmatpush2.bf16.msra.mxu0 0
  %2211 = vmatprep.subr.bf16.mxu0 0
  %2212 = vmatpush2.bf16.msra.mxu0 0
  %2213 = vmatprep.mubr.bf16.mxu0 0
  %2214 = vmatmul.mubr.bf16.gmra.mxu0 %v2023
  %v2215 = vpop.f32.mrf.mxu0
  %v2216 = vadd.f32 %v2144, %v2215
  %v2217 = vpop.f32.mrf.mxu0
  %v2218 = vpop.f32.mrf.mxu0
  %v2219 = vadd.f32 %v2147, %v2218
  %v2220 = vpop.f32.mrf.mxu0
  %2221 = vmatprep.mubr.bf16.mxu0 0
  %2222 = vmatmul.mubr.bf16.gmra.mxu0 %v2026
  %v2223 = vpop.f32.mrf.mxu0
  %v2224 = vadd.f32 %v2152, %v2223
  %v2225 = vpop.f32.mrf.mxu0
  %v2226 = vpop.f32.mrf.mxu0
  %v2227 = vadd.f32 %v2155, %v2226
  %v2228 = vpop.f32.mrf.mxu0
  %2229 = vmatprep.mubr.bf16.mxu0 0
  %2230 = vmatmul.mubr.bf16.gmra.mxu0 %v2029
  %v2231 = vpop.f32.mrf.mxu0
  %v2232 = vadd.f32 %v2160, %v2231
  %v2233 = vpop.f32.mrf.mxu0
  %v2234 = vpop.f32.mrf.mxu0
  %v2235 = vadd.f32 %v2163, %v2234
  %v2236 = vpop.f32.mrf.mxu0
  %2237 = vmatprep.mubr.bf16.mxu0 0
  %2238 = vmatmul.mubr.bf16.gmra.mxu0 %v2032
  %v2239 = vpop.f32.mrf.mxu0
  %v2240 = vadd.f32 %v2168, %v2239
  %v2241 = vpop.f32.mrf.mxu0
  %v2242 = vpop.f32.mrf.mxu0
  %v2243 = vadd.f32 %v2171, %v2242
  %v2244 = vpop.f32.mrf.mxu0
  %2245 = vmatprep.mubr.bf16.mxu0 0
  %2246 = vmatmul.mubr.bf16.gmra.mxu0 %v2035
  %v2247 = vpop.f32.mrf.mxu0
  %v2248 = vadd.f32 %v2176, %v2247
  %v2249 = vpop.f32.mrf.mxu0
  %v2250 = vpop.f32.mrf.mxu0
  %v2251 = vpop.f32.mrf.mxu0
  %2252 = vdwg.mxu0
  %v2253 = vmax.f32 %v2216, 0.0
  %v2254 = vmax.f32 %v2219, 0.0
  %v2255 = vmax.f32 %v2224, 0.0
  %v2256 = vmax.f32 %v2227, 0.0
  %v2257 = vmax.f32 %v2232, 0.0
  %v2258 = vmax.f32 %v2235, 0.0
  %v2259 = vmax.f32 %v2240, 0.0
  %v2260 = vmax.f32 %v2243, 0.0
  %v2261 = vmax.f32 %v2248, 0.0
  %v2262 = vmax.f32 %v1868, %v2253
  %v2263 = vmax.f32 %v1869, %v2254
  %v2264 = vmax.f32 %v1870, %v2255
  %v2265 = vmax.f32 %v1871, %v2256
  %v2266 = vmax.f32 %v1872, %v2257
  %v2267 = vmax.f32 %v1873, %v2258
  %v2268 = vmax.f32 %v1874, %v2259
  %v2269 = vmax.f32 %v1875, %v2260
  %v2270 = vmax.f32 %v1876, %v2261
  %s2271 = scalar_lea.vmem %s0, 900
  %v2272 = vld [vmem:[%s2271] sm:$0xff]
  %v2273 = vld [vmem:[%s2271 + $0x8] sm:$0xff]
  %v2274 = vld [vmem:[%s2271 + $0x10] sm:$0xf]
  %v2275 = vld [vmem:[%s2271 + $0x14] sm:$0xff]
  %v2276 = vld [vmem:[%s2271 + $0x1c] sm:$0xff]
  %v2277 = vld [vmem:[%s2271 + $0x24] sm:$0xf]
  %v2278 = vld [vmem:[%s2271 + $0x28] sm:$0xff]
  %v2279 = vld [vmem:[%s2271 + $0x30] sm:$0xff]
  %v2280 = vld [vmem:[%s2271 + $0x38] sm:$0xf]
  %v2281 = vld [vmem:[%s2271 + $0x3c] sm:$0xff]
  %v2282 = vld [vmem:[%s2271 + $0x44] sm:$0xff]
  %v2283 = vld [vmem:[%s2271 + $0x4c] sm:$0xf]
  %v2284 = vld [vmem:[%s2271 + $0x50] sm:$0xff]
  %v2285 = vld [vmem:[%s2271 + $0x58] sm:$0xff]
  %v2286 = vld [vmem:[%s2271 + $0x60] sm:$0xf]
  %v2287 = vld [vmem:[%s2271 + $0x64] sm:$0xff]
  %v2288 = vld [vmem:[%s2271 + $0x6c] sm:$0xff]
  %v2289 = vld [vmem:[%s2271 + $0x74] sm:$0xf]
  %v2290 = vld [vmem:[%s2271 + $0x78] sm:$0xff]
  %v2291 = vld [vmem:[%s2271 + $0x80] sm:$0xff]
  %v2292 = vld [vmem:[%s2271 + $0x88] sm:$0xf]
  %v2293 = vld [vmem:[%s2271 + $0x8c] sm:$0xff]
  %v2294 = vld [vmem:[%s2271 + $0x94] sm:$0xff]
  %v2295 = vld [vmem:[%s2271 + $0x9c] sm:$0xf]
  %v2296 = vld [vmem:[%s2271 + $0xa0] sm:$0xff]
  %v2297 = vld [vmem:[%s2271 + $0xa8] sm:$0xff]
  %v2298 = vld [vmem:[%s2271 + $0xb0] sm:$0xf]
  %v2326 = vunpack.c.l.b16 %v2272
  %v2327 = vunpack.c.h.b16 %v2272
  %v2328 = vunpack.c.l.b16 %v2273
  %v2329 = vunpack.c.h.b16 %v2273
  %v2330 = vunpack.c.l.b16 %v2274
  %v2331 = vunpack.c.l.b16 %v2275
  %v2332 = vunpack.c.h.b16 %v2275
  %v2333 = vunpack.c.l.b16 %v2276
  %v2334 = vunpack.c.h.b16 %v2276
  %v2335 = vunpack.c.l.b16 %v2277
  %v2336 = vunpack.c.l.b16 %v2278
  %v2337 = vunpack.c.h.b16 %v2278
  %v2338 = vunpack.c.l.b16 %v2279
  %v2339 = vunpack.c.h.b16 %v2279
  %v2340 = vunpack.c.l.b16 %v2280
  %v2341 = vunpack.c.l.b16 %v2281
  %v2342 = vunpack.c.h.b16 %v2281
  %v2343 = vunpack.c.l.b16 %v2282
  %v2344 = vunpack.c.h.b16 %v2282
  %v2345 = vunpack.c.l.b16 %v2283
  %v2346 = vunpack.c.l.b16 %v2284
  %v2347 = vunpack.c.h.b16 %v2284
  %v2348 = vunpack.c.l.b16 %v2285
  %v2349 = vunpack.c.h.b16 %v2285
  %v2350 = vunpack.c.l.b16 %v2286
  %v2351 = vunpack.c.l.b16 %v2287
  %v2352 = vunpack.c.h.b16 %v2287
  %v2353 = vunpack.c.l.b16 %v2288
  %v2354 = vunpack.c.h.b16 %v2288
  %v2355 = vunpack.c.l.b16 %v2289
  %v2356 = vunpack.c.l.b16 %v2290
  %v2357 = vunpack.c.h.b16 %v2290
  %v2358 = vunpack.c.l.b16 %v2291
  %v2359 = vunpack.c.h.b16 %v2291
  %v2360 = vunpack.c.l.b16 %v2292
  %v2361 = vunpack.c.l.b16 %v2293
  %v2362 = vunpack.c.h.b16 %v2293
  %v2363 = vunpack.c.l.b16 %v2294
  %v2364 = vunpack.c.h.b16 %v2294
  %v2365 = vunpack.c.l.b16 %v2295
  %v2366 = vunpack.c.l.b16 %v2296
  %v2367 = vunpack.c.h.b16 %v2296
  %v2368 = vunpack.c.l.b16 %v2297
  %v2369 = vunpack.c.h.b16 %v2297
  %v2370 = vunpack.c.l.b16 %v2298
  %v2371 = vpack.c.b16 %v2331, %v2326
  %v2372 = vpack.c.b16 %v2332, %v2327
  %v2373 = vpack.c.b16 %v2333, %v2328
  %v2374 = vpack.c.b16 %v2334, %v2329
  %v2375 = vpack.c.b16 %v2335, %v2330
  %v2376 = vpack.c.b16 %v2341, %v2336
  %v2377 = vpack.c.b16 %v2342, %v2337
  %v2378 = vpack.c.b16 %v2343, %v2338
  %v2379 = vpack.c.b16 %v2344, %v2339
  %v2380 = vpack.c.b16 %v2345, %v2340
  %v2381 = vpack.c.b16 %v2351, %v2346
  %v2382 = vpack.c.b16 %v2352, %v2347
  %v2383 = vpack.c.b16 %v2353, %v2348
  %v2384 = vpack.c.b16 %v2354, %v2349
  %v2385 = vpack.c.b16 %v2355, %v2350
  %v2386 = vpack.c.b16 %v2361, %v2356
  %v2387 = vpack.c.b16 %v2362, %v2357
  %v2388 = vpack.c.b16 %v2363, %v2358
  %v2389 = vpack.c.b16 %v2364, %v2359
  %v2390 = vpack.c.b16 %v2365, %v2360
  %v2391 = vpack.c.b16 %v2366, %v2366
  %v2392 = vpack.c.b16 %v2367, %v2367
  %v2393 = vpack.c.b16 %v2368, %v2368
  %v2394 = vpack.c.b16 %v2369, %v2369
  %v2395 = vpack.c.b16 %v2370, %v2370
  %v2417 = vsel %vm454, %v2375, 0
  %v2420 = vsel %vm454, %v2380, 0
  %v2423 = vsel %vm454, %v2385, 0
  %v2426 = vsel %vm454, %v2390, 0
  %v2429 = vsel %vm454, %v2395, 0
  %2431 = vmatprep.subr.bf16.mxu0 0
  %2432 = vmatpush1.bf16.msra.mxu0 %v389
  %2433 = vmatprep.subr.bf16.mxu0 0
  %2434 = vmatpush1.bf16.msra.mxu0 %v388
  %2435 = vmatprep.subr.bf16.mxu0 0
  %2436 = vmatpush1.bf16.msra.mxu0 %v387
  %2437 = vmatprep.subr.bf16.mxu0 0
  %2438 = vmatpush1.bf16.msra.mxu0 %v386
  %2439 = vmatprep.subr.bf16.mxu0 0
  %2440 = vmatpush1.bf16.msra.mxu0 %v385
  %2441 = vmatprep.subr.bf16.mxu0 0
  %2442 = vmatpush1.bf16.msra.mxu0 %v384
  %2443 = vmatprep.subr.bf16.mxu0 0
  %2444 = vmatpush1.bf16.msra.mxu0 %v383
  %2445 = vmatprep.subr.bf16.mxu0 0
  %2446 = vmatpush1.bf16.msra.mxu0 %v382
  %2447 = vmatprep.subr.bf16.mxu0 0
  %2448 = vmatpush2.bf16.msra.mxu0 %v397
  %2449 = vmatprep.subr.bf16.mxu0 0
  %2450 = vmatpush2.bf16.msra.mxu0 %v396
  %2451 = vmatprep.subr.bf16.mxu0 0
  %2452 = vmatpush2.bf16.msra.mxu0 %v395
  %2453 = vmatprep.subr.bf16.mxu0 0
  %2454 = vmatpush2.bf16.msra.mxu0 %v394
  %2455 = vmatprep.subr.bf16.mxu0 0
  %2456 = vmatpush2.bf16.msra.mxu0 %v393
  %2457 = vmatprep.subr.bf16.mxu0 0
  %2458 = vmatpush2.bf16.msra.mxu0 %v392
  %2459 = vmatprep.subr.bf16.mxu0 0
  %2460 = vmatpush2.bf16.msra.mxu0 %v391
  %2461 = vmatprep.subr.bf16.mxu0 0
  %2462 = vmatpush2.bf16.msra.mxu0 %v390
  %2463 = vmatprep.mubr.bf16.mxu0 %v2372
  %2464 = vmatmul.mubr.bf16.gmra.mxu0 %v2371
  %v2465 = vpop.f32.mrf.mxu0
  %v2466 = vadd.f32 %v119, %v2465
  %v2467 = vpop.f32.mrf.mxu0
  %v2468 = vpop.f32.mrf.mxu0
  %v2469 = vadd.f32 %v119, %v2468
  %v2470 = vpop.f32.mrf.mxu0
  %2471 = vmatprep.mubr.bf16.mxu0 %v2377
  %2472 = vmatmul.mubr.bf16.gmra.mxu0 %v2376
  %v2473 = vpop.f32.mrf.mxu0
  %v2474 = vadd.f32 %v119, %v2473
  %v2475 = vpop.f32.mrf.mxu0
  %v2476 = vpop.f32.mrf.mxu0
  %v2477 = vadd.f32 %v119, %v2476
  %v2478 = vpop.f32.mrf.mxu0
  %2479 = vmatprep.mubr.bf16.mxu0 %v2382
  %2480 = vmatmul.mubr.bf16.gmra.mxu0 %v2381
  %v2481 = vpop.f32.mrf.mxu0
  %v2482 = vadd.f32 %v119, %v2481
  %v2483 = vpop.f32.mrf.mxu0
  %v2484 = vpop.f32.mrf.mxu0
  %v2485 = vadd.f32 %v119, %v2484
  %v2486 = vpop.f32.mrf.mxu0
  %2487 = vmatprep.mubr.bf16.mxu0 %v2387
  %2488 = vmatmul.mubr.bf16.gmra.mxu0 %v2386
  %v2489 = vpop.f32.mrf.mxu0
  %v2490 = vadd.f32 %v119, %v2489
  %v2491 = vpop.f32.mrf.mxu0
  %v2492 = vpop.f32.mrf.mxu0
  %v2493 = vadd.f32 %v119, %v2492
  %v2494 = vpop.f32.mrf.mxu0
  %2495 = vmatprep.mubr.bf16.mxu0 %v2392
  %2496 = vmatmul.mubr.bf16.gmra.mxu0 %v2391
  %v2497 = vpop.f32.mrf.mxu0
  %v2498 = vadd.f32 %v119, %v2497
  %v2499 = vpop.f32.mrf.mxu0
  %v2500 = vpop.f32.mrf.mxu0
  %v2501 = vpop.f32.mrf.mxu0
  %2502 = vdwg.mxu0
  %2503 = vmatprep.subr.bf16.mxu0 0
  %2504 = vmatpush1.bf16.msra.mxu0 %v405
  %2505 = vmatprep.subr.bf16.mxu0 0
  %2506 = vmatpush1.bf16.msra.mxu0 %v404
  %2507 = vmatprep.subr.bf16.mxu0 0
  %2508 = vmatpush1.bf16.msra.mxu0 %v403
  %2509 = vmatprep.subr.bf16.mxu0 0
  %2510 = vmatpush1.bf16.msra.mxu0 %v402
  %2511 = vmatprep.subr.bf16.mxu0 0
  %2512 = vmatpush1.bf16.msra.mxu0 %v401
  %2513 = vmatprep.subr.bf16.mxu0 0
  %2514 = vmatpush1.bf16.msra.mxu0 %v400
  %2515 = vmatprep.subr.bf16.mxu0 0
  %2516 = vmatpush1.bf16.msra.mxu0 %v399
  %2517 = vmatprep.subr.bf16.mxu0 0
  %2518 = vmatpush1.bf16.msra.mxu0 %v398
  %2519 = vmatprep.subr.bf16.mxu0 0
  %2520 = vmatpush2.bf16.msra.mxu0 %v413
  %2521 = vmatprep.subr.bf16.mxu0 0
  %2522 = vmatpush2.bf16.msra.mxu0 %v412
  %2523 = vmatprep.subr.bf16.mxu0 0
  %2524 = vmatpush2.bf16.msra.mxu0 %v411
  %2525 = vmatprep.subr.bf16.mxu0 0
  %2526 = vmatpush2.bf16.msra.mxu0 %v410
  %2527 = vmatprep.subr.bf16.mxu0 0
  %2528 = vmatpush2.bf16.msra.mxu0 %v409
  %2529 = vmatprep.subr.bf16.mxu0 0
  %2530 = vmatpush2.bf16.msra.mxu0 %v408
  %2531 = vmatprep.subr.bf16.mxu0 0
  %2532 = vmatpush2.bf16.msra.mxu0 %v407
  %2533 = vmatprep.subr.bf16.mxu0 0
  %2534 = vmatpush2.bf16.msra.mxu0 %v406
  %2535 = vmatprep.mubr.bf16.mxu0 %v2374
  %2536 = vmatmul.mubr.bf16.gmra.mxu0 %v2373
  %v2537 = vpop.f32.mrf.mxu0
  %v2538 = vadd.f32 %v2466, %v2537
  %v2539 = vpop.f32.mrf.mxu0
  %v2540 = vpop.f32.mrf.mxu0
  %v2541 = vadd.f32 %v2469, %v2540
  %v2542 = vpop.f32.mrf.mxu0
  %2543 = vmatprep.mubr.bf16.mxu0 %v2379
  %2544 = vmatmul.mubr.bf16.gmra.mxu0 %v2378
  %v2545 = vpop.f32.mrf.mxu0
  %v2546 = vadd.f32 %v2474, %v2545
  %v2547 = vpop.f32.mrf.mxu0
  %v2548 = vpop.f32.mrf.mxu0
  %v2549 = vadd.f32 %v2477, %v2548
  %v2550 = vpop.f32.mrf.mxu0
  %2551 = vmatprep.mubr.bf16.mxu0 %v2384
  %2552 = vmatmul.mubr.bf16.gmra.mxu0 %v2383
  %v2553 = vpop.f32.mrf.mxu0
  %v2554 = vadd.f32 %v2482, %v2553
  %v2555 = vpop.f32.mrf.mxu0
  %v2556 = vpop.f32.mrf.mxu0
  %v2557 = vadd.f32 %v2485, %v2556
  %v2558 = vpop.f32.mrf.mxu0
  %2559 = vmatprep.mubr.bf16.mxu0 %v2389
  %2560 = vmatmul.mubr.bf16.gmra.mxu0 %v2388
  %v2561 = vpop.f32.mrf.mxu0
  %v2562 = vadd.f32 %v2490, %v2561
  %v2563 = vpop.f32.mrf.mxu0
  %v2564 = vpop.f32.mrf.mxu0
  %v2565 = vadd.f32 %v2493, %v2564
  %v2566 = vpop.f32.mrf.mxu0
  %2567 = vmatprep.mubr.bf16.mxu0 %v2394
  %2568 = vmatmul.mubr.bf16.gmra.mxu0 %v2393
  %v2569 = vpop.f32.mrf.mxu0
  %v2570 = vadd.f32 %v2498, %v2569
  %v2571 = vpop.f32.mrf.mxu0
  %v2572 = vpop.f32.mrf.mxu0
  %v2573 = vpop.f32.mrf.mxu0
  %2574 = vdwg.mxu0
  %2575 = vmatprep.subr.bf16.mxu0 0
  %2576 = vmatpush1.bf16.msra.mxu0 0
  %2577 = vmatprep.subr.bf16.mxu0 0
  %2578 = vmatpush1.bf16.msra.mxu0 0
  %2579 = vmatprep.subr.bf16.mxu0 0
  %2580 = vmatpush1.bf16.msra.mxu0 0
  %2581 = vmatprep.subr.bf16.mxu0 0
  %2582 = vmatpush1.bf16.msra.mxu0 0
  %2583 = vmatprep.subr.bf16.mxu0 0
  %2584 = vmatpush1.bf16.msra.mxu0 %v417
  %2585 = vmatprep.subr.bf16.mxu0 0
  %2586 = vmatpush1.bf16.msra.mxu0 %v416
  %2587 = vmatprep.subr.bf16.mxu0 0
  %2588 = vmatpush1.bf16.msra.mxu0 %v415
  %2589 = vmatprep.subr.bf16.mxu0 0
  %2590 = vmatpush1.bf16.msra.mxu0 %v414
  %2591 = vmatprep.subr.bf16.mxu0 0
  %2592 = vmatpush2.bf16.msra.mxu0 0
  %2593 = vmatprep.subr.bf16.mxu0 0
  %2594 = vmatpush2.bf16.msra.mxu0 0
  %2595 = vmatprep.subr.bf16.mxu0 0
  %2596 = vmatpush2.bf16.msra.mxu0 0
  %2597 = vmatprep.subr.bf16.mxu0 0
  %2598 = vmatpush2.bf16.msra.mxu0 0
  %2599 = vmatprep.subr.bf16.mxu0 0
  %2600 = vmatpush2.bf16.msra.mxu0 0
  %2601 = vmatprep.subr.bf16.mxu0 0
  %2602 = vmatpush2.bf16.msra.mxu0 0
  %2603 = vmatprep.subr.bf16.mxu0 0
  %2604 = vmatpush2.bf16.msra.mxu0 0
  %2605 = vmatprep.subr.bf16.mxu0 0
  %2606 = vmatpush2.bf16.msra.mxu0 0
  %2607 = vmatprep.mubr.bf16.mxu0 0
  %2608 = vmatmul.mubr.bf16.gmra.mxu0 %v2417
  %v2609 = vpop.f32.mrf.mxu0
  %v2610 = vadd.f32 %v2538, %v2609
  %v2611 = vpop.f32.mrf.mxu0
  %v2612 = vpop.f32.mrf.mxu0
  %v2613 = vadd.f32 %v2541, %v2612
  %v2614 = vpop.f32.mrf.mxu0
  %2615 = vmatprep.mubr.bf16.mxu0 0
  %2616 = vmatmul.mubr.bf16.gmra.mxu0 %v2420
  %v2617 = vpop.f32.mrf.mxu0
  %v2618 = vadd.f32 %v2546, %v2617
  %v2619 = vpop.f32.mrf.mxu0
  %v2620 = vpop.f32.mrf.mxu0
  %v2621 = vadd.f32 %v2549, %v2620
  %v2622 = vpop.f32.mrf.mxu0
  %2623 = vmatprep.mubr.bf16.mxu0 0
  %2624 = vmatmul.mubr.bf16.gmra.mxu0 %v2423
  %v2625 = vpop.f32.mrf.mxu0
  %v2626 = vadd.f32 %v2554, %v2625
  %v2627 = vpop.f32.mrf.mxu0
  %v2628 = vpop.f32.mrf.mxu0
  %v2629 = vadd.f32 %v2557, %v2628
  %v2630 = vpop.f32.mrf.mxu0
  %2631 = vmatprep.mubr.bf16.mxu0 0
  %2632 = vmatmul.mubr.bf16.gmra.mxu0 %v2426
  %v2633 = vpop.f32.mrf.mxu0
  %v2634 = vadd.f32 %v2562, %v2633
  %v2635 = vpop.f32.mrf.mxu0
  %v2636 = vpop.f32.mrf.mxu0
  %v2637 = vadd.f32 %v2565, %v2636
  %v2638 = vpop.f32.mrf.mxu0
  %2639 = vmatprep.mubr.bf16.mxu0 0
  %2640 = vmatmul.mubr.bf16.gmra.mxu0 %v2429
  %v2641 = vpop.f32.mrf.mxu0
  %v2642 = vadd.f32 %v2570, %v2641
  %v2643 = vpop.f32.mrf.mxu0
  %v2644 = vpop.f32.mrf.mxu0
  %v2645 = vpop.f32.mrf.mxu0
  %2646 = vdwg.mxu0
  %v2647 = vmax.f32 %v2610, 0.0
  %v2648 = vmax.f32 %v2613, 0.0
  %v2649 = vmax.f32 %v2618, 0.0
  %v2650 = vmax.f32 %v2621, 0.0
  %v2651 = vmax.f32 %v2626, 0.0
  %v2652 = vmax.f32 %v2629, 0.0
  %v2653 = vmax.f32 %v2634, 0.0
  %v2654 = vmax.f32 %v2637, 0.0
  %v2655 = vmax.f32 %v2642, 0.0
  %v2656 = vmax.f32 %v2262, %v2647
  %v2657 = vmax.f32 %v2263, %v2648
  %v2658 = vmax.f32 %v2264, %v2649
  %v2659 = vmax.f32 %v2265, %v2650
  %v2660 = vmax.f32 %v2266, %v2651
  %v2661 = vmax.f32 %v2267, %v2652
  %v2662 = vmax.f32 %v2268, %v2653
  %v2663 = vmax.f32 %v2269, %v2654
  %v2664 = vmax.f32 %v2270, %v2655
  %s2665 = scalar_lea.vmem %s0, 1080
  %v2666 = vld [vmem:[%s2665] sm:$0xff]
  %v2667 = vld [vmem:[%s2665 + $0x8] sm:$0xff]
  %v2668 = vld [vmem:[%s2665 + $0x10] sm:$0xf]
  %v2669 = vld [vmem:[%s2665 + $0x14] sm:$0xff]
  %v2670 = vld [vmem:[%s2665 + $0x1c] sm:$0xff]
  %v2671 = vld [vmem:[%s2665 + $0x24] sm:$0xf]
  %v2672 = vld [vmem:[%s2665 + $0x28] sm:$0xff]
  %v2673 = vld [vmem:[%s2665 + $0x30] sm:$0xff]
  %v2674 = vld [vmem:[%s2665 + $0x38] sm:$0xf]
  %v2675 = vld [vmem:[%s2665 + $0x3c] sm:$0xff]
  %v2676 = vld [vmem:[%s2665 + $0x44] sm:$0xff]
  %v2677 = vld [vmem:[%s2665 + $0x4c] sm:$0xf]
  %v2678 = vld [vmem:[%s2665 + $0x50] sm:$0xff]
  %v2679 = vld [vmem:[%s2665 + $0x58] sm:$0xff]
  %v2680 = vld [vmem:[%s2665 + $0x60] sm:$0xf]
  %v2681 = vld [vmem:[%s2665 + $0x64] sm:$0xff]
  %v2682 = vld [vmem:[%s2665 + $0x6c] sm:$0xff]
  %v2683 = vld [vmem:[%s2665 + $0x74] sm:$0xf]
  %v2684 = vld [vmem:[%s2665 + $0x78] sm:$0xff]
  %v2685 = vld [vmem:[%s2665 + $0x80] sm:$0xff]
  %v2686 = vld [vmem:[%s2665 + $0x88] sm:$0xf]
  %v2687 = vld [vmem:[%s2665 + $0x8c] sm:$0xff]
  %v2688 = vld [vmem:[%s2665 + $0x94] sm:$0xff]
  %v2689 = vld [vmem:[%s2665 + $0x9c] sm:$0xf]
  %v2690 = vld [vmem:[%s2665 + $0xa0] sm:$0xff]
  %v2691 = vld [vmem:[%s2665 + $0xa8] sm:$0xff]
  %v2692 = vld [vmem:[%s2665 + $0xb0] sm:$0xf]
  %v2720 = vunpack.c.l.b16 %v2666
  %v2721 = vunpack.c.h.b16 %v2666
  %v2722 = vunpack.c.l.b16 %v2667
  %v2723 = vunpack.c.h.b16 %v2667
  %v2724 = vunpack.c.l.b16 %v2668
  %v2725 = vunpack.c.l.b16 %v2669
  %v2726 = vunpack.c.h.b16 %v2669
  %v2727 = vunpack.c.l.b16 %v2670
  %v2728 = vunpack.c.h.b16 %v2670
  %v2729 = vunpack.c.l.b16 %v2671
  %v2730 = vunpack.c.l.b16 %v2672
  %v2731 = vunpack.c.h.b16 %v2672
  %v2732 = vunpack.c.l.b16 %v2673
  %v2733 = vunpack.c.h.b16 %v2673
  %v2734 = vunpack.c.l.b16 %v2674
  %v2735 = vunpack.c.l.b16 %v2675
  %v2736 = vunpack.c.h.b16 %v2675
  %v2737 = vunpack.c.l.b16 %v2676
  %v2738 = vunpack.c.h.b16 %v2676
  %v2739 = vunpack.c.l.b16 %v2677
  %v2740 = vunpack.c.l.b16 %v2678
  %v2741 = vunpack.c.h.b16 %v2678
  %v2742 = vunpack.c.l.b16 %v2679
  %v2743 = vunpack.c.h.b16 %v2679
  %v2744 = vunpack.c.l.b16 %v2680
  %v2745 = vunpack.c.l.b16 %v2681
  %v2746 = vunpack.c.h.b16 %v2681
  %v2747 = vunpack.c.l.b16 %v2682
  %v2748 = vunpack.c.h.b16 %v2682
  %v2749 = vunpack.c.l.b16 %v2683
  %v2750 = vunpack.c.l.b16 %v2684
  %v2751 = vunpack.c.h.b16 %v2684
  %v2752 = vunpack.c.l.b16 %v2685
  %v2753 = vunpack.c.h.b16 %v2685
  %v2754 = vunpack.c.l.b16 %v2686
  %v2755 = vunpack.c.l.b16 %v2687
  %v2756 = vunpack.c.h.b16 %v2687
  %v2757 = vunpack.c.l.b16 %v2688
  %v2758 = vunpack.c.h.b16 %v2688
  %v2759 = vunpack.c.l.b16 %v2689
  %v2760 = vunpack.c.l.b16 %v2690
  %v2761 = vunpack.c.h.b16 %v2690
  %v2762 = vunpack.c.l.b16 %v2691
  %v2763 = vunpack.c.h.b16 %v2691
  %v2764 = vunpack.c.l.b16 %v2692
  %v2765 = vpack.c.b16 %v2725, %v2720
  %v2766 = vpack.c.b16 %v2726, %v2721
  %v2767 = vpack.c.b16 %v2727, %v2722
  %v2768 = vpack.c.b16 %v2728, %v2723
  %v2769 = vpack.c.b16 %v2729, %v2724
  %v2770 = vpack.c.b16 %v2735, %v2730
  %v2771 = vpack.c.b16 %v2736, %v2731
  %v2772 = vpack.c.b16 %v2737, %v2732
  %v2773 = vpack.c.b16 %v2738, %v2733
  %v2774 = vpack.c.b16 %v2739, %v2734
  %v2775 = vpack.c.b16 %v2745, %v2740
  %v2776 = vpack.c.b16 %v2746, %v2741
  %v2777 = vpack.c.b16 %v2747, %v2742
  %v2778 = vpack.c.b16 %v2748, %v2743
  %v2779 = vpack.c.b16 %v2749, %v2744
  %v2780 = vpack.c.b16 %v2755, %v2750
  %v2781 = vpack.c.b16 %v2756, %v2751
  %v2782 = vpack.c.b16 %v2757, %v2752
  %v2783 = vpack.c.b16 %v2758, %v2753
  %v2784 = vpack.c.b16 %v2759, %v2754
  %v2785 = vpack.c.b16 %v2760, %v2760
  %v2786 = vpack.c.b16 %v2761, %v2761
  %v2787 = vpack.c.b16 %v2762, %v2762
  %v2788 = vpack.c.b16 %v2763, %v2763
  %v2789 = vpack.c.b16 %v2764, %v2764
  %v2811 = vsel %vm454, %v2769, 0
  %v2814 = vsel %vm454, %v2774, 0
  %v2817 = vsel %vm454, %v2779, 0
  %v2820 = vsel %vm454, %v2784, 0
  %v2823 = vsel %vm454, %v2789, 0
  %2825 = vmatprep.subr.bf16.mxu0 0
  %2826 = vmatpush1.bf16.msra.mxu0 %v389
  %2827 = vmatprep.subr.bf16.mxu0 0
  %2828 = vmatpush1.bf16.msra.mxu0 %v388
  %2829 = vmatprep.subr.bf16.mxu0 0
  %2830 = vmatpush1.bf16.msra.mxu0 %v387
  %2831 = vmatprep.subr.bf16.mxu0 0
  %2832 = vmatpush1.bf16.msra.mxu0 %v386
  %2833 = vmatprep.subr.bf16.mxu0 0
  %2834 = vmatpush1.bf16.msra.mxu0 %v385
  %2835 = vmatprep.subr.bf16.mxu0 0
  %2836 = vmatpush1.bf16.msra.mxu0 %v384
  %2837 = vmatprep.subr.bf16.mxu0 0
  %2838 = vmatpush1.bf16.msra.mxu0 %v383
  %2839 = vmatprep.subr.bf16.mxu0 0
  %2840 = vmatpush1.bf16.msra.mxu0 %v382
  %2841 = vmatprep.subr.bf16.mxu0 0
  %2842 = vmatpush2.bf16.msra.mxu0 %v397
  %2843 = vmatprep.subr.bf16.mxu0 0
  %2844 = vmatpush2.bf16.msra.mxu0 %v396
  %2845 = vmatprep.subr.bf16.mxu0 0
  %2846 = vmatpush2.bf16.msra.mxu0 %v395
  %2847 = vmatprep.subr.bf16.mxu0 0
  %2848 = vmatpush2.bf16.msra.mxu0 %v394
  %2849 = vmatprep.subr.bf16.mxu0 0
  %2850 = vmatpush2.bf16.msra.mxu0 %v393
  %2851 = vmatprep.subr.bf16.mxu0 0
  %2852 = vmatpush2.bf16.msra.mxu0 %v392
  %2853 = vmatprep.subr.bf16.mxu0 0
  %2854 = vmatpush2.bf16.msra.mxu0 %v391
  %2855 = vmatprep.subr.bf16.mxu0 0
  %2856 = vmatpush2.bf16.msra.mxu0 %v390
  %2857 = vmatprep.mubr.bf16.mxu0 %v2766
  %2858 = vmatmul.mubr.bf16.gmra.mxu0 %v2765
  %v2859 = vpop.f32.mrf.mxu0
  %v2860 = vadd.f32 %v119, %v2859
  %v2861 = vpop.f32.mrf.mxu0
  %v2862 = vpop.f32.mrf.mxu0
  %v2863 = vadd.f32 %v119, %v2862
  %v2864 = vpop.f32.mrf.mxu0
  %2865 = vmatprep.mubr.bf16.mxu0 %v2771
  %2866 = vmatmul.mubr.bf16.gmra.mxu0 %v2770
  %v2867 = vpop.f32.mrf.mxu0
  %v2868 = vadd.f32 %v119, %v2867
  %v2869 = vpop.f32.mrf.mxu0
  %v2870 = vpop.f32.mrf.mxu0
  %v2871 = vadd.f32 %v119, %v2870
  %v2872 = vpop.f32.mrf.mxu0
  %2873 = vmatprep.mubr.bf16.mxu0 %v2776
  %2874 = vmatmul.mubr.bf16.gmra.mxu0 %v2775
  %v2875 = vpop.f32.mrf.mxu0
  %v2876 = vadd.f32 %v119, %v2875
  %v2877 = vpop.f32.mrf.mxu0
  %v2878 = vpop.f32.mrf.mxu0
  %v2879 = vadd.f32 %v119, %v2878
  %v2880 = vpop.f32.mrf.mxu0
  %2881 = vmatprep.mubr.bf16.mxu0 %v2781
  %2882 = vmatmul.mubr.bf16.gmra.mxu0 %v2780
  %v2883 = vpop.f32.mrf.mxu0
  %v2884 = vadd.f32 %v119, %v2883
  %v2885 = vpop.f32.mrf.mxu0
  %v2886 = vpop.f32.mrf.mxu0
  %v2887 = vadd.f32 %v119, %v2886
  %v2888 = vpop.f32.mrf.mxu0
  %2889 = vmatprep.mubr.bf16.mxu0 %v2786
  %2890 = vmatmul.mubr.bf16.gmra.mxu0 %v2785
  %v2891 = vpop.f32.mrf.mxu0
  %v2892 = vadd.f32 %v119, %v2891
  %v2893 = vpop.f32.mrf.mxu0
  %v2894 = vpop.f32.mrf.mxu0
  %v2895 = vpop.f32.mrf.mxu0
  %2896 = vdwg.mxu0
  %2897 = vmatprep.subr.bf16.mxu0 0
  %2898 = vmatpush1.bf16.msra.mxu0 %v405
  %2899 = vmatprep.subr.bf16.mxu0 0
  %2900 = vmatpush1.bf16.msra.mxu0 %v404
  %2901 = vmatprep.subr.bf16.mxu0 0
  %2902 = vmatpush1.bf16.msra.mxu0 %v403
  %2903 = vmatprep.subr.bf16.mxu0 0
  %2904 = vmatpush1.bf16.msra.mxu0 %v402
  %2905 = vmatprep.subr.bf16.mxu0 0
  %2906 = vmatpush1.bf16.msra.mxu0 %v401
  %2907 = vmatprep.subr.bf16.mxu0 0
  %2908 = vmatpush1.bf16.msra.mxu0 %v400
  %2909 = vmatprep.subr.bf16.mxu0 0
  %2910 = vmatpush1.bf16.msra.mxu0 %v399
  %2911 = vmatprep.subr.bf16.mxu0 0
  %2912 = vmatpush1.bf16.msra.mxu0 %v398
  %2913 = vmatprep.subr.bf16.mxu0 0
  %2914 = vmatpush2.bf16.msra.mxu0 %v413
  %2915 = vmatprep.subr.bf16.mxu0 0
  %2916 = vmatpush2.bf16.msra.mxu0 %v412
  %2917 = vmatprep.subr.bf16.mxu0 0
  %2918 = vmatpush2.bf16.msra.mxu0 %v411
  %2919 = vmatprep.subr.bf16.mxu0 0
  %2920 = vmatpush2.bf16.msra.mxu0 %v410
  %2921 = vmatprep.subr.bf16.mxu0 0
  %2922 = vmatpush2.bf16.msra.mxu0 %v409
  %2923 = vmatprep.subr.bf16.mxu0 0
  %2924 = vmatpush2.bf16.msra.mxu0 %v408
  %2925 = vmatprep.subr.bf16.mxu0 0
  %2926 = vmatpush2.bf16.msra.mxu0 %v407
  %2927 = vmatprep.subr.bf16.mxu0 0
  %2928 = vmatpush2.bf16.msra.mxu0 %v406
  %2929 = vmatprep.mubr.bf16.mxu0 %v2768
  %2930 = vmatmul.mubr.bf16.gmra.mxu0 %v2767
  %v2931 = vpop.f32.mrf.mxu0
  %v2932 = vadd.f32 %v2860, %v2931
  %v2933 = vpop.f32.mrf.mxu0
  %v2934 = vpop.f32.mrf.mxu0
  %v2935 = vadd.f32 %v2863, %v2934
  %v2936 = vpop.f32.mrf.mxu0
  %2937 = vmatprep.mubr.bf16.mxu0 %v2773
  %2938 = vmatmul.mubr.bf16.gmra.mxu0 %v2772
  %v2939 = vpop.f32.mrf.mxu0
  %v2940 = vadd.f32 %v2868, %v2939
  %v2941 = vpop.f32.mrf.mxu0
  %v2942 = vpop.f32.mrf.mxu0
  %v2943 = vadd.f32 %v2871, %v2942
  %v2944 = vpop.f32.mrf.mxu0
  %2945 = vmatprep.mubr.bf16.mxu0 %v2778
  %2946 = vmatmul.mubr.bf16.gmra.mxu0 %v2777
  %v2947 = vpop.f32.mrf.mxu0
  %v2948 = vadd.f32 %v2876, %v2947
  %v2949 = vpop.f32.mrf.mxu0
  %v2950 = vpop.f32.mrf.mxu0
  %v2951 = vadd.f32 %v2879, %v2950
  %v2952 = vpop.f32.mrf.mxu0
  %2953 = vmatprep.mubr.bf16.mxu0 %v2783
  %2954 = vmatmul.mubr.bf16.gmra.mxu0 %v2782
  %v2955 = vpop.f32.mrf.mxu0
  %v2956 = vadd.f32 %v2884, %v2955
  %v2957 = vpop.f32.mrf.mxu0
  %v2958 = vpop.f32.mrf.mxu0
  %v2959 = vadd.f32 %v2887, %v2958
  %v2960 = vpop.f32.mrf.mxu0
  %2961 = vmatprep.mubr.bf16.mxu0 %v2788
  %2962 = vmatmul.mubr.bf16.gmra.mxu0 %v2787
  %v2963 = vpop.f32.mrf.mxu0
  %v2964 = vadd.f32 %v2892, %v2963
  %v2965 = vpop.f32.mrf.mxu0
  %v2966 = vpop.f32.mrf.mxu0
  %v2967 = vpop.f32.mrf.mxu0
  %2968 = vdwg.mxu0
  %2969 = vmatprep.subr.bf16.mxu0 0
  %2970 = vmatpush1.bf16.msra.mxu0 0
  %2971 = vmatprep.subr.bf16.mxu0 0
  %2972 = vmatpush1.bf16.msra.mxu0 0
  %2973 = vmatprep.subr.bf16.mxu0 0
  %2974 = vmatpush1.bf16.msra.mxu0 0
  %2975 = vmatprep.subr.bf16.mxu0 0
  %2976 = vmatpush1.bf16.msra.mxu0 0
  %2977 = vmatprep.subr.bf16.mxu0 0
  %2978 = vmatpush1.bf16.msra.mxu0 %v417
  %2979 = vmatprep.subr.bf16.mxu0 0
  %2980 = vmatpush1.bf16.msra.mxu0 %v416
  %2981 = vmatprep.subr.bf16.mxu0 0
  %2982 = vmatpush1.bf16.msra.mxu0 %v415
  %2983 = vmatprep.subr.bf16.mxu0 0
  %2984 = vmatpush1.bf16.msra.mxu0 %v414
  %2985 = vmatprep.subr.bf16.mxu0 0
  %2986 = vmatpush2.bf16.msra.mxu0 0
  %2987 = vmatprep.subr.bf16.mxu0 0
  %2988 = vmatpush2.bf16.msra.mxu0 0
  %2989 = vmatprep.subr.bf16.mxu0 0
  %2990 = vmatpush2.bf16.msra.mxu0 0
  %2991 = vmatprep.subr.bf16.mxu0 0
  %2992 = vmatpush2.bf16.msra.mxu0 0
  %2993 = vmatprep.subr.bf16.mxu0 0
  %2994 = vmatpush2.bf16.msra.mxu0 0
  %2995 = vmatprep.subr.bf16.mxu0 0
  %2996 = vmatpush2.bf16.msra.mxu0 0
  %2997 = vmatprep.subr.bf16.mxu0 0
  %2998 = vmatpush2.bf16.msra.mxu0 0
  %2999 = vmatprep.subr.bf16.mxu0 0
  %3000 = vmatpush2.bf16.msra.mxu0 0
  %3001 = vmatprep.mubr.bf16.mxu0 0
  %3002 = vmatmul.mubr.bf16.gmra.mxu0 %v2811
  %v3003 = vpop.f32.mrf.mxu0
  %v3004 = vadd.f32 %v2932, %v3003
  %v3005 = vpop.f32.mrf.mxu0
  %v3006 = vpop.f32.mrf.mxu0
  %v3007 = vadd.f32 %v2935, %v3006
  %v3008 = vpop.f32.mrf.mxu0
  %3009 = vmatprep.mubr.bf16.mxu0 0
  %3010 = vmatmul.mubr.bf16.gmra.mxu0 %v2814
  %v3011 = vpop.f32.mrf.mxu0
  %v3012 = vadd.f32 %v2940, %v3011
  %v3013 = vpop.f32.mrf.mxu0
  %v3014 = vpop.f32.mrf.mxu0
  %v3015 = vadd.f32 %v2943, %v3014
  %v3016 = vpop.f32.mrf.mxu0
  %3017 = vmatprep.mubr.bf16.mxu0 0
  %3018 = vmatmul.mubr.bf16.gmra.mxu0 %v2817
  %v3019 = vpop.f32.mrf.mxu0
  %v3020 = vadd.f32 %v2948, %v3019
  %v3021 = vpop.f32.mrf.mxu0
  %v3022 = vpop.f32.mrf.mxu0
  %v3023 = vadd.f32 %v2951, %v3022
  %v3024 = vpop.f32.mrf.mxu0
  %3025 = vmatprep.mubr.bf16.mxu0 0
  %3026 = vmatmul.mubr.bf16.gmra.mxu0 %v2820
  %v3027 = vpop.f32.mrf.mxu0
  %v3028 = vadd.f32 %v2956, %v3027
  %v3029 = vpop.f32.mrf.mxu0
  %v3030 = vpop.f32.mrf.mxu0
  %v3031 = vadd.f32 %v2959, %v3030
  %v3032 = vpop.f32.mrf.mxu0
  %3033 = vmatprep.mubr.bf16.mxu0 0
  %3034 = vmatmul.mubr.bf16.gmra.mxu0 %v2823
  %v3035 = vpop.f32.mrf.mxu0
  %v3036 = vadd.f32 %v2964, %v3035
  %v3037 = vpop.f32.mrf.mxu0
  %v3038 = vpop.f32.mrf.mxu0
  %v3039 = vpop.f32.mrf.mxu0
  %3040 = vdwg.mxu0
  %v3041 = vmax.f32 %v3004, 0.0
  %v3042 = vmax.f32 %v3007, 0.0
  %v3043 = vmax.f32 %v3012, 0.0
  %v3044 = vmax.f32 %v3015, 0.0
  %v3045 = vmax.f32 %v3020, 0.0
  %v3046 = vmax.f32 %v3023, 0.0
  %v3047 = vmax.f32 %v3028, 0.0
  %v3048 = vmax.f32 %v3031, 0.0
  %v3049 = vmax.f32 %v3036, 0.0
  %v3050 = vmax.f32 %v2656, %v3041
  %v3051 = vmax.f32 %v2657, %v3042
  %v3052 = vmax.f32 %v2658, %v3043
  %v3053 = vmax.f32 %v2659, %v3044
  %v3054 = vmax.f32 %v2660, %v3045
  %v3055 = vmax.f32 %v2661, %v3046
  %v3056 = vmax.f32 %v2662, %v3047
  %v3057 = vmax.f32 %v2663, %v3048
  %v3058 = vmax.f32 %v2664, %v3049
  %s3059 = scalar_lea.vmem %s0, 1260
  %v3060 = vld [vmem:[%s3059] sm:$0xff]
  %v3061 = vld [vmem:[%s3059 + $0x8] sm:$0xff]
  %v3062 = vld [vmem:[%s3059 + $0x10] sm:$0xf]
  %v3063 = vld [vmem:[%s3059 + $0x14] sm:$0xff]
  %v3064 = vld [vmem:[%s3059 + $0x1c] sm:$0xff]
  %v3065 = vld [vmem:[%s3059 + $0x24] sm:$0xf]
  %v3066 = vld [vmem:[%s3059 + $0x28] sm:$0xff]
  %v3067 = vld [vmem:[%s3059 + $0x30] sm:$0xff]
  %v3068 = vld [vmem:[%s3059 + $0x38] sm:$0xf]
  %v3069 = vld [vmem:[%s3059 + $0x3c] sm:$0xff]
  %v3070 = vld [vmem:[%s3059 + $0x44] sm:$0xff]
  %v3071 = vld [vmem:[%s3059 + $0x4c] sm:$0xf]
  %v3072 = vld [vmem:[%s3059 + $0x50] sm:$0xff]
  %v3073 = vld [vmem:[%s3059 + $0x58] sm:$0xff]
  %v3074 = vld [vmem:[%s3059 + $0x60] sm:$0xf]
  %v3075 = vld [vmem:[%s3059 + $0x64] sm:$0xff]
  %v3076 = vld [vmem:[%s3059 + $0x6c] sm:$0xff]
  %v3077 = vld [vmem:[%s3059 + $0x74] sm:$0xf]
  %v3078 = vld [vmem:[%s3059 + $0x78] sm:$0xff]
  %v3079 = vld [vmem:[%s3059 + $0x80] sm:$0xff]
  %v3080 = vld [vmem:[%s3059 + $0x88] sm:$0xf]
  %v3081 = vld [vmem:[%s3059 + $0x8c] sm:$0xff]
  %v3082 = vld [vmem:[%s3059 + $0x94] sm:$0xff]
  %v3083 = vld [vmem:[%s3059 + $0x9c] sm:$0xf]
  %v3084 = vld [vmem:[%s3059 + $0xa0] sm:$0xff]
  %v3085 = vld [vmem:[%s3059 + $0xa8] sm:$0xff]
  %v3086 = vld [vmem:[%s3059 + $0xb0] sm:$0xf]
  %v3114 = vunpack.c.l.b16 %v3060
  %v3115 = vunpack.c.h.b16 %v3060
  %v3116 = vunpack.c.l.b16 %v3061
  %v3117 = vunpack.c.h.b16 %v3061
  %v3118 = vunpack.c.l.b16 %v3062
  %v3119 = vunpack.c.l.b16 %v3063
  %v3120 = vunpack.c.h.b16 %v3063
  %v3121 = vunpack.c.l.b16 %v3064
  %v3122 = vunpack.c.h.b16 %v3064
  %v3123 = vunpack.c.l.b16 %v3065
  %v3124 = vunpack.c.l.b16 %v3066
  %v3125 = vunpack.c.h.b16 %v3066
  %v3126 = vunpack.c.l.b16 %v3067
  %v3127 = vunpack.c.h.b16 %v3067
  %v3128 = vunpack.c.l.b16 %v3068
  %v3129 = vunpack.c.l.b16 %v3069
  %v3130 = vunpack.c.h.b16 %v3069
  %v3131 = vunpack.c.l.b16 %v3070
  %v3132 = vunpack.c.h.b16 %v3070
  %v3133 = vunpack.c.l.b16 %v3071
  %v3134 = vunpack.c.l.b16 %v3072
  %v3135 = vunpack.c.h.b16 %v3072
  %v3136 = vunpack.c.l.b16 %v3073
  %v3137 = vunpack.c.h.b16 %v3073
  %v3138 = vunpack.c.l.b16 %v3074
  %v3139 = vunpack.c.l.b16 %v3075
  %v3140 = vunpack.c.h.b16 %v3075
  %v3141 = vunpack.c.l.b16 %v3076
  %v3142 = vunpack.c.h.b16 %v3076
  %v3143 = vunpack.c.l.b16 %v3077
  %v3144 = vunpack.c.l.b16 %v3078
  %v3145 = vunpack.c.h.b16 %v3078
  %v3146 = vunpack.c.l.b16 %v3079
  %v3147 = vunpack.c.h.b16 %v3079
  %v3148 = vunpack.c.l.b16 %v3080
  %v3149 = vunpack.c.l.b16 %v3081
  %v3150 = vunpack.c.h.b16 %v3081
  %v3151 = vunpack.c.l.b16 %v3082
  %v3152 = vunpack.c.h.b16 %v3082
  %v3153 = vunpack.c.l.b16 %v3083
  %v3154 = vunpack.c.l.b16 %v3084
  %v3155 = vunpack.c.h.b16 %v3084
  %v3156 = vunpack.c.l.b16 %v3085
  %v3157 = vunpack.c.h.b16 %v3085
  %v3158 = vunpack.c.l.b16 %v3086
  %v3159 = vpack.c.b16 %v3119, %v3114
  %v3160 = vpack.c.b16 %v3120, %v3115
  %v3161 = vpack.c.b16 %v3121, %v3116
  %v3162 = vpack.c.b16 %v3122, %v3117
  %v3163 = vpack.c.b16 %v3123, %v3118
  %v3164 = vpack.c.b16 %v3129, %v3124
  %v3165 = vpack.c.b16 %v3130, %v3125
  %v3166 = vpack.c.b16 %v3131, %v3126
  %v3167 = vpack.c.b16 %v3132, %v3127
  %v3168 = vpack.c.b16 %v3133, %v3128
  %v3169 = vpack.c.b16 %v3139, %v3134
  %v3170 = vpack.c.b16 %v3140, %v3135
  %v3171 = vpack.c.b16 %v3141, %v3136
  %v3172 = vpack.c.b16 %v3142, %v3137
  %v3173 = vpack.c.b16 %v3143, %v3138
  %v3174 = vpack.c.b16 %v3149, %v3144
  %v3175 = vpack.c.b16 %v3150, %v3145
  %v3176 = vpack.c.b16 %v3151, %v3146
  %v3177 = vpack.c.b16 %v3152, %v3147
  %v3178 = vpack.c.b16 %v3153, %v3148
  %v3179 = vpack.c.b16 %v3154, %v3154
  %v3180 = vpack.c.b16 %v3155, %v3155
  %v3181 = vpack.c.b16 %v3156, %v3156
  %v3182 = vpack.c.b16 %v3157, %v3157
  %v3183 = vpack.c.b16 %v3158, %v3158
  %v3205 = vsel %vm454, %v3163, 0
  %v3208 = vsel %vm454, %v3168, 0
  %v3211 = vsel %vm454, %v3173, 0
  %v3214 = vsel %vm454, %v3178, 0
  %v3217 = vsel %vm454, %v3183, 0
  %3219 = vmatprep.subr.bf16.mxu0 0
  %3220 = vmatpush1.bf16.msra.mxu0 %v389
  %3221 = vmatprep.subr.bf16.mxu0 0
  %3222 = vmatpush1.bf16.msra.mxu0 %v388
  %3223 = vmatprep.subr.bf16.mxu0 0
  %3224 = vmatpush1.bf16.msra.mxu0 %v387
  %3225 = vmatprep.subr.bf16.mxu0 0
  %3226 = vmatpush1.bf16.msra.mxu0 %v386
  %3227 = vmatprep.subr.bf16.mxu0 0
  %3228 = vmatpush1.bf16.msra.mxu0 %v385
  %3229 = vmatprep.subr.bf16.mxu0 0
  %3230 = vmatpush1.bf16.msra.mxu0 %v384
  %3231 = vmatprep.subr.bf16.mxu0 0
  %3232 = vmatpush1.bf16.msra.mxu0 %v383
  %3233 = vmatprep.subr.bf16.mxu0 0
  %3234 = vmatpush1.bf16.msra.mxu0 %v382
  %3235 = vmatprep.subr.bf16.mxu0 0
  %3236 = vmatpush2.bf16.msra.mxu0 %v397
  %3237 = vmatprep.subr.bf16.mxu0 0
  %3238 = vmatpush2.bf16.msra.mxu0 %v396
  %3239 = vmatprep.subr.bf16.mxu0 0
  %3240 = vmatpush2.bf16.msra.mxu0 %v395
  %3241 = vmatprep.subr.bf16.mxu0 0
  %3242 = vmatpush2.bf16.msra.mxu0 %v394
  %3243 = vmatprep.subr.bf16.mxu0 0
  %3244 = vmatpush2.bf16.msra.mxu0 %v393
  %3245 = vmatprep.subr.bf16.mxu0 0
  %3246 = vmatpush2.bf16.msra.mxu0 %v392
  %3247 = vmatprep.subr.bf16.mxu0 0
  %3248 = vmatpush2.bf16.msra.mxu0 %v391
  %3249 = vmatprep.subr.bf16.mxu0 0
  %3250 = vmatpush2.bf16.msra.mxu0 %v390
  %3251 = vmatprep.mubr.bf16.mxu0 %v3160
  %3252 = vmatmul.mubr.bf16.gmra.mxu0 %v3159
  %v3253 = vpop.f32.mrf.mxu0
  %v3254 = vadd.f32 %v119, %v3253
  %v3255 = vpop.f32.mrf.mxu0
  %v3256 = vpop.f32.mrf.mxu0
  %v3257 = vadd.f32 %v119, %v3256
  %v3258 = vpop.f32.mrf.mxu0
  %3259 = vmatprep.mubr.bf16.mxu0 %v3165
  %3260 = vmatmul.mubr.bf16.gmra.mxu0 %v3164
  %v3261 = vpop.f32.mrf.mxu0
  %v3262 = vadd.f32 %v119, %v3261
  %v3263 = vpop.f32.mrf.mxu0
  %v3264 = vpop.f32.mrf.mxu0
  %v3265 = vadd.f32 %v119, %v3264
  %v3266 = vpop.f32.mrf.mxu0
  %3267 = vmatprep.mubr.bf16.mxu0 %v3170
  %3268 = vmatmul.mubr.bf16.gmra.mxu0 %v3169
  %v3269 = vpop.f32.mrf.mxu0
  %v3270 = vadd.f32 %v119, %v3269
  %v3271 = vpop.f32.mrf.mxu0
  %v3272 = vpop.f32.mrf.mxu0
  %v3273 = vadd.f32 %v119, %v3272
  %v3274 = vpop.f32.mrf.mxu0
  %3275 = vmatprep.mubr.bf16.mxu0 %v3175
  %3276 = vmatmul.mubr.bf16.gmra.mxu0 %v3174
  %v3277 = vpop.f32.mrf.mxu0
  %v3278 = vadd.f32 %v119, %v3277
  %v3279 = vpop.f32.mrf.mxu0
  %v3280 = vpop.f32.mrf.mxu0
  %v3281 = vadd.f32 %v119, %v3280
  %v3282 = vpop.f32.mrf.mxu0
  %3283 = vmatprep.mubr.bf16.mxu0 %v3180
  %3284 = vmatmul.mubr.bf16.gmra.mxu0 %v3179
  %v3285 = vpop.f32.mrf.mxu0
  %v3286 = vadd.f32 %v119, %v3285
  %v3287 = vpop.f32.mrf.mxu0
  %v3288 = vpop.f32.mrf.mxu0
  %v3289 = vpop.f32.mrf.mxu0
  %3290 = vdwg.mxu0
  %3291 = vmatprep.subr.bf16.mxu0 0
  %3292 = vmatpush1.bf16.msra.mxu0 %v405
  %3293 = vmatprep.subr.bf16.mxu0 0
  %3294 = vmatpush1.bf16.msra.mxu0 %v404
  %3295 = vmatprep.subr.bf16.mxu0 0
  %3296 = vmatpush1.bf16.msra.mxu0 %v403
  %3297 = vmatprep.subr.bf16.mxu0 0
  %3298 = vmatpush1.bf16.msra.mxu0 %v402
  %3299 = vmatprep.subr.bf16.mxu0 0
  %3300 = vmatpush1.bf16.msra.mxu0 %v401
  %3301 = vmatprep.subr.bf16.mxu0 0
  %3302 = vmatpush1.bf16.msra.mxu0 %v400
  %3303 = vmatprep.subr.bf16.mxu0 0
  %3304 = vmatpush1.bf16.msra.mxu0 %v399
  %3305 = vmatprep.subr.bf16.mxu0 0
  %3306 = vmatpush1.bf16.msra.mxu0 %v398
  %3307 = vmatprep.subr.bf16.mxu0 0
  %3308 = vmatpush2.bf16.msra.mxu0 %v413
  %3309 = vmatprep.subr.bf16.mxu0 0
  %3310 = vmatpush2.bf16.msra.mxu0 %v412
  %3311 = vmatprep.subr.bf16.mxu0 0
  %3312 = vmatpush2.bf16.msra.mxu0 %v411
  %3313 = vmatprep.subr.bf16.mxu0 0
  %3314 = vmatpush2.bf16.msra.mxu0 %v410
  %3315 = vmatprep.subr.bf16.mxu0 0
  %3316 = vmatpush2.bf16.msra.mxu0 %v409
  %3317 = vmatprep.subr.bf16.mxu0 0
  %3318 = vmatpush2.bf16.msra.mxu0 %v408
  %3319 = vmatprep.subr.bf16.mxu0 0
  %3320 = vmatpush2.bf16.msra.mxu0 %v407
  %3321 = vmatprep.subr.bf16.mxu0 0
  %3322 = vmatpush2.bf16.msra.mxu0 %v406
  %3323 = vmatprep.mubr.bf16.mxu0 %v3162
  %3324 = vmatmul.mubr.bf16.gmra.mxu0 %v3161
  %v3325 = vpop.f32.mrf.mxu0
  %v3326 = vadd.f32 %v3254, %v3325
  %v3327 = vpop.f32.mrf.mxu0
  %v3328 = vpop.f32.mrf.mxu0
  %v3329 = vadd.f32 %v3257, %v3328
  %v3330 = vpop.f32.mrf.mxu0
  %3331 = vmatprep.mubr.bf16.mxu0 %v3167
  %3332 = vmatmul.mubr.bf16.gmra.mxu0 %v3166
  %v3333 = vpop.f32.mrf.mxu0
  %v3334 = vadd.f32 %v3262, %v3333
  %v3335 = vpop.f32.mrf.mxu0
  %v3336 = vpop.f32.mrf.mxu0
  %v3337 = vadd.f32 %v3265, %v3336
  %v3338 = vpop.f32.mrf.mxu0
  %3339 = vmatprep.mubr.bf16.mxu0 %v3172
  %3340 = vmatmul.mubr.bf16.gmra.mxu0 %v3171
  %v3341 = vpop.f32.mrf.mxu0
  %v3342 = vadd.f32 %v3270, %v3341
  %v3343 = vpop.f32.mrf.mxu0
  %v3344 = vpop.f32.mrf.mxu0
  %v3345 = vadd.f32 %v3273, %v3344
  %v3346 = vpop.f32.mrf.mxu0
  %3347 = vmatprep.mubr.bf16.mxu0 %v3177
  %3348 = vmatmul.mubr.bf16.gmra.mxu0 %v3176
  %v3349 = vpop.f32.mrf.mxu0
  %v3350 = vadd.f32 %v3278, %v3349
  %v3351 = vpop.f32.mrf.mxu0
  %v3352 = vpop.f32.mrf.mxu0
  %v3353 = vadd.f32 %v3281, %v3352
  %v3354 = vpop.f32.mrf.mxu0
  %3355 = vmatprep.mubr.bf16.mxu0 %v3182
  %3356 = vmatmul.mubr.bf16.gmra.mxu0 %v3181
  %v3357 = vpop.f32.mrf.mxu0
  %v3358 = vadd.f32 %v3286, %v3357
  %v3359 = vpop.f32.mrf.mxu0
  %v3360 = vpop.f32.mrf.mxu0
  %v3361 = vpop.f32.mrf.mxu0
  %3362 = vdwg.mxu0
  %3363 = vmatprep.subr.bf16.mxu0 0
  %3364 = vmatpush1.bf16.msra.mxu0 0
  %3365 = vmatprep.subr.bf16.mxu0 0
  %3366 = vmatpush1.bf16.msra.mxu0 0
  %3367 = vmatprep.subr.bf16.mxu0 0
  %3368 = vmatpush1.bf16.msra.mxu0 0
  %3369 = vmatprep.subr.bf16.mxu0 0
  %3370 = vmatpush1.bf16.msra.mxu0 0
  %3371 = vmatprep.subr.bf16.mxu0 0
  %3372 = vmatpush1.bf16.msra.mxu0 %v417
  %3373 = vmatprep.subr.bf16.mxu0 0
  %3374 = vmatpush1.bf16.msra.mxu0 %v416
  %3375 = vmatprep.subr.bf16.mxu0 0
  %3376 = vmatpush1.bf16.msra.mxu0 %v415
  %3377 = vmatprep.subr.bf16.mxu0 0
  %3378 = vmatpush1.bf16.msra.mxu0 %v414
  %3379 = vmatprep.subr.bf16.mxu0 0
  %3380 = vmatpush2.bf16.msra.mxu0 0
  %3381 = vmatprep.subr.bf16.mxu0 0
  %3382 = vmatpush2.bf16.msra.mxu0 0
  %3383 = vmatprep.subr.bf16.mxu0 0
  %3384 = vmatpush2.bf16.msra.mxu0 0
  %3385 = vmatprep.subr.bf16.mxu0 0
  %3386 = vmatpush2.bf16.msra.mxu0 0
  %3387 = vmatprep.subr.bf16.mxu0 0
  %3388 = vmatpush2.bf16.msra.mxu0 0
  %3389 = vmatprep.subr.bf16.mxu0 0
  %3390 = vmatpush2.bf16.msra.mxu0 0
  %3391 = vmatprep.subr.bf16.mxu0 0
  %3392 = vmatpush2.bf16.msra.mxu0 0
  %3393 = vmatprep.subr.bf16.mxu0 0
  %3394 = vmatpush2.bf16.msra.mxu0 0
  %3395 = vmatprep.mubr.bf16.mxu0 0
  %3396 = vmatmul.mubr.bf16.gmra.mxu0 %v3205
  %v3397 = vpop.f32.mrf.mxu0
  %v3398 = vadd.f32 %v3326, %v3397
  %v3399 = vpop.f32.mrf.mxu0
  %v3400 = vpop.f32.mrf.mxu0
  %v3401 = vadd.f32 %v3329, %v3400
  %v3402 = vpop.f32.mrf.mxu0
  %3403 = vmatprep.mubr.bf16.mxu0 0
  %3404 = vmatmul.mubr.bf16.gmra.mxu0 %v3208
  %v3405 = vpop.f32.mrf.mxu0
  %v3406 = vadd.f32 %v3334, %v3405
  %v3407 = vpop.f32.mrf.mxu0
  %v3408 = vpop.f32.mrf.mxu0
  %v3409 = vadd.f32 %v3337, %v3408
  %v3410 = vpop.f32.mrf.mxu0
  %3411 = vmatprep.mubr.bf16.mxu0 0
  %3412 = vmatmul.mubr.bf16.gmra.mxu0 %v3211
  %v3413 = vpop.f32.mrf.mxu0
  %v3414 = vadd.f32 %v3342, %v3413
  %v3415 = vpop.f32.mrf.mxu0
  %v3416 = vpop.f32.mrf.mxu0
  %v3417 = vadd.f32 %v3345, %v3416
  %v3418 = vpop.f32.mrf.mxu0
  %3419 = vmatprep.mubr.bf16.mxu0 0
  %3420 = vmatmul.mubr.bf16.gmra.mxu0 %v3214
  %v3421 = vpop.f32.mrf.mxu0
  %v3422 = vadd.f32 %v3350, %v3421
  %v3423 = vpop.f32.mrf.mxu0
  %v3424 = vpop.f32.mrf.mxu0
  %v3425 = vadd.f32 %v3353, %v3424
  %v3426 = vpop.f32.mrf.mxu0
  %3427 = vmatprep.mubr.bf16.mxu0 0
  %3428 = vmatmul.mubr.bf16.gmra.mxu0 %v3217
  %v3429 = vpop.f32.mrf.mxu0
  %v3430 = vadd.f32 %v3358, %v3429
  %v3431 = vpop.f32.mrf.mxu0
  %v3432 = vpop.f32.mrf.mxu0
  %v3433 = vpop.f32.mrf.mxu0
  %3434 = vdwg.mxu0
  %v3435 = vmax.f32 %v3398, 0.0
  %v3436 = vmax.f32 %v3401, 0.0
  %v3437 = vmax.f32 %v3406, 0.0
  %v3438 = vmax.f32 %v3409, 0.0
  %v3439 = vmax.f32 %v3414, 0.0
  %v3440 = vmax.f32 %v3417, 0.0
  %v3441 = vmax.f32 %v3422, 0.0
  %v3442 = vmax.f32 %v3425, 0.0
  %v3443 = vmax.f32 %v3430, 0.0
  %v3444 = vmax.f32 %v3050, %v3435
  %v3445 = vmax.f32 %v3051, %v3436
  %v3446 = vmax.f32 %v3052, %v3437
  %v3447 = vmax.f32 %v3053, %v3438
  %v3448 = vmax.f32 %v3054, %v3439
  %v3449 = vmax.f32 %v3055, %v3440
  %v3450 = vmax.f32 %v3056, %v3441
  %v3451 = vmax.f32 %v3057, %v3442
  %v3452 = vmax.f32 %v3058, %v3443
  %s3453 = scalar_lea.vmem %s0, 1440
  %v3454 = vld [vmem:[%s3453] sm:$0xff]
  %v3455 = vld [vmem:[%s3453 + $0x8] sm:$0xff]
  %v3456 = vld [vmem:[%s3453 + $0x10] sm:$0xf]
  %v3457 = vld [vmem:[%s3453 + $0x14] sm:$0xff]
  %v3458 = vld [vmem:[%s3453 + $0x1c] sm:$0xff]
  %v3459 = vld [vmem:[%s3453 + $0x24] sm:$0xf]
  %v3460 = vld [vmem:[%s3453 + $0x28] sm:$0xff]
  %v3461 = vld [vmem:[%s3453 + $0x30] sm:$0xff]
  %v3462 = vld [vmem:[%s3453 + $0x38] sm:$0xf]
  %v3463 = vld [vmem:[%s3453 + $0x3c] sm:$0xff]
  %v3464 = vld [vmem:[%s3453 + $0x44] sm:$0xff]
  %v3465 = vld [vmem:[%s3453 + $0x4c] sm:$0xf]
  %v3466 = vld [vmem:[%s3453 + $0x50] sm:$0xff]
  %v3467 = vld [vmem:[%s3453 + $0x58] sm:$0xff]
  %v3468 = vld [vmem:[%s3453 + $0x60] sm:$0xf]
  %v3469 = vld [vmem:[%s3453 + $0x64] sm:$0xff]
  %v3470 = vld [vmem:[%s3453 + $0x6c] sm:$0xff]
  %v3471 = vld [vmem:[%s3453 + $0x74] sm:$0xf]
  %v3472 = vld [vmem:[%s3453 + $0x78] sm:$0xff]
  %v3473 = vld [vmem:[%s3453 + $0x80] sm:$0xff]
  %v3474 = vld [vmem:[%s3453 + $0x88] sm:$0xf]
  %v3475 = vld [vmem:[%s3453 + $0x8c] sm:$0xff]
  %v3476 = vld [vmem:[%s3453 + $0x94] sm:$0xff]
  %v3477 = vld [vmem:[%s3453 + $0x9c] sm:$0xf]
  %v3478 = vld [vmem:[%s3453 + $0xa0] sm:$0xff]
  %v3479 = vld [vmem:[%s3453 + $0xa8] sm:$0xff]
  %v3480 = vld [vmem:[%s3453 + $0xb0] sm:$0xf]
  %v3508 = vunpack.c.l.b16 %v3454
  %v3509 = vunpack.c.h.b16 %v3454
  %v3510 = vunpack.c.l.b16 %v3455
  %v3511 = vunpack.c.h.b16 %v3455
  %v3512 = vunpack.c.l.b16 %v3456
  %v3513 = vunpack.c.l.b16 %v3457
  %v3514 = vunpack.c.h.b16 %v3457
  %v3515 = vunpack.c.l.b16 %v3458
  %v3516 = vunpack.c.h.b16 %v3458
  %v3517 = vunpack.c.l.b16 %v3459
  %v3518 = vunpack.c.l.b16 %v3460
  %v3519 = vunpack.c.h.b16 %v3460
  %v3520 = vunpack.c.l.b16 %v3461
  %v3521 = vunpack.c.h.b16 %v3461
  %v3522 = vunpack.c.l.b16 %v3462
  %v3523 = vunpack.c.l.b16 %v3463
  %v3524 = vunpack.c.h.b16 %v3463
  %v3525 = vunpack.c.l.b16 %v3464
  %v3526 = vunpack.c.h.b16 %v3464
  %v3527 = vunpack.c.l.b16 %v3465
  %v3528 = vunpack.c.l.b16 %v3466
  %v3529 = vunpack.c.h.b16 %v3466
  %v3530 = vunpack.c.l.b16 %v3467
  %v3531 = vunpack.c.h.b16 %v3467
  %v3532 = vunpack.c.l.b16 %v3468
  %v3533 = vunpack.c.l.b16 %v3469
  %v3534 = vunpack.c.h.b16 %v3469
  %v3535 = vunpack.c.l.b16 %v3470
  %v3536 = vunpack.c.h.b16 %v3470
  %v3537 = vunpack.c.l.b16 %v3471
  %v3538 = vunpack.c.l.b16 %v3472
  %v3539 = vunpack.c.h.b16 %v3472
  %v3540 = vunpack.c.l.b16 %v3473
  %v3541 = vunpack.c.h.b16 %v3473
  %v3542 = vunpack.c.l.b16 %v3474
  %v3543 = vunpack.c.l.b16 %v3475
  %v3544 = vunpack.c.h.b16 %v3475
  %v3545 = vunpack.c.l.b16 %v3476
  %v3546 = vunpack.c.h.b16 %v3476
  %v3547 = vunpack.c.l.b16 %v3477
  %v3548 = vunpack.c.l.b16 %v3478
  %v3549 = vunpack.c.h.b16 %v3478
  %v3550 = vunpack.c.l.b16 %v3479
  %v3551 = vunpack.c.h.b16 %v3479
  %v3552 = vunpack.c.l.b16 %v3480
  %v3553 = vpack.c.b16 %v3513, %v3508
  %v3554 = vpack.c.b16 %v3514, %v3509
  %v3555 = vpack.c.b16 %v3515, %v3510
  %v3556 = vpack.c.b16 %v3516, %v3511
  %v3557 = vpack.c.b16 %v3517, %v3512
  %v3558 = vpack.c.b16 %v3523, %v3518
  %v3559 = vpack.c.b16 %v3524, %v3519
  %v3560 = vpack.c.b16 %v3525, %v3520
  %v3561 = vpack.c.b16 %v3526, %v3521
  %v3562 = vpack.c.b16 %v3527, %v3522
  %v3563 = vpack.c.b16 %v3533, %v3528
  %v3564 = vpack.c.b16 %v3534, %v3529
  %v3565 = vpack.c.b16 %v3535, %v3530
  %v3566 = vpack.c.b16 %v3536, %v3531
  %v3567 = vpack.c.b16 %v3537, %v3532
  %v3568 = vpack.c.b16 %v3543, %v3538
  %v3569 = vpack.c.b16 %v3544, %v3539
  %v3570 = vpack.c.b16 %v3545, %v3540
  %v3571 = vpack.c.b16 %v3546, %v3541
  %v3572 = vpack.c.b16 %v3547, %v3542
  %v3573 = vpack.c.b16 %v3548, %v3548
  %v3574 = vpack.c.b16 %v3549, %v3549
  %v3575 = vpack.c.b16 %v3550, %v3550
  %v3576 = vpack.c.b16 %v3551, %v3551
  %v3577 = vpack.c.b16 %v3552, %v3552
  %v3599 = vsel %vm454, %v3557, 0
  %v3602 = vsel %vm454, %v3562, 0
  %v3605 = vsel %vm454, %v3567, 0
  %v3608 = vsel %vm454, %v3572, 0
  %v3611 = vsel %vm454, %v3577, 0
  %3613 = vmatprep.subr.bf16.mxu0 0
  %3614 = vmatpush1.bf16.msra.mxu0 %v389
  %3615 = vmatprep.subr.bf16.mxu0 0
  %3616 = vmatpush1.bf16.msra.mxu0 %v388
  %3617 = vmatprep.subr.bf16.mxu0 0
  %3618 = vmatpush1.bf16.msra.mxu0 %v387
  %3619 = vmatprep.subr.bf16.mxu0 0
  %3620 = vmatpush1.bf16.msra.mxu0 %v386
  %3621 = vmatprep.subr.bf16.mxu0 0
  %3622 = vmatpush1.bf16.msra.mxu0 %v385
  %3623 = vmatprep.subr.bf16.mxu0 0
  %3624 = vmatpush1.bf16.msra.mxu0 %v384
  %3625 = vmatprep.subr.bf16.mxu0 0
  %3626 = vmatpush1.bf16.msra.mxu0 %v383
  %3627 = vmatprep.subr.bf16.mxu0 0
  %3628 = vmatpush1.bf16.msra.mxu0 %v382
  %3629 = vmatprep.subr.bf16.mxu0 0
  %3630 = vmatpush2.bf16.msra.mxu0 %v397
  %3631 = vmatprep.subr.bf16.mxu0 0
  %3632 = vmatpush2.bf16.msra.mxu0 %v396
  %3633 = vmatprep.subr.bf16.mxu0 0
  %3634 = vmatpush2.bf16.msra.mxu0 %v395
  %3635 = vmatprep.subr.bf16.mxu0 0
  %3636 = vmatpush2.bf16.msra.mxu0 %v394
  %3637 = vmatprep.subr.bf16.mxu0 0
  %3638 = vmatpush2.bf16.msra.mxu0 %v393
  %3639 = vmatprep.subr.bf16.mxu0 0
  %3640 = vmatpush2.bf16.msra.mxu0 %v392
  %3641 = vmatprep.subr.bf16.mxu0 0
  %3642 = vmatpush2.bf16.msra.mxu0 %v391
  %3643 = vmatprep.subr.bf16.mxu0 0
  %3644 = vmatpush2.bf16.msra.mxu0 %v390
  %3645 = vmatprep.mubr.bf16.mxu0 %v3554
  %3646 = vmatmul.mubr.bf16.gmra.mxu0 %v3553
  %v3647 = vpop.f32.mrf.mxu0
  %v3648 = vadd.f32 %v119, %v3647
  %v3649 = vpop.f32.mrf.mxu0
  %v3650 = vpop.f32.mrf.mxu0
  %v3651 = vadd.f32 %v119, %v3650
  %v3652 = vpop.f32.mrf.mxu0
  %3653 = vmatprep.mubr.bf16.mxu0 %v3559
  %3654 = vmatmul.mubr.bf16.gmra.mxu0 %v3558
  %v3655 = vpop.f32.mrf.mxu0
  %v3656 = vadd.f32 %v119, %v3655
  %v3657 = vpop.f32.mrf.mxu0
  %v3658 = vpop.f32.mrf.mxu0
  %v3659 = vadd.f32 %v119, %v3658
  %v3660 = vpop.f32.mrf.mxu0
  %3661 = vmatprep.mubr.bf16.mxu0 %v3564
  %3662 = vmatmul.mubr.bf16.gmra.mxu0 %v3563
  %v3663 = vpop.f32.mrf.mxu0
  %v3664 = vadd.f32 %v119, %v3663
  %v3665 = vpop.f32.mrf.mxu0
  %v3666 = vpop.f32.mrf.mxu0
  %v3667 = vadd.f32 %v119, %v3666
  %v3668 = vpop.f32.mrf.mxu0
  %3669 = vmatprep.mubr.bf16.mxu0 %v3569
  %3670 = vmatmul.mubr.bf16.gmra.mxu0 %v3568
  %v3671 = vpop.f32.mrf.mxu0
  %v3672 = vadd.f32 %v119, %v3671
  %v3673 = vpop.f32.mrf.mxu0
  %v3674 = vpop.f32.mrf.mxu0
  %v3675 = vadd.f32 %v119, %v3674
  %v3676 = vpop.f32.mrf.mxu0
  %3677 = vmatprep.mubr.bf16.mxu0 %v3574
  %3678 = vmatmul.mubr.bf16.gmra.mxu0 %v3573
  %v3679 = vpop.f32.mrf.mxu0
  %v3680 = vadd.f32 %v119, %v3679
  %v3681 = vpop.f32.mrf.mxu0
  %v3682 = vpop.f32.mrf.mxu0
  %v3683 = vpop.f32.mrf.mxu0
  %3684 = vdwg.mxu0
  %3685 = vmatprep.subr.bf16.mxu0 0
  %3686 = vmatpush1.bf16.msra.mxu0 %v405
  %3687 = vmatprep.subr.bf16.mxu0 0
  %3688 = vmatpush1.bf16.msra.mxu0 %v404
  %3689 = vmatprep.subr.bf16.mxu0 0
  %3690 = vmatpush1.bf16.msra.mxu0 %v403
  %3691 = vmatprep.subr.bf16.mxu0 0
  %3692 = vmatpush1.bf16.msra.mxu0 %v402
  %3693 = vmatprep.subr.bf16.mxu0 0
  %3694 = vmatpush1.bf16.msra.mxu0 %v401
  %3695 = vmatprep.subr.bf16.mxu0 0
  %3696 = vmatpush1.bf16.msra.mxu0 %v400
  %3697 = vmatprep.subr.bf16.mxu0 0
  %3698 = vmatpush1.bf16.msra.mxu0 %v399
  %3699 = vmatprep.subr.bf16.mxu0 0
  %3700 = vmatpush1.bf16.msra.mxu0 %v398
  %3701 = vmatprep.subr.bf16.mxu0 0
  %3702 = vmatpush2.bf16.msra.mxu0 %v413
  %3703 = vmatprep.subr.bf16.mxu0 0
  %3704 = vmatpush2.bf16.msra.mxu0 %v412
  %3705 = vmatprep.subr.bf16.mxu0 0
  %3706 = vmatpush2.bf16.msra.mxu0 %v411
  %3707 = vmatprep.subr.bf16.mxu0 0
  %3708 = vmatpush2.bf16.msra.mxu0 %v410
  %3709 = vmatprep.subr.bf16.mxu0 0
  %3710 = vmatpush2.bf16.msra.mxu0 %v409
  %3711 = vmatprep.subr.bf16.mxu0 0
  %3712 = vmatpush2.bf16.msra.mxu0 %v408
  %3713 = vmatprep.subr.bf16.mxu0 0
  %3714 = vmatpush2.bf16.msra.mxu0 %v407
  %3715 = vmatprep.subr.bf16.mxu0 0
  %3716 = vmatpush2.bf16.msra.mxu0 %v406
  %3717 = vmatprep.mubr.bf16.mxu0 %v3556
  %3718 = vmatmul.mubr.bf16.gmra.mxu0 %v3555
  %v3719 = vpop.f32.mrf.mxu0
  %v3720 = vadd.f32 %v3648, %v3719
  %v3721 = vpop.f32.mrf.mxu0
  %v3722 = vpop.f32.mrf.mxu0
  %v3723 = vadd.f32 %v3651, %v3722
  %v3724 = vpop.f32.mrf.mxu0
  %3725 = vmatprep.mubr.bf16.mxu0 %v3561
  %3726 = vmatmul.mubr.bf16.gmra.mxu0 %v3560
  %v3727 = vpop.f32.mrf.mxu0
  %v3728 = vadd.f32 %v3656, %v3727
  %v3729 = vpop.f32.mrf.mxu0
  %v3730 = vpop.f32.mrf.mxu0
  %v3731 = vadd.f32 %v3659, %v3730
  %v3732 = vpop.f32.mrf.mxu0
  %3733 = vmatprep.mubr.bf16.mxu0 %v3566
  %3734 = vmatmul.mubr.bf16.gmra.mxu0 %v3565
  %v3735 = vpop.f32.mrf.mxu0
  %v3736 = vadd.f32 %v3664, %v3735
  %v3737 = vpop.f32.mrf.mxu0
  %v3738 = vpop.f32.mrf.mxu0
  %v3739 = vadd.f32 %v3667, %v3738
  %v3740 = vpop.f32.mrf.mxu0
  %3741 = vmatprep.mubr.bf16.mxu0 %v3571
  %3742 = vmatmul.mubr.bf16.gmra.mxu0 %v3570
  %v3743 = vpop.f32.mrf.mxu0
  %v3744 = vadd.f32 %v3672, %v3743
  %v3745 = vpop.f32.mrf.mxu0
  %v3746 = vpop.f32.mrf.mxu0
  %v3747 = vadd.f32 %v3675, %v3746
  %v3748 = vpop.f32.mrf.mxu0
  %3749 = vmatprep.mubr.bf16.mxu0 %v3576
  %3750 = vmatmul.mubr.bf16.gmra.mxu0 %v3575
  %v3751 = vpop.f32.mrf.mxu0
  %v3752 = vadd.f32 %v3680, %v3751
  %v3753 = vpop.f32.mrf.mxu0
  %v3754 = vpop.f32.mrf.mxu0
  %v3755 = vpop.f32.mrf.mxu0
  %3756 = vdwg.mxu0
  %3757 = vmatprep.subr.bf16.mxu0 0
  %3758 = vmatpush1.bf16.msra.mxu0 0
  %3759 = vmatprep.subr.bf16.mxu0 0
  %3760 = vmatpush1.bf16.msra.mxu0 0
  %3761 = vmatprep.subr.bf16.mxu0 0
  %3762 = vmatpush1.bf16.msra.mxu0 0
  %3763 = vmatprep.subr.bf16.mxu0 0
  %3764 = vmatpush1.bf16.msra.mxu0 0
  %3765 = vmatprep.subr.bf16.mxu0 0
  %3766 = vmatpush1.bf16.msra.mxu0 %v417
  %3767 = vmatprep.subr.bf16.mxu0 0
  %3768 = vmatpush1.bf16.msra.mxu0 %v416
  %3769 = vmatprep.subr.bf16.mxu0 0
  %3770 = vmatpush1.bf16.msra.mxu0 %v415
  %3771 = vmatprep.subr.bf16.mxu0 0
  %3772 = vmatpush1.bf16.msra.mxu0 %v414
  %3773 = vmatprep.subr.bf16.mxu0 0
  %3774 = vmatpush2.bf16.msra.mxu0 0
  %3775 = vmatprep.subr.bf16.mxu0 0
  %3776 = vmatpush2.bf16.msra.mxu0 0
  %3777 = vmatprep.subr.bf16.mxu0 0
  %3778 = vmatpush2.bf16.msra.mxu0 0
  %3779 = vmatprep.subr.bf16.mxu0 0
  %3780 = vmatpush2.bf16.msra.mxu0 0
  %3781 = vmatprep.subr.bf16.mxu0 0
  %3782 = vmatpush2.bf16.msra.mxu0 0
  %3783 = vmatprep.subr.bf16.mxu0 0
  %3784 = vmatpush2.bf16.msra.mxu0 0
  %3785 = vmatprep.subr.bf16.mxu0 0
  %3786 = vmatpush2.bf16.msra.mxu0 0
  %3787 = vmatprep.subr.bf16.mxu0 0
  %3788 = vmatpush2.bf16.msra.mxu0 0
  %3789 = vmatprep.mubr.bf16.mxu0 0
  %3790 = vmatmul.mubr.bf16.gmra.mxu0 %v3599
  %v3791 = vpop.f32.mrf.mxu0
  %v3792 = vadd.f32 %v3720, %v3791
  %v3793 = vpop.f32.mrf.mxu0
  %v3794 = vpop.f32.mrf.mxu0
  %v3795 = vadd.f32 %v3723, %v3794
  %v3796 = vpop.f32.mrf.mxu0
  %3797 = vmatprep.mubr.bf16.mxu0 0
  %3798 = vmatmul.mubr.bf16.gmra.mxu0 %v3602
  %v3799 = vpop.f32.mrf.mxu0
  %v3800 = vadd.f32 %v3728, %v3799
  %v3801 = vpop.f32.mrf.mxu0
  %v3802 = vpop.f32.mrf.mxu0
  %v3803 = vadd.f32 %v3731, %v3802
  %v3804 = vpop.f32.mrf.mxu0
  %3805 = vmatprep.mubr.bf16.mxu0 0
  %3806 = vmatmul.mubr.bf16.gmra.mxu0 %v3605
  %v3807 = vpop.f32.mrf.mxu0
  %v3808 = vadd.f32 %v3736, %v3807
  %v3809 = vpop.f32.mrf.mxu0
  %v3810 = vpop.f32.mrf.mxu0
  %v3811 = vadd.f32 %v3739, %v3810
  %v3812 = vpop.f32.mrf.mxu0
  %3813 = vmatprep.mubr.bf16.mxu0 0
  %3814 = vmatmul.mubr.bf16.gmra.mxu0 %v3608
  %v3815 = vpop.f32.mrf.mxu0
  %v3816 = vadd.f32 %v3744, %v3815
  %v3817 = vpop.f32.mrf.mxu0
  %v3818 = vpop.f32.mrf.mxu0
  %v3819 = vadd.f32 %v3747, %v3818
  %v3820 = vpop.f32.mrf.mxu0
  %3821 = vmatprep.mubr.bf16.mxu0 0
  %3822 = vmatmul.mubr.bf16.gmra.mxu0 %v3611
  %v3823 = vpop.f32.mrf.mxu0
  %v3824 = vadd.f32 %v3752, %v3823
  %v3825 = vpop.f32.mrf.mxu0
  %v3826 = vpop.f32.mrf.mxu0
  %v3827 = vpop.f32.mrf.mxu0
  %3828 = vdwg.mxu0
  %v3829 = vmax.f32 %v3792, 0.0
  %v3830 = vmax.f32 %v3795, 0.0
  %v3831 = vmax.f32 %v3800, 0.0
  %v3832 = vmax.f32 %v3803, 0.0
  %v3833 = vmax.f32 %v3808, 0.0
  %v3834 = vmax.f32 %v3811, 0.0
  %v3835 = vmax.f32 %v3816, 0.0
  %v3836 = vmax.f32 %v3819, 0.0
  %v3837 = vmax.f32 %v3824, 0.0
  %v3838 = vmax.f32 %v3444, %v3829
  %v3839 = vmax.f32 %v3445, %v3830
  %v3840 = vmax.f32 %v3446, %v3831
  %v3841 = vmax.f32 %v3447, %v3832
  %v3842 = vmax.f32 %v3448, %v3833
  %v3843 = vmax.f32 %v3449, %v3834
  %v3844 = vmax.f32 %v3450, %v3835
  %v3845 = vmax.f32 %v3451, %v3836
  %v3846 = vmax.f32 %v3452, %v3837
  %v3847 = vpack.c.bf16 %v3839, %v3838
  %v3848 = vpack.c.bf16 %v3841, %v3840
  %v3849 = vpack.c.bf16 %v3843, %v3842
  %v3850 = vpack.c.bf16 %v3845, %v3844
  %v3851 = vpack.c.bf16 %v3846, %v3846
  %v3857 = vunpack.c.l.b16 %v3847
  %v3858 = vunpack.c.h.b16 %v3847
  %v3859 = vunpack.c.l.b16 %v3848
  %v3860 = vunpack.c.h.b16 %v3848
  %v3861 = vunpack.c.l.b16 %v3849
  %v3862 = vunpack.c.h.b16 %v3849
  %v3863 = vunpack.c.l.b16 %v3850
  %v3864 = vunpack.c.h.b16 %v3850
  %v3865 = vunpack.c.l.b16 %v3851
  %v3866 = vpack.c.b16 %v3857, %v3857
  %v3867 = vpack.c.b16 %v3858, %v3858
  %v3868 = vpack.c.b16 %v3859, %v3859
  %v3869 = vpack.c.b16 %v3860, %v3860
  %v3870 = vpack.c.b16 %v3861, %v3861
  %v3871 = vpack.c.b16 %v3862, %v3862
  %v3872 = vpack.c.b16 %v3863, %v3863
  %v3873 = vpack.c.b16 %v3864, %v3864
  %v3874 = vpack.c.b16 %v3865, %v3865
  %3884 = vst [vmem:[%s3] sm:$0xf] %v3866
  %3885 = vst [vmem:[%s3 + $0x4] sm:$0xf] %v3867
  %3886 = vst [vmem:[%s3 + $0x8] sm:$0xf] %v3868
  %3887 = vst [vmem:[%s3 + $0xc] sm:$0xf] %v3869
  %3888 = vst [vmem:[%s3 + $0x10] sm:$0xf] %v3870
  %3889 = vst [vmem:[%s3 + $0x14] sm:$0xf] %v3871
  %3890 = vst [vmem:[%s3 + $0x18] sm:$0xf] %v3872
  %3891 = vst [vmem:[%s3 + $0x1c] sm:$0xf] %v3873
  %3892 = vst [vmem:[%s3 + $0x20] sm:$0xf] %v3874
  // Predicated region
  $region14: #{forward.5} parent=0 // pred_check
    _
  $region15: #{forward.5} parent=0 // pred_check_branch
    %3894 = sbr.rel (0) target = $region17
  $region16: #{forward.5} parent=0 // pred_region
    _
  $region17: #{forward.5} parent=0 // pred_fallthru
    _
  // Predicated region
  $region18: #{forward.5} parent=0 // pred_check
    _
  $region19: #{forward.5} parent=0 // pred_check_branch
    %3896 = sbr.rel (0) target = $region21
  $region20: #{forward.5} parent=0 // pred_region
    _
  $region21: #{forward.5} parent=0 // pred_fallthru
    _

// kernel: forward.7
$region0: #{forward.7}
  #allocation0 [shape = 'u32[]', space=smem, size = 0x4, offset = 0x4, fixed_abs, tag = 'smem constant byte address 0x4 - core index']
  #allocation1 [shape = 'u32[144,128]{1,0:T(1,128)}', space=vmem, size = 0x12000, scoped, tag = 'internal scratch']
  %s0 = inlined_call_operand.vmem [shape: bf16[2,1024], index: 0, kind: input, shape index: {}]
  %s1 = inlined_call_operand.vmem [shape: bf16[1024,384], index: 1, kind: input, shape index: {}]
  %s2 = inlined_call_operand.vmem [shape: f32[1,384], index: 2, kind: input, shape index: {}]
  %s3 = inlined_call_operand.vmem [shape: bf16[384,192], index: 3, kind: input, shape index: {}]
  %s4 = inlined_call_operand.vmem [shape: f32[1,192], index: 4, kind: input, shape index: {}]
  %s5 = inlined_call_operand.vmem [shape: bf16[192,10], index: 5, kind: input, shape index: {}]
  %s6 = inlined_call_operand.vmem [shape: f32[1,10], index: 6, kind: input, shape index: {}]
  %s7 = inlined_call_operand.hbm [shape: f32[2,10], index: 7, kind: output, shape index: {}]
  %s8 = sld [smem:[#allocation0]]
  $region38: #{forward.7} parent=0
    _
  %s10 = ssub.s32 1, %s8
  %s11 = scalar_select 0, %s10, %s8
  $region1: #{forward.7} parent=0
    #allocation2 [shape = 'u8[1024]{0}', space=vmem, size = 0x400, scoped, tag = 'output window, operand 0, single buffered']
    #allocation3 [shape = 's32[1]{0}', space=sflag, size = 0x4, scoped, tag = 'scoped memory for forward.7']
    %12 = vsyncpa [#allocation3], 0
    // Predicated region
    $region2: #{forward.7} parent=1 // pred_check
      _
    $region3: #{forward.7} parent=1 // pred_check_branch
      %14 = sbr.rel (0) target = $region5
    $region4: #{forward.7} parent=1 // pred_region
      _
    $region5: #{forward.7} parent=1 // pred_fallthru
      _
    // Predicated region
    $region6: #{forward.7} parent=1 // pred_check
      _
    $region7: #{forward.7} parent=1 // pred_check_branch
      %16 = sbr.rel (0) target = $region9
    $region8: #{forward.7} parent=1 // pred_region
      _
    $region9: #{forward.7} parent=1 // pred_fallthru
      _
    // Predicated region
    $region10: #{forward.7} parent=1 // pred_check
      _
    $region11: #{forward.7} parent=1 // pred_check_branch
      %18 = sbr.rel (0) target = $region13
    $region12: #{forward.7} parent=1 // pred_region
      _
    $region13: #{forward.7} parent=1 // pred_fallthru
      _
    // Predicated region
    $region14: #{forward.7} parent=1 // pred_check
      _
    $region15: #{forward.7} parent=1 // pred_check_branch
      %20 = sbr.rel (0) target = $region17
    $region16: #{forward.7} parent=1 // pred_region
      _
    $region17: #{forward.7} parent=1 // pred_fallthru
      _
    // Predicated region
    $region18: #{forward.7} parent=1 // pred_check
      _
    $region19: #{forward.7} parent=1 // pred_check_branch
      %22 = sbr.rel (0) target = $region21
    $region20: #{forward.7} parent=1 // pred_region
      _
    $region21: #{forward.7} parent=1 // pred_fallthru
      _
    // Predicated region
    $region22: #{forward.7} parent=1 // pred_check
      _
    $region23: #{forward.7} parent=1 // pred_check_branch
      %24 = sbr.rel (0) target = $region25
    $region24: #{forward.7} parent=1 // pred_region
      _
    $region25: #{forward.7} parent=1 // pred_fallthru
      _
    // Predicated region
    $region26: #{forward.7} parent=1 // pred_check
      _
    $region27: #{forward.7} parent=1 // pred_check_branch
      %26 = sbr.rel (0) target = $region29
    $region28: #{forward.7} parent=1 // pred_region
      _
    $region29: #{forward.7} parent=1 // pred_fallthru
      _
    %v28 = vld [vmem:[%s0] sm:$0xff]
    %v29 = vld [vmem:[%s1] sm:$0xff]
    %v30 = vld [vmem:[%s1 + $0x8] sm:$0xf]
    %v31 = vld [vmem:[%s1 + $0xc] sm:$0xff]
    %v32 = vld [vmem:[%s1 + $0x14] sm:$0xf]
    %v33 = vld [vmem:[%s1 + $0x18] sm:$0xff]
    %v34 = vld [vmem:[%s1 + $0x20] sm:$0xf]
    %v35 = vld [vmem:[%s1 + $0x24] sm:$0xff]
    %v36 = vld [vmem:[%s1 + $0x2c] sm:$0xf]
    %v37 = vld [vmem:[%s1 + $0x30] sm:$0xff]
    %v38 = vld [vmem:[%s1 + $0x38] sm:$0xf]
    %v39 = vld [vmem:[%s1 + $0x3c] sm:$0xff]
    %v40 = vld [vmem:[%s1 + $0x44] sm:$0xf]
    %v41 = vld [vmem:[%s1 + $0x48] sm:$0xff]
    %v42 = vld [vmem:[%s1 + $0x50] sm:$0xf]
    %v43 = vld [vmem:[%s1 + $0x54] sm:$0xff]
    %v44 = vld [vmem:[%s1 + $0x5c] sm:$0xf]
    %v45 = vld [vmem:[%s1 + $0x60] sm:$0xff]
    %v46 = vld [vmem:[%s1 + $0x68] sm:$0xf]
    %v47 = vld [vmem:[%s1 + $0x6c] sm:$0xff]
    %v48 = vld [vmem:[%s1 + $0x74] sm:$0xf]
    %v49 = vld [vmem:[%s1 + $0x78] sm:$0xff]
    %v50 = vld [vmem:[%s1 + $0x80] sm:$0xf]
    %v51 = vld [vmem:[%s1 + $0x84] sm:$0xff]
    %v52 = vld [vmem:[%s1 + $0x8c] sm:$0xf]
    %v53 = vld [vmem:[%s1 + $0x90] sm:$0xff]
    %v54 = vld [vmem:[%s1 + $0x98] sm:$0xf]
    %v55 = vld [vmem:[%s1 + $0x9c] sm:$0xff]
    %v56 = vld [vmem:[%s1 + $0xa4] sm:$0xf]
    %v57 = vld [vmem:[%s1 + $0xa8] sm:$0xff]
    %v58 = vld [vmem:[%s1 + $0xb0] sm:$0xf]
    %v59 = vld [vmem:[%s1 + $0xb4] sm:$0xff]
    %v60 = vld [vmem:[%s1 + $0xbc] sm:$0xf]
    %v61 = vld [vmem:[%s1 + $0xc0] sm:$0xff]
    %v62 = vld [vmem:[%s1 + $0xc8] sm:$0xf]
    %v63 = vld [vmem:[%s1 + $0xcc] sm:$0xff]
    %v64 = vld [vmem:[%s1 + $0xd4] sm:$0xf]
    %v65 = vld [vmem:[%s1 + $0xd8] sm:$0xff]
    %v66 = vld [vmem:[%s1 + $0xe0] sm:$0xf]
    %v67 = vld [vmem:[%s1 + $0xe4] sm:$0xff]
    %v68 = vld [vmem:[%s1 + $0xec] sm:$0xf]
    %v69 = vld [vmem:[%s1 + $0xf0] sm:$0xff]
    %v70 = vld [vmem:[%s1 + $0xf8] sm:$0xf]
    %v71 = vld [vmem:[%s1 + $0xfc] sm:$0xff]
    %v72 = vld [vmem:[%s1 + $0x104] sm:$0xf]
    %v73 = vld [vmem:[%s1 + $0x108] sm:$0xff]
    %v74 = vld [vmem:[%s1 + $0x110] sm:$0xf]
    %v75 = vld [vmem:[%s1 + $0x114] sm:$0xff]
    %v76 = vld [vmem:[%s1 + $0x11c] sm:$0xf]
    %v77 = vld [vmem:[%s1 + $0x120] sm:$0xff]
    %v78 = vld [vmem:[%s1 + $0x128] sm:$0xf]
    %v79 = vld [vmem:[%s1 + $0x12c] sm:$0xff]
    %v80 = vld [vmem:[%s1 + $0x134] sm:$0xf]
    %v81 = vld [vmem:[%s1 + $0x138] sm:$0xff]
    %v82 = vld [vmem:[%s1 + $0x140] sm:$0xf]
    %v83 = vld [vmem:[%s1 + $0x144] sm:$0xff]
    %v84 = vld [vmem:[%s1 + $0x14c] sm:$0xf]
    %v85 = vld [vmem:[%s1 + $0x150] sm:$0xff]
    %v86 = vld [vmem:[%s1 + $0x158] sm:$0xf]
    %v87 = vld [vmem:[%s1 + $0x15c] sm:$0xff]
    %v88 = vld [vmem:[%s1 + $0x164] sm:$0xf]
    %v89 = vld [vmem:[%s1 + $0x168] sm:$0xff]
    %v90 = vld [vmem:[%s1 + $0x170] sm:$0xf]
    %v91 = vld [vmem:[%s1 + $0x174] sm:$0xff]
    %v92 = vld [vmem:[%s1 + $0x17c] sm:$0xf]
    %v93 = vld [vmem:[%s1 + $0x180] sm:$0xff]
    %v94 = vld [vmem:[%s1 + $0x188] sm:$0xf]
    %v95 = vld [vmem:[%s1 + $0x18c] sm:$0xff]
    %v96 = vld [vmem:[%s1 + $0x194] sm:$0xf]
    %v97 = vld [vmem:[%s1 + $0x198] sm:$0xff]
    %v98 = vld [vmem:[%s1 + $0x1a0] sm:$0xf]
    %v99 = vld [vmem:[%s1 + $0x1a4] sm:$0xff]
    %v100 = vld [vmem:[%s1 + $0x1ac] sm:$0xf]
    %v101 = vld [vmem:[%s1 + $0x1b0] sm:$0xff]
    %v102 = vld [vmem:[%s1 + $0x1b8] sm:$0xf]
    %v103 = vld [vmem:[%s1 + $0x1bc] sm:$0xff]
    %v104 = vld [vmem:[%s1 + $0x1c4] sm:$0xf]
    %v105 = vld [vmem:[%s1 + $0x1c8] sm:$0xff]
    %v106 = vld [vmem:[%s1 + $0x1d0] sm:$0xf]
    %v107 = vld [vmem:[%s1 + $0x1d4] sm:$0xff]
    %v108 = vld [vmem:[%s1 + $0x1dc] sm:$0xf]
    %v109 = vld [vmem:[%s1 + $0x1e0] sm:$0xff]
    %v110 = vld [vmem:[%s1 + $0x1e8] sm:$0xf]
    %v111 = vld [vmem:[%s1 + $0x1ec] sm:$0xff]
    %v112 = vld [vmem:[%s1 + $0x1f4] sm:$0xf]
    %v113 = vld [vmem:[%s1 + $0x1f8] sm:$0xff]
    %v114 = vld [vmem:[%s1 + $0x200] sm:$0xf]
    %v115 = vld [vmem:[%s1 + $0x204] sm:$0xff]
    %v116 = vld [vmem:[%s1 + $0x20c] sm:$0xf]
    %v117 = vld [vmem:[%s1 + $0x210] sm:$0xff]
    %v118 = vld [vmem:[%s1 + $0x218] sm:$0xf]
    %v119 = vld [vmem:[%s1 + $0x21c] sm:$0xff]
    %v120 = vld [vmem:[%s1 + $0x224] sm:$0xf]
    %v121 = vld [vmem:[%s1 + $0x228] sm:$0xff]
    %v122 = vld [vmem:[%s1 + $0x230] sm:$0xf]
    %v123 = vld [vmem:[%s1 + $0x234] sm:$0xff]
    %v124 = vld [vmem:[%s1 + $0x23c] sm:$0xf]
    %v125 = vld [vmem:[%s1 + $0x240] sm:$0xff]
    %v126 = vld [vmem:[%s1 + $0x248] sm:$0xf]
    %v127 = vld [vmem:[%s1 + $0x24c] sm:$0xff]
    %v128 = vld [vmem:[%s1 + $0x254] sm:$0xf]
    %v129 = vld [vmem:[%s1 + $0x258] sm:$0xff]
    %v130 = vld [vmem:[%s1 + $0x260] sm:$0xf]
    %v131 = vld [vmem:[%s1 + $0x264] sm:$0xff]
    %v132 = vld [vmem:[%s1 + $0x26c] sm:$0xf]
    %v133 = vld [vmem:[%s1 + $0x270] sm:$0xff]
    %v134 = vld [vmem:[%s1 + $0x278] sm:$0xf]
    %v135 = vld [vmem:[%s1 + $0x27c] sm:$0xff]
    %v136 = vld [vmem:[%s1 + $0x284] sm:$0xf]
    %v137 = vld [vmem:[%s1 + $0x288] sm:$0xff]
    %v138 = vld [vmem:[%s1 + $0x290] sm:$0xf]
    %v139 = vld [vmem:[%s1 + $0x294] sm:$0xff]
    %v140 = vld [vmem:[%s1 + $0x29c] sm:$0xf]
    %v141 = vld [vmem:[%s1 + $0x2a0] sm:$0xff]
    %v142 = vld [vmem:[%s1 + $0x2a8] sm:$0xf]
    %v143 = vld [vmem:[%s1 + $0x2ac] sm:$0xff]
    %v144 = vld [vmem:[%s1 + $0x2b4] sm:$0xf]
    %v145 = vld [vmem:[%s1 + $0x2b8] sm:$0xff]
    %v146 = vld [vmem:[%s1 + $0x2c0] sm:$0xf]
    %v147 = vld [vmem:[%s1 + $0x2c4] sm:$0xff]
    %v148 = vld [vmem:[%s1 + $0x2cc] sm:$0xf]
    %v149 = vld [vmem:[%s1 + $0x2d0] sm:$0xff]
    %v150 = vld [vmem:[%s1 + $0x2d8] sm:$0xf]
    %v151 = vld [vmem:[%s1 + $0x2dc] sm:$0xff]
    %v152 = vld [vmem:[%s1 + $0x2e4] sm:$0xf]
    %v153 = vld [vmem:[%s1 + $0x2e8] sm:$0xff]
    %v154 = vld [vmem:[%s1 + $0x2f0] sm:$0xf]
    %v155 = vld [vmem:[%s1 + $0x2f4] sm:$0xff]
    %v156 = vld [vmem:[%s1 + $0x2fc] sm:$0xf]
    %v157 = vld [vmem:[%s1 + $0x300] sm:$0xff]
    %v158 = vld [vmem:[%s1 + $0x308] sm:$0xf]
    %v159 = vld [vmem:[%s1 + $0x30c] sm:$0xff]
    %v160 = vld [vmem:[%s1 + $0x314] sm:$0xf]
    %v161 = vld [vmem:[%s1 + $0x318] sm:$0xff]
    %v162 = vld [vmem:[%s1 + $0x320] sm:$0xf]
    %v163 = vld [vmem:[%s1 + $0x324] sm:$0xff]
    %v164 = vld [vmem:[%s1 + $0x32c] sm:$0xf]
    %v165 = vld [vmem:[%s1 + $0x330] sm:$0xff]
    %v166 = vld [vmem:[%s1 + $0x338] sm:$0xf]
    %v167 = vld [vmem:[%s1 + $0x33c] sm:$0xff]
    %v168 = vld [vmem:[%s1 + $0x344] sm:$0xf]
    %v169 = vld [vmem:[%s1 + $0x348] sm:$0xff]
    %v170 = vld [vmem:[%s1 + $0x350] sm:$0xf]
    %v171 = vld [vmem:[%s1 + $0x354] sm:$0xff]
    %v172 = vld [vmem:[%s1 + $0x35c] sm:$0xf]
    %v173 = vld [vmem:[%s1 + $0x360] sm:$0xff]
    %v174 = vld [vmem:[%s1 + $0x368] sm:$0xf]
    %v175 = vld [vmem:[%s1 + $0x36c] sm:$0xff]
    %v176 = vld [vmem:[%s1 + $0x374] sm:$0xf]
    %v177 = vld [vmem:[%s1 + $0x378] sm:$0xff]
    %v178 = vld [vmem:[%s1 + $0x380] sm:$0xf]
    %v179 = vld [vmem:[%s1 + $0x384] sm:$0xff]
    %v180 = vld [vmem:[%s1 + $0x38c] sm:$0xf]
    %v181 = vld [vmem:[%s1 + $0x390] sm:$0xff]
    %v182 = vld [vmem:[%s1 + $0x398] sm:$0xf]
    %v183 = vld [vmem:[%s1 + $0x39c] sm:$0xff]
    %v184 = vld [vmem:[%s1 + $0x3a4] sm:$0xf]
    %v185 = vld [vmem:[%s1 + $0x3a8] sm:$0xff]
    %v186 = vld [vmem:[%s1 + $0x3b0] sm:$0xf]
    %v187 = vld [vmem:[%s1 + $0x3b4] sm:$0xff]
    %v188 = vld [vmem:[%s1 + $0x3bc] sm:$0xf]
    %v189 = vld [vmem:[%s1 + $0x3c0] sm:$0xff]
    %v190 = vld [vmem:[%s1 + $0x3c8] sm:$0xf]
    %v191 = vld [vmem:[%s1 + $0x3cc] sm:$0xff]
    %v192 = vld [vmem:[%s1 + $0x3d4] sm:$0xf]
    %v193 = vld [vmem:[%s1 + $0x3d8] sm:$0xff]
    %v194 = vld [vmem:[%s1 + $0x3e0] sm:$0xf]
    %v195 = vld [vmem:[%s1 + $0x3e4] sm:$0xff]
    %v196 = vld [vmem:[%s1 + $0x3ec] sm:$0xf]
    %v197 = vld [vmem:[%s1 + $0x3f0] sm:$0xff]
    %v198 = vld [vmem:[%s1 + $0x3f8] sm:$0xf]
    %v199 = vld [vmem:[%s1 + $0x3fc] sm:$0xff]
    %v200 = vld [vmem:[%s1 + $0x404] sm:$0xf]
    %v201 = vld [vmem:[%s1 + $0x408] sm:$0xff]
    %v202 = vld [vmem:[%s1 + $0x410] sm:$0xf]
    %v203 = vld [vmem:[%s1 + $0x414] sm:$0xff]
    %v204 = vld [vmem:[%s1 + $0x41c] sm:$0xf]
    %v205 = vld [vmem:[%s1 + $0x420] sm:$0xff]
    %v206 = vld [vmem:[%s1 + $0x428] sm:$0xf]
    %v207 = vld [vmem:[%s1 + $0x42c] sm:$0xff]
    %v208 = vld [vmem:[%s1 + $0x434] sm:$0xf]
    %v209 = vld [vmem:[%s1 + $0x438] sm:$0xff]
    %v210 = vld [vmem:[%s1 + $0x440] sm:$0xf]
    %v211 = vld [vmem:[%s1 + $0x444] sm:$0xff]
    %v212 = vld [vmem:[%s1 + $0x44c] sm:$0xf]
    %v213 = vld [vmem:[%s1 + $0x450] sm:$0xff]
    %v214 = vld [vmem:[%s1 + $0x458] sm:$0xf]
    %v215 = vld [vmem:[%s1 + $0x45c] sm:$0xff]
    %v216 = vld [vmem:[%s1 + $0x464] sm:$0xf]
    %v217 = vld [vmem:[%s1 + $0x468] sm:$0xff]
    %v218 = vld [vmem:[%s1 + $0x470] sm:$0xf]
    %v219 = vld [vmem:[%s1 + $0x474] sm:$0xff]
    %v220 = vld [vmem:[%s1 + $0x47c] sm:$0xf]
    %v221 = vld [vmem:[%s1 + $0x480] sm:$0xff]
    %v222 = vld [vmem:[%s1 + $0x488] sm:$0xf]
    %v223 = vld [vmem:[%s1 + $0x48c] sm:$0xff]
    %v224 = vld [vmem:[%s1 + $0x494] sm:$0xf]
    %v225 = vld [vmem:[%s1 + $0x498] sm:$0xff]
    %v226 = vld [vmem:[%s1 + $0x4a0] sm:$0xf]
    %v227 = vld [vmem:[%s1 + $0x4a4] sm:$0xff]
    %v228 = vld [vmem:[%s1 + $0x4ac] sm:$0xf]
    %v229 = vld [vmem:[%s1 + $0x4b0] sm:$0xff]
    %v230 = vld [vmem:[%s1 + $0x4b8] sm:$0xf]
    %v231 = vld [vmem:[%s1 + $0x4bc] sm:$0xff]
    %v232 = vld [vmem:[%s1 + $0x4c4] sm:$0xf]
    %v233 = vld [vmem:[%s1 + $0x4c8] sm:$0xff]
    %v234 = vld [vmem:[%s1 + $0x4d0] sm:$0xf]
    %v235 = vld [vmem:[%s1 + $0x4d4] sm:$0xff]
    %v236 = vld [vmem:[%s1 + $0x4dc] sm:$0xf]
    %v237 = vld [vmem:[%s1 + $0x4e0] sm:$0xff]
    %v238 = vld [vmem:[%s1 + $0x4e8] sm:$0xf]
    %v239 = vld [vmem:[%s1 + $0x4ec] sm:$0xff]
    %v240 = vld [vmem:[%s1 + $0x4f4] sm:$0xf]
    %v241 = vld [vmem:[%s1 + $0x4f8] sm:$0xff]
    %v242 = vld [vmem:[%s1 + $0x500] sm:$0xf]
    %v243 = vld [vmem:[%s1 + $0x504] sm:$0xff]
    %v244 = vld [vmem:[%s1 + $0x50c] sm:$0xf]
    %v245 = vld [vmem:[%s1 + $0x510] sm:$0xff]
    %v246 = vld [vmem:[%s1 + $0x518] sm:$0xf]
    %v247 = vld [vmem:[%s1 + $0x51c] sm:$0xff]
    %v248 = vld [vmem:[%s1 + $0x524] sm:$0xf]
    %v249 = vld [vmem:[%s1 + $0x528] sm:$0xff]
    %v250 = vld [vmem:[%s1 + $0x530] sm:$0xf]
    %v251 = vld [vmem:[%s1 + $0x534] sm:$0xff]
    %v252 = vld [vmem:[%s1 + $0x53c] sm:$0xf]
    %v253 = vld [vmem:[%s1 + $0x540] sm:$0xff]
    %v254 = vld [vmem:[%s1 + $0x548] sm:$0xf]
    %v255 = vld [vmem:[%s1 + $0x54c] sm:$0xff]
    %v256 = vld [vmem:[%s1 + $0x554] sm:$0xf]
    %v257 = vld [vmem:[%s1 + $0x558] sm:$0xff]
    %v258 = vld [vmem:[%s1 + $0x560] sm:$0xf]
    %v259 = vld [vmem:[%s1 + $0x564] sm:$0xff]
    %v260 = vld [vmem:[%s1 + $0x56c] sm:$0xf]
    %v261 = vld [vmem:[%s1 + $0x570] sm:$0xff]
    %v262 = vld [vmem:[%s1 + $0x578] sm:$0xf]
    %v263 = vld [vmem:[%s1 + $0x57c] sm:$0xff]
    %v264 = vld [vmem:[%s1 + $0x584] sm:$0xf]
    %v265 = vld [vmem:[%s1 + $0x588] sm:$0xff]
    %v266 = vld [vmem:[%s1 + $0x590] sm:$0xf]
    %v267 = vld [vmem:[%s1 + $0x594] sm:$0xff]
    %v268 = vld [vmem:[%s1 + $0x59c] sm:$0xf]
    %v269 = vld [vmem:[%s1 + $0x5a0] sm:$0xff]
    %v270 = vld [vmem:[%s1 + $0x5a8] sm:$0xf]
    %v271 = vld [vmem:[%s1 + $0x5ac] sm:$0xff]
    %v272 = vld [vmem:[%s1 + $0x5b4] sm:$0xf]
    %v273 = vld [vmem:[%s1 + $0x5b8] sm:$0xff]
    %v274 = vld [vmem:[%s1 + $0x5c0] sm:$0xf]
    %v275 = vld [vmem:[%s1 + $0x5c4] sm:$0xff]
    %v276 = vld [vmem:[%s1 + $0x5cc] sm:$0xf]
    %v277 = vld [vmem:[%s1 + $0x5d0] sm:$0xff]
    %v278 = vld [vmem:[%s1 + $0x5d8] sm:$0xf]
    %v279 = vld [vmem:[%s1 + $0x5dc] sm:$0xff]
    %v280 = vld [vmem:[%s1 + $0x5e4] sm:$0xf]
    %v281 = vld [vmem:[%s1 + $0x5e8] sm:$0xff]
    %v282 = vld [vmem:[%s1 + $0x5f0] sm:$0xf]
    %v283 = vld [vmem:[%s1 + $0x5f4] sm:$0xff]
    %v284 = vld [vmem:[%s1 + $0x5fc] sm:$0xf]
    %v285 = vld [vmem:[%s2] sm:$0x7]
    %v287 = vlaneseq
    %v288 = vshrl.u32 %v287, 7
    %v289 = vsub.s32 0, %v288
    %v290 = vrot.slane %v285, %v289
    %v291 = vlaneseq
    %v292 = vshrl.u32 %v291, 7
    %v293 = vsub.s32 1, %v292
    %v294 = vrot.slane %v285, %v293
    %v295 = vlaneseq
    %v296 = vshrl.u32 %v295, 7
    %v297 = vsub.s32 2, %v296
    %v298 = vrot.slane %v285, %v297
    %v303 = vcombine.high %v28, %v28
    %v305 = vunpack.c.l.s4 1966171168
    %v306 = vunpack.c.0.s8 %v305
    %v307 = vlaneseq
    %v308 = vshrl.u32 %v307, 7
    %v309 = vsub.s32 %v306, %v308
    %v310 = vrot.slane %v28, %v309
    %v312 = vunpack.c.l.s4 1966171168
    %v313 = vunpack.c.0.s8 %v312
    %v314 = vlaneseq
    %v315 = vshrl.u32 %v314, 7
    %v316 = vsub.s32 %v313, %v315
    %v317 = vrot.slane %v303, %v316
    %v318 = vcombine.high %v310, %v310
    %v319 = vcombine.high %v317, %v317
    %v321 = vunpack.c.l.s4 1966171168
    %v322 = vunpack.c.0.s8 %v321
    %v323 = vlaneseq
    %v324 = vshrl.u32 %v323, 7
    %v325 = vsub.s32 %v322, %v324
    %v326 = vrot.slane %v310, %v325
    %v328 = vunpack.c.l.s4 1966171168
    %v329 = vunpack.c.0.s8 %v328
    %v330 = vlaneseq
    %v331 = vshrl.u32 %v330, 7
    %v332 = vsub.s32 %v329, %v331
    %v333 = vrot.slane %v317, %v332
    %v335 = vunpack.c.l.s4 1966171168
    %v336 = vunpack.c.0.s8 %v335
    %v337 = vlaneseq
    %v338 = vshrl.u32 %v337, 7
    %v339 = vsub.s32 %v336, %v338
    %v340 = vrot.slane %v318, %v339
    %v342 = vunpack.c.l.s4 1966171168
    %v343 = vunpack.c.0.s8 %v342
    %v344 = vlaneseq
    %v345 = vshrl.u32 %v344, 7
    %v346 = vsub.s32 %v343, %v345
    %v347 = vrot.slane %v319, %v346
    %v348 = vcombine.high %v326, %v326
    %v349 = vcombine.high %v333, %v333
    %v350 = vcombine.high %v340, %v340
    %v351 = vcombine.high %v347, %v347
    %v616 = vunpack.c.l.b16 %v29
    %v617 = vunpack.c.h.b16 %v29
    %v618 = vunpack.c.l.b16 %v30
    %v619 = vunpack.c.l.b16 %v31
    %v620 = vunpack.c.h.b16 %v31
    %v621 = vunpack.c.l.b16 %v32
    %v622 = vunpack.c.l.b16 %v33
    %v623 = vunpack.c.h.b16 %v33
    %v624 = vunpack.c.l.b16 %v34
    %v625 = vunpack.c.l.b16 %v35
    %v626 = vunpack.c.h.b16 %v35
    %v627 = vunpack.c.l.b16 %v36
    %v628 = vunpack.c.l.b16 %v37
    %v629 = vunpack.c.h.b16 %v37
    %v630 = vunpack.c.l.b16 %v38
    %v631 = vunpack.c.l.b16 %v39
    %v632 = vunpack.c.h.b16 %v39
    %v633 = vunpack.c.l.b16 %v40
    %v634 = vunpack.c.l.b16 %v41
    %v635 = vunpack.c.h.b16 %v41
    %v636 = vunpack.c.l.b16 %v42
    %v637 = vunpack.c.l.b16 %v43
    %v638 = vunpack.c.h.b16 %v43
    %v639 = vunpack.c.l.b16 %v44
    %v640 = vunpack.c.l.b16 %v45
    %v641 = vunpack.c.h.b16 %v45
    %v642 = vunpack.c.l.b16 %v46
    %v643 = vunpack.c.l.b16 %v47
    %v644 = vunpack.c.h.b16 %v47
    %v645 = vunpack.c.l.b16 %v48
    %v646 = vunpack.c.l.b16 %v49
    %v647 = vunpack.c.h.b16 %v49
    %v648 = vunpack.c.l.b16 %v50
    %v649 = vunpack.c.l.b16 %v51
    %v650 = vunpack.c.h.b16 %v51
    %v651 = vunpack.c.l.b16 %v52
    %v652 = vunpack.c.l.b16 %v53
    %v653 = vunpack.c.h.b16 %v53
    %v654 = vunpack.c.l.b16 %v54
    %v655 = vunpack.c.l.b16 %v55
    %v656 = vunpack.c.h.b16 %v55
    %v657 = vunpack.c.l.b16 %v56
    %v658 = vunpack.c.l.b16 %v57
    %v659 = vunpack.c.h.b16 %v57
    %v660 = vunpack.c.l.b16 %v58
    %v661 = vunpack.c.l.b16 %v59
    %v662 = vunpack.c.h.b16 %v59
    %v663 = vunpack.c.l.b16 %v60
    %v664 = vunpack.c.l.b16 %v61
    %v665 = vunpack.c.h.b16 %v61
    %v666 = vunpack.c.l.b16 %v62
    %v667 = vunpack.c.l.b16 %v63
    %v668 = vunpack.c.h.b16 %v63
    %v669 = vunpack.c.l.b16 %v64
    %v670 = vunpack.c.l.b16 %v65
    %v671 = vunpack.c.h.b16 %v65
    %v672 = vunpack.c.l.b16 %v66
    %v673 = vunpack.c.l.b16 %v67
    %v674 = vunpack.c.h.b16 %v67
    %v675 = vunpack.c.l.b16 %v68
    %v676 = vunpack.c.l.b16 %v69
    %v677 = vunpack.c.h.b16 %v69
    %v678 = vunpack.c.l.b16 %v70
    %v679 = vunpack.c.l.b16 %v71
    %v680 = vunpack.c.h.b16 %v71
    %v681 = vunpack.c.l.b16 %v72
    %v682 = vunpack.c.l.b16 %v73
    %v683 = vunpack.c.h.b16 %v73
    %v684 = vunpack.c.l.b16 %v74
    %v685 = vunpack.c.l.b16 %v75
    %v686 = vunpack.c.h.b16 %v75
    %v687 = vunpack.c.l.b16 %v76
    %v688 = vunpack.c.l.b16 %v77
    %v689 = vunpack.c.h.b16 %v77
    %v690 = vunpack.c.l.b16 %v78
    %v691 = vunpack.c.l.b16 %v79
    %v692 = vunpack.c.h.b16 %v79
    %v693 = vunpack.c.l.b16 %v80
    %v694 = vunpack.c.l.b16 %v81
    %v695 = vunpack.c.h.b16 %v81
    %v696 = vunpack.c.l.b16 %v82
    %v697 = vunpack.c.l.b16 %v83
    %v698 = vunpack.c.h.b16 %v83
    %v699 = vunpack.c.l.b16 %v84
    %v700 = vunpack.c.l.b16 %v85
    %v701 = vunpack.c.h.b16 %v85
    %v702 = vunpack.c.l.b16 %v86
    %v703 = vunpack.c.l.b16 %v87
    %v704 = vunpack.c.h.b16 %v87
    %v705 = vunpack.c.l.b16 %v88
    %v706 = vunpack.c.l.b16 %v89
    %v707 = vunpack.c.h.b16 %v89
    %v708 = vunpack.c.l.b16 %v90
    %v709 = vunpack.c.l.b16 %v91
    %v710 = vunpack.c.h.b16 %v91
    %v711 = vunpack.c.l.b16 %v92
    %v712 = vunpack.c.l.b16 %v93
    %v713 = vunpack.c.h.b16 %v93
    %v714 = vunpack.c.l.b16 %v94
    %v715 = vunpack.c.l.b16 %v95
    %v716 = vunpack.c.h.b16 %v95
    %v717 = vunpack.c.l.b16 %v96
    %v718 = vunpack.c.l.b16 %v97
    %v719 = vunpack.c.h.b16 %v97
    %v720 = vunpack.c.l.b16 %v98
    %v721 = vunpack.c.l.b16 %v99
    %v722 = vunpack.c.h.b16 %v99
    %v723 = vunpack.c.l.b16 %v100
    %v724 = vunpack.c.l.b16 %v101
    %v725 = vunpack.c.h.b16 %v101
    %v726 = vunpack.c.l.b16 %v102
    %v727 = vunpack.c.l.b16 %v103
    %v728 = vunpack.c.h.b16 %v103
    %v729 = vunpack.c.l.b16 %v104
    %v730 = vunpack.c.l.b16 %v105
    %v731 = vunpack.c.h.b16 %v105
    %v732 = vunpack.c.l.b16 %v106
    %v733 = vunpack.c.l.b16 %v107
    %v734 = vunpack.c.h.b16 %v107
    %v735 = vunpack.c.l.b16 %v108
    %v736 = vunpack.c.l.b16 %v109
    %v737 = vunpack.c.h.b16 %v109
    %v738 = vunpack.c.l.b16 %v110
    %v739 = vunpack.c.l.b16 %v111
    %v740 = vunpack.c.h.b16 %v111
    %v741 = vunpack.c.l.b16 %v112
    %v742 = vunpack.c.l.b16 %v113
    %v743 = vunpack.c.h.b16 %v113
    %v744 = vunpack.c.l.b16 %v114
    %v745 = vunpack.c.l.b16 %v115
    %v746 = vunpack.c.h.b16 %v115
    %v747 = vunpack.c.l.b16 %v116
    %v748 = vunpack.c.l.b16 %v117
    %v749 = vunpack.c.h.b16 %v117
    %v750 = vunpack.c.l.b16 %v118
    %v751 = vunpack.c.l.b16 %v119
    %v752 = vunpack.c.h.b16 %v119
    %v753 = vunpack.c.l.b16 %v120
    %v754 = vunpack.c.l.b16 %v121
    %v755 = vunpack.c.h.b16 %v121
    %v756 = vunpack.c.l.b16 %v122
    %v757 = vunpack.c.l.b16 %v123
    %v758 = vunpack.c.h.b16 %v123
    %v759 = vunpack.c.l.b16 %v124
    %v760 = vunpack.c.l.b16 %v125
    %v761 = vunpack.c.h.b16 %v125
    %v762 = vunpack.c.l.b16 %v126
    %v763 = vunpack.c.l.b16 %v127
    %v764 = vunpack.c.h.b16 %v127
    %v765 = vunpack.c.l.b16 %v128
    %v766 = vunpack.c.l.b16 %v129
    %v767 = vunpack.c.h.b16 %v129
    %v768 = vunpack.c.l.b16 %v130
    %v769 = vunpack.c.l.b16 %v131
    %v770 = vunpack.c.h.b16 %v131
    %v771 = vunpack.c.l.b16 %v132
    %v772 = vunpack.c.l.b16 %v133
    %v773 = vunpack.c.h.b16 %v133
    %v774 = vunpack.c.l.b16 %v134
    %v775 = vunpack.c.l.b16 %v135
    %v776 = vunpack.c.h.b16 %v135
    %v777 = vunpack.c.l.b16 %v136
    %v778 = vunpack.c.l.b16 %v137
    %v779 = vunpack.c.h.b16 %v137
    %v780 = vunpack.c.l.b16 %v138
    %v781 = vunpack.c.l.b16 %v139
    %v782 = vunpack.c.h.b16 %v139
    %v783 = vunpack.c.l.b16 %v140
    %v784 = vunpack.c.l.b16 %v141
    %v785 = vunpack.c.h.b16 %v141
    %v786 = vunpack.c.l.b16 %v142
    %v787 = vunpack.c.l.b16 %v143
    %v788 = vunpack.c.h.b16 %v143
    %v789 = vunpack.c.l.b16 %v144
    %v790 = vunpack.c.l.b16 %v145
    %v791 = vunpack.c.h.b16 %v145
    %v792 = vunpack.c.l.b16 %v146
    %v793 = vunpack.c.l.b16 %v147
    %v794 = vunpack.c.h.b16 %v147
    %v795 = vunpack.c.l.b16 %v148
    %v796 = vunpack.c.l.b16 %v149
    %v797 = vunpack.c.h.b16 %v149
    %v798 = vunpack.c.l.b16 %v150
    %v799 = vunpack.c.l.b16 %v151
    %v800 = vunpack.c.h.b16 %v151
    %v801 = vunpack.c.l.b16 %v152
    %v802 = vunpack.c.l.b16 %v153
    %v803 = vunpack.c.h.b16 %v153
    %v804 = vunpack.c.l.b16 %v154
    %v805 = vunpack.c.l.b16 %v155
    %v806 = vunpack.c.h.b16 %v155
    %v807 = vunpack.c.l.b16 %v156
    %v808 = vunpack.c.l.b16 %v157
    %v809 = vunpack.c.h.b16 %v157
    %v810 = vunpack.c.l.b16 %v158
    %v811 = vunpack.c.l.b16 %v159
    %v812 = vunpack.c.h.b16 %v159
    %v813 = vunpack.c.l.b16 %v160
    %v814 = vunpack.c.l.b16 %v161
    %v815 = vunpack.c.h.b16 %v161
    %v816 = vunpack.c.l.b16 %v162
    %v817 = vunpack.c.l.b16 %v163
    %v818 = vunpack.c.h.b16 %v163
    %v819 = vunpack.c.l.b16 %v164
    %v820 = vunpack.c.l.b16 %v165
    %v821 = vunpack.c.h.b16 %v165
    %v822 = vunpack.c.l.b16 %v166
    %v823 = vunpack.c.l.b16 %v167
    %v824 = vunpack.c.h.b16 %v167
    %v825 = vunpack.c.l.b16 %v168
    %v826 = vunpack.c.l.b16 %v169
    %v827 = vunpack.c.h.b16 %v169
    %v828 = vunpack.c.l.b16 %v170
    %v829 = vunpack.c.l.b16 %v171
    %v830 = vunpack.c.h.b16 %v171
    %v831 = vunpack.c.l.b16 %v172
    %v832 = vunpack.c.l.b16 %v173
    %v833 = vunpack.c.h.b16 %v173
    %v834 = vunpack.c.l.b16 %v174
    %v835 = vunpack.c.l.b16 %v175
    %v836 = vunpack.c.h.b16 %v175
    %v837 = vunpack.c.l.b16 %v176
    %v838 = vunpack.c.l.b16 %v177
    %v839 = vunpack.c.h.b16 %v177
    %v840 = vunpack.c.l.b16 %v178
    %v841 = vunpack.c.l.b16 %v179
    %v842 = vunpack.c.h.b16 %v179
    %v843 = vunpack.c.l.b16 %v180
    %v844 = vunpack.c.l.b16 %v181
    %v845 = vunpack.c.h.b16 %v181
    %v846 = vunpack.c.l.b16 %v182
    %v847 = vunpack.c.l.b16 %v183
    %v848 = vunpack.c.h.b16 %v183
    %v849 = vunpack.c.l.b16 %v184
    %v850 = vunpack.c.l.b16 %v185
    %v851 = vunpack.c.h.b16 %v185
    %v852 = vunpack.c.l.b16 %v186
    %v853 = vunpack.c.l.b16 %v187
    %v854 = vunpack.c.h.b16 %v187
    %v855 = vunpack.c.l.b16 %v188
    %v856 = vunpack.c.l.b16 %v189
    %v857 = vunpack.c.h.b16 %v189
    %v858 = vunpack.c.l.b16 %v190
    %v859 = vunpack.c.l.b16 %v191
    %v860 = vunpack.c.h.b16 %v191
    %v861 = vunpack.c.l.b16 %v192
    %v862 = vunpack.c.l.b16 %v193
    %v863 = vunpack.c.h.b16 %v193
    %v864 = vunpack.c.l.b16 %v194
    %v865 = vunpack.c.l.b16 %v195
    %v866 = vunpack.c.h.b16 %v195
    %v867 = vunpack.c.l.b16 %v196
    %v868 = vunpack.c.l.b16 %v197
    %v869 = vunpack.c.h.b16 %v197
    %v870 = vunpack.c.l.b16 %v198
    %v871 = vunpack.c.l.b16 %v199
    %v872 = vunpack.c.h.b16 %v199
    %v873 = vunpack.c.l.b16 %v200
    %v874 = vunpack.c.l.b16 %v201
    %v875 = vunpack.c.h.b16 %v201
    %v876 = vunpack.c.l.b16 %v202
    %v877 = vunpack.c.l.b16 %v203
    %v878 = vunpack.c.h.b16 %v203
    %v879 = vunpack.c.l.b16 %v204
    %v880 = vunpack.c.l.b16 %v205
    %v881 = vunpack.c.h.b16 %v205
    %v882 = vunpack.c.l.b16 %v206
    %v883 = vunpack.c.l.b16 %v207
    %v884 = vunpack.c.h.b16 %v207
    %v885 = vunpack.c.l.b16 %v208
    %v886 = vunpack.c.l.b16 %v209
    %v887 = vunpack.c.h.b16 %v209
    %v888 = vunpack.c.l.b16 %v210
    %v889 = vunpack.c.l.b16 %v211
    %v890 = vunpack.c.h.b16 %v211
    %v891 = vunpack.c.l.b16 %v212
    %v892 = vunpack.c.l.b16 %v213
    %v893 = vunpack.c.h.b16 %v213
    %v894 = vunpack.c.l.b16 %v214
    %v895 = vunpack.c.l.b16 %v215
    %v896 = vunpack.c.h.b16 %v215
    %v897 = vunpack.c.l.b16 %v216
    %v898 = vunpack.c.l.b16 %v217
    %v899 = vunpack.c.h.b16 %v217
    %v900 = vunpack.c.l.b16 %v218
    %v901 = vunpack.c.l.b16 %v219
    %v902 = vunpack.c.h.b16 %v219
    %v903 = vunpack.c.l.b16 %v220
    %v904 = vunpack.c.l.b16 %v221
    %v905 = vunpack.c.h.b16 %v221
    %v906 = vunpack.c.l.b16 %v222
    %v907 = vunpack.c.l.b16 %v223
    %v908 = vunpack.c.h.b16 %v223
    %v909 = vunpack.c.l.b16 %v224
    %v910 = vunpack.c.l.b16 %v225
    %v911 = vunpack.c.h.b16 %v225
    %v912 = vunpack.c.l.b16 %v226
    %v913 = vunpack.c.l.b16 %v227
    %v914 = vunpack.c.h.b16 %v227
    %v915 = vunpack.c.l.b16 %v228
    %v916 = vunpack.c.l.b16 %v229
    %v917 = vunpack.c.h.b16 %v229
    %v918 = vunpack.c.l.b16 %v230
    %v919 = vunpack.c.l.b16 %v231
    %v920 = vunpack.c.h.b16 %v231
    %v921 = vunpack.c.l.b16 %v232
    %v922 = vunpack.c.l.b16 %v233
    %v923 = vunpack.c.h.b16 %v233
    %v924 = vunpack.c.l.b16 %v234
    %v925 = vunpack.c.l.b16 %v235
    %v926 = vunpack.c.h.b16 %v235
    %v927 = vunpack.c.l.b16 %v236
    %v928 = vunpack.c.l.b16 %v237
    %v929 = vunpack.c.h.b16 %v237
    %v930 = vunpack.c.l.b16 %v238
    %v931 = vunpack.c.l.b16 %v239
    %v932 = vunpack.c.h.b16 %v239
    %v933 = vunpack.c.l.b16 %v240
    %v934 = vunpack.c.l.b16 %v241
    %v935 = vunpack.c.h.b16 %v241
    %v936 = vunpack.c.l.b16 %v242
    %v937 = vunpack.c.l.b16 %v243
    %v938 = vunpack.c.h.b16 %v243
    %v939 = vunpack.c.l.b16 %v244
    %v940 = vunpack.c.l.b16 %v245
    %v941 = vunpack.c.h.b16 %v245
    %v942 = vunpack.c.l.b16 %v246
    %v943 = vunpack.c.l.b16 %v247
    %v944 = vunpack.c.h.b16 %v247
    %v945 = vunpack.c.l.b16 %v248
    %v946 = vunpack.c.l.b16 %v249
    %v947 = vunpack.c.h.b16 %v249
    %v948 = vunpack.c.l.b16 %v250
    %v949 = vunpack.c.l.b16 %v251
    %v950 = vunpack.c.h.b16 %v251
    %v951 = vunpack.c.l.b16 %v252
    %v952 = vunpack.c.l.b16 %v253
    %v953 = vunpack.c.h.b16 %v253
    %v954 = vunpack.c.l.b16 %v254
    %v955 = vunpack.c.l.b16 %v255
    %v956 = vunpack.c.h.b16 %v255
    %v957 = vunpack.c.l.b16 %v256
    %v958 = vunpack.c.l.b16 %v257
    %v959 = vunpack.c.h.b16 %v257
    %v960 = vunpack.c.l.b16 %v258
    %v961 = vunpack.c.l.b16 %v259
    %v962 = vunpack.c.h.b16 %v259
    %v963 = vunpack.c.l.b16 %v260
    %v964 = vunpack.c.l.b16 %v261
    %v965 = vunpack.c.h.b16 %v261
    %v966 = vunpack.c.l.b16 %v262
    %v967 = vunpack.c.l.b16 %v263
    %v968 = vunpack.c.h.b16 %v263
    %v969 = vunpack.c.l.b16 %v264
    %v970 = vunpack.c.l.b16 %v265
    %v971 = vunpack.c.h.b16 %v265
    %v972 = vunpack.c.l.b16 %v266
    %v973 = vunpack.c.l.b16 %v267
    %v974 = vunpack.c.h.b16 %v267
    %v975 = vunpack.c.l.b16 %v268
    %v976 = vunpack.c.l.b16 %v269
    %v977 = vunpack.c.h.b16 %v269
    %v978 = vunpack.c.l.b16 %v270
    %v979 = vunpack.c.l.b16 %v271
    %v980 = vunpack.c.h.b16 %v271
    %v981 = vunpack.c.l.b16 %v272
    %v982 = vunpack.c.l.b16 %v273
    %v983 = vunpack.c.h.b16 %v273
    %v984 = vunpack.c.l.b16 %v274
    %v985 = vunpack.c.l.b16 %v275
    %v986 = vunpack.c.h.b16 %v275
    %v987 = vunpack.c.l.b16 %v276
    %v988 = vunpack.c.l.b16 %v277
    %v989 = vunpack.c.h.b16 %v277
    %v990 = vunpack.c.l.b16 %v278
    %v991 = vunpack.c.l.b16 %v279
    %v992 = vunpack.c.h.b16 %v279
    %v993 = vunpack.c.l.b16 %v280
    %v994 = vunpack.c.l.b16 %v281
    %v995 = vunpack.c.h.b16 %v281
    %v996 = vunpack.c.l.b16 %v282
    %v997 = vunpack.c.l.b16 %v283
    %v998 = vunpack.c.h.b16 %v283
    %v999 = vunpack.c.l.b16 %v284
    %v1000 = vpack.c.b16 %v619, %v616
    %v1001 = vpack.c.b16 %v620, %v617
    %v1002 = vpack.c.b16 %v621, %v618
    %v1003 = vpack.c.b16 %v625, %v622
    %v1004 = vpack.c.b16 %v626, %v623
    %v1005 = vpack.c.b16 %v627, %v624
    %v1006 = vpack.c.b16 %v631, %v628
    %v1007 = vpack.c.b16 %v632, %v629
    %v1008 = vpack.c.b16 %v633, %v630
    %v1009 = vpack.c.b16 %v637, %v634
    %v1010 = vpack.c.b16 %v638, %v635
    %v1011 = vpack.c.b16 %v639, %v636
    %v1012 = vpack.c.b16 %v643, %v640
    %v1013 = vpack.c.b16 %v644, %v641
    %v1014 = vpack.c.b16 %v645, %v642
    %v1015 = vpack.c.b16 %v649, %v646
    %v1016 = vpack.c.b16 %v650, %v647
    %v1017 = vpack.c.b16 %v651, %v648
    %v1018 = vpack.c.b16 %v655, %v652
    %v1019 = vpack.c.b16 %v656, %v653
    %v1020 = vpack.c.b16 %v657, %v654
    %v1021 = vpack.c.b16 %v661, %v658
    %v1022 = vpack.c.b16 %v662, %v659
    %v1023 = vpack.c.b16 %v663, %v660
    %v1024 = vpack.c.b16 %v667, %v664
    %v1025 = vpack.c.b16 %v668, %v665
    %v1026 = vpack.c.b16 %v669, %v666
    %v1027 = vpack.c.b16 %v673, %v670
    %v1028 = vpack.c.b16 %v674, %v671
    %v1029 = vpack.c.b16 %v675, %v672
    %v1030 = vpack.c.b16 %v679, %v676
    %v1031 = vpack.c.b16 %v680, %v677
    %v1032 = vpack.c.b16 %v681, %v678
    %v1033 = vpack.c.b16 %v685, %v682
    %v1034 = vpack.c.b16 %v686, %v683
    %v1035 = vpack.c.b16 %v687, %v684
    %v1036 = vpack.c.b16 %v691, %v688
    %v1037 = vpack.c.b16 %v692, %v689
    %v1038 = vpack.c.b16 %v693, %v690
    %v1039 = vpack.c.b16 %v697, %v694
    %v1040 = vpack.c.b16 %v698, %v695
    %v1041 = vpack.c.b16 %v699, %v696
    %v1042 = vpack.c.b16 %v703, %v700
    %v1043 = vpack.c.b16 %v704, %v701
    %v1044 = vpack.c.b16 %v705, %v702
    %v1045 = vpack.c.b16 %v709, %v706
    %v1046 = vpack.c.b16 %v710, %v707
    %v1047 = vpack.c.b16 %v711, %v708
    %v1048 = vpack.c.b16 %v715, %v712
    %v1049 = vpack.c.b16 %v716, %v713
    %v1050 = vpack.c.b16 %v717, %v714
    %v1051 = vpack.c.b16 %v721, %v718
    %v1052 = vpack.c.b16 %v722, %v719
    %v1053 = vpack.c.b16 %v723, %v720
    %v1054 = vpack.c.b16 %v727, %v724
    %v1055 = vpack.c.b16 %v728, %v725
    %v1056 = vpack.c.b16 %v729, %v726
    %v1057 = vpack.c.b16 %v733, %v730
    %v1058 = vpack.c.b16 %v734, %v731
    %v1059 = vpack.c.b16 %v735, %v732
    %v1060 = vpack.c.b16 %v739, %v736
    %v1061 = vpack.c.b16 %v740, %v737
    %v1062 = vpack.c.b16 %v741, %v738
    %v1063 = vpack.c.b16 %v745, %v742
    %v1064 = vpack.c.b16 %v746, %v743
    %v1065 = vpack.c.b16 %v747, %v744
    %v1066 = vpack.c.b16 %v751, %v748
    %v1067 = vpack.c.b16 %v752, %v749
    %v1068 = vpack.c.b16 %v753, %v750
    %v1069 = vpack.c.b16 %v757, %v754
    %v1070 = vpack.c.b16 %v758, %v755
    %v1071 = vpack.c.b16 %v759, %v756
    %v1072 = vpack.c.b16 %v763, %v760
    %v1073 = vpack.c.b16 %v764, %v761
    %v1074 = vpack.c.b16 %v765, %v762
    %v1075 = vpack.c.b16 %v769, %v766
    %v1076 = vpack.c.b16 %v770, %v767
    %v1077 = vpack.c.b16 %v771, %v768
    %v1078 = vpack.c.b16 %v775, %v772
    %v1079 = vpack.c.b16 %v776, %v773
    %v1080 = vpack.c.b16 %v777, %v774
    %v1081 = vpack.c.b16 %v781, %v778
    %v1082 = vpack.c.b16 %v782, %v779
    %v1083 = vpack.c.b16 %v783, %v780
    %v1084 = vpack.c.b16 %v787, %v784
    %v1085 = vpack.c.b16 %v788, %v785
    %v1086 = vpack.c.b16 %v789, %v786
    %v1087 = vpack.c.b16 %v793, %v790
    %v1088 = vpack.c.b16 %v794, %v791
    %v1089 = vpack.c.b16 %v795, %v792
    %v1090 = vpack.c.b16 %v799, %v796
    %v1091 = vpack.c.b16 %v800, %v797
    %v1092 = vpack.c.b16 %v801, %v798
    %v1093 = vpack.c.b16 %v805, %v802
    %v1094 = vpack.c.b16 %v806, %v803
    %v1095 = vpack.c.b16 %v807, %v804
    %v1096 = vpack.c.b16 %v811, %v808
    %v1097 = vpack.c.b16 %v812, %v809
    %v1098 = vpack.c.b16 %v813, %v810
    %v1099 = vpack.c.b16 %v817, %v814
    %v1100 = vpack.c.b16 %v818, %v815
    %v1101 = vpack.c.b16 %v819, %v816
    %v1102 = vpack.c.b16 %v823, %v820
    %v1103 = vpack.c.b16 %v824, %v821
    %v1104 = vpack.c.b16 %v825, %v822
    %v1105 = vpack.c.b16 %v829, %v826
    %v1106 = vpack.c.b16 %v830, %v827
    %v1107 = vpack.c.b16 %v831, %v828
    %v1108 = vpack.c.b16 %v835, %v832
    %v1109 = vpack.c.b16 %v836, %v833
    %v1110 = vpack.c.b16 %v837, %v834
    %v1111 = vpack.c.b16 %v841, %v838
    %v1112 = vpack.c.b16 %v842, %v839
    %v1113 = vpack.c.b16 %v843, %v840
    %v1114 = vpack.c.b16 %v847, %v844
    %v1115 = vpack.c.b16 %v848, %v845
    %v1116 = vpack.c.b16 %v849, %v846
    %v1117 = vpack.c.b16 %v853, %v850
    %v1118 = vpack.c.b16 %v854, %v851
    %v1119 = vpack.c.b16 %v855, %v852
    %v1120 = vpack.c.b16 %v859, %v856
    %v1121 = vpack.c.b16 %v860, %v857
    %v1122 = vpack.c.b16 %v861, %v858
    %v1123 = vpack.c.b16 %v865, %v862
    %v1124 = vpack.c.b16 %v866, %v863
    %v1125 = vpack.c.b16 %v867, %v864
    %v1126 = vpack.c.b16 %v871, %v868
    %v1127 = vpack.c.b16 %v872, %v869
    %v1128 = vpack.c.b16 %v873, %v870
    %v1129 = vpack.c.b16 %v877, %v874
    %v1130 = vpack.c.b16 %v878, %v875
    %v1131 = vpack.c.b16 %v879, %v876
    %v1132 = vpack.c.b16 %v883, %v880
    %v1133 = vpack.c.b16 %v884, %v881
    %v1134 = vpack.c.b16 %v885, %v882
    %v1135 = vpack.c.b16 %v889, %v886
    %v1136 = vpack.c.b16 %v890, %v887
    %v1137 = vpack.c.b16 %v891, %v888
    %v1138 = vpack.c.b16 %v895, %v892
    %v1139 = vpack.c.b16 %v896, %v893
    %v1140 = vpack.c.b16 %v897, %v894
    %v1141 = vpack.c.b16 %v901, %v898
    %v1142 = vpack.c.b16 %v902, %v899
    %v1143 = vpack.c.b16 %v903, %v900
    %v1144 = vpack.c.b16 %v907, %v904
    %v1145 = vpack.c.b16 %v908, %v905
    %v1146 = vpack.c.b16 %v909, %v906
    %v1147 = vpack.c.b16 %v913, %v910
    %v1148 = vpack.c.b16 %v914, %v911
    %v1149 = vpack.c.b16 %v915, %v912
    %v1150 = vpack.c.b16 %v919, %v916
    %v1151 = vpack.c.b16 %v920, %v917
    %v1152 = vpack.c.b16 %v921, %v918
    %v1153 = vpack.c.b16 %v925, %v922
    %v1154 = vpack.c.b16 %v926, %v923
    %v1155 = vpack.c.b16 %v927, %v924
    %v1156 = vpack.c.b16 %v931, %v928
    %v1157 = vpack.c.b16 %v932, %v929
    %v1158 = vpack.c.b16 %v933, %v930
    %v1159 = vpack.c.b16 %v937, %v934
    %v1160 = vpack.c.b16 %v938, %v935
    %v1161 = vpack.c.b16 %v939, %v936
    %v1162 = vpack.c.b16 %v943, %v940
    %v1163 = vpack.c.b16 %v944, %v941
    %v1164 = vpack.c.b16 %v945, %v942
    %v1165 = vpack.c.b16 %v949, %v946
    %v1166 = vpack.c.b16 %v950, %v947
    %v1167 = vpack.c.b16 %v951, %v948
    %v1168 = vpack.c.b16 %v955, %v952
    %v1169 = vpack.c.b16 %v956, %v953
    %v1170 = vpack.c.b16 %v957, %v954
    %v1171 = vpack.c.b16 %v961, %v958
    %v1172 = vpack.c.b16 %v962, %v959
    %v1173 = vpack.c.b16 %v963, %v960
    %v1174 = vpack.c.b16 %v967, %v964
    %v1175 = vpack.c.b16 %v968, %v965
    %v1176 = vpack.c.b16 %v969, %v966
    %v1177 = vpack.c.b16 %v973, %v970
    %v1178 = vpack.c.b16 %v974, %v971
    %v1179 = vpack.c.b16 %v975, %v972
    %v1180 = vpack.c.b16 %v979, %v976
    %v1181 = vpack.c.b16 %v980, %v977
    %v1182 = vpack.c.b16 %v981, %v978
    %v1183 = vpack.c.b16 %v985, %v982
    %v1184 = vpack.c.b16 %v986, %v983
    %v1185 = vpack.c.b16 %v987, %v984
    %v1186 = vpack.c.b16 %v991, %v988
    %v1187 = vpack.c.b16 %v992, %v989
    %v1188 = vpack.c.b16 %v993, %v990
    %v1189 = vpack.c.b16 %v997, %v994
    %v1190 = vpack.c.b16 %v998, %v995
    %v1191 = vpack.c.b16 %v999, %v996
    %1384 = vmatprep.subr.bf16.mxu0 %v1022
    %1385 = vmatpush1.bf16.msra.mxu0 %v1021
    %1386 = vmatprep.subr.bf16.mxu0 %v1019
    %1387 = vmatpush1.bf16.msra.mxu0 %v1018
    %1388 = vmatprep.subr.bf16.mxu0 %v1016
    %1389 = vmatpush1.bf16.msra.mxu0 %v1015
    %1390 = vmatprep.subr.bf16.mxu0 %v1013
    %1391 = vmatpush1.bf16.msra.mxu0 %v1012
    %1392 = vmatprep.subr.bf16.mxu0 %v1010
    %1393 = vmatpush1.bf16.msra.mxu0 %v1009
    %1394 = vmatprep.subr.bf16.mxu0 %v1007
    %1395 = vmatpush1.bf16.msra.mxu0 %v1006
    %1396 = vmatprep.subr.bf16.mxu0 %v1004
    %1397 = vmatpush1.bf16.msra.mxu0 %v1003
    %1398 = vmatprep.subr.bf16.mxu0 %v1001
    %1399 = vmatpush1.bf16.msra.mxu0 %v1000
    %1400 = vmatprep.subr.bf16.mxu0 %v1046
    %1401 = vmatpush2.bf16.msra.mxu0 %v1045
    %1402 = vmatprep.subr.bf16.mxu0 %v1043
    %1403 = vmatpush2.bf16.msra.mxu0 %v1042
    %1404 = vmatprep.subr.bf16.mxu0 %v1040
    %1405 = vmatpush2.bf16.msra.mxu0 %v1039
    %1406 = vmatprep.subr.bf16.mxu0 %v1037
    %1407 = vmatpush2.bf16.msra.mxu0 %v1036
    %1408 = vmatprep.subr.bf16.mxu0 %v1034
    %1409 = vmatpush2.bf16.msra.mxu0 %v1033
    %1410 = vmatprep.subr.bf16.mxu0 %v1031
    %1411 = vmatpush2.bf16.msra.mxu0 %v1030
    %1412 = vmatprep.subr.bf16.mxu0 %v1028
    %1413 = vmatpush2.bf16.msra.mxu0 %v1027
    %1414 = vmatprep.subr.bf16.mxu0 %v1025
    %1415 = vmatpush2.bf16.msra.mxu0 %v1024
    %1416 = vmatprep.mubr.bf16.mxu0 %v340
    %1417 = vmatmul.mubr.bf16.gmra.mxu0 %v326
    %v1418 = vpop.f32.mrf.mxu0
    %v1419 = vadd.f32 %v290, %v1418
    %v1420 = vpop.f32.mrf.mxu0
    %v1421 = vadd.f32 %v294, %v1420
    %v1422 = vpop.f32.mrf.mxu0
    %v1423 = vpop.f32.mrf.mxu0
    %1424 = vdwg.mxu0
    %1425 = vmatprep.subr.bf16.mxu0 %v1070
    %1426 = vmatpush1.bf16.msra.mxu0 %v1069
    %1427 = vmatprep.subr.bf16.mxu0 %v1067
    %1428 = vmatpush1.bf16.msra.mxu0 %v1066
    %1429 = vmatprep.subr.bf16.mxu0 %v1064
    %1430 = vmatpush1.bf16.msra.mxu0 %v1063
    %1431 = vmatprep.subr.bf16.mxu0 %v1061
    %1432 = vmatpush1.bf16.msra.mxu0 %v1060
    %1433 = vmatprep.subr.bf16.mxu0 %v1058
    %1434 = vmatpush1.bf16.msra.mxu0 %v1057
    %1435 = vmatprep.subr.bf16.mxu0 %v1055
    %1436 = vmatpush1.bf16.msra.mxu0 %v1054
    %1437 = vmatprep.subr.bf16.mxu0 %v1052
    %1438 = vmatpush1.bf16.msra.mxu0 %v1051
    %1439 = vmatprep.subr.bf16.mxu0 %v1049
    %1440 = vmatpush1.bf16.msra.mxu0 %v1048
    %1441 = vmatprep.subr.bf16.mxu0 %v1094
    %1442 = vmatpush2.bf16.msra.mxu0 %v1093
    %1443 = vmatprep.subr.bf16.mxu0 %v1091
    %1444 = vmatpush2.bf16.msra.mxu0 %v1090
    %1445 = vmatprep.subr.bf16.mxu0 %v1088
    %1446 = vmatpush2.bf16.msra.mxu0 %v1087
    %1447 = vmatprep.subr.bf16.mxu0 %v1085
    %1448 = vmatpush2.bf16.msra.mxu0 %v1084
    %1449 = vmatprep.subr.bf16.mxu0 %v1082
    %1450 = vmatpush2.bf16.msra.mxu0 %v1081
    %1451 = vmatprep.subr.bf16.mxu0 %v1079
    %1452 = vmatpush2.bf16.msra.mxu0 %v1078
    %1453 = vmatprep.subr.bf16.mxu0 %v1076
    %1454 = vmatpush2.bf16.msra.mxu0 %v1075
    %1455 = vmatprep.subr.bf16.mxu0 %v1073
    %1456 = vmatpush2.bf16.msra.mxu0 %v1072
    %1457 = vmatprep.mubr.bf16.mxu0 %v350
    %1458 = vmatmul.mubr.bf16.gmra.mxu0 %v348
    %v1459 = vpop.f32.mrf.mxu0
    %v1460 = vadd.f32 %v1419, %v1459
    %v1461 = vpop.f32.mrf.mxu0
    %v1462 = vadd.f32 %v1421, %v1461
    %v1463 = vpop.f32.mrf.mxu0
    %v1464 = vpop.f32.mrf.mxu0
    %1465 = vdwg.mxu0
    %1466 = vmatprep.subr.bf16.mxu0 %v1118
    %1467 = vmatpush1.bf16.msra.mxu0 %v1117
    %1468 = vmatprep.subr.bf16.mxu0 %v1115
    %1469 = vmatpush1.bf16.msra.mxu0 %v1114
    %1470 = vmatprep.subr.bf16.mxu0 %v1112
    %1471 = vmatpush1.bf16.msra.mxu0 %v1111
    %1472 = vmatprep.subr.bf16.mxu0 %v1109
    %1473 = vmatpush1.bf16.msra.mxu0 %v1108
    %1474 = vmatprep.subr.bf16.mxu0 %v1106
    %1475 = vmatpush1.bf16.msra.mxu0 %v1105
    %1476 = vmatprep.subr.bf16.mxu0 %v1103
    %1477 = vmatpush1.bf16.msra.mxu0 %v1102
    %1478 = vmatprep.subr.bf16.mxu0 %v1100
    %1479 = vmatpush1.bf16.msra.mxu0 %v1099
    %1480 = vmatprep.subr.bf16.mxu0 %v1097
    %1481 = vmatpush1.bf16.msra.mxu0 %v1096
    %1482 = vmatprep.subr.bf16.mxu0 %v1142
    %1483 = vmatpush2.bf16.msra.mxu0 %v1141
    %1484 = vmatprep.subr.bf16.mxu0 %v1139
    %1485 = vmatpush2.bf16.msra.mxu0 %v1138
    %1486 = vmatprep.subr.bf16.mxu0 %v1136
    %1487 = vmatpush2.bf16.msra.mxu0 %v1135
    %1488 = vmatprep.subr.bf16.mxu0 %v1133
    %1489 = vmatpush2.bf16.msra.mxu0 %v1132
    %1490 = vmatprep.subr.bf16.mxu0 %v1130
    %1491 = vmatpush2.bf16.msra.mxu0 %v1129
    %1492 = vmatprep.subr.bf16.mxu0 %v1127
    %1493 = vmatpush2.bf16.msra.mxu0 %v1126
    %1494 = vmatprep.subr.bf16.mxu0 %v1124
    %1495 = vmatpush2.bf16.msra.mxu0 %v1123
    %1496 = vmatprep.subr.bf16.mxu0 %v1121
    %1497 = vmatpush2.bf16.msra.mxu0 %v1120
    %1498 = vmatprep.mubr.bf16.mxu0 %v347
    %1499 = vmatmul.mubr.bf16.gmra.mxu0 %v333
    %v1500 = vpop.f32.mrf.mxu0
    %v1501 = vadd.f32 %v1460, %v1500
    %v1502 = vpop.f32.mrf.mxu0
    %v1503 = vadd.f32 %v1462, %v1502
    %v1504 = vpop.f32.mrf.mxu0
    %v1505 = vpop.f32.mrf.mxu0
    %1506 = vdwg.mxu0
    %1507 = vmatprep.subr.bf16.mxu0 %v1166
    %1508 = vmatpush1.bf16.msra.mxu0 %v1165
    %1509 = vmatprep.subr.bf16.mxu0 %v1163
    %1510 = vmatpush1.bf16.msra.mxu0 %v1162
    %1511 = vmatprep.subr.bf16.mxu0 %v1160
    %1512 = vmatpush1.bf16.msra.mxu0 %v1159
    %1513 = vmatprep.subr.bf16.mxu0 %v1157
    %1514 = vmatpush1.bf16.msra.mxu0 %v1156
    %1515 = vmatprep.subr.bf16.mxu0 %v1154
    %1516 = vmatpush1.bf16.msra.mxu0 %v1153
    %1517 = vmatprep.subr.bf16.mxu0 %v1151
    %1518 = vmatpush1.bf16.msra.mxu0 %v1150
    %1519 = vmatprep.subr.bf16.mxu0 %v1148
    %1520 = vmatpush1.bf16.msra.mxu0 %v1147
    %1521 = vmatprep.subr.bf16.mxu0 %v1145
    %1522 = vmatpush1.bf16.msra.mxu0 %v1144
    %1523 = vmatprep.subr.bf16.mxu0 %v1190
    %1524 = vmatpush2.bf16.msra.mxu0 %v1189
    %1525 = vmatprep.subr.bf16.mxu0 %v1187
    %1526 = vmatpush2.bf16.msra.mxu0 %v1186
    %1527 = vmatprep.subr.bf16.mxu0 %v1184
    %1528 = vmatpush2.bf16.msra.mxu0 %v1183
    %1529 = vmatprep.subr.bf16.mxu0 %v1181
    %1530 = vmatpush2.bf16.msra.mxu0 %v1180
    %1531 = vmatprep.subr.bf16.mxu0 %v1178
    %1532 = vmatpush2.bf16.msra.mxu0 %v1177
    %1533 = vmatprep.subr.bf16.mxu0 %v1175
    %1534 = vmatpush2.bf16.msra.mxu0 %v1174
    %1535 = vmatprep.subr.bf16.mxu0 %v1172
    %1536 = vmatpush2.bf16.msra.mxu0 %v1171
    %1537 = vmatprep.subr.bf16.mxu0 %v1169
    %1538 = vmatpush2.bf16.msra.mxu0 %v1168
    %1539 = vmatprep.mubr.bf16.mxu0 %v351
    %1540 = vmatmul.mubr.bf16.gmra.mxu0 %v349
    %v1541 = vpop.f32.mrf.mxu0
    %v1542 = vadd.f32 %v1501, %v1541
    %v1543 = vpop.f32.mrf.mxu0
    %v1544 = vadd.f32 %v1503, %v1543
    %v1545 = vpop.f32.mrf.mxu0
    %v1546 = vpop.f32.mrf.mxu0
    %1547 = vdwg.mxu0
    %1548 = vmatprep.subr.bf16.mxu0 0
    %1549 = vmatpush1.bf16.msra.mxu0 %v1023
    %1550 = vmatprep.subr.bf16.mxu0 0
    %1551 = vmatpush1.bf16.msra.mxu0 %v1020
    %1552 = vmatprep.subr.bf16.mxu0 0
    %1553 = vmatpush1.bf16.msra.mxu0 %v1017
    %1554 = vmatprep.subr.bf16.mxu0 0
    %1555 = vmatpush1.bf16.msra.mxu0 %v1014
    %1556 = vmatprep.subr.bf16.mxu0 0
    %1557 = vmatpush1.bf16.msra.mxu0 %v1011
    %1558 = vmatprep.subr.bf16.mxu0 0
    %1559 = vmatpush1.bf16.msra.mxu0 %v1008
    %1560 = vmatprep.subr.bf16.mxu0 0
    %1561 = vmatpush1.bf16.msra.mxu0 %v1005
    %1562 = vmatprep.subr.bf16.mxu0 0
    %1563 = vmatpush1.bf16.msra.mxu0 %v1002
    %1564 = vmatprep.subr.bf16.mxu0 0
    %1565 = vmatpush2.bf16.msra.mxu0 %v1047
    %1566 = vmatprep.subr.bf16.mxu0 0
    %1567 = vmatpush2.bf16.msra.mxu0 %v1044
    %1568 = vmatprep.subr.bf16.mxu0 0
    %1569 = vmatpush2.bf16.msra.mxu0 %v1041
    %1570 = vmatprep.subr.bf16.mxu0 0
    %1571 = vmatpush2.bf16.msra.mxu0 %v1038
    %1572 = vmatprep.subr.bf16.mxu0 0
    %1573 = vmatpush2.bf16.msra.mxu0 %v1035
    %1574 = vmatprep.subr.bf16.mxu0 0
    %1575 = vmatpush2.bf16.msra.mxu0 %v1032
    %1576 = vmatprep.subr.bf16.mxu0 0
    %1577 = vmatpush2.bf16.msra.mxu0 %v1029
    %1578 = vmatprep.subr.bf16.mxu0 0
    %1579 = vmatpush2.bf16.msra.mxu0 %v1026
    %1580 = vmatprep.mubr.bf16.mxu0 %v340
    %1581 = vmatmul.mubr.bf16.gmra.mxu0 %v326
    %v1582 = vpop.f32.mrf.mxu0
    %v1583 = vadd.f32 %v298, %v1582
    %v1584 = vpop.f32.mrf.mxu0
    %v1585 = vpop.f32.mrf.mxu0
    %v1586 = vpop.f32.mrf.mxu0
    %1587 = vdwg.mxu0
    %1588 = vmatprep.subr.bf16.mxu0 0
    %1589 = vmatpush1.bf16.msra.mxu0 %v1071
    %1590 = vmatprep.subr.bf16.mxu0 0
    %1591 = vmatpush1.bf16.msra.mxu0 %v1068
    %1592 = vmatprep.subr.bf16.mxu0 0
    %1593 = vmatpush1.bf16.msra.mxu0 %v1065
    %1594 = vmatprep.subr.bf16.mxu0 0
    %1595 = vmatpush1.bf16.msra.mxu0 %v1062
    %1596 = vmatprep.subr.bf16.mxu0 0
    %1597 = vmatpush1.bf16.msra.mxu0 %v1059
    %1598 = vmatprep.subr.bf16.mxu0 0
    %1599 = vmatpush1.bf16.msra.mxu0 %v1056
    %1600 = vmatprep.subr.bf16.mxu0 0
    %1601 = vmatpush1.bf16.msra.mxu0 %v1053
    %1602 = vmatprep.subr.bf16.mxu0 0
    %1603 = vmatpush1.bf16.msra.mxu0 %v1050
    %1604 = vmatprep.subr.bf16.mxu0 0
    %1605 = vmatpush2.bf16.msra.mxu0 %v1095
    %1606 = vmatprep.subr.bf16.mxu0 0
    %1607 = vmatpush2.bf16.msra.mxu0 %v1092
    %1608 = vmatprep.subr.bf16.mxu0 0
    %1609 = vmatpush2.bf16.msra.mxu0 %v1089
    %1610 = vmatprep.subr.bf16.mxu0 0
    %1611 = vmatpush2.bf16.msra.mxu0 %v1086
    %1612 = vmatprep.subr.bf16.mxu0 0
    %1613 = vmatpush2.bf16.msra.mxu0 %v1083
    %1614 = vmatprep.subr.bf16.mxu0 0
    %1615 = vmatpush2.bf16.msra.mxu0 %v1080
    %1616 = vmatprep.subr.bf16.mxu0 0
    %1617 = vmatpush2.bf16.msra.mxu0 %v1077
    %1618 = vmatprep.subr.bf16.mxu0 0
    %1619 = vmatpush2.bf16.msra.mxu0 %v1074
    %1620 = vmatprep.mubr.bf16.mxu0 %v350
    %1621 = vmatmul.mubr.bf16.gmra.mxu0 %v348
    %v1622 = vpop.f32.mrf.mxu0
    %v1623 = vadd.f32 %v1583, %v1622
    %v1624 = vpop.f32.mrf.mxu0
    %v1625 = vpop.f32.mrf.mxu0
    %v1626 = vpop.f32.mrf.mxu0
    %1627 = vdwg.mxu0
    %1628 = vmatprep.subr.bf16.mxu0 0
    %1629 = vmatpush1.bf16.msra.mxu0 %v1119
    %1630 = vmatprep.subr.bf16.mxu0 0
    %1631 = vmatpush1.bf16.msra.mxu0 %v1116
    %1632 = vmatprep.subr.bf16.mxu0 0
    %1633 = vmatpush1.bf16.msra.mxu0 %v1113
    %1634 = vmatprep.subr.bf16.mxu0 0
    %1635 = vmatpush1.bf16.msra.mxu0 %v1110
    %1636 = vmatprep.subr.bf16.mxu0 0
    %1637 = vmatpush1.bf16.msra.mxu0 %v1107
    %1638 = vmatprep.subr.bf16.mxu0 0
    %1639 = vmatpush1.bf16.msra.mxu0 %v1104
    %1640 = vmatprep.subr.bf16.mxu0 0
    %1641 = vmatpush1.bf16.msra.mxu0 %v1101
    %1642 = vmatprep.subr.bf16.mxu0 0
    %1643 = vmatpush1.bf16.msra.mxu0 %v1098
    %1644 = vmatprep.subr.bf16.mxu0 0
    %1645 = vmatpush2.bf16.msra.mxu0 %v1143
    %1646 = vmatprep.subr.bf16.mxu0 0
    %1647 = vmatpush2.bf16.msra.mxu0 %v1140
    %1648 = vmatprep.subr.bf16.mxu0 0
    %1649 = vmatpush2.bf16.msra.mxu0 %v1137
    %1650 = vmatprep.subr.bf16.mxu0 0
    %1651 = vmatpush2.bf16.msra.mxu0 %v1134
    %1652 = vmatprep.subr.bf16.mxu0 0
    %1653 = vmatpush2.bf16.msra.mxu0 %v1131
    %1654 = vmatprep.subr.bf16.mxu0 0
    %1655 = vmatpush2.bf16.msra.mxu0 %v1128
    %1656 = vmatprep.subr.bf16.mxu0 0
    %1657 = vmatpush2.bf16.msra.mxu0 %v1125
    %1658 = vmatprep.subr.bf16.mxu0 0
    %1659 = vmatpush2.bf16.msra.mxu0 %v1122
    %1660 = vmatprep.mubr.bf16.mxu0 %v347
    %1661 = vmatmul.mubr.bf16.gmra.mxu0 %v333
    %v1662 = vpop.f32.mrf.mxu0
    %v1663 = vadd.f32 %v1623, %v1662
    %v1664 = vpop.f32.mrf.mxu0
    %v1665 = vpop.f32.mrf.mxu0
    %v1666 = vpop.f32.mrf.mxu0
    %1667 = vdwg.mxu0
    %1668 = vmatprep.subr.bf16.mxu0 0
    %1669 = vmatpush1.bf16.msra.mxu0 %v1167
    %1670 = vmatprep.subr.bf16.mxu0 0
    %1671 = vmatpush1.bf16.msra.mxu0 %v1164
    %1672 = vmatprep.subr.bf16.mxu0 0
    %1673 = vmatpush1.bf16.msra.mxu0 %v1161
    %1674 = vmatprep.subr.bf16.mxu0 0
    %1675 = vmatpush1.bf16.msra.mxu0 %v1158
    %1676 = vmatprep.subr.bf16.mxu0 0
    %1677 = vmatpush1.bf16.msra.mxu0 %v1155
    %1678 = vmatprep.subr.bf16.mxu0 0
    %1679 = vmatpush1.bf16.msra.mxu0 %v1152
    %1680 = vmatprep.subr.bf16.mxu0 0
    %1681 = vmatpush1.bf16.msra.mxu0 %v1149
    %1682 = vmatprep.subr.bf16.mxu0 0
    %1683 = vmatpush1.bf16.msra.mxu0 %v1146
    %1684 = vmatprep.subr.bf16.mxu0 0
    %1685 = vmatpush2.bf16.msra.mxu0 %v1191
    %1686 = vmatprep.subr.bf16.mxu0 0
    %1687 = vmatpush2.bf16.msra.mxu0 %v1188
    %1688 = vmatprep.subr.bf16.mxu0 0
    %1689 = vmatpush2.bf16.msra.mxu0 %v1185
    %1690 = vmatprep.subr.bf16.mxu0 0
    %1691 = vmatpush2.bf16.msra.mxu0 %v1182
    %1692 = vmatprep.subr.bf16.mxu0 0
    %1693 = vmatpush2.bf16.msra.mxu0 %v1179
    %1694 = vmatprep.subr.bf16.mxu0 0
    %1695 = vmatpush2.bf16.msra.mxu0 %v1176
    %1696 = vmatprep.subr.bf16.mxu0 0
    %1697 = vmatpush2.bf16.msra.mxu0 %v1173
    %1698 = vmatprep.subr.bf16.mxu0 0
    %1699 = vmatpush2.bf16.msra.mxu0 %v1170
    %1700 = vmatprep.mubr.bf16.mxu0 %v351
    %1701 = vmatmul.mubr.bf16.gmra.mxu0 %v349
    %v1702 = vpop.f32.mrf.mxu0
    %v1703 = vadd.f32 %v1663, %v1702
    %v1704 = vpop.f32.mrf.mxu0
    %v1705 = vpop.f32.mrf.mxu0
    %v1706 = vpop.f32.mrf.mxu0
    %1707 = vdwg.mxu0
    %v1708 = vmax.f32 %v1542, 0.0
    %v1709 = vmax.f32 %v1544, 0.0
    %v1710 = vmax.f32 %v1703, 0.0
    %v1711 = vpack.c.bf16 %v1708, %v1708
    %v1712 = vpack.c.bf16 %v1709, %v1709
    %v1713 = vpack.c.bf16 %v1710, %v1710
    %v1714 = vld [vmem:[%s3] sm:$0xff]
    %v1715 = vld [vmem:[%s3 + $0x8] sm:$0xff]
    %v1716 = vld [vmem:[%s3 + $0x10] sm:$0xff]
    %v1717 = vld [vmem:[%s3 + $0x18] sm:$0xff]
    %v1718 = vld [vmem:[%s3 + $0x20] sm:$0xff]
    %v1719 = vld [vmem:[%s3 + $0x28] sm:$0xff]
    %v1720 = vld [vmem:[%s3 + $0x30] sm:$0xff]
    %v1721 = vld [vmem:[%s3 + $0x38] sm:$0xff]
    %v1722 = vld [vmem:[%s3 + $0x40] sm:$0xff]
    %v1723 = vld [vmem:[%s3 + $0x48] sm:$0xff]
    %v1724 = vld [vmem:[%s3 + $0x50] sm:$0xff]
    %v1725 = vld [vmem:[%s3 + $0x58] sm:$0xff]
    %v1726 = vld [vmem:[%s3 + $0x60] sm:$0xff]
    %v1727 = vld [vmem:[%s3 + $0x68] sm:$0xff]
    %v1728 = vld [vmem:[%s3 + $0x70] sm:$0xff]
    %v1729 = vld [vmem:[%s3 + $0x78] sm:$0xff]
    %v1730 = vld [vmem:[%s3 + $0x80] sm:$0xff]
    %v1731 = vld [vmem:[%s3 + $0x88] sm:$0xff]
    %v1732 = vld [vmem:[%s3 + $0x90] sm:$0xff]
    %v1733 = vld [vmem:[%s3 + $0x98] sm:$0xff]
    %v1734 = vld [vmem:[%s3 + $0xa0] sm:$0xff]
    %v1735 = vld [vmem:[%s3 + $0xa8] sm:$0xff]
    %v1736 = vld [vmem:[%s3 + $0xb0] sm:$0xff]
    %v1737 = vld [vmem:[%s3 + $0xb8] sm:$0xff]
    %v1738 = vld [vmem:[%s3 + $0xc0] sm:$0xff]
    %v1739 = vld [vmem:[%s3 + $0xc8] sm:$0xff]
    %v1740 = vld [vmem:[%s3 + $0xd0] sm:$0xff]
    %v1741 = vld [vmem:[%s3 + $0xd8] sm:$0xff]
    %v1742 = vld [vmem:[%s3 + $0xe0] sm:$0xff]
    %v1743 = vld [vmem:[%s3 + $0xe8] sm:$0xff]
    %v1744 = vld [vmem:[%s3 + $0xf0] sm:$0xff]
    %v1745 = vld [vmem:[%s3 + $0xf8] sm:$0xff]
    %v1746 = vld [vmem:[%s3 + $0x100] sm:$0xff]
    %v1747 = vld [vmem:[%s3 + $0x108] sm:$0xff]
    %v1748 = vld [vmem:[%s3 + $0x110] sm:$0xff]
    %v1749 = vld [vmem:[%s3 + $0x118] sm:$0xff]
    %v1750 = vld [vmem:[%s3 + $0x120] sm:$0xff]
    %v1751 = vld [vmem:[%s3 + $0x128] sm:$0xff]
    %v1752 = vld [vmem:[%s3 + $0x130] sm:$0xff]
    %v1753 = vld [vmem:[%s3 + $0x138] sm:$0xff]
    %v1754 = vld [vmem:[%s3 + $0x140] sm:$0xff]
    %v1755 = vld [vmem:[%s3 + $0x148] sm:$0xff]
    %v1756 = vld [vmem:[%s3 + $0x150] sm:$0xff]
    %v1757 = vld [vmem:[%s3 + $0x158] sm:$0xff]
    %v1758 = vld [vmem:[%s3 + $0x160] sm:$0xff]
    %v1759 = vld [vmem:[%s3 + $0x168] sm:$0xff]
    %v1760 = vld [vmem:[%s3 + $0x170] sm:$0xff]
    %v1761 = vld [vmem:[%s3 + $0x178] sm:$0xff]
    %v1762 = vld [vmem:[%s4] sm:$0x3]
    %v1764 = vlaneseq
    %v1765 = vshrl.u32 %v1764, 7
    %v1766 = vsub.s32 0, %v1765
    %v1767 = vrot.slane %v1762, %v1766
    %v1768 = vlaneseq
    %v1769 = vshrl.u32 %v1768, 7
    %v1770 = vsub.s32 1, %v1769
    %v1771 = vrot.slane %v1762, %v1770
    %v1822 = vunpack.c.l.b16 %v1714
    %v1823 = vunpack.c.h.b16 %v1714
    %v1824 = vunpack.c.l.b16 %v1715
    %v1825 = vunpack.c.h.b16 %v1715
    %v1826 = vunpack.c.l.b16 %v1716
    %v1827 = vunpack.c.h.b16 %v1716
    %v1828 = vunpack.c.l.b16 %v1717
    %v1829 = vunpack.c.h.b16 %v1717
    %v1830 = vunpack.c.l.b16 %v1718
    %v1831 = vunpack.c.h.b16 %v1718
    %v1832 = vunpack.c.l.b16 %v1719
    %v1833 = vunpack.c.h.b16 %v1719
    %v1834 = vunpack.c.l.b16 %v1720
    %v1835 = vunpack.c.h.b16 %v1720
    %v1836 = vunpack.c.l.b16 %v1721
    %v1837 = vunpack.c.h.b16 %v1721
    %v1838 = vunpack.c.l.b16 %v1722
    %v1839 = vunpack.c.h.b16 %v1722
    %v1840 = vunpack.c.l.b16 %v1723
    %v1841 = vunpack.c.h.b16 %v1723
    %v1842 = vunpack.c.l.b16 %v1724
    %v1843 = vunpack.c.h.b16 %v1724
    %v1844 = vunpack.c.l.b16 %v1725
    %v1845 = vunpack.c.h.b16 %v1725
    %v1846 = vunpack.c.l.b16 %v1726
    %v1847 = vunpack.c.h.b16 %v1726
    %v1848 = vunpack.c.l.b16 %v1727
    %v1849 = vunpack.c.h.b16 %v1727
    %v1850 = vunpack.c.l.b16 %v1728
    %v1851 = vunpack.c.h.b16 %v1728
    %v1852 = vunpack.c.l.b16 %v1729
    %v1853 = vunpack.c.h.b16 %v1729
    %v1854 = vunpack.c.l.b16 %v1730
    %v1855 = vunpack.c.h.b16 %v1730
    %v1856 = vunpack.c.l.b16 %v1731
    %v1857 = vunpack.c.h.b16 %v1731
    %v1858 = vunpack.c.l.b16 %v1732
    %v1859 = vunpack.c.h.b16 %v1732
    %v1860 = vunpack.c.l.b16 %v1733
    %v1861 = vunpack.c.h.b16 %v1733
    %v1862 = vunpack.c.l.b16 %v1734
    %v1863 = vunpack.c.h.b16 %v1734
    %v1864 = vunpack.c.l.b16 %v1735
    %v1865 = vunpack.c.h.b16 %v1735
    %v1866 = vunpack.c.l.b16 %v1736
    %v1867 = vunpack.c.h.b16 %v1736
    %v1868 = vunpack.c.l.b16 %v1737
    %v1869 = vunpack.c.h.b16 %v1737
    %v1870 = vunpack.c.l.b16 %v1738
    %v1871 = vunpack.c.h.b16 %v1738
    %v1872 = vunpack.c.l.b16 %v1739
    %v1873 = vunpack.c.h.b16 %v1739
    %v1874 = vunpack.c.l.b16 %v1740
    %v1875 = vunpack.c.h.b16 %v1740
    %v1876 = vunpack.c.l.b16 %v1741
    %v1877 = vunpack.c.h.b16 %v1741
    %v1878 = vunpack.c.l.b16 %v1742
    %v1879 = vunpack.c.h.b16 %v1742
    %v1880 = vunpack.c.l.b16 %v1743
    %v1881 = vunpack.c.h.b16 %v1743
    %v1882 = vunpack.c.l.b16 %v1744
    %v1883 = vunpack.c.h.b16 %v1744
    %v1884 = vunpack.c.l.b16 %v1745
    %v1885 = vunpack.c.h.b16 %v1745
    %v1886 = vunpack.c.l.b16 %v1746
    %v1887 = vunpack.c.h.b16 %v1746
    %v1888 = vunpack.c.l.b16 %v1747
    %v1889 = vunpack.c.h.b16 %v1747
    %v1890 = vunpack.c.l.b16 %v1748
    %v1891 = vunpack.c.h.b16 %v1748
    %v1892 = vunpack.c.l.b16 %v1749
    %v1893 = vunpack.c.h.b16 %v1749
    %v1894 = vunpack.c.l.b16 %v1750
    %v1895 = vunpack.c.h.b16 %v1750
    %v1896 = vunpack.c.l.b16 %v1751
    %v1897 = vunpack.c.h.b16 %v1751
    %v1898 = vunpack.c.l.b16 %v1752
    %v1899 = vunpack.c.h.b16 %v1752
    %v1900 = vunpack.c.l.b16 %v1753
    %v1901 = vunpack.c.h.b16 %v1753
    %v1902 = vunpack.c.l.b16 %v1754
    %v1903 = vunpack.c.h.b16 %v1754
    %v1904 = vunpack.c.l.b16 %v1755
    %v1905 = vunpack.c.h.b16 %v1755
    %v1906 = vunpack.c.l.b16 %v1756
    %v1907 = vunpack.c.h.b16 %v1756
    %v1908 = vunpack.c.l.b16 %v1757
    %v1909 = vunpack.c.h.b16 %v1757
    %v1910 = vunpack.c.l.b16 %v1758
    %v1911 = vunpack.c.h.b16 %v1758
    %v1912 = vunpack.c.l.b16 %v1759
    %v1913 = vunpack.c.h.b16 %v1759
    %v1914 = vunpack.c.l.b16 %v1760
    %v1915 = vunpack.c.h.b16 %v1760
    %v1916 = vunpack.c.l.b16 %v1761
    %v1917 = vunpack.c.h.b16 %v1761
    %v1918 = vpack.c.b16 %v1824, %v1822
    %v1919 = vpack.c.b16 %v1825, %v1823
    %v1920 = vpack.c.b16 %v1828, %v1826
    %v1921 = vpack.c.b16 %v1829, %v1827
    %v1922 = vpack.c.b16 %v1832, %v1830
    %v1923 = vpack.c.b16 %v1833, %v1831
    %v1924 = vpack.c.b16 %v1836, %v1834
    %v1925 = vpack.c.b16 %v1837, %v1835
    %v1926 = vpack.c.b16 %v1840, %v1838
    %v1927 = vpack.c.b16 %v1841, %v1839
    %v1928 = vpack.c.b16 %v1844, %v1842
    %v1929 = vpack.c.b16 %v1845, %v1843
    %v1930 = vpack.c.b16 %v1848, %v1846
    %v1931 = vpack.c.b16 %v1849, %v1847
    %v1932 = vpack.c.b16 %v1852, %v1850
    %v1933 = vpack.c.b16 %v1853, %v1851
    %v1934 = vpack.c.b16 %v1856, %v1854
    %v1935 = vpack.c.b16 %v1857, %v1855
    %v1936 = vpack.c.b16 %v1860, %v1858
    %v1937 = vpack.c.b16 %v1861, %v1859
    %v1938 = vpack.c.b16 %v1864, %v1862
    %v1939 = vpack.c.b16 %v1865, %v1863
    %v1940 = vpack.c.b16 %v1868, %v1866
    %v1941 = vpack.c.b16 %v1869, %v1867
    %v1942 = vpack.c.b16 %v1872, %v1870
    %v1943 = vpack.c.b16 %v1873, %v1871
    %v1944 = vpack.c.b16 %v1876, %v1874
    %v1945 = vpack.c.b16 %v1877, %v1875
    %v1946 = vpack.c.b16 %v1880, %v1878
    %v1947 = vpack.c.b16 %v1881, %v1879
    %v1948 = vpack.c.b16 %v1884, %v1882
    %v1949 = vpack.c.b16 %v1885, %v1883
    %v1950 = vpack.c.b16 %v1888, %v1886
    %v1951 = vpack.c.b16 %v1889, %v1887
    %v1952 = vpack.c.b16 %v1892, %v1890
    %v1953 = vpack.c.b16 %v1893, %v1891
    %v1954 = vpack.c.b16 %v1896, %v1894
    %v1955 = vpack.c.b16 %v1897, %v1895
    %v1956 = vpack.c.b16 %v1900, %v1898
    %v1957 = vpack.c.b16 %v1901, %v1899
    %v1958 = vpack.c.b16 %v1904, %v1902
    %v1959 = vpack.c.b16 %v1905, %v1903
    %v1960 = vpack.c.b16 %v1908, %v1906
    %v1961 = vpack.c.b16 %v1909, %v1907
    %v1962 = vpack.c.b16 %v1912, %v1910
    %v1963 = vpack.c.b16 %v1913, %v1911
    %v1964 = vpack.c.b16 %v1916, %v1914
    %v1965 = vpack.c.b16 %v1917, %v1915
    %2014 = vmatprep.subr.bf16.mxu0 %v1933
    %2015 = vmatpush1.bf16.msra.mxu0 %v1932
    %2016 = vmatprep.subr.bf16.mxu0 %v1931
    %2017 = vmatpush1.bf16.msra.mxu0 %v1930
    %2018 = vmatprep.subr.bf16.mxu0 %v1929
    %2019 = vmatpush1.bf16.msra.mxu0 %v1928
    %2020 = vmatprep.subr.bf16.mxu0 %v1927
    %2021 = vmatpush1.bf16.msra.mxu0 %v1926
    %2022 = vmatprep.subr.bf16.mxu0 %v1925
    %2023 = vmatpush1.bf16.msra.mxu0 %v1924
    %2024 = vmatprep.subr.bf16.mxu0 %v1923
    %2025 = vmatpush1.bf16.msra.mxu0 %v1922
    %2026 = vmatprep.subr.bf16.mxu0 %v1921
    %2027 = vmatpush1.bf16.msra.mxu0 %v1920
    %2028 = vmatprep.subr.bf16.mxu0 %v1919
    %2029 = vmatpush1.bf16.msra.mxu0 %v1918
    %2030 = vmatprep.subr.bf16.mxu0 %v1949
    %2031 = vmatpush2.bf16.msra.mxu0 %v1948
    %2032 = vmatprep.subr.bf16.mxu0 %v1947
    %2033 = vmatpush2.bf16.msra.mxu0 %v1946
    %2034 = vmatprep.subr.bf16.mxu0 %v1945
    %2035 = vmatpush2.bf16.msra.mxu0 %v1944
    %2036 = vmatprep.subr.bf16.mxu0 %v1943
    %2037 = vmatpush2.bf16.msra.mxu0 %v1942
    %2038 = vmatprep.subr.bf16.mxu0 %v1941
    %2039 = vmatpush2.bf16.msra.mxu0 %v1940
    %2040 = vmatprep.subr.bf16.mxu0 %v1939
    %2041 = vmatpush2.bf16.msra.mxu0 %v1938
    %2042 = vmatprep.subr.bf16.mxu0 %v1937
    %2043 = vmatpush2.bf16.msra.mxu0 %v1936
    %2044 = vmatprep.subr.bf16.mxu0 %v1935
    %2045 = vmatpush2.bf16.msra.mxu0 %v1934
    %2046 = vmatprep.mubr.bf16.mxu0 %v1712
    %2047 = vmatmul.mubr.bf16.gmra.mxu0 %v1711
    %v2048 = vpop.f32.mrf.mxu0
    %v2049 = vadd.f32 %v1767, %v2048
    %v2050 = vpop.f32.mrf.mxu0
    %v2051 = vadd.f32 %v1771, %v2050
    %v2052 = vpop.f32.mrf.mxu0
    %v2053 = vpop.f32.mrf.mxu0
    %2054 = vdwg.mxu0
    %2055 = vmatprep.subr.bf16.mxu0 %v1965
    %2056 = vmatpush1.bf16.msra.mxu0 %v1964
    %2057 = vmatprep.subr.bf16.mxu0 %v1963
    %2058 = vmatpush1.bf16.msra.mxu0 %v1962
    %2059 = vmatprep.subr.bf16.mxu0 %v1961
    %2060 = vmatpush1.bf16.msra.mxu0 %v1960
    %2061 = vmatprep.subr.bf16.mxu0 %v1959
    %2062 = vmatpush1.bf16.msra.mxu0 %v1958
    %2063 = vmatprep.subr.bf16.mxu0 %v1957
    %2064 = vmatpush1.bf16.msra.mxu0 %v1956
    %2065 = vmatprep.subr.bf16.mxu0 %v1955
    %2066 = vmatpush1.bf16.msra.mxu0 %v1954
    %2067 = vmatprep.subr.bf16.mxu0 %v1953
    %2068 = vmatpush1.bf16.msra.mxu0 %v1952
    %2069 = vmatprep.subr.bf16.mxu0 %v1951
    %2070 = vmatpush1.bf16.msra.mxu0 %v1950
    %2071 = vmatprep.subr.bf16.mxu0 0
    %2072 = vmatpush2.bf16.msra.mxu0 0
    %2073 = vmatprep.subr.bf16.mxu0 0
    %2074 = vmatpush2.bf16.msra.mxu0 0
    %2075 = vmatprep.subr.bf16.mxu0 0
    %2076 = vmatpush2.bf16.msra.mxu0 0
    %2077 = vmatprep.subr.bf16.mxu0 0
    %2078 = vmatpush2.bf16.msra.mxu0 0
    %2079 = vmatprep.subr.bf16.mxu0 0
    %2080 = vmatpush2.bf16.msra.mxu0 0
    %2081 = vmatprep.subr.bf16.mxu0 0
    %2082 = vmatpush2.bf16.msra.mxu0 0
    %2083 = vmatprep.subr.bf16.mxu0 0
    %2084 = vmatpush2.bf16.msra.mxu0 0
    %2085 = vmatprep.subr.bf16.mxu0 0
    %2086 = vmatpush2.bf16.msra.mxu0 0
    %2087 = vmatprep.mubr.bf16.mxu0 0
    %2088 = vmatmul.mubr.bf16.gmra.mxu0 %v1713
    %v2089 = vpop.f32.mrf.mxu0
    %v2090 = vadd.f32 %v2049, %v2089
    %v2091 = vpop.f32.mrf.mxu0
    %v2092 = vadd.f32 %v2051, %v2091
    %v2093 = vpop.f32.mrf.mxu0
    %v2094 = vpop.f32.mrf.mxu0
    %2095 = vdwg.mxu0
    %v2096 = vmax.f32 %v2090, 0.0
    %v2097 = vmax.f32 %v2092, 0.0
    %v2098 = vpack.c.bf16 %v2096, %v2096
    %v2099 = vpack.c.bf16 %v2097, %v2097
    %v2100 = vld [vmem:[%s5] sm:$0xf]
    %v2101 = vld [vmem:[%s5 + $0x4] sm:$0xf]
    %v2102 = vld [vmem:[%s5 + $0x8] sm:$0xf]
    %v2103 = vld [vmem:[%s5 + $0xc] sm:$0xf]
    %v2104 = vld [vmem:[%s5 + $0x10] sm:$0xf]
    %v2105 = vld [vmem:[%s5 + $0x14] sm:$0xf]
    %v2106 = vld [vmem:[%s5 + $0x18] sm:$0xf]
    %v2107 = vld [vmem:[%s5 + $0x1c] sm:$0xf]
    %v2108 = vld [vmem:[%s5 + $0x20] sm:$0xf]
    %v2109 = vld [vmem:[%s5 + $0x24] sm:$0xf]
    %v2110 = vld [vmem:[%s5 + $0x28] sm:$0xf]
    %v2111 = vld [vmem:[%s5 + $0x2c] sm:$0xf]
    %v2112 = vld [vmem:[%s5 + $0x30] sm:$0xf]
    %v2113 = vld [vmem:[%s5 + $0x34] sm:$0xf]
    %v2114 = vld [vmem:[%s5 + $0x38] sm:$0xf]
    %v2115 = vld [vmem:[%s5 + $0x3c] sm:$0xf]
    %v2116 = vld [vmem:[%s5 + $0x40] sm:$0xf]
    %v2117 = vld [vmem:[%s5 + $0x44] sm:$0xf]
    %v2118 = vld [vmem:[%s5 + $0x48] sm:$0xf]
    %v2119 = vld [vmem:[%s5 + $0x4c] sm:$0xf]
    %v2120 = vld [vmem:[%s5 + $0x50] sm:$0xf]
    %v2121 = vld [vmem:[%s5 + $0x54] sm:$0xf]
    %v2122 = vld [vmem:[%s5 + $0x58] sm:$0xf]
    %v2123 = vld [vmem:[%s5 + $0x5c] sm:$0xf]
    %v2124 = vld [vmem:[%s6] sm:$0x1]
    %v2126 = vlaneseq
    %v2127 = vshrl.u32 %v2126, 7
    %v2128 = vsub.s32 0, %v2127
    %v2129 = vrot.slane %v2124, %v2128
    %v2155 = vunpack.c.l.b16 %v2100
    %v2156 = vunpack.c.l.b16 %v2101
    %v2157 = vunpack.c.l.b16 %v2102
    %v2158 = vunpack.c.l.b16 %v2103
    %v2159 = vunpack.c.l.b16 %v2104
    %v2160 = vunpack.c.l.b16 %v2105
    %v2161 = vunpack.c.l.b16 %v2106
    %v2162 = vunpack.c.l.b16 %v2107
    %v2163 = vunpack.c.l.b16 %v2108
    %v2164 = vunpack.c.l.b16 %v2109
    %v2165 = vunpack.c.l.b16 %v2110
    %v2166 = vunpack.c.l.b16 %v2111
    %v2167 = vunpack.c.l.b16 %v2112
    %v2168 = vunpack.c.l.b16 %v2113
    %v2169 = vunpack.c.l.b16 %v2114
    %v2170 = vunpack.c.l.b16 %v2115
    %v2171 = vunpack.c.l.b16 %v2116
    %v2172 = vunpack.c.l.b16 %v2117
    %v2173 = vunpack.c.l.b16 %v2118
    %v2174 = vunpack.c.l.b16 %v2119
    %v2175 = vunpack.c.l.b16 %v2120
    %v2176 = vunpack.c.l.b16 %v2121
    %v2177 = vunpack.c.l.b16 %v2122
    %v2178 = vunpack.c.l.b16 %v2123
    %v2179 = vpack.c.b16 %v2156, %v2155
    %v2180 = vpack.c.b16 %v2158, %v2157
    %v2181 = vpack.c.b16 %v2160, %v2159
    %v2182 = vpack.c.b16 %v2162, %v2161
    %v2183 = vpack.c.b16 %v2164, %v2163
    %v2184 = vpack.c.b16 %v2166, %v2165
    %v2185 = vpack.c.b16 %v2168, %v2167
    %v2186 = vpack.c.b16 %v2170, %v2169
    %v2187 = vpack.c.b16 %v2172, %v2171
    %v2188 = vpack.c.b16 %v2174, %v2173
    %v2189 = vpack.c.b16 %v2176, %v2175
    %v2190 = vpack.c.b16 %v2178, %v2177
    %vm2203 = vcmask 523264
    %v2205 = vsel %vm2203, %v2099, 0
    %2207 = vmatprep.subr.bf16.mxu0 0
    %2208 = vmatpush1.bf16.msra.mxu0 %v2186
    %2209 = vmatprep.subr.bf16.mxu0 0
    %2210 = vmatpush1.bf16.msra.mxu0 %v2185
    %2211 = vmatprep.subr.bf16.mxu0 0
    %2212 = vmatpush1.bf16.msra.mxu0 %v2184
    %2213 = vmatprep.subr.bf16.mxu0 0
    %2214 = vmatpush1.bf16.msra.mxu0 %v2183
    %2215 = vmatprep.subr.bf16.mxu0 0
    %2216 = vmatpush1.bf16.msra.mxu0 %v2182
    %2217 = vmatprep.subr.bf16.mxu0 0
    %2218 = vmatpush1.bf16.msra.mxu0 %v2181
    %2219 = vmatprep.subr.bf16.mxu0 0
    %2220 = vmatpush1.bf16.msra.mxu0 %v2180
    %2221 = vmatprep.subr.bf16.mxu0 0
    %2222 = vmatpush1.bf16.msra.mxu0 %v2179
    %2223 = vmatprep.subr.bf16.mxu0 0
    %2224 = vmatpush2.bf16.msra.mxu0 0
    %2225 = vmatprep.subr.bf16.mxu0 0
    %2226 = vmatpush2.bf16.msra.mxu0 0
    %2227 = vmatprep.subr.bf16.mxu0 0
    %2228 = vmatpush2.bf16.msra.mxu0 0
    %2229 = vmatprep.subr.bf16.mxu0 0
    %2230 = vmatpush2.bf16.msra.mxu0 0
    %2231 = vmatprep.subr.bf16.mxu0 0
    %2232 = vmatpush2.bf16.msra.mxu0 %v2190
    %2233 = vmatprep.subr.bf16.mxu0 0
    %2234 = vmatpush2.bf16.msra.mxu0 %v2189
    %2235 = vmatprep.subr.bf16.mxu0 0
    %2236 = vmatpush2.bf16.msra.mxu0 %v2188
    %2237 = vmatprep.subr.bf16.mxu0 0
    %2238 = vmatpush2.bf16.msra.mxu0 %v2187
    %2239 = vmatprep.mubr.bf16.mxu0 %v2205
    %2240 = vmatmul.mubr.bf16.gmra.mxu0 %v2098
    %v2241 = vpop.f32.mrf.mxu0
    %v2242 = vadd.f32 %v2129, %v2241
    %v2243 = vpop.f32.mrf.mxu0
    %v2244 = vpop.f32.mrf.mxu0
    %v2245 = vpop.f32.mrf.mxu0
    %2246 = vdwg.mxu0
    %vm2247 = vcmask 74752
    %v2248 = vsel %vm2247, %v2242, -inf
    %2249 = vmax.xlane.f32.xlu0 %v2248
    %v2250 = vpop.xlane.xlu0 %2249
    %v2251 = vsub.f32 %v2242, %v2250
    %v2252 = vmul.f32 %v2251, 1.442695
    %v2253 = vpow.pop %v2252
    %v2254 = vsel %vm2247, %v2253, 0.0
    %2255 = vadd.xlane.f32.xlu0 %v2254
    %v2256 = vpop.xlane.xlu0 %2255
    %v2257 = vrcp.pop %v2256
    %v2258 = vmul.f32 %v2253, %v2257
    %2259 = vst.msk [vmem:[#allocation2] sm:$0x3] %vm2247, %v2258
    // Predicated region
    $region30: #{forward.7} parent=1 // pred_check
      _
    $region31: #{forward.7} parent=1 // pred_check_branch
      %2261 = sbr.rel (0) target = $region33
    $region32: #{forward.7} parent=1 // pred_region
      %s2263 = ssub.s32 32, 32
      %2264 = vsyncadd [#allocation3], %s2263
      %s2266 = sshll.u32 [#allocation2], 4
      %s2267 = int_to_ptr.vmem [resolvable:$true] %s2266
      %2269 = dma.vmem_to_hbm [thread:$0]  %s2267, 32, %s7, [#allocation3]
    $region33: #{forward.7} parent=1 // pred_fallthru
      _
    // Predicated region
    $region34: #{forward.7} parent=1 // pred_check
      _
    $region35: #{forward.7} parent=1 // pred_check_branch
      %2271 = sbr.rel (0) target = $region37
    $region36: #{forward.7} parent=1 // pred_region
      %2272 = dma.done [#allocation3], 32
    $region37: #{forward.7} parent=1 // pred_fallthru
      _
    %2273 = vsyncpa [#allocation3], 1

</llo_original>
